<compile_context>
chip_gen: v7x
topology: tpu7x:2x2x1
jax: 0.10.0
libtpu: 0.0.40
codegen_flags: <defaults>
</compile_context>

<pallas_src>
import functools

import jax
import jax.numpy as jnp
from jax.experimental import pallas as pl
from jax.experimental.pallas import tpu as pltpu

LEAKY_SLOPE = 0.2
BN_EPS = 1e-5
_LANE = 128                       # output lanes (pad Cout up to this)
_MAX_TM = 2048                    # max rows per M-tile (multiple of 16)
_VMEM_LIMIT = 32 * 1024 * 1024    # scoped VMEM request; safe on v5e/v6e/v7x
_RESIDENT_BUDGET = 16 * 1024 * 1024   # max bytes for a VMEM-resident output


def _round_up(x, m):
    return (x + m - 1) // m * m


def _pick_tiles(M):
    """(tile_m, padded_M): tile is a multiple of 16 (bf16 packing), <= _MAX_TM."""
    Mp = _round_up(M, 16)
    if Mp <= _MAX_TM:
        return Mp, Mp
    return _MAX_TM, _round_up(M, _MAX_TM)


# --------------------------------------------------------------------------
# Pallas kernels
# --------------------------------------------------------------------------
def _conv_act_kernel(a_ref, w_ref, o_ref, *, apply_leaky):
    """One M-tile of (patches @ weight) with optional fused LeakyReLU."""
    y = jnp.dot(a_ref[...], w_ref[...], preferred_element_type=jnp.float32)
    if apply_leaky:
        y = jnp.where(y > 0.0, y, LEAKY_SLOPE * y)
    o_ref[...] = y.astype(o_ref.dtype)


def _conv_bn_lrelu_resident_kernel(a_ref, w_ref, g_ref, b_ref, o_ref,
                                   sum_ref, sq_ref,
                                   *, m_valid, tm, n_tiles, pad_rows):
    """Single-sweep fused Conv(GEMM) + BatchNorm(batch stats) + LeakyReLU.

    grid = (n_tiles,).  The output block (n_tiles, tm, Cp) has a constant block
    index, so it stays resident in VMEM for the whole grid and is written back
    to HBM exactly once.  Each step GEMMs one M-tile, accumulates per-channel
    sum / sumsq, and stashes the pre-BN tile into its slab of the resident
    output.  On the last tile the stats are turned into (scale, shift) with an
    EUP rsqrt and the whole resident buffer is normalized + LeakyReLU'd in
    place before the single write-back.
    """
    i = pl.program_id(0)

    y = jnp.dot(a_ref[...], w_ref[...], preferred_element_type=jnp.float32)

    @pl.when(i == 0)
    def _():
        sum_ref[...] = jnp.zeros_like(sum_ref)
        sq_ref[...] = jnp.zeros_like(sq_ref)

    def _accum(vals):
        sum_ref[...] += jnp.sum(vals, axis=0, keepdims=True)
        sq_ref[...] += jnp.sum(vals * vals, axis=0, keepdims=True)

    if pad_rows:
        # Only the last tile contains padded rows -> mask only there.
        @pl.when(i == n_tiles - 1)
        def _():
            row = jax.lax.broadcasted_iota(jnp.int32, (tm, 1), 0) + i * tm
            _accum(y * (row < m_valid).astype(jnp.float32))

        @pl.when(i < n_tiles - 1)
        def _():
            _accum(y)
    else:
        _accum(y)

    # Stash the pre-BN tile into the VMEM-resident output (bf16).
    o_ref[i] = y.astype(o_ref.dtype)

    @pl.when(i == n_tiles - 1)
    def _():
        inv_m = jnp.float32(1.0 / m_valid)
        mean = sum_ref[...] * inv_m
        var = sq_ref[...] * inv_m - mean * mean        # biased batch variance
        scale = jax.lax.rsqrt(var + BN_EPS) * g_ref[...]
        shift = b_ref[...] - mean * scale
        z = o_ref[...].astype(jnp.float32) * scale + shift
        o_ref[...] = jnp.where(z > 0.0, z, LEAKY_SLOPE * z).astype(o_ref.dtype)


def _conv_bn_lrelu_twosweep_kernel(a_ref, w_ref, g_ref, b_ref, o_ref,
                                   sum_ref, sq_ref, scale_ref, shift_ref,
                                   *, m_valid, tm):
    """Fallback (only used when the resident output would not fit in VMEM).

    grid = (2, n_tiles): phase 0 accumulates the BN statistics (output block
    pinned at 0, so the uninitialized output buffer is never flushed); phase 1
    recomputes the GEMM tiles, applies affine BN + LeakyReLU and streams the
    lane-dense bf16 result out.
    """
    p = pl.program_id(0)
    i = pl.program_id(1)

    y = jnp.dot(a_ref[...], w_ref[...], preferred_element_type=jnp.float32)

    @pl.when(jnp.logical_and(p == 0, i == 0))
    def _():
        sum_ref[...] = jnp.zeros_like(sum_ref)
        sq_ref[...] = jnp.zeros_like(sq_ref)

    @pl.when(p == 0)
    def _():
        row = jax.lax.broadcasted_iota(jnp.int32, (tm, 1), 0) + i * tm
        mask = (row < m_valid).astype(jnp.float32)
        ym = y * mask
        sum_ref[...] += jnp.sum(ym, axis=0, keepdims=True)
        sq_ref[...] += jnp.sum(ym * ym, axis=0, keepdims=True)

    @pl.when(jnp.logical_and(p == 1, i == 0))
    def _():
        inv_m = jnp.float32(1.0 / m_valid)
        mean = sum_ref[...] * inv_m
        var = sq_ref[...] * inv_m - mean * mean
        scale = jax.lax.rsqrt(var + BN_EPS) * g_ref[...]
        scale_ref[...] = scale
        shift_ref[...] = b_ref[...] - mean * scale

    @pl.when(p == 1)
    def _():
        z = y * scale_ref[...] + shift_ref[...]
        o_ref[...] = jnp.where(z > 0.0, z, LEAKY_SLOPE * z).astype(o_ref.dtype)


def _conv_bn_lrelu_conv_head_kernel(a_ref, w_ref, g_ref, b_ref, w5_ref,
                                    ind_ref, o_ref, *, m_valid):
    """Layer-4 Conv + BN + LeakyReLU fused with the final 4x4 valid conv.

    Single invocation (M rows fit one tile).  The normalized activation never
    leaves VMEM: it is contracted against the spatially-tiled conv5 weight and
    reduced per image via a tiny indicator matmul; only (Npad, 1) scores are
    written back.
    """
    y = jnp.dot(a_ref[...], w_ref[...], preferred_element_type=jnp.float32)
    inv_m = jnp.float32(1.0 / m_valid)
    mean = jnp.sum(y, axis=0, keepdims=True) * inv_m
    var = jnp.sum(y * y, axis=0, keepdims=True) * inv_m - mean * mean
    scale = jax.lax.rsqrt(var + BN_EPS) * g_ref[...]
    shift = b_ref[...] - mean * scale
    z = y * scale + shift
    z = jnp.where(z > 0.0, z, LEAKY_SLOPE * z)
    # conv5: per-image contraction of the (Ho*Wo, C) activation with w5.
    p5 = z * w5_ref[...]                                            # (M, Cp)
    t5 = jnp.dot(ind_ref[...], p5, preferred_element_type=jnp.float32)  # (Np, Cp)
    o_ref[...] = jnp.sum(t5, axis=1, keepdims=True)                 # (Np, 1)


# --------------------------------------------------------------------------
# Pallas-call wrappers
# --------------------------------------------------------------------------
def _prep_operands(patches, w_mat):
    M, K = patches.shape
    Cout = w_mat.shape[1]
    Cp = _round_up(Cout, _LANE)
    tm, Mp = _pick_tiles(M)
    a = patches.astype(jnp.bfloat16)
    if Mp != M:                           # only pad when M is not a tile multiple
        a = jnp.pad(a, ((0, Mp - M), (0, 0)))
    w = w_mat
    if Cp != Cout:
        w = jnp.pad(w, ((0, 0), (0, Cp - Cout)))
    w = w.astype(jnp.bfloat16)
    return a, w, M, K, Cout, Cp, tm, Mp


def _pad_affine(v, Cout, Cp):
    v = v.reshape(1, Cout).astype(jnp.float32)
    if Cp != Cout:
        v = jnp.pad(v, ((0, 0), (0, Cp - Cout)))
    return v


def fused_conv(patches, w_mat, apply_leaky, out_dtype=jnp.bfloat16):
    """(M,K) @ (K,Cout) with optional LeakyReLU; lane-dense (Cout padded to 128)."""
    a, w, M, K, Cout, Cp, tm, Mp = _prep_operands(patches, w_mat)
    n_tiles = Mp // tm
    osz = jnp.dtype(out_dtype).itemsize
    out = pl.pallas_call(
        functools.partial(_conv_act_kernel, apply_leaky=apply_leaky),
        out_shape=jax.ShapeDtypeStruct((Mp, Cp), out_dtype),
        grid_spec=pltpu.PrefetchScalarGridSpec(
            num_scalar_prefetch=0,
            grid=(n_tiles,),
            in_specs=[pl.BlockSpec((tm, K), lambda i: (i, 0)),
                      pl.BlockSpec((K, Cp), lambda i: (0, 0))],
            out_specs=pl.BlockSpec((tm, Cp), lambda i: (i, 0))),
        compiler_params=pltpu.CompilerParams(
            dimension_semantics=("parallel",),
            vmem_limit_bytes=_VMEM_LIMIT),
        cost_estimate=pl.CostEstimate(
            flops=2 * Mp * K * Cp,
            transcendentals=0,
            bytes_accessed=(Mp * K + K * Cp) * 2 + Mp * Cp * osz),
    )(a, w)
    if Mp != M:
        out = out[:M]
    return out[:, :Cout]


def fused_conv_bn_lrelu(patches, w_mat, gamma, beta):
    """Fused Conv + BatchNorm (training-mode batch stats) + LeakyReLU(0.2)."""
    a, w, M, K, Cout, Cp, tm, Mp = _prep_operands(patches, w_mat)
    n_tiles = Mp // tm
    g = _pad_affine(gamma, Cout, Cp)
    b = _pad_affine(beta, Cout, Cp)

    if Mp * Cp * 2 <= _RESIDENT_BUDGET:
        # Single-sweep path: output resident in VMEM, one HBM write-back.
        out3 = pl.pallas_call(
            functools.partial(_conv_bn_lrelu_resident_kernel,
                              m_valid=M, tm=tm, n_tiles=n_tiles,
                              pad_rows=(Mp != M)),
            out_shape=jax.ShapeDtypeStruct((n_tiles, tm, Cp), jnp.bfloat16),
            grid_spec=pltpu.PrefetchScalarGridSpec(
                num_scalar_prefetch=0,
                grid=(n_tiles,),
                in_specs=[pl.BlockSpec((tm, K), lambda i: (i, 0)),
                          pl.BlockSpec((K, Cp), lambda i: (0, 0)),
                          pl.BlockSpec((1, Cp), lambda i: (0, 0)),
                          pl.BlockSpec((1, Cp), lambda i: (0, 0))],
                out_specs=pl.BlockSpec((n_tiles, tm, Cp),
                                       lambda i: (0, 0, 0)),
                scratch_shapes=[pltpu.VMEM((1, Cp), jnp.float32),   # sum
                                pltpu.VMEM((1, Cp), jnp.float32)]), # sumsq
            compiler_params=pltpu.CompilerParams(
                dimension_semantics=("arbitrary",),
                vmem_limit_bytes=_VMEM_LIMIT),
            cost_estimate=pl.CostEstimate(
                flops=2 * Mp * K * Cp,
                transcendentals=Cp,
                bytes_accessed=(Mp * K + K * Cp) * 2 + Mp * Cp * 2),
        )(a, w, g, b)
        out = out3.reshape(Mp, Cp)
    else:
        # Fallback: proven two-sweep kernel (reads patches twice).
        out = pl.pallas_call(
            functools.partial(_conv_bn_lrelu_twosweep_kernel,
                              m_valid=M, tm=tm),
            out_shape=jax.ShapeDtypeStruct((Mp, Cp), jnp.bfloat16),
            grid_spec=pltpu.PrefetchScalarGridSpec(
                num_scalar_prefetch=0,
                grid=(2, n_tiles),
                in_specs=[pl.BlockSpec((tm, K), lambda p, i: (i, 0)),
                          pl.BlockSpec((K, Cp), lambda p, i: (0, 0)),
                          pl.BlockSpec((1, Cp), lambda p, i: (0, 0)),
                          pl.BlockSpec((1, Cp), lambda p, i: (0, 0))],
                # phase 0 keeps the output block pinned (no HBM write-back);
                # phase 1 streams the lane-dense normalized tiles out.
                out_specs=pl.BlockSpec((tm, Cp), lambda p, i: (i * p, 0)),
                scratch_shapes=[pltpu.VMEM((1, Cp), jnp.float32),   # sum
                                pltpu.VMEM((1, Cp), jnp.float32),   # sumsq
                                pltpu.VMEM((1, Cp), jnp.float32),   # scale
                                pltpu.VMEM((1, Cp), jnp.float32)]), # shift
            compiler_params=pltpu.CompilerParams(
                dimension_semantics=("arbitrary", "arbitrary"),
                vmem_limit_bytes=_VMEM_LIMIT),
            cost_estimate=pl.CostEstimate(
                flops=4 * Mp * K * Cp,
                transcendentals=Cp,
                bytes_accessed=2 * (Mp * K + K * Cp) * 2 + Mp * Cp * 2),
        )(a, w, g, b)

    if Mp != M:
        out = out[:M]
    return out[:, :Cout]


def fused_conv_bn_lrelu_conv_head(patches, w4_mat, gamma, beta, w5_ochw,
                                  n_batch, hw):
    """Layer-4 Conv+BN+LeakyReLU fused with the final 4x4 valid conv (Cout=1)."""
    M, K = patches.shape
    Cout = w4_mat.shape[1]
    Cp = _round_up(Cout, _LANE)
    a = patches.astype(jnp.bfloat16)
    w = w4_mat
    if Cp != Cout:
        w = jnp.pad(w, ((0, 0), (0, Cp - Cout)))
    w = w.astype(jnp.bfloat16)
    g = _pad_affine(gamma, Cout, Cp)
    b = _pad_affine(beta, Cout, Cp)

    # conv5 weight laid out per spatial position (matching the GEMM row order
    # n-major, then h, then w) and tiled over the batch: w5t[m, c] = w5[0,c,h,w].
    c5 = w5_ochw.shape[1]
    w5m = jnp.transpose(w5_ochw[0], (1, 2, 0)).reshape(hw, c5)      # (hw, C4)
    if Cp != c5:
        w5m = jnp.pad(w5m, ((0, 0), (0, Cp - c5)))
    w5t = jnp.tile(w5m.astype(jnp.float32), (n_batch, 1))           # (M, Cp)

    Np = _round_up(n_batch, 8)
    ind = (jnp.arange(M)[None, :] // hw
           == jnp.arange(Np)[:, None]).astype(jnp.float32)          # (Np, M)

    out = pl.pallas_call(
        functools.partial(_conv_bn_lrelu_conv_head_kernel, m_valid=M),
        out_shape=jax.ShapeDtypeStruct((Np, 1), jnp.float32),
        grid_spec=pltpu.PrefetchScalarGridSpec(
            num_scalar_prefetch=0,
            grid=(1,),
            in_specs=[pl.BlockSpec((M, K), lambda i: (0, 0)),
                      pl.BlockSpec((K, Cp), lambda i: (0, 0)),
                      pl.BlockSpec((1, Cp), lambda i: (0, 0)),
                      pl.BlockSpec((1, Cp), lambda i: (0, 0)),
                      pl.BlockSpec((M, Cp), lambda i: (0, 0)),
                      pl.BlockSpec((Np, M), lambda i: (0, 0))],
            out_specs=pl.BlockSpec((Np, 1), lambda i: (0, 0))),
        compiler_params=pltpu.CompilerParams(
            dimension_semantics=("arbitrary",),
            vmem_limit_bytes=_VMEM_LIMIT),
        cost_estimate=pl.CostEstimate(
            flops=2 * M * K * Cp + 2 * Np * M * Cp,
            transcendentals=Cp,
            bytes_accessed=(M * K + K * Cp) * 2 + (M * Cp + Np * M) * 4 + Np * 4),
    )(a, w, g, b, w5t, ind)
    return out[:n_batch].reshape(n_batch, 1, 1, 1)


# --------------------------------------------------------------------------
# Glue: im2col, per-layer wrappers, full forward
# --------------------------------------------------------------------------
def im2col(x_nhwc, kh, kw, stride, pad):
    # TODO(synk): patch extraction stays in XLA; fold into the kernel later.
    N, H, W, C = x_nhwc.shape
    xp = jnp.pad(x_nhwc, ((0, 0), (pad, pad), (pad, pad), (0, 0)))
    Ho = (H + 2 * pad - kh) // stride + 1
    Wo = (W + 2 * pad - kw) // stride + 1
    cols = []
    for i in range(kh):
        for j in range(kw):
            cols.append(xp[:, i:i + Ho * stride:stride,
                           j:j + Wo * stride:stride, :])
    patches = jnp.stack(cols, axis=3)                 # (N, Ho, Wo, kh*kw, C)
    return patches.reshape(N * Ho * Wo, kh * kw * C), N, Ho, Wo


def _weight_matrix(w_ochw):
    Cout, Cin, KH, KW = w_ochw.shape
    return jnp.transpose(w_ochw, (2, 3, 1, 0)).reshape(KH * KW * Cin, Cout)


def conv_layer(x_nhwc, w_ochw, stride, pad, apply_leaky,
               out_dtype=jnp.bfloat16):
    Cout, Cin, KH, KW = w_ochw.shape
    patches, N, Ho, Wo = im2col(x_nhwc.astype(jnp.bfloat16), KH, KW, stride, pad)
    out = fused_conv(patches, _weight_matrix(w_ochw), apply_leaky, out_dtype)
    return out.reshape(N, Ho, Wo, Cout)


def conv_bn_lrelu_layer(x_nhwc, w_ochw, gamma, beta, stride, pad):
    Cout, Cin, KH, KW = w_ochw.shape
    patches, N, Ho, Wo = im2col(x_nhwc.astype(jnp.bfloat16), KH, KW, stride, pad)
    out = fused_conv_bn_lrelu(patches, _weight_matrix(w_ochw), gamma, beta)
    return out.reshape(N, Ho, Wo, Cout)


def critic_head(x_nhwc, w4_ochw, gamma, beta, w5_ochw, stride, pad):
    """Layer 4 (Conv+BN+LeakyReLU) + final 4x4 valid conv, fused when possible."""
    C4, C3, KH, KW = w4_ochw.shape
    patches, N, Ho, Wo = im2col(x_nhwc.astype(jnp.bfloat16), KH, KW, stride, pad)
    M, _ = patches.shape
    k5h, k5w = w5_ochw.shape[2], w5_ochw.shape[3]
    foldable = (Ho == k5h and Wo == k5w
                and w5_ochw.shape[0] == 1 and w5_ochw.shape[1] == C4
                and M % 8 == 0 and M <= _MAX_TM
                and M * _LANE * 4 <= _RESIDENT_BUDGET)
    if foldable:
        return fused_conv_bn_lrelu_conv_head(
            patches, _weight_matrix(w4_ochw), gamma, beta, w5_ochw, N, Ho * Wo)
    # Generic fallback: unfused layer 4 + separate final conv.
    h = fused_conv_bn_lrelu(patches, _weight_matrix(w4_ochw), gamma, beta)
    h = h.reshape(N, Ho, Wo, C4)
    h = conv_layer(h, w5_ochw, 1, 0, apply_leaky=False, out_dtype=jnp.float32)
    return jnp.transpose(h, (0, 3, 1, 2))


def critic_forward(params, x_nchw, label_nchw):
    """Matches Critic.forward: concat on channel dim then the conv stack."""
    h = jnp.concatenate([x_nchw, label_nchw], axis=1)          # NCHW
    h = jnp.transpose(h, (0, 2, 3, 1))                         # -> NHWC
    h = conv_layer(h, params["w1"], 2, 1, apply_leaky=True)
    h = conv_bn_lrelu_layer(h, params["w2"], params["g2"], params["b2"], 2, 1)
    h = conv_bn_lrelu_layer(h, params["w3"], params["g3"], params["b3"], 2, 1)
    # Layer 4 + final 4x4 valid conv fused in one kernel -> (N, 1, 1, 1) NCHW.
    return critic_head(h, params["w4"], params["g4"], params["b4"],
                       params["w5"], 2, 1)


# --------------------------------------------------------------------------
# Pure-JAX reference (correctness check for the Pallas path)
# --------------------------------------------------------------------------
def reference_forward(params, x, label):
    h = jnp.concatenate([x, label], axis=1).astype(jnp.float32)

    def conv(h, w, stride, pad):
        return jax.lax.conv_general_dilated(
            h, w, window_strides=(stride, stride),
            padding=[(pad, pad), (pad, pad)],
            dimension_numbers=("NCHW", "OIHW", "NCHW"),
            precision=jax.lax.Precision.HIGHEST)

    def lrelu(h):
        return jnp.where(h > 0, h, LEAKY_SLOPE * h)

    def bn(h, g, b):
        mean = jnp.mean(h, axis=(0, 2, 3), keepdims=True)
        var = jnp.mean(jnp.square(h - mean), axis=(0, 2, 3), keepdims=True)
        return ((h - mean) * jax.lax.rsqrt(var + BN_EPS)
                * g.reshape(1, -1, 1, 1) + b.reshape(1, -1, 1, 1))

    h = lrelu(conv(h, params["w1"], 2, 1))
    h = lrelu(bn(conv(h, params["w2"], 2, 1), params["g2"], params["b2"]))
    h = lrelu(bn(conv(h, params["w3"], 2, 1), params["g3"], params["b3"]))
    h = lrelu(bn(conv(h, params["w4"], 2, 1), params["g4"], params["b4"]))
    return conv(h, params["w5"], 1, 0)


# --------------------------------------------------------------------------
# Deterministic parameter init (DCGAN-style N(0, 0.02) conv weights)
# --------------------------------------------------------------------------
def init_params(key, img_channels, z_dim):
    cin0 = img_channels + 3
    shapes = {
        "w1": (z_dim, cin0, 4, 4),
        "w2": (z_dim * 2, z_dim, 4, 4),
        "w3": (z_dim * 4, z_dim * 2, 4, 4),
        "w4": (z_dim * 8, z_dim * 4, 4, 4),
        "w5": (1, z_dim * 8, 4, 4),
    }
    params = {}
    keys = jax.random.split(key, len(shapes))
    for k, (name, shp) in zip(keys, shapes.items()):
        params[name] = 0.02 * jax.random.normal(k, shp, dtype=jnp.float32)
    # BatchNorm affine params (PyTorch default: gamma=1, beta=0)
    for i, c in zip((2, 3, 4), (z_dim * 2, z_dim * 4, z_dim * 8)):
        params[f"g{i}"] = jnp.ones((c,), jnp.float32)
        params[f"b{i}"] = jnp.zeros((c,), jnp.float32)
    return params


if __name__ == "__main__":
    img_channels, z_dim = 1, 8
    batch, H, W = 2, 64, 64   # 64->32->16->8->4 -> final 4x4 valid conv -> 1x1

    key = jax.random.PRNGKey(0)
    kx, kl, kp = jax.random.split(key, 3)
    x = jax.random.normal(kx, (batch, img_channels, H, W), dtype=jnp.float32)
    label = jax.random.normal(kl, (batch, 3, H, W), dtype=jnp.float32)
    params = init_params(kp, img_channels, z_dim)

    out = jax.jit(critic_forward)(params, x, label)
    out = jax.block_until_ready(out)
    assert out.shape == (batch, 1, 1, 1), out.shape

    ref = jax.block_until_ready(reference_forward(params, x, label))
    assert jnp.allclose(out.astype(jnp.float32), ref, atol=5e-2, rtol=5e-2), (
        "max abs diff", float(jnp.max(jnp.abs(out.astype(jnp.float32) - ref))))

    print("KERNEL_OK")
</pallas_src>

<mosaic_0001>
module attributes {stable_mosaic.version = 11 : i64} {
  func.func @_conv_act_kernel(%arg0: i32, %arg1: memref<2048x64xbf16, #tpu.memory_space<vmem>>, %arg2: memref<64x128xbf16, #tpu.memory_space<vmem>>, %arg3: memref<2048x128xbf16, #tpu.memory_space<vmem>>) attributes {dimension_semantics = [#tpu.dimension_semantics<parallel>], iteration_bounds = array<i64: 1>, scalar_prefetch = 0 : i64, scratch_operands = 0 : i64, tpu.core_type = #tpu.core_type<tc>, window_params = [{transform_indices = @transform_0, window_bounds = array<i64: 2048, 64>}, {pipeline_mode = #tpu.pipeline_mode<synchronous>, transform_indices = @transform_1, window_bounds = array<i64: 64, 128>}, {transform_indices = @transform_2, window_bounds = array<i64: 2048, 128>}]} {
    %c0 = arith.constant 0 : index
    %c0_0 = arith.constant 0 : index
    %0 = vector.load %arg1[%c0, %c0_0] : memref<2048x64xbf16, #tpu.memory_space<vmem>>, vector<2048x64xbf16>
    %c0_1 = arith.constant 0 : index
    %c0_2 = arith.constant 0 : index
    %1 = vector.load %arg2[%c0_1, %c0_2] : memref<64x128xbf16, #tpu.memory_space<vmem>>, vector<64x128xbf16>
    %cst = arith.constant dense<0.000000e+00> : vector<2048x128xf32>
    %2 = tpu.matmul %0, %1, %cst {dimension_numbers = #tpu.dot_dimension_numbers<[1], [0], [0], [1], [0, 0, 1, 1], [], []>} : vector<2048x64xbf16>, vector<64x128xbf16>, vector<2048x128xf32> -> vector<2048x128xf32>
    %cst_3 = arith.constant 0.000000e+00 : f32
    %3 = vector.broadcast %cst_3 : f32 to vector<2048x128xf32>
    %4 = arith.cmpf ogt, %2, %3 : vector<2048x128xf32>
    %cst_4 = arith.constant 2.000000e-01 : f32
    %5 = vector.broadcast %cst_4 : f32 to vector<2048x128xf32>
    %6 = arith.mulf %5, %2 : vector<2048x128xf32>
    %7 = arith.select %4, %2, %6 : vector<2048x128xi1>, vector<2048x128xf32>
    %8 = arith.truncf %7 : vector<2048x128xf32> to vector<2048x128xbf16>
    %c0_5 = arith.constant 0 : index
    %c0_6 = arith.constant 0 : index
    %9 = vector.load %arg3[%c0_5, %c0_6] : memref<2048x128xbf16, #tpu.memory_space<vmem>>, vector<2048x128xbf16>
    tpu.vector_store %arg3[%c0_5, %c0_6], %8 {strides = array<i32>} : memref<2048x128xbf16, #tpu.memory_space<vmem>>, vector<2048x128xbf16>,
    return
  }
  func.func @transform_0(%arg0: i32) -> (i32, i32) {
    %c0_i32 = arith.constant 0 : i32
    %c0_i32_0 = arith.constant 0 : i32
    return %arg0, %c0_i32 : i32, i32
  }
  func.func @transform_1(%arg0: i32) -> (i32, i32) {
    %c0_i32 = arith.constant 0 : i32
    %c0_i32_0 = arith.constant 0 : i32
    %c0_i32_1 = arith.constant 0 : i32
    return %c0_i32, %c0_i32_0 : i32, i32
  }
  func.func @transform_2(%arg0: i32) -> (i32, i32) {
    %c0_i32 = arith.constant 0 : i32
    %c0_i32_0 = arith.constant 0 : i32
    return %arg0, %c0_i32 : i32, i32
  }
}

module attributes {stable_mosaic.version = 11 : i64} {
  func.func @_conv_bn_lrelu_resident_kernel(%arg0: i32, %arg1: memref<512x128xbf16, #tpu.memory_space<vmem>>, %arg2: memref<128x128xbf16, #tpu.memory_space<vmem>>, %arg3: memref<1x128xf32, #tpu.memory_space<vmem>>, %arg4: memref<1x128xf32, #tpu.memory_space<vmem>>, %arg5: memref<1x512x128xbf16, #tpu.memory_space<vmem>>, %arg6: memref<1x128xf32, #tpu.memory_space<vmem>>, %arg7: memref<1x128xf32, #tpu.memory_space<vmem>>) attributes {dimension_semantics = [#tpu.dimension_semantics<arbitrary>], iteration_bounds = array<i64: 1>, scalar_prefetch = 0 : i64, scratch_operands = 2 : i64, tpu.core_type = #tpu.core_type<tc>, window_params = [{transform_indices = @transform_0, window_bounds = array<i64: 512, 128>}, {pipeline_mode = #tpu.pipeline_mode<synchronous>, transform_indices = @transform_1, window_bounds = array<i64: 128, 128>}, {pipeline_mode = #tpu.pipeline_mode<synchronous>, transform_indices = @transform_2, window_bounds = array<i64: 1, 128>}, {pipeline_mode = #tpu.pipeline_mode<synchronous>, transform_indices = @transform_3, window_bounds = array<i64: 1, 128>}, {pipeline_mode = #tpu.pipeline_mode<synchronous>, transform_indices = @transform_4, window_bounds = array<i64: 1, 512, 128>}]} {
    %c0 = arith.constant 0 : index
    %c0_0 = arith.constant 0 : index
    %0 = vector.load %arg1[%c0, %c0_0] : memref<512x128xbf16, #tpu.memory_space<vmem>>, vector<512x128xbf16>
    %c0_1 = arith.constant 0 : index
    %c0_2 = arith.constant 0 : index
    %1 = vector.load %arg2[%c0_1, %c0_2] : memref<128x128xbf16, #tpu.memory_space<vmem>>, vector<128x128xbf16>
    %cst = arith.constant dense<0.000000e+00> : vector<512x128xf32>
    %2 = tpu.matmul %0, %1, %cst {dimension_numbers = #tpu.dot_dimension_numbers<[1], [0], [0], [1], [0, 0, 1, 1], [], []>} : vector<512x128xbf16>, vector<128x128xbf16>, vector<512x128xf32> -> vector<512x128xf32>
    %c0_i32 = arith.constant 0 : i32
    %3 = arith.cmpi eq, %arg0, %c0_i32 : i32
    %4 = arith.extui %3 : i1 to i32
    %c0_i32_3 = arith.constant 0 : i32
    %5 = arith.cmpi ne, %4, %c0_i32_3 : i32
    scf.if %5 {
      %cst_18 = arith.constant 0.000000e+00 : f32
      %25 = vector.broadcast %cst_18 : f32 to vector<1x128xf32>
      %c0_19 = arith.constant 0 : index
      %c0_20 = arith.constant 0 : index
      %26 = vector.load %arg6[%c0_19, %c0_20] : memref<1x128xf32, #tpu.memory_space<vmem>>, vector<1x128xf32>
      tpu.vector_store %arg6[%c0_19, %c0_20], %25 {strides = array<i32>} : memref<1x128xf32, #tpu.memory_space<vmem>>, vector<1x128xf32>,
      %cst_21 = arith.constant 0.000000e+00 : f32
      %27 = vector.broadcast %cst_21 : f32 to vector<1x128xf32>
      %c0_22 = arith.constant 0 : index
      %c0_23 = arith.constant 0 : index
      %28 = vector.load %arg7[%c0_22, %c0_23] : memref<1x128xf32, #tpu.memory_space<vmem>>, vector<1x128xf32>
      tpu.vector_store %arg7[%c0_22, %c0_23], %27 {strides = array<i32>} : memref<1x128xf32, #tpu.memory_space<vmem>>, vector<1x128xf32>,
    } else {
    }
    %c0_4 = arith.constant 0 : index
    %c0_5 = arith.constant 0 : index
    %6 = vector.load %arg6[%c0_4, %c0_5] : memref<1x128xf32, #tpu.memory_space<vmem>>, vector<1x128xf32>
    %cst_6 = arith.constant dense<0.000000e+00> : vector<128xf32>
    %7 = vector.multi_reduction <add>, %2, %cst_6 [0] : vector<512x128xf32> to vector<128xf32>
    %8 = vector.shape_cast %7 : vector<128xf32> to vector<1x128xf32>
    %9 = arith.addf %6, %8 : vector<1x128xf32>
    %c0_7 = arith.constant 0 : index
    %c0_8 = arith.constant 0 : index
    %10 = vector.load %arg6[%c0_7, %c0_8] : memref<1x128xf32, #tpu.memory_space<vmem>>, vector<1x128xf32>
    tpu.vector_store %arg6[%c0_7, %c0_8], %9 {strides = array<i32>} : memref<1x128xf32, #tpu.memory_space<vmem>>, vector<1x128xf32>,
    %c0_9 = arith.constant 0 : index
    %c0_10 = arith.constant 0 : index
    %11 = vector.load %arg7[%c0_9, %c0_10] : memref<1x128xf32, #tpu.memory_space<vmem>>, vector<1x128xf32>
    %12 = arith.mulf %2, %2 : vector<512x128xf32>
    %cst_11 = arith.constant dense<0.000000e+00> : vector<128xf32>
    %13 = vector.multi_reduction <add>, %12, %cst_11 [0] : vector<512x128xf32> to vector<128xf32>
    %14 = vector.shape_cast %13 : vector<128xf32> to vector<1x128xf32>
    %15 = arith.addf %11, %14 : vector<1x128xf32>
    %c0_12 = arith.constant 0 : index
    %c0_13 = arith.constant 0 : index
    %16 = vector.load %arg7[%c0_12, %c0_13] : memref<1x128xf32, #tpu.memory_space<vmem>>, vector<1x128xf32>
    tpu.vector_store %arg7[%c0_12, %c0_13], %15 {strides = array<i32>} : memref<1x128xf32, #tpu.memory_space<vmem>>, vector<1x128xf32>,
    %17 = arith.truncf %2 : vector<512x128xf32> to vector<512x128xbf16>
    %18 = arith.index_cast %arg0 : i32 to index
    %c0_14 = arith.constant 0 : index
    %c0_15 = arith.constant 0 : index
    %19 = vector.load %arg5[%18, %c0_14, %c0_15] : memref<1x512x128xbf16, #tpu.memory_space<vmem>>, vector<1x512x128xbf16>
    %20 = vector.shape_cast %19 : vector<1x512x128xbf16> to vector<512x128xbf16>
    %21 = vector.shape_cast %17 : vector<512x128xbf16> to vector<1x512x128xbf16>
    tpu.vector_store %arg5[%18, %c0_14, %c0_15], %21 {strides = array<i32>} : memref<1x512x128xbf16, #tpu.memory_space<vmem>>, vector<1x512x128xbf16>,
    %c0_i32_16 = arith.constant 0 : i32
    %22 = arith.cmpi eq, %arg0, %c0_i32_16 : i32
    %23 = arith.extui %22 : i1 to i32
    %c0_i32_17 = arith.constant 0 : i32
    %24 = arith.cmpi ne, %23, %c0_i32_17 : i32
    scf.if %24 {
      %c0_18 = arith.constant 0 : index
      %c0_19 = arith.constant 0 : index
      %25 = vector.load %arg6[%c0_18, %c0_19] : memref<1x128xf32, #tpu.memory_space<vmem>>, vector<1x128xf32>
      %cst_20 = arith.constant 0.001953125 : f32
      %26 = vector.broadcast %cst_20 : f32 to vector<1x128xf32>
      %27 = arith.mulf %25, %26 : vector<1x128xf32>
      %c0_21 = arith.constant 0 : index
      %c0_22 = arith.constant 0 : index
      %28 = vector.load %arg7[%c0_21, %c0_22] : memref<1x128xf32, #tpu.memory_space<vmem>>, vector<1x128xf32>
      %cst_23 = arith.constant 0.001953125 : f32
      %29 = vector.broadcast %cst_23 : f32 to vector<1x128xf32>
      %30 = arith.mulf %28, %29 : vector<1x128xf32>
      %31 = arith.mulf %27, %27 : vector<1x128xf32>
      %32 = arith.subf %30, %31 : vector<1x128xf32>
      %cst_24 = arith.constant 9.99999974E-6 : f32
      %33 = vector.broadcast %cst_24 : f32 to vector<1x128xf32>
      %34 = arith.addf %32, %33 : vector<1x128xf32>
      %35 = math.rsqrt %34 : vector<1x128xf32>
      %c0_25 = arith.constant 0 : index
      %c0_26 = arith.constant 0 : index
      %36 = vector.load %arg3[%c0_25, %c0_26] : memref<1x128xf32, #tpu.memory_space<vmem>>, vector<1x128xf32>
      %37 = arith.mulf %35, %36 : vector<1x128xf32>
      %c0_27 = arith.constant 0 : index
      %c0_28 = arith.constant 0 : index
      %38 = vector.load %arg4[%c0_27, %c0_28] : memref<1x128xf32, #tpu.memory_space<vmem>>, vector<1x128xf32>
      %39 = arith.mulf %27, %37 : vector<1x128xf32>
      %40 = arith.subf %38, %39 : vector<1x128xf32>
      %c0_29 = arith.constant 0 : index
      %c0_30 = arith.constant 0 : index
      %c0_31 = arith.constant 0 : index
      %41 = vector.load %arg5[%c0_29, %c0_30, %c0_31] : memref<1x512x128xbf16, #tpu.memory_space<vmem>>, vector<1x512x128xbf16>
      %42 = arith.extf %41 : vector<1x512x128xbf16> to vector<1x512x128xf32>
      %43 = vector.shape_cast %37 : vector<1x128xf32> to vector<1x1x128xf32>
      %44 = vector.broadcast %43 : vector<1x1x128xf32> to vector<1x512x128xf32>
      %45 = arith.mulf %42, %44 : vector<1x512x128xf32>
      %46 = vector.shape_cast %40 : vector<1x128xf32> to vector<1x1x128xf32>
      %47 = vector.broadcast %46 : vector<1x1x128xf32> to vector<1x512x128xf32>
      %48 = arith.addf %45, %47 : vector<1x512x128xf32>
      %cst_32 = arith.constant 0.000000e+00 : f32
      %49 = vector.broadcast %cst_32 : f32 to vector<1x512x128xf32>
      %50 = arith.cmpf ogt, %48, %49 : vector<1x512x128xf32>
      %cst_33 = arith.constant 2.000000e-01 : f32
      %51 = vector.broadcast %cst_33 : f32 to vector<1x512x128xf32>
      %52 = arith.mulf %51, %48 : vector<1x512x128xf32>
      %53 = arith.select %50, %48, %52 : vector<1x512x128xi1>, vector<1x512x128xf32>
      %54 = arith.truncf %53 : vector<1x512x128xf32> to vector<1x512x128xbf16>
      %c0_34 = arith.constant 0 : index
      %c0_35 = arith.constant 0 : index
      %c0_36 = arith.constant 0 : index
      %55 = vector.load %arg5[%c0_34, %c0_35, %c0_36] : memref<1x512x128xbf16, #tpu.memory_space<vmem>>, vector<1x512x128xbf16>
      tpu.vector_store %arg5[%c0_34, %c0_35, %c0_36], %54 {strides = array<i32>} : memref<1x512x128xbf16, #tpu.memory_space<vmem>>, vector<1x512x128xbf16>,
    } else {
    }
    return
  }
  func.func @transform_0(%arg0: i32) -> (i32, i32) {
    %c0_i32 = arith.constant 0 : i32
    %c0_i32_0 = arith.constant 0 : i32
    return %arg0, %c0_i32 : i32, i32
  }
  func.func @transform_1(%arg0: i32) -> (i32, i32) {
    %c0_i32 = arith.constant 0 : i32
    %c0_i32_0 = arith.constant 0 : i32
    %c0_i32_1 = arith.constant 0 : i32
    return %c0_i32, %c0_i32_0 : i32, i32
  }
  func.func @transform_2(%arg0: i32) -> (i32, i32) {
    %c0_i32 = arith.constant 0 : i32
    %c0_i32_0 = arith.constant 0 : i32
    %c0_i32_1 = arith.constant 0 : i32
    return %c0_i32, %c0_i32_0 : i32, i32
  }
  func.func @transform_3(%arg0: i32) -> (i32, i32) {
    %c0_i32 = arith.constant 0 : i32
    %c0_i32_0 = arith.constant 0 : i32
    %c0_i32_1 = arith.constant 0 : i32
    return %c0_i32, %c0_i32_0 : i32, i32
  }
  func.func @transform_4(%arg0: i32) -> (i32, i32, i32) {
    %c0_i32 = arith.constant 0 : i32
    %c0_i32_0 = arith.constant 0 : i32
    %c0_i32_1 = arith.constant 0 : i32
    %c0_i32_2 = arith.constant 0 : i32
    return %c0_i32, %c0_i32_0, %c0_i32_1 : i32, i32, i32
  }
}

module attributes {stable_mosaic.version = 11 : i64} {
  func.func @_conv_bn_lrelu_resident_kernel(%arg0: i32, %arg1: memref<128x256xbf16, #tpu.memory_space<vmem>>, %arg2: memref<256x128xbf16, #tpu.memory_space<vmem>>, %arg3: memref<1x128xf32, #tpu.memory_space<vmem>>, %arg4: memref<1x128xf32, #tpu.memory_space<vmem>>, %arg5: memref<1x128x128xbf16, #tpu.memory_space<vmem>>, %arg6: memref<1x128xf32, #tpu.memory_space<vmem>>, %arg7: memref<1x128xf32, #tpu.memory_space<vmem>>) attributes {dimension_semantics = [#tpu.dimension_semantics<arbitrary>], iteration_bounds = array<i64: 1>, scalar_prefetch = 0 : i64, scratch_operands = 2 : i64, tpu.core_type = #tpu.core_type<tc>, window_params = [{transform_indices = @transform_0, window_bounds = array<i64: 128, 256>}, {pipeline_mode = #tpu.pipeline_mode<synchronous>, transform_indices = @transform_1, window_bounds = array<i64: 256, 128>}, {pipeline_mode = #tpu.pipeline_mode<synchronous>, transform_indices = @transform_2, window_bounds = array<i64: 1, 128>}, {pipeline_mode = #tpu.pipeline_mode<synchronous>, transform_indices = @transform_3, window_bounds = array<i64: 1, 128>}, {pipeline_mode = #tpu.pipeline_mode<synchronous>, transform_indices = @transform_4, window_bounds = array<i64: 1, 128, 128>}]} {
    %c0 = arith.constant 0 : index
    %c0_0 = arith.constant 0 : index
    %0 = vector.load %arg1[%c0, %c0_0] : memref<128x256xbf16, #tpu.memory_space<vmem>>, vector<128x256xbf16>
    %c0_1 = arith.constant 0 : index
    %c0_2 = arith.constant 0 : index
    %1 = vector.load %arg2[%c0_1, %c0_2] : memref<256x128xbf16, #tpu.memory_space<vmem>>, vector<256x128xbf16>
    %cst = arith.constant dense<0.000000e+00> : vector<128x128xf32>
    %2 = tpu.matmul %0, %1, %cst {dimension_numbers = #tpu.dot_dimension_numbers<[1], [0], [0], [1], [0, 0, 1, 1], [], []>} : vector<128x256xbf16>, vector<256x128xbf16>, vector<128x128xf32> -> vector<128x128xf32>
    %c0_i32 = arith.constant 0 : i32
    %3 = arith.cmpi eq, %arg0, %c0_i32 : i32
    %4 = arith.extui %3 : i1 to i32
    %c0_i32_3 = arith.constant 0 : i32
    %5 = arith.cmpi ne, %4, %c0_i32_3 : i32
    scf.if %5 {
      %cst_18 = arith.constant 0.000000e+00 : f32
      %25 = vector.broadcast %cst_18 : f32 to vector<1x128xf32>
      %c0_19 = arith.constant 0 : index
      %c0_20 = arith.constant 0 : index
      %26 = vector.load %arg6[%c0_19, %c0_20] : memref<1x128xf32, #tpu.memory_space<vmem>>, vector<1x128xf32>
      tpu.vector_store %arg6[%c0_19, %c0_20], %25 {strides = array<i32>} : memref<1x128xf32, #tpu.memory_space<vmem>>, vector<1x128xf32>,
      %cst_21 = arith.constant 0.000000e+00 : f32
      %27 = vector.broadcast %cst_21 : f32 to vector<1x128xf32>
      %c0_22 = arith.constant 0 : index
      %c0_23 = arith.constant 0 : index
      %28 = vector.load %arg7[%c0_22, %c0_23] : memref<1x128xf32, #tpu.memory_space<vmem>>, vector<1x128xf32>
      tpu.vector_store %arg7[%c0_22, %c0_23], %27 {strides = array<i32>} : memref<1x128xf32, #tpu.memory_space<vmem>>, vector<1x128xf32>,
    } else {
    }
    %c0_4 = arith.constant 0 : index
    %c0_5 = arith.constant 0 : index
    %6 = vector.load %arg6[%c0_4, %c0_5] : memref<1x128xf32, #tpu.memory_space<vmem>>, vector<1x128xf32>
    %cst_6 = arith.constant dense<0.000000e+00> : vector<128xf32>
    %7 = vector.multi_reduction <add>, %2, %cst_6 [0] : vector<128x128xf32> to vector<128xf32>
    %8 = vector.shape_cast %7 : vector<128xf32> to vector<1x128xf32>
    %9 = arith.addf %6, %8 : vector<1x128xf32>
    %c0_7 = arith.constant 0 : index
    %c0_8 = arith.constant 0 : index
    %10 = vector.load %arg6[%c0_7, %c0_8] : memref<1x128xf32, #tpu.memory_space<vmem>>, vector<1x128xf32>
    tpu.vector_store %arg6[%c0_7, %c0_8], %9 {strides = array<i32>} : memref<1x128xf32, #tpu.memory_space<vmem>>, vector<1x128xf32>,
    %c0_9 = arith.constant 0 : index
    %c0_10 = arith.constant 0 : index
    %11 = vector.load %arg7[%c0_9, %c0_10] : memref<1x128xf32, #tpu.memory_space<vmem>>, vector<1x128xf32>
    %12 = arith.mulf %2, %2 : vector<128x128xf32>
    %cst_11 = arith.constant dense<0.000000e+00> : vector<128xf32>
    %13 = vector.multi_reduction <add>, %12, %cst_11 [0] : vector<128x128xf32> to vector<128xf32>
    %14 = vector.shape_cast %13 : vector<128xf32> to vector<1x128xf32>
    %15 = arith.addf %11, %14 : vector<1x128xf32>
    %c0_12 = arith.constant 0 : index
    %c0_13 = arith.constant 0 : index
    %16 = vector.load %arg7[%c0_12, %c0_13] : memref<1x128xf32, #tpu.memory_space<vmem>>, vector<1x128xf32>
    tpu.vector_store %arg7[%c0_12, %c0_13], %15 {strides = array<i32>} : memref<1x128xf32, #tpu.memory_space<vmem>>, vector<1x128xf32>,
    %17 = arith.truncf %2 : vector<128x128xf32> to vector<128x128xbf16>
    %18 = arith.index_cast %arg0 : i32 to index
    %c0_14 = arith.constant 0 : index
    %c0_15 = arith.constant 0 : index
    %19 = vector.load %arg5[%18, %c0_14, %c0_15] : memref<1x128x128xbf16, #tpu.memory_space<vmem>>, vector<1x128x128xbf16>
    %20 = vector.shape_cast %19 : vector<1x128x128xbf16> to vector<128x128xbf16>
    %21 = vector.shape_cast %17 : vector<128x128xbf16> to vector<1x128x128xbf16>
    tpu.vector_store %arg5[%18, %c0_14, %c0_15], %21 {strides = array<i32>} : memref<1x128x128xbf16, #tpu.memory_space<vmem>>, vector<1x128x128xbf16>,
    %c0_i32_16 = arith.constant 0 : i32
    %22 = arith.cmpi eq, %arg0, %c0_i32_16 : i32
    %23 = arith.extui %22 : i1 to i32
    %c0_i32_17 = arith.constant 0 : i32
    %24 = arith.cmpi ne, %23, %c0_i32_17 : i32
    scf.if %24 {
      %c0_18 = arith.constant 0 : index
      %c0_19 = arith.constant 0 : index
      %25 = vector.load %arg6[%c0_18, %c0_19] : memref<1x128xf32, #tpu.memory_space<vmem>>, vector<1x128xf32>
      %cst_20 = arith.constant 7.812500e-03 : f32
      %26 = vector.broadcast %cst_20 : f32 to vector<1x128xf32>
      %27 = arith.mulf %25, %26 : vector<1x128xf32>
      %c0_21 = arith.constant 0 : index
      %c0_22 = arith.constant 0 : index
      %28 = vector.load %arg7[%c0_21, %c0_22] : memref<1x128xf32, #tpu.memory_space<vmem>>, vector<1x128xf32>
      %cst_23 = arith.constant 7.812500e-03 : f32
      %29 = vector.broadcast %cst_23 : f32 to vector<1x128xf32>
      %30 = arith.mulf %28, %29 : vector<1x128xf32>
      %31 = arith.mulf %27, %27 : vector<1x128xf32>
      %32 = arith.subf %30, %31 : vector<1x128xf32>
      %cst_24 = arith.constant 9.99999974E-6 : f32
      %33 = vector.broadcast %cst_24 : f32 to vector<1x128xf32>
      %34 = arith.addf %32, %33 : vector<1x128xf32>
      %35 = math.rsqrt %34 : vector<1x128xf32>
      %c0_25 = arith.constant 0 : index
      %c0_26 = arith.constant 0 : index
      %36 = vector.load %arg3[%c0_25, %c0_26] : memref<1x128xf32, #tpu.memory_space<vmem>>, vector<1x128xf32>
      %37 = arith.mulf %35, %36 : vector<1x128xf32>
      %c0_27 = arith.constant 0 : index
      %c0_28 = arith.constant 0 : index
      %38 = vector.load %arg4[%c0_27, %c0_28] : memref<1x128xf32, #tpu.memory_space<vmem>>, vector<1x128xf32>
      %39 = arith.mulf %27, %37 : vector<1x128xf32>
      %40 = arith.subf %38, %39 : vector<1x128xf32>
      %c0_29 = arith.constant 0 : index
      %c0_30 = arith.constant 0 : index
      %c0_31 = arith.constant 0 : index
      %41 = vector.load %arg5[%c0_29, %c0_30, %c0_31] : memref<1x128x128xbf16, #tpu.memory_space<vmem>>, vector<1x128x128xbf16>
      %42 = arith.extf %41 : vector<1x128x128xbf16> to vector<1x128x128xf32>
      %43 = vector.shape_cast %37 : vector<1x128xf32> to vector<1x1x128xf32>
      %44 = vector.broadcast %43 : vector<1x1x128xf32> to vector<1x128x128xf32>
      %45 = arith.mulf %42, %44 : vector<1x128x128xf32>
      %46 = vector.shape_cast %40 : vector<1x128xf32> to vector<1x1x128xf32>
      %47 = vector.broadcast %46 : vector<1x1x128xf32> to vector<1x128x128xf32>
      %48 = arith.addf %45, %47 : vector<1x128x128xf32>
      %cst_32 = arith.constant 0.000000e+00 : f32
      %49 = vector.broadcast %cst_32 : f32 to vector<1x128x128xf32>
      %50 = arith.cmpf ogt, %48, %49 : vector<1x128x128xf32>
      %cst_33 = arith.constant 2.000000e-01 : f32
      %51 = vector.broadcast %cst_33 : f32 to vector<1x128x128xf32>
      %52 = arith.mulf %51, %48 : vector<1x128x128xf32>
      %53 = arith.select %50, %48, %52 : vector<1x128x128xi1>, vector<1x128x128xf32>
      %54 = arith.truncf %53 : vector<1x128x128xf32> to vector<1x128x128xbf16>
      %c0_34 = arith.constant 0 : index
      %c0_35 = arith.constant 0 : index
      %c0_36 = arith.constant 0 : index
      %55 = vector.load %arg5[%c0_34, %c0_35, %c0_36] : memref<1x128x128xbf16, #tpu.memory_space<vmem>>, vector<1x128x128xbf16>
      tpu.vector_store %arg5[%c0_34, %c0_35, %c0_36], %54 {strides = array<i32>} : memref<1x128x128xbf16, #tpu.memory_space<vmem>>, vector<1x128x128xbf16>,
    } else {
    }
    return
  }
  func.func @transform_0(%arg0: i32) -> (i32, i32) {
    %c0_i32 = arith.constant 0 : i32
    %c0_i32_0 = arith.constant 0 : i32
    return %arg0, %c0_i32 : i32, i32
  }
  func.func @transform_1(%arg0: i32) -> (i32, i32) {
    %c0_i32 = arith.constant 0 : i32
    %c0_i32_0 = arith.constant 0 : i32
    %c0_i32_1 = arith.constant 0 : i32
    return %c0_i32, %c0_i32_0 : i32, i32
  }
  func.func @transform_2(%arg0: i32) -> (i32, i32) {
    %c0_i32 = arith.constant 0 : i32
    %c0_i32_0 = arith.constant 0 : i32
    %c0_i32_1 = arith.constant 0 : i32
    return %c0_i32, %c0_i32_0 : i32, i32
  }
  func.func @transform_3(%arg0: i32) -> (i32, i32) {
    %c0_i32 = arith.constant 0 : i32
    %c0_i32_0 = arith.constant 0 : i32
    %c0_i32_1 = arith.constant 0 : i32
    return %c0_i32, %c0_i32_0 : i32, i32
  }
  func.func @transform_4(%arg0: i32) -> (i32, i32, i32) {
    %c0_i32 = arith.constant 0 : i32
    %c0_i32_0 = arith.constant 0 : i32
    %c0_i32_1 = arith.constant 0 : i32
    %c0_i32_2 = arith.constant 0 : i32
    return %c0_i32, %c0_i32_0, %c0_i32_1 : i32, i32, i32
  }
}

module attributes {stable_mosaic.version = 11 : i64} {
  func.func @_conv_bn_lrelu_conv_head_kernel(%arg0: i32, %arg1: memref<32x512xbf16, #tpu.memory_space<vmem>>, %arg2: memref<512x128xbf16, #tpu.memory_space<vmem>>, %arg3: memref<1x128xf32, #tpu.memory_space<vmem>>, %arg4: memref<1x128xf32, #tpu.memory_space<vmem>>, %arg5: memref<32x128xf32, #tpu.memory_space<vmem>>, %arg6: memref<8x32xf32, #tpu.memory_space<vmem>>, %arg7: memref<8x1xf32, #tpu.memory_space<vmem>>) attributes {dimension_semantics = [#tpu.dimension_semantics<arbitrary>], iteration_bounds = array<i64: 1>, scalar_prefetch = 0 : i64, scratch_operands = 0 : i64, tpu.core_type = #tpu.core_type<tc>, window_params = [{pipeline_mode = #tpu.pipeline_mode<synchronous>, transform_indices = @transform_0, window_bounds = array<i64: 32, 512>}, {pipeline_mode = #tpu.pipeline_mode<synchronous>, transform_indices = @transform_1, window_bounds = array<i64: 512, 128>}, {pipeline_mode = #tpu.pipeline_mode<synchronous>, transform_indices = @transform_2, window_bounds = array<i64: 1, 128>}, {pipeline_mode = #tpu.pipeline_mode<synchronous>, transform_indices = @transform_3, window_bounds = array<i64: 1, 128>}, {pipeline_mode = #tpu.pipeline_mode<synchronous>, transform_indices = @transform_4, window_bounds = array<i64: 32, 128>}, {pipeline_mode = #tpu.pipeline_mode<synchronous>, transform_indices = @transform_5, window_bounds = array<i64: 8, 32>}, {pipeline_mode = #tpu.pipeline_mode<synchronous>, transform_indices = @transform_6, window_bounds = array<i64: 8, 1>}]} {
    %c0 = arith.constant 0 : index
    %c0_0 = arith.constant 0 : index
    %0 = vector.load %arg1[%c0, %c0_0] : memref<32x512xbf16, #tpu.memory_space<vmem>>, vector<32x512xbf16>
    %c0_1 = arith.constant 0 : index
    %c0_2 = arith.constant 0 : index
    %1 = vector.load %arg2[%c0_1, %c0_2] : memref<512x128xbf16, #tpu.memory_space<vmem>>, vector<512x128xbf16>
    %cst = arith.constant dense<0.000000e+00> : vector<32x128xf32>
    %2 = tpu.matmul %0, %1, %cst {dimension_numbers = #tpu.dot_dimension_numbers<[1], [0], [0], [1], [0, 0, 1, 1], [], []>} : vector<32x512xbf16>, vector<512x128xbf16>, vector<32x128xf32> -> vector<32x128xf32>
    %cst_3 = arith.constant dense<0.000000e+00> : vector<128xf32>
    %3 = vector.multi_reduction <add>, %2, %cst_3 [0] : vector<32x128xf32> to vector<128xf32>
    %4 = vector.shape_cast %3 : vector<128xf32> to vector<1x128xf32>
    %cst_4 = arith.constant 3.125000e-02 : f32
    %5 = vector.broadcast %cst_4 : f32 to vector<1x128xf32>
    %6 = arith.mulf %4, %5 : vector<1x128xf32>
    %7 = arith.mulf %2, %2 : vector<32x128xf32>
    %cst_5 = arith.constant dense<0.000000e+00> : vector<128xf32>
    %8 = vector.multi_reduction <add>, %7, %cst_5 [0] : vector<32x128xf32> to vector<128xf32>
    %9 = vector.shape_cast %8 : vector<128xf32> to vector<1x128xf32>
    %cst_6 = arith.constant 3.125000e-02 : f32
    %10 = vector.broadcast %cst_6 : f32 to vector<1x128xf32>
    %11 = arith.mulf %9, %10 : vector<1x128xf32>
    %12 = arith.mulf %6, %6 : vector<1x128xf32>
    %13 = arith.subf %11, %12 : vector<1x128xf32>
    %cst_7 = arith.constant 9.99999974E-6 : f32
    %14 = vector.broadcast %cst_7 : f32 to vector<1x128xf32>
    %15 = arith.addf %13, %14 : vector<1x128xf32>
    %16 = math.rsqrt %15 : vector<1x128xf32>
    %c0_8 = arith.constant 0 : index
    %c0_9 = arith.constant 0 : index
    %17 = vector.load %arg3[%c0_8, %c0_9] : memref<1x128xf32, #tpu.memory_space<vmem>>, vector<1x128xf32>
    %18 = arith.mulf %16, %17 : vector<1x128xf32>
    %c0_10 = arith.constant 0 : index
    %c0_11 = arith.constant 0 : index
    %19 = vector.load %arg4[%c0_10, %c0_11] : memref<1x128xf32, #tpu.memory_space<vmem>>, vector<1x128xf32>
    %20 = arith.mulf %6, %18 : vector<1x128xf32>
    %21 = arith.subf %19, %20 : vector<1x128xf32>
    %22 = vector.broadcast %18 : vector<1x128xf32> to vector<32x128xf32>
    %23 = arith.mulf %2, %22 : vector<32x128xf32>
    %24 = vector.broadcast %21 : vector<1x128xf32> to vector<32x128xf32>
    %25 = arith.addf %23, %24 : vector<32x128xf32>
    %cst_12 = arith.constant 0.000000e+00 : f32
    %26 = vector.broadcast %cst_12 : f32 to vector<32x128xf32>
    %27 = arith.cmpf ogt, %25, %26 : vector<32x128xf32>
    %cst_13 = arith.constant 2.000000e-01 : f32
    %28 = vector.broadcast %cst_13 : f32 to vector<32x128xf32>
    %29 = arith.mulf %28, %25 : vector<32x128xf32>
    %30 = arith.select %27, %25, %29 : vector<32x128xi1>, vector<32x128xf32>
    %c0_14 = arith.constant 0 : index
    %c0_15 = arith.constant 0 : index
    %31 = vector.load %arg5[%c0_14, %c0_15] : memref<32x128xf32, #tpu.memory_space<vmem>>, vector<32x128xf32>
    %32 = arith.mulf %30, %31 : vector<32x128xf32>
    %c0_16 = arith.constant 0 : index
    %c0_17 = arith.constant 0 : index
    %33 = vector.load %arg6[%c0_16, %c0_17] : memref<8x32xf32, #tpu.memory_space<vmem>>, vector<8x32xf32>
    %cst_18 = arith.constant dense<0.000000e+00> : vector<8x128xf32>
    %34 = tpu.matmul %33, %32, %cst_18 {dimension_numbers = #tpu.dot_dimension_numbers<[1], [0], [0], [1], [0, 0, 1, 1], [], []>} : vector<8x32xf32>, vector<32x128xf32>, vector<8x128xf32> -> vector<8x128xf32>
    %cst_19 = arith.constant dense<0.000000e+00> : vector<8xf32>
    %35 = vector.multi_reduction <add>, %34, %cst_19 [1] : vector<8x128xf32> to vector<8xf32>
    %36 = vector.shape_cast %35 : vector<8xf32> to vector<8x1xf32>
    %c0_20 = arith.constant 0 : index
    %c0_21 = arith.constant 0 : index
    %37 = vector.load %arg7[%c0_20, %c0_21] : memref<8x1xf32, #tpu.memory_space<vmem>>, vector<8x1xf32>
    tpu.vector_store %arg7[%c0_20, %c0_21], %36 {strides = array<i32>} : memref<8x1xf32, #tpu.memory_space<vmem>>, vector<8x1xf32>,
    return
  }
  func.func @transform_0(%arg0: i32) -> (i32, i32) {
    %c0_i32 = arith.constant 0 : i32
    %c0_i32_0 = arith.constant 0 : i32
    %c0_i32_1 = arith.constant 0 : i32
    return %c0_i32, %c0_i32_0 : i32, i32
  }
  func.func @transform_1(%arg0: i32) -> (i32, i32) {
    %c0_i32 = arith.constant 0 : i32
    %c0_i32_0 = arith.constant 0 : i32
    %c0_i32_1 = arith.constant 0 : i32
    return %c0_i32, %c0_i32_0 : i32, i32
  }
  func.func @transform_2(%arg0: i32) -> (i32, i32) {
    %c0_i32 = arith.constant 0 : i32
    %c0_i32_0 = arith.constant 0 : i32
    %c0_i32_1 = arith.constant 0 : i32
    return %c0_i32, %c0_i32_0 : i32, i32
  }
  func.func @transform_3(%arg0: i32) -> (i32, i32) {
    %c0_i32 = arith.constant 0 : i32
    %c0_i32_0 = arith.constant 0 : i32
    %c0_i32_1 = arith.constant 0 : i32
    return %c0_i32, %c0_i32_0 : i32, i32
  }
  func.func @transform_4(%arg0: i32) -> (i32, i32) {
    %c0_i32 = arith.constant 0 : i32
    %c0_i32_0 = arith.constant 0 : i32
    %c0_i32_1 = arith.constant 0 : i32
    return %c0_i32, %c0_i32_0 : i32, i32
  }
  func.func @transform_5(%arg0: i32) -> (i32, i32) {
    %c0_i32 = arith.constant 0 : i32
    %c0_i32_0 = arith.constant 0 : i32
    %c0_i32_1 = arith.constant 0 : i32
    return %c0_i32, %c0_i32_0 : i32, i32
  }
  func.func @transform_6(%arg0: i32) -> (i32, i32) {
    %c0_i32 = arith.constant 0 : i32
    %c0_i32_0 = arith.constant 0 : i32
    %c0_i32_1 = arith.constant 0 : i32
    return %c0_i32, %c0_i32_0 : i32, i32
  }
}

</mosaic_0001>

<llo_original>
// kernel: critic_forward.4
$region0: #{critic_forward.4}
  #allocation0 [shape = 'u32[]', space=smem, size = 0x4, offset = 0x4, fixed_abs, tag = 'smem constant byte address 0x4 - core index']
  #allocation1 [shape = 'u32[144,128]{1,0:T(1,128)}', space=vmem, size = 0x12000, scoped, tag = 'internal scratch']
  %s0 = inlined_call_operand.vmem [shape: bf16[2048,64], index: 0, kind: input, shape index: {}]
  %s1 = inlined_call_operand.vmem [shape: bf16[64,128], index: 1, kind: input, shape index: {}]
  %s2 = inlined_call_operand.vmem [shape: bf16[2048,128], index: 2, kind: output, shape index: {}]
  %s3 = sld [smem:[#allocation0]]
  $region18: #{critic_forward.4} parent=0
    _
  %s5 = ssub.s32 1, %s3
  %s6 = scalar_select 0, %s5, %s3
  // Predicated region
  $region2: #{critic_forward.4} parent=0 // pred_check
    _
  $region3: #{critic_forward.4} parent=0 // pred_check_branch
    %8 = sbr.rel (0) target = $region5
  $region4: #{critic_forward.4} parent=0 // pred_region
    _
  $region5: #{critic_forward.4} parent=0 // pred_fallthru
    _
  // Predicated region
  $region6: #{critic_forward.4} parent=0 // pred_check
    _
  $region7: #{critic_forward.4} parent=0 // pred_check_branch
    %10 = sbr.rel (0) target = $region9
  $region8: #{critic_forward.4} parent=0 // pred_region
    _
  $region9: #{critic_forward.4} parent=0 // pred_fallthru
    _
  %v12 = vld [vmem:[%s0] sm:$0xf]
  %v13 = vld [vmem:[%s0 + $0x4] sm:$0xf]
  %v14 = vld [vmem:[%s0 + $0x8] sm:$0xf]
  %v15 = vld [vmem:[%s0 + $0xc] sm:$0xf]
  %v16 = vld [vmem:[%s0 + $0x10] sm:$0xf]
  %v17 = vld [vmem:[%s0 + $0x14] sm:$0xf]
  %v18 = vld [vmem:[%s0 + $0x18] sm:$0xf]
  %v19 = vld [vmem:[%s0 + $0x1c] sm:$0xf]
  %v20 = vld [vmem:[%s0 + $0x20] sm:$0xf]
  %v21 = vld [vmem:[%s0 + $0x24] sm:$0xf]
  %v22 = vld [vmem:[%s0 + $0x28] sm:$0xf]
  %v23 = vld [vmem:[%s0 + $0x2c] sm:$0xf]
  %v24 = vld [vmem:[%s0 + $0x30] sm:$0xf]
  %v25 = vld [vmem:[%s0 + $0x34] sm:$0xf]
  %v26 = vld [vmem:[%s0 + $0x38] sm:$0xf]
  %v27 = vld [vmem:[%s0 + $0x3c] sm:$0xf]
  %v28 = vld [vmem:[%s0 + $0x40] sm:$0xf]
  %v29 = vld [vmem:[%s0 + $0x44] sm:$0xf]
  %v30 = vld [vmem:[%s0 + $0x48] sm:$0xf]
  %v31 = vld [vmem:[%s0 + $0x4c] sm:$0xf]
  %v32 = vld [vmem:[%s0 + $0x50] sm:$0xf]
  %v33 = vld [vmem:[%s0 + $0x54] sm:$0xf]
  %v34 = vld [vmem:[%s0 + $0x58] sm:$0xf]
  %v35 = vld [vmem:[%s0 + $0x5c] sm:$0xf]
  %v36 = vld [vmem:[%s0 + $0x60] sm:$0xf]
  %v37 = vld [vmem:[%s0 + $0x64] sm:$0xf]
  %v38 = vld [vmem:[%s0 + $0x68] sm:$0xf]
  %v39 = vld [vmem:[%s0 + $0x6c] sm:$0xf]
  %v40 = vld [vmem:[%s0 + $0x70] sm:$0xf]
  %v41 = vld [vmem:[%s0 + $0x74] sm:$0xf]
  %v42 = vld [vmem:[%s0 + $0x78] sm:$0xf]
  %v43 = vld [vmem:[%s0 + $0x7c] sm:$0xf]
  %v44 = vld [vmem:[%s0 + $0x80] sm:$0xf]
  %v45 = vld [vmem:[%s0 + $0x84] sm:$0xf]
  %v46 = vld [vmem:[%s0 + $0x88] sm:$0xf]
  %v47 = vld [vmem:[%s0 + $0x8c] sm:$0xf]
  %v48 = vld [vmem:[%s0 + $0x90] sm:$0xf]
  %v49 = vld [vmem:[%s0 + $0x94] sm:$0xf]
  %v50 = vld [vmem:[%s0 + $0x98] sm:$0xf]
  %v51 = vld [vmem:[%s0 + $0x9c] sm:$0xf]
  %v52 = vld [vmem:[%s0 + $0xa0] sm:$0xf]
  %v53 = vld [vmem:[%s0 + $0xa4] sm:$0xf]
  %v54 = vld [vmem:[%s0 + $0xa8] sm:$0xf]
  %v55 = vld [vmem:[%s0 + $0xac] sm:$0xf]
  %v56 = vld [vmem:[%s0 + $0xb0] sm:$0xf]
  %v57 = vld [vmem:[%s0 + $0xb4] sm:$0xf]
  %v58 = vld [vmem:[%s0 + $0xb8] sm:$0xf]
  %v59 = vld [vmem:[%s0 + $0xbc] sm:$0xf]
  %v60 = vld [vmem:[%s0 + $0xc0] sm:$0xf]
  %v61 = vld [vmem:[%s0 + $0xc4] sm:$0xf]
  %v62 = vld [vmem:[%s0 + $0xc8] sm:$0xf]
  %v63 = vld [vmem:[%s0 + $0xcc] sm:$0xf]
  %v64 = vld [vmem:[%s0 + $0xd0] sm:$0xf]
  %v65 = vld [vmem:[%s0 + $0xd4] sm:$0xf]
  %v66 = vld [vmem:[%s0 + $0xd8] sm:$0xf]
  %v67 = vld [vmem:[%s0 + $0xdc] sm:$0xf]
  %v68 = vld [vmem:[%s0 + $0xe0] sm:$0xf]
  %v69 = vld [vmem:[%s0 + $0xe4] sm:$0xf]
  %v70 = vld [vmem:[%s0 + $0xe8] sm:$0xf]
  %v71 = vld [vmem:[%s0 + $0xec] sm:$0xf]
  %v72 = vld [vmem:[%s0 + $0xf0] sm:$0xf]
  %v73 = vld [vmem:[%s0 + $0xf4] sm:$0xf]
  %v74 = vld [vmem:[%s0 + $0xf8] sm:$0xf]
  %v75 = vld [vmem:[%s0 + $0xfc] sm:$0xf]
  %v76 = vld [vmem:[%s0 + $0x100] sm:$0xf]
  %v77 = vld [vmem:[%s0 + $0x104] sm:$0xf]
  %v78 = vld [vmem:[%s0 + $0x108] sm:$0xf]
  %v79 = vld [vmem:[%s0 + $0x10c] sm:$0xf]
  %v80 = vld [vmem:[%s0 + $0x110] sm:$0xf]
  %v81 = vld [vmem:[%s0 + $0x114] sm:$0xf]
  %v82 = vld [vmem:[%s0 + $0x118] sm:$0xf]
  %v83 = vld [vmem:[%s0 + $0x11c] sm:$0xf]
  %v84 = vld [vmem:[%s0 + $0x120] sm:$0xf]
  %v85 = vld [vmem:[%s0 + $0x124] sm:$0xf]
  %v86 = vld [vmem:[%s0 + $0x128] sm:$0xf]
  %v87 = vld [vmem:[%s0 + $0x12c] sm:$0xf]
  %v88 = vld [vmem:[%s0 + $0x130] sm:$0xf]
  %v89 = vld [vmem:[%s0 + $0x134] sm:$0xf]
  %v90 = vld [vmem:[%s0 + $0x138] sm:$0xf]
  %v91 = vld [vmem:[%s0 + $0x13c] sm:$0xf]
  %v92 = vld [vmem:[%s0 + $0x140] sm:$0xf]
  %v93 = vld [vmem:[%s0 + $0x144] sm:$0xf]
  %v94 = vld [vmem:[%s0 + $0x148] sm:$0xf]
  %v95 = vld [vmem:[%s0 + $0x14c] sm:$0xf]
  %v96 = vld [vmem:[%s0 + $0x150] sm:$0xf]
  %v97 = vld [vmem:[%s0 + $0x154] sm:$0xf]
  %v98 = vld [vmem:[%s0 + $0x158] sm:$0xf]
  %v99 = vld [vmem:[%s0 + $0x15c] sm:$0xf]
  %v100 = vld [vmem:[%s0 + $0x160] sm:$0xf]
  %v101 = vld [vmem:[%s0 + $0x164] sm:$0xf]
  %v102 = vld [vmem:[%s0 + $0x168] sm:$0xf]
  %v103 = vld [vmem:[%s0 + $0x16c] sm:$0xf]
  %v104 = vld [vmem:[%s0 + $0x170] sm:$0xf]
  %v105 = vld [vmem:[%s0 + $0x174] sm:$0xf]
  %v106 = vld [vmem:[%s0 + $0x178] sm:$0xf]
  %v107 = vld [vmem:[%s0 + $0x17c] sm:$0xf]
  %v108 = vld [vmem:[%s0 + $0x180] sm:$0xf]
  %v109 = vld [vmem:[%s0 + $0x184] sm:$0xf]
  %v110 = vld [vmem:[%s0 + $0x188] sm:$0xf]
  %v111 = vld [vmem:[%s0 + $0x18c] sm:$0xf]
  %v112 = vld [vmem:[%s0 + $0x190] sm:$0xf]
  %v113 = vld [vmem:[%s0 + $0x194] sm:$0xf]
  %v114 = vld [vmem:[%s0 + $0x198] sm:$0xf]
  %v115 = vld [vmem:[%s0 + $0x19c] sm:$0xf]
  %v116 = vld [vmem:[%s0 + $0x1a0] sm:$0xf]
  %v117 = vld [vmem:[%s0 + $0x1a4] sm:$0xf]
  %v118 = vld [vmem:[%s0 + $0x1a8] sm:$0xf]
  %v119 = vld [vmem:[%s0 + $0x1ac] sm:$0xf]
  %v120 = vld [vmem:[%s0 + $0x1b0] sm:$0xf]
  %v121 = vld [vmem:[%s0 + $0x1b4] sm:$0xf]
  %v122 = vld [vmem:[%s0 + $0x1b8] sm:$0xf]
  %v123 = vld [vmem:[%s0 + $0x1bc] sm:$0xf]
  %v124 = vld [vmem:[%s0 + $0x1c0] sm:$0xf]
  %v125 = vld [vmem:[%s0 + $0x1c4] sm:$0xf]
  %v126 = vld [vmem:[%s0 + $0x1c8] sm:$0xf]
  %v127 = vld [vmem:[%s0 + $0x1cc] sm:$0xf]
  %v128 = vld [vmem:[%s0 + $0x1d0] sm:$0xf]
  %v129 = vld [vmem:[%s0 + $0x1d4] sm:$0xf]
  %v130 = vld [vmem:[%s0 + $0x1d8] sm:$0xf]
  %v131 = vld [vmem:[%s0 + $0x1dc] sm:$0xf]
  %v132 = vld [vmem:[%s0 + $0x1e0] sm:$0xf]
  %v133 = vld [vmem:[%s0 + $0x1e4] sm:$0xf]
  %v134 = vld [vmem:[%s0 + $0x1e8] sm:$0xf]
  %v135 = vld [vmem:[%s0 + $0x1ec] sm:$0xf]
  %v136 = vld [vmem:[%s0 + $0x1f0] sm:$0xf]
  %v137 = vld [vmem:[%s0 + $0x1f4] sm:$0xf]
  %v138 = vld [vmem:[%s0 + $0x1f8] sm:$0xf]
  %v139 = vld [vmem:[%s0 + $0x1fc] sm:$0xf]
  %v140 = vld [vmem:[%s0 + $0x200] sm:$0xf]
  %v141 = vld [vmem:[%s0 + $0x204] sm:$0xf]
  %v142 = vld [vmem:[%s0 + $0x208] sm:$0xf]
  %v143 = vld [vmem:[%s0 + $0x20c] sm:$0xf]
  %v144 = vld [vmem:[%s0 + $0x210] sm:$0xf]
  %v145 = vld [vmem:[%s0 + $0x214] sm:$0xf]
  %v146 = vld [vmem:[%s0 + $0x218] sm:$0xf]
  %v147 = vld [vmem:[%s0 + $0x21c] sm:$0xf]
  %v148 = vld [vmem:[%s0 + $0x220] sm:$0xf]
  %v149 = vld [vmem:[%s0 + $0x224] sm:$0xf]
  %v150 = vld [vmem:[%s0 + $0x228] sm:$0xf]
  %v151 = vld [vmem:[%s0 + $0x22c] sm:$0xf]
  %v152 = vld [vmem:[%s0 + $0x230] sm:$0xf]
  %v153 = vld [vmem:[%s0 + $0x234] sm:$0xf]
  %v154 = vld [vmem:[%s0 + $0x238] sm:$0xf]
  %v155 = vld [vmem:[%s0 + $0x23c] sm:$0xf]
  %v156 = vld [vmem:[%s0 + $0x240] sm:$0xf]
  %v157 = vld [vmem:[%s0 + $0x244] sm:$0xf]
  %v158 = vld [vmem:[%s0 + $0x248] sm:$0xf]
  %v159 = vld [vmem:[%s0 + $0x24c] sm:$0xf]
  %v160 = vld [vmem:[%s0 + $0x250] sm:$0xf]
  %v161 = vld [vmem:[%s0 + $0x254] sm:$0xf]
  %v162 = vld [vmem:[%s0 + $0x258] sm:$0xf]
  %v163 = vld [vmem:[%s0 + $0x25c] sm:$0xf]
  %v164 = vld [vmem:[%s0 + $0x260] sm:$0xf]
  %v165 = vld [vmem:[%s0 + $0x264] sm:$0xf]
  %v166 = vld [vmem:[%s0 + $0x268] sm:$0xf]
  %v167 = vld [vmem:[%s0 + $0x26c] sm:$0xf]
  %v168 = vld [vmem:[%s0 + $0x270] sm:$0xf]
  %v169 = vld [vmem:[%s0 + $0x274] sm:$0xf]
  %v170 = vld [vmem:[%s0 + $0x278] sm:$0xf]
  %v171 = vld [vmem:[%s0 + $0x27c] sm:$0xf]
  %v172 = vld [vmem:[%s0 + $0x280] sm:$0xf]
  %v173 = vld [vmem:[%s0 + $0x284] sm:$0xf]
  %v174 = vld [vmem:[%s0 + $0x288] sm:$0xf]
  %v175 = vld [vmem:[%s0 + $0x28c] sm:$0xf]
  %v176 = vld [vmem:[%s0 + $0x290] sm:$0xf]
  %v177 = vld [vmem:[%s0 + $0x294] sm:$0xf]
  %v178 = vld [vmem:[%s0 + $0x298] sm:$0xf]
  %v179 = vld [vmem:[%s0 + $0x29c] sm:$0xf]
  %v180 = vld [vmem:[%s0 + $0x2a0] sm:$0xf]
  %v181 = vld [vmem:[%s0 + $0x2a4] sm:$0xf]
  %v182 = vld [vmem:[%s0 + $0x2a8] sm:$0xf]
  %v183 = vld [vmem:[%s0 + $0x2ac] sm:$0xf]
  %v184 = vld [vmem:[%s0 + $0x2b0] sm:$0xf]
  %v185 = vld [vmem:[%s0 + $0x2b4] sm:$0xf]
  %v186 = vld [vmem:[%s0 + $0x2b8] sm:$0xf]
  %v187 = vld [vmem:[%s0 + $0x2bc] sm:$0xf]
  %v188 = vld [vmem:[%s0 + $0x2c0] sm:$0xf]
  %v189 = vld [vmem:[%s0 + $0x2c4] sm:$0xf]
  %v190 = vld [vmem:[%s0 + $0x2c8] sm:$0xf]
  %v191 = vld [vmem:[%s0 + $0x2cc] sm:$0xf]
  %v192 = vld [vmem:[%s0 + $0x2d0] sm:$0xf]
  %v193 = vld [vmem:[%s0 + $0x2d4] sm:$0xf]
  %v194 = vld [vmem:[%s0 + $0x2d8] sm:$0xf]
  %v195 = vld [vmem:[%s0 + $0x2dc] sm:$0xf]
  %v196 = vld [vmem:[%s0 + $0x2e0] sm:$0xf]
  %v197 = vld [vmem:[%s0 + $0x2e4] sm:$0xf]
  %v198 = vld [vmem:[%s0 + $0x2e8] sm:$0xf]
  %v199 = vld [vmem:[%s0 + $0x2ec] sm:$0xf]
  %v200 = vld [vmem:[%s0 + $0x2f0] sm:$0xf]
  %v201 = vld [vmem:[%s0 + $0x2f4] sm:$0xf]
  %v202 = vld [vmem:[%s0 + $0x2f8] sm:$0xf]
  %v203 = vld [vmem:[%s0 + $0x2fc] sm:$0xf]
  %v204 = vld [vmem:[%s0 + $0x300] sm:$0xf]
  %v205 = vld [vmem:[%s0 + $0x304] sm:$0xf]
  %v206 = vld [vmem:[%s0 + $0x308] sm:$0xf]
  %v207 = vld [vmem:[%s0 + $0x30c] sm:$0xf]
  %v208 = vld [vmem:[%s0 + $0x310] sm:$0xf]
  %v209 = vld [vmem:[%s0 + $0x314] sm:$0xf]
  %v210 = vld [vmem:[%s0 + $0x318] sm:$0xf]
  %v211 = vld [vmem:[%s0 + $0x31c] sm:$0xf]
  %v212 = vld [vmem:[%s0 + $0x320] sm:$0xf]
  %v213 = vld [vmem:[%s0 + $0x324] sm:$0xf]
  %v214 = vld [vmem:[%s0 + $0x328] sm:$0xf]
  %v215 = vld [vmem:[%s0 + $0x32c] sm:$0xf]
  %v216 = vld [vmem:[%s0 + $0x330] sm:$0xf]
  %v217 = vld [vmem:[%s0 + $0x334] sm:$0xf]
  %v218 = vld [vmem:[%s0 + $0x338] sm:$0xf]
  %v219 = vld [vmem:[%s0 + $0x33c] sm:$0xf]
  %v220 = vld [vmem:[%s0 + $0x340] sm:$0xf]
  %v221 = vld [vmem:[%s0 + $0x344] sm:$0xf]
  %v222 = vld [vmem:[%s0 + $0x348] sm:$0xf]
  %v223 = vld [vmem:[%s0 + $0x34c] sm:$0xf]
  %v224 = vld [vmem:[%s0 + $0x350] sm:$0xf]
  %v225 = vld [vmem:[%s0 + $0x354] sm:$0xf]
  %v226 = vld [vmem:[%s0 + $0x358] sm:$0xf]
  %v227 = vld [vmem:[%s0 + $0x35c] sm:$0xf]
  %v228 = vld [vmem:[%s0 + $0x360] sm:$0xf]
  %v229 = vld [vmem:[%s0 + $0x364] sm:$0xf]
  %v230 = vld [vmem:[%s0 + $0x368] sm:$0xf]
  %v231 = vld [vmem:[%s0 + $0x36c] sm:$0xf]
  %v232 = vld [vmem:[%s0 + $0x370] sm:$0xf]
  %v233 = vld [vmem:[%s0 + $0x374] sm:$0xf]
  %v234 = vld [vmem:[%s0 + $0x378] sm:$0xf]
  %v235 = vld [vmem:[%s0 + $0x37c] sm:$0xf]
  %v236 = vld [vmem:[%s0 + $0x380] sm:$0xf]
  %v237 = vld [vmem:[%s0 + $0x384] sm:$0xf]
  %v238 = vld [vmem:[%s0 + $0x388] sm:$0xf]
  %v239 = vld [vmem:[%s0 + $0x38c] sm:$0xf]
  %v240 = vld [vmem:[%s0 + $0x390] sm:$0xf]
  %v241 = vld [vmem:[%s0 + $0x394] sm:$0xf]
  %v242 = vld [vmem:[%s0 + $0x398] sm:$0xf]
  %v243 = vld [vmem:[%s0 + $0x39c] sm:$0xf]
  %v244 = vld [vmem:[%s0 + $0x3a0] sm:$0xf]
  %v245 = vld [vmem:[%s0 + $0x3a4] sm:$0xf]
  %v246 = vld [vmem:[%s0 + $0x3a8] sm:$0xf]
  %v247 = vld [vmem:[%s0 + $0x3ac] sm:$0xf]
  %v248 = vld [vmem:[%s0 + $0x3b0] sm:$0xf]
  %v249 = vld [vmem:[%s0 + $0x3b4] sm:$0xf]
  %v250 = vld [vmem:[%s0 + $0x3b8] sm:$0xf]
  %v251 = vld [vmem:[%s0 + $0x3bc] sm:$0xf]
  %v252 = vld [vmem:[%s0 + $0x3c0] sm:$0xf]
  %v253 = vld [vmem:[%s0 + $0x3c4] sm:$0xf]
  %v254 = vld [vmem:[%s0 + $0x3c8] sm:$0xf]
  %v255 = vld [vmem:[%s0 + $0x3cc] sm:$0xf]
  %v256 = vld [vmem:[%s0 + $0x3d0] sm:$0xf]
  %v257 = vld [vmem:[%s0 + $0x3d4] sm:$0xf]
  %v258 = vld [vmem:[%s0 + $0x3d8] sm:$0xf]
  %v259 = vld [vmem:[%s0 + $0x3dc] sm:$0xf]
  %v260 = vld [vmem:[%s0 + $0x3e0] sm:$0xf]
  %v261 = vld [vmem:[%s0 + $0x3e4] sm:$0xf]
  %v262 = vld [vmem:[%s0 + $0x3e8] sm:$0xf]
  %v263 = vld [vmem:[%s0 + $0x3ec] sm:$0xf]
  %v264 = vld [vmem:[%s0 + $0x3f0] sm:$0xf]
  %v265 = vld [vmem:[%s0 + $0x3f4] sm:$0xf]
  %v266 = vld [vmem:[%s0 + $0x3f8] sm:$0xf]
  %v267 = vld [vmem:[%s0 + $0x3fc] sm:$0xf]
  %v268 = vld [vmem:[%s1] sm:$0xf]
  %v269 = vld [vmem:[%s1 + $0x4] sm:$0xf]
  %v270 = vld [vmem:[%s1 + $0x8] sm:$0xf]
  %v271 = vld [vmem:[%s1 + $0xc] sm:$0xf]
  %v272 = vld [vmem:[%s1 + $0x10] sm:$0xf]
  %v273 = vld [vmem:[%s1 + $0x14] sm:$0xf]
  %v274 = vld [vmem:[%s1 + $0x18] sm:$0xf]
  %v275 = vld [vmem:[%s1 + $0x1c] sm:$0xf]
  %v532 = vunpack.c.l.b16 %v12
  %v533 = vunpack.c.l.b16 %v13
  %v534 = vunpack.c.l.b16 %v14
  %v535 = vunpack.c.l.b16 %v15
  %v536 = vunpack.c.l.b16 %v16
  %v537 = vunpack.c.l.b16 %v17
  %v538 = vunpack.c.l.b16 %v18
  %v539 = vunpack.c.l.b16 %v19
  %v540 = vunpack.c.l.b16 %v20
  %v541 = vunpack.c.l.b16 %v21
  %v542 = vunpack.c.l.b16 %v22
  %v543 = vunpack.c.l.b16 %v23
  %v544 = vunpack.c.l.b16 %v24
  %v545 = vunpack.c.l.b16 %v25
  %v546 = vunpack.c.l.b16 %v26
  %v547 = vunpack.c.l.b16 %v27
  %v548 = vunpack.c.l.b16 %v28
  %v549 = vunpack.c.l.b16 %v29
  %v550 = vunpack.c.l.b16 %v30
  %v551 = vunpack.c.l.b16 %v31
  %v552 = vunpack.c.l.b16 %v32
  %v553 = vunpack.c.l.b16 %v33
  %v554 = vunpack.c.l.b16 %v34
  %v555 = vunpack.c.l.b16 %v35
  %v556 = vunpack.c.l.b16 %v36
  %v557 = vunpack.c.l.b16 %v37
  %v558 = vunpack.c.l.b16 %v38
  %v559 = vunpack.c.l.b16 %v39
  %v560 = vunpack.c.l.b16 %v40
  %v561 = vunpack.c.l.b16 %v41
  %v562 = vunpack.c.l.b16 %v42
  %v563 = vunpack.c.l.b16 %v43
  %v564 = vunpack.c.l.b16 %v44
  %v565 = vunpack.c.l.b16 %v45
  %v566 = vunpack.c.l.b16 %v46
  %v567 = vunpack.c.l.b16 %v47
  %v568 = vunpack.c.l.b16 %v48
  %v569 = vunpack.c.l.b16 %v49
  %v570 = vunpack.c.l.b16 %v50
  %v571 = vunpack.c.l.b16 %v51
  %v572 = vunpack.c.l.b16 %v52
  %v573 = vunpack.c.l.b16 %v53
  %v574 = vunpack.c.l.b16 %v54
  %v575 = vunpack.c.l.b16 %v55
  %v576 = vunpack.c.l.b16 %v56
  %v577 = vunpack.c.l.b16 %v57
  %v578 = vunpack.c.l.b16 %v58
  %v579 = vunpack.c.l.b16 %v59
  %v580 = vunpack.c.l.b16 %v60
  %v581 = vunpack.c.l.b16 %v61
  %v582 = vunpack.c.l.b16 %v62
  %v583 = vunpack.c.l.b16 %v63
  %v584 = vunpack.c.l.b16 %v64
  %v585 = vunpack.c.l.b16 %v65
  %v586 = vunpack.c.l.b16 %v66
  %v587 = vunpack.c.l.b16 %v67
  %v588 = vunpack.c.l.b16 %v68
  %v589 = vunpack.c.l.b16 %v69
  %v590 = vunpack.c.l.b16 %v70
  %v591 = vunpack.c.l.b16 %v71
  %v592 = vunpack.c.l.b16 %v72
  %v593 = vunpack.c.l.b16 %v73
  %v594 = vunpack.c.l.b16 %v74
  %v595 = vunpack.c.l.b16 %v75
  %v596 = vunpack.c.l.b16 %v76
  %v597 = vunpack.c.l.b16 %v77
  %v598 = vunpack.c.l.b16 %v78
  %v599 = vunpack.c.l.b16 %v79
  %v600 = vunpack.c.l.b16 %v80
  %v601 = vunpack.c.l.b16 %v81
  %v602 = vunpack.c.l.b16 %v82
  %v603 = vunpack.c.l.b16 %v83
  %v604 = vunpack.c.l.b16 %v84
  %v605 = vunpack.c.l.b16 %v85
  %v606 = vunpack.c.l.b16 %v86
  %v607 = vunpack.c.l.b16 %v87
  %v608 = vunpack.c.l.b16 %v88
  %v609 = vunpack.c.l.b16 %v89
  %v610 = vunpack.c.l.b16 %v90
  %v611 = vunpack.c.l.b16 %v91
  %v612 = vunpack.c.l.b16 %v92
  %v613 = vunpack.c.l.b16 %v93
  %v614 = vunpack.c.l.b16 %v94
  %v615 = vunpack.c.l.b16 %v95
  %v616 = vunpack.c.l.b16 %v96
  %v617 = vunpack.c.l.b16 %v97
  %v618 = vunpack.c.l.b16 %v98
  %v619 = vunpack.c.l.b16 %v99
  %v620 = vunpack.c.l.b16 %v100
  %v621 = vunpack.c.l.b16 %v101
  %v622 = vunpack.c.l.b16 %v102
  %v623 = vunpack.c.l.b16 %v103
  %v624 = vunpack.c.l.b16 %v104
  %v625 = vunpack.c.l.b16 %v105
  %v626 = vunpack.c.l.b16 %v106
  %v627 = vunpack.c.l.b16 %v107
  %v628 = vunpack.c.l.b16 %v108
  %v629 = vunpack.c.l.b16 %v109
  %v630 = vunpack.c.l.b16 %v110
  %v631 = vunpack.c.l.b16 %v111
  %v632 = vunpack.c.l.b16 %v112
  %v633 = vunpack.c.l.b16 %v113
  %v634 = vunpack.c.l.b16 %v114
  %v635 = vunpack.c.l.b16 %v115
  %v636 = vunpack.c.l.b16 %v116
  %v637 = vunpack.c.l.b16 %v117
  %v638 = vunpack.c.l.b16 %v118
  %v639 = vunpack.c.l.b16 %v119
  %v640 = vunpack.c.l.b16 %v120
  %v641 = vunpack.c.l.b16 %v121
  %v642 = vunpack.c.l.b16 %v122
  %v643 = vunpack.c.l.b16 %v123
  %v644 = vunpack.c.l.b16 %v124
  %v645 = vunpack.c.l.b16 %v125
  %v646 = vunpack.c.l.b16 %v126
  %v647 = vunpack.c.l.b16 %v127
  %v648 = vunpack.c.l.b16 %v128
  %v649 = vunpack.c.l.b16 %v129
  %v650 = vunpack.c.l.b16 %v130
  %v651 = vunpack.c.l.b16 %v131
  %v652 = vunpack.c.l.b16 %v132
  %v653 = vunpack.c.l.b16 %v133
  %v654 = vunpack.c.l.b16 %v134
  %v655 = vunpack.c.l.b16 %v135
  %v656 = vunpack.c.l.b16 %v136
  %v657 = vunpack.c.l.b16 %v137
  %v658 = vunpack.c.l.b16 %v138
  %v659 = vunpack.c.l.b16 %v139
  %v660 = vunpack.c.l.b16 %v140
  %v661 = vunpack.c.l.b16 %v141
  %v662 = vunpack.c.l.b16 %v142
  %v663 = vunpack.c.l.b16 %v143
  %v664 = vunpack.c.l.b16 %v144
  %v665 = vunpack.c.l.b16 %v145
  %v666 = vunpack.c.l.b16 %v146
  %v667 = vunpack.c.l.b16 %v147
  %v668 = vunpack.c.l.b16 %v148
  %v669 = vunpack.c.l.b16 %v149
  %v670 = vunpack.c.l.b16 %v150
  %v671 = vunpack.c.l.b16 %v151
  %v672 = vunpack.c.l.b16 %v152
  %v673 = vunpack.c.l.b16 %v153
  %v674 = vunpack.c.l.b16 %v154
  %v675 = vunpack.c.l.b16 %v155
  %v676 = vunpack.c.l.b16 %v156
  %v677 = vunpack.c.l.b16 %v157
  %v678 = vunpack.c.l.b16 %v158
  %v679 = vunpack.c.l.b16 %v159
  %v680 = vunpack.c.l.b16 %v160
  %v681 = vunpack.c.l.b16 %v161
  %v682 = vunpack.c.l.b16 %v162
  %v683 = vunpack.c.l.b16 %v163
  %v684 = vunpack.c.l.b16 %v164
  %v685 = vunpack.c.l.b16 %v165
  %v686 = vunpack.c.l.b16 %v166
  %v687 = vunpack.c.l.b16 %v167
  %v688 = vunpack.c.l.b16 %v168
  %v689 = vunpack.c.l.b16 %v169
  %v690 = vunpack.c.l.b16 %v170
  %v691 = vunpack.c.l.b16 %v171
  %v692 = vunpack.c.l.b16 %v172
  %v693 = vunpack.c.l.b16 %v173
  %v694 = vunpack.c.l.b16 %v174
  %v695 = vunpack.c.l.b16 %v175
  %v696 = vunpack.c.l.b16 %v176
  %v697 = vunpack.c.l.b16 %v177
  %v698 = vunpack.c.l.b16 %v178
  %v699 = vunpack.c.l.b16 %v179
  %v700 = vunpack.c.l.b16 %v180
  %v701 = vunpack.c.l.b16 %v181
  %v702 = vunpack.c.l.b16 %v182
  %v703 = vunpack.c.l.b16 %v183
  %v704 = vunpack.c.l.b16 %v184
  %v705 = vunpack.c.l.b16 %v185
  %v706 = vunpack.c.l.b16 %v186
  %v707 = vunpack.c.l.b16 %v187
  %v708 = vunpack.c.l.b16 %v188
  %v709 = vunpack.c.l.b16 %v189
  %v710 = vunpack.c.l.b16 %v190
  %v711 = vunpack.c.l.b16 %v191
  %v712 = vunpack.c.l.b16 %v192
  %v713 = vunpack.c.l.b16 %v193
  %v714 = vunpack.c.l.b16 %v194
  %v715 = vunpack.c.l.b16 %v195
  %v716 = vunpack.c.l.b16 %v196
  %v717 = vunpack.c.l.b16 %v197
  %v718 = vunpack.c.l.b16 %v198
  %v719 = vunpack.c.l.b16 %v199
  %v720 = vunpack.c.l.b16 %v200
  %v721 = vunpack.c.l.b16 %v201
  %v722 = vunpack.c.l.b16 %v202
  %v723 = vunpack.c.l.b16 %v203
  %v724 = vunpack.c.l.b16 %v204
  %v725 = vunpack.c.l.b16 %v205
  %v726 = vunpack.c.l.b16 %v206
  %v727 = vunpack.c.l.b16 %v207
  %v728 = vunpack.c.l.b16 %v208
  %v729 = vunpack.c.l.b16 %v209
  %v730 = vunpack.c.l.b16 %v210
  %v731 = vunpack.c.l.b16 %v211
  %v732 = vunpack.c.l.b16 %v212
  %v733 = vunpack.c.l.b16 %v213
  %v734 = vunpack.c.l.b16 %v214
  %v735 = vunpack.c.l.b16 %v215
  %v736 = vunpack.c.l.b16 %v216
  %v737 = vunpack.c.l.b16 %v217
  %v738 = vunpack.c.l.b16 %v218
  %v739 = vunpack.c.l.b16 %v219
  %v740 = vunpack.c.l.b16 %v220
  %v741 = vunpack.c.l.b16 %v221
  %v742 = vunpack.c.l.b16 %v222
  %v743 = vunpack.c.l.b16 %v223
  %v744 = vunpack.c.l.b16 %v224
  %v745 = vunpack.c.l.b16 %v225
  %v746 = vunpack.c.l.b16 %v226
  %v747 = vunpack.c.l.b16 %v227
  %v748 = vunpack.c.l.b16 %v228
  %v749 = vunpack.c.l.b16 %v229
  %v750 = vunpack.c.l.b16 %v230
  %v751 = vunpack.c.l.b16 %v231
  %v752 = vunpack.c.l.b16 %v232
  %v753 = vunpack.c.l.b16 %v233
  %v754 = vunpack.c.l.b16 %v234
  %v755 = vunpack.c.l.b16 %v235
  %v756 = vunpack.c.l.b16 %v236
  %v757 = vunpack.c.l.b16 %v237
  %v758 = vunpack.c.l.b16 %v238
  %v759 = vunpack.c.l.b16 %v239
  %v760 = vunpack.c.l.b16 %v240
  %v761 = vunpack.c.l.b16 %v241
  %v762 = vunpack.c.l.b16 %v242
  %v763 = vunpack.c.l.b16 %v243
  %v764 = vunpack.c.l.b16 %v244
  %v765 = vunpack.c.l.b16 %v245
  %v766 = vunpack.c.l.b16 %v246
  %v767 = vunpack.c.l.b16 %v247
  %v768 = vunpack.c.l.b16 %v248
  %v769 = vunpack.c.l.b16 %v249
  %v770 = vunpack.c.l.b16 %v250
  %v771 = vunpack.c.l.b16 %v251
  %v772 = vunpack.c.l.b16 %v252
  %v773 = vunpack.c.l.b16 %v253
  %v774 = vunpack.c.l.b16 %v254
  %v775 = vunpack.c.l.b16 %v255
  %v776 = vunpack.c.l.b16 %v256
  %v777 = vunpack.c.l.b16 %v257
  %v778 = vunpack.c.l.b16 %v258
  %v779 = vunpack.c.l.b16 %v259
  %v780 = vunpack.c.l.b16 %v260
  %v781 = vunpack.c.l.b16 %v261
  %v782 = vunpack.c.l.b16 %v262
  %v783 = vunpack.c.l.b16 %v263
  %v784 = vunpack.c.l.b16 %v264
  %v785 = vunpack.c.l.b16 %v265
  %v786 = vunpack.c.l.b16 %v266
  %v787 = vunpack.c.l.b16 %v267
  %v788 = vpack.c.b16 %v533, %v532
  %v789 = vpack.c.b16 %v535, %v534
  %v790 = vpack.c.b16 %v537, %v536
  %v791 = vpack.c.b16 %v539, %v538
  %v792 = vpack.c.b16 %v541, %v540
  %v793 = vpack.c.b16 %v543, %v542
  %v794 = vpack.c.b16 %v545, %v544
  %v795 = vpack.c.b16 %v547, %v546
  %v796 = vpack.c.b16 %v549, %v548
  %v797 = vpack.c.b16 %v551, %v550
  %v798 = vpack.c.b16 %v553, %v552
  %v799 = vpack.c.b16 %v555, %v554
  %v800 = vpack.c.b16 %v557, %v556
  %v801 = vpack.c.b16 %v559, %v558
  %v802 = vpack.c.b16 %v561, %v560
  %v803 = vpack.c.b16 %v563, %v562
  %v804 = vpack.c.b16 %v565, %v564
  %v805 = vpack.c.b16 %v567, %v566
  %v806 = vpack.c.b16 %v569, %v568
  %v807 = vpack.c.b16 %v571, %v570
  %v808 = vpack.c.b16 %v573, %v572
  %v809 = vpack.c.b16 %v575, %v574
  %v810 = vpack.c.b16 %v577, %v576
  %v811 = vpack.c.b16 %v579, %v578
  %v812 = vpack.c.b16 %v581, %v580
  %v813 = vpack.c.b16 %v583, %v582
  %v814 = vpack.c.b16 %v585, %v584
  %v815 = vpack.c.b16 %v587, %v586
  %v816 = vpack.c.b16 %v589, %v588
  %v817 = vpack.c.b16 %v591, %v590
  %v818 = vpack.c.b16 %v593, %v592
  %v819 = vpack.c.b16 %v595, %v594
  %v820 = vpack.c.b16 %v597, %v596
  %v821 = vpack.c.b16 %v599, %v598
  %v822 = vpack.c.b16 %v601, %v600
  %v823 = vpack.c.b16 %v603, %v602
  %v824 = vpack.c.b16 %v605, %v604
  %v825 = vpack.c.b16 %v607, %v606
  %v826 = vpack.c.b16 %v609, %v608
  %v827 = vpack.c.b16 %v611, %v610
  %v828 = vpack.c.b16 %v613, %v612
  %v829 = vpack.c.b16 %v615, %v614
  %v830 = vpack.c.b16 %v617, %v616
  %v831 = vpack.c.b16 %v619, %v618
  %v832 = vpack.c.b16 %v621, %v620
  %v833 = vpack.c.b16 %v623, %v622
  %v834 = vpack.c.b16 %v625, %v624
  %v835 = vpack.c.b16 %v627, %v626
  %v836 = vpack.c.b16 %v629, %v628
  %v837 = vpack.c.b16 %v631, %v630
  %v838 = vpack.c.b16 %v633, %v632
  %v839 = vpack.c.b16 %v635, %v634
  %v840 = vpack.c.b16 %v637, %v636
  %v841 = vpack.c.b16 %v639, %v638
  %v842 = vpack.c.b16 %v641, %v640
  %v843 = vpack.c.b16 %v643, %v642
  %v844 = vpack.c.b16 %v645, %v644
  %v845 = vpack.c.b16 %v647, %v646
  %v846 = vpack.c.b16 %v649, %v648
  %v847 = vpack.c.b16 %v651, %v650
  %v848 = vpack.c.b16 %v653, %v652
  %v849 = vpack.c.b16 %v655, %v654
  %v850 = vpack.c.b16 %v657, %v656
  %v851 = vpack.c.b16 %v659, %v658
  %v852 = vpack.c.b16 %v661, %v660
  %v853 = vpack.c.b16 %v663, %v662
  %v854 = vpack.c.b16 %v665, %v664
  %v855 = vpack.c.b16 %v667, %v666
  %v856 = vpack.c.b16 %v669, %v668
  %v857 = vpack.c.b16 %v671, %v670
  %v858 = vpack.c.b16 %v673, %v672
  %v859 = vpack.c.b16 %v675, %v674
  %v860 = vpack.c.b16 %v677, %v676
  %v861 = vpack.c.b16 %v679, %v678
  %v862 = vpack.c.b16 %v681, %v680
  %v863 = vpack.c.b16 %v683, %v682
  %v864 = vpack.c.b16 %v685, %v684
  %v865 = vpack.c.b16 %v687, %v686
  %v866 = vpack.c.b16 %v689, %v688
  %v867 = vpack.c.b16 %v691, %v690
  %v868 = vpack.c.b16 %v693, %v692
  %v869 = vpack.c.b16 %v695, %v694
  %v870 = vpack.c.b16 %v697, %v696
  %v871 = vpack.c.b16 %v699, %v698
  %v872 = vpack.c.b16 %v701, %v700
  %v873 = vpack.c.b16 %v703, %v702
  %v874 = vpack.c.b16 %v705, %v704
  %v875 = vpack.c.b16 %v707, %v706
  %v876 = vpack.c.b16 %v709, %v708
  %v877 = vpack.c.b16 %v711, %v710
  %v878 = vpack.c.b16 %v713, %v712
  %v879 = vpack.c.b16 %v715, %v714
  %v880 = vpack.c.b16 %v717, %v716
  %v881 = vpack.c.b16 %v719, %v718
  %v882 = vpack.c.b16 %v721, %v720
  %v883 = vpack.c.b16 %v723, %v722
  %v884 = vpack.c.b16 %v725, %v724
  %v885 = vpack.c.b16 %v727, %v726
  %v886 = vpack.c.b16 %v729, %v728
  %v887 = vpack.c.b16 %v731, %v730
  %v888 = vpack.c.b16 %v733, %v732
  %v889 = vpack.c.b16 %v735, %v734
  %v890 = vpack.c.b16 %v737, %v736
  %v891 = vpack.c.b16 %v739, %v738
  %v892 = vpack.c.b16 %v741, %v740
  %v893 = vpack.c.b16 %v743, %v742
  %v894 = vpack.c.b16 %v745, %v744
  %v895 = vpack.c.b16 %v747, %v746
  %v896 = vpack.c.b16 %v749, %v748
  %v897 = vpack.c.b16 %v751, %v750
  %v898 = vpack.c.b16 %v753, %v752
  %v899 = vpack.c.b16 %v755, %v754
  %v900 = vpack.c.b16 %v757, %v756
  %v901 = vpack.c.b16 %v759, %v758
  %v902 = vpack.c.b16 %v761, %v760
  %v903 = vpack.c.b16 %v763, %v762
  %v904 = vpack.c.b16 %v765, %v764
  %v905 = vpack.c.b16 %v767, %v766
  %v906 = vpack.c.b16 %v769, %v768
  %v907 = vpack.c.b16 %v771, %v770
  %v908 = vpack.c.b16 %v773, %v772
  %v909 = vpack.c.b16 %v775, %v774
  %v910 = vpack.c.b16 %v777, %v776
  %v911 = vpack.c.b16 %v779, %v778
  %v912 = vpack.c.b16 %v781, %v780
  %v913 = vpack.c.b16 %v783, %v782
  %v914 = vpack.c.b16 %v785, %v784
  %v915 = vpack.c.b16 %v787, %v786
  %v924 = vunpack.c.l.b16 %v268
  %v925 = vunpack.c.l.b16 %v269
  %v926 = vunpack.c.l.b16 %v270
  %v927 = vunpack.c.l.b16 %v271
  %v928 = vunpack.c.l.b16 %v272
  %v929 = vunpack.c.l.b16 %v273
  %v930 = vunpack.c.l.b16 %v274
  %v931 = vunpack.c.l.b16 %v275
  %v932 = vpack.c.b16 %v925, %v924
  %v933 = vpack.c.b16 %v927, %v926
  %v934 = vpack.c.b16 %v929, %v928
  %v935 = vpack.c.b16 %v931, %v930
  %vm940 = vcmask 523264
  %v942 = vsel %vm940, %v788, 0
  %v945 = vsel %vm940, %v789, 0
  %v948 = vsel %vm940, %v790, 0
  %v951 = vsel %vm940, %v791, 0
  %v954 = vsel %vm940, %v792, 0
  %v957 = vsel %vm940, %v793, 0
  %v960 = vsel %vm940, %v794, 0
  %v963 = vsel %vm940, %v795, 0
  %v966 = vsel %vm940, %v796, 0
  %v969 = vsel %vm940, %v797, 0
  %v972 = vsel %vm940, %v798, 0
  %v975 = vsel %vm940, %v799, 0
  %v978 = vsel %vm940, %v800, 0
  %v981 = vsel %vm940, %v801, 0
  %v984 = vsel %vm940, %v802, 0
  %v987 = vsel %vm940, %v803, 0
  %v990 = vsel %vm940, %v804, 0
  %v993 = vsel %vm940, %v805, 0
  %v996 = vsel %vm940, %v806, 0
  %v999 = vsel %vm940, %v807, 0
  %v1002 = vsel %vm940, %v808, 0
  %v1005 = vsel %vm940, %v809, 0
  %v1008 = vsel %vm940, %v810, 0
  %v1011 = vsel %vm940, %v811, 0
  %v1014 = vsel %vm940, %v812, 0
  %v1017 = vsel %vm940, %v813, 0
  %v1020 = vsel %vm940, %v814, 0
  %v1023 = vsel %vm940, %v815, 0
  %v1026 = vsel %vm940, %v816, 0
  %v1029 = vsel %vm940, %v817, 0
  %v1032 = vsel %vm940, %v818, 0
  %v1035 = vsel %vm940, %v819, 0
  %v1038 = vsel %vm940, %v820, 0
  %v1041 = vsel %vm940, %v821, 0
  %v1044 = vsel %vm940, %v822, 0
  %v1047 = vsel %vm940, %v823, 0
  %v1050 = vsel %vm940, %v824, 0
  %v1053 = vsel %vm940, %v825, 0
  %v1056 = vsel %vm940, %v826, 0
  %v1059 = vsel %vm940, %v827, 0
  %v1062 = vsel %vm940, %v828, 0
  %v1065 = vsel %vm940, %v829, 0
  %v1068 = vsel %vm940, %v830, 0
  %v1071 = vsel %vm940, %v831, 0
  %v1074 = vsel %vm940, %v832, 0
  %v1077 = vsel %vm940, %v833, 0
  %v1080 = vsel %vm940, %v834, 0
  %v1083 = vsel %vm940, %v835, 0
  %v1086 = vsel %vm940, %v836, 0
  %v1089 = vsel %vm940, %v837, 0
  %v1092 = vsel %vm940, %v838, 0
  %v1095 = vsel %vm940, %v839, 0
  %v1098 = vsel %vm940, %v840, 0
  %v1101 = vsel %vm940, %v841, 0
  %v1104 = vsel %vm940, %v842, 0
  %v1107 = vsel %vm940, %v843, 0
  %v1110 = vsel %vm940, %v844, 0
  %v1113 = vsel %vm940, %v845, 0
  %v1116 = vsel %vm940, %v846, 0
  %v1119 = vsel %vm940, %v847, 0
  %v1122 = vsel %vm940, %v848, 0
  %v1125 = vsel %vm940, %v849, 0
  %v1128 = vsel %vm940, %v850, 0
  %v1131 = vsel %vm940, %v851, 0
  %v1134 = vsel %vm940, %v852, 0
  %v1137 = vsel %vm940, %v853, 0
  %v1140 = vsel %vm940, %v854, 0
  %v1143 = vsel %vm940, %v855, 0
  %v1146 = vsel %vm940, %v856, 0
  %v1149 = vsel %vm940, %v857, 0
  %v1152 = vsel %vm940, %v858, 0
  %v1155 = vsel %vm940, %v859, 0
  %v1158 = vsel %vm940, %v860, 0
  %v1161 = vsel %vm940, %v861, 0
  %v1164 = vsel %vm940, %v862, 0
  %v1167 = vsel %vm940, %v863, 0
  %v1170 = vsel %vm940, %v864, 0
  %v1173 = vsel %vm940, %v865, 0
  %v1176 = vsel %vm940, %v866, 0
  %v1179 = vsel %vm940, %v867, 0
  %v1182 = vsel %vm940, %v868, 0
  %v1185 = vsel %vm940, %v869, 0
  %v1188 = vsel %vm940, %v870, 0
  %v1191 = vsel %vm940, %v871, 0
  %v1194 = vsel %vm940, %v872, 0
  %v1197 = vsel %vm940, %v873, 0
  %v1200 = vsel %vm940, %v874, 0
  %v1203 = vsel %vm940, %v875, 0
  %v1206 = vsel %vm940, %v876, 0
  %v1209 = vsel %vm940, %v877, 0
  %v1212 = vsel %vm940, %v878, 0
  %v1215 = vsel %vm940, %v879, 0
  %v1218 = vsel %vm940, %v880, 0
  %v1221 = vsel %vm940, %v881, 0
  %v1224 = vsel %vm940, %v882, 0
  %v1227 = vsel %vm940, %v883, 0
  %v1230 = vsel %vm940, %v884, 0
  %v1233 = vsel %vm940, %v885, 0
  %v1236 = vsel %vm940, %v886, 0
  %v1239 = vsel %vm940, %v887, 0
  %v1242 = vsel %vm940, %v888, 0
  %v1245 = vsel %vm940, %v889, 0
  %v1248 = vsel %vm940, %v890, 0
  %v1251 = vsel %vm940, %v891, 0
  %v1254 = vsel %vm940, %v892, 0
  %v1257 = vsel %vm940, %v893, 0
  %v1260 = vsel %vm940, %v894, 0
  %v1263 = vsel %vm940, %v895, 0
  %v1266 = vsel %vm940, %v896, 0
  %v1269 = vsel %vm940, %v897, 0
  %v1272 = vsel %vm940, %v898, 0
  %v1275 = vsel %vm940, %v899, 0
  %v1278 = vsel %vm940, %v900, 0
  %v1281 = vsel %vm940, %v901, 0
  %v1284 = vsel %vm940, %v902, 0
  %v1287 = vsel %vm940, %v903, 0
  %v1290 = vsel %vm940, %v904, 0
  %v1293 = vsel %vm940, %v905, 0
  %v1296 = vsel %vm940, %v906, 0
  %v1299 = vsel %vm940, %v907, 0
  %v1302 = vsel %vm940, %v908, 0
  %v1305 = vsel %vm940, %v909, 0
  %v1308 = vsel %vm940, %v910, 0
  %v1311 = vsel %vm940, %v911, 0
  %v1314 = vsel %vm940, %v912, 0
  %v1317 = vsel %vm940, %v913, 0
  %v1320 = vsel %vm940, %v914, 0
  %v1323 = vsel %vm940, %v915, 0
  %1325 = vmatprep.subr.bf16.mxu0 0
  %1326 = vmatpush1.bf16.msra.mxu0 %v932
  %1327 = vmatprep.subr.bf16.mxu0 0
  %1328 = vmatpush1.bf16.msra.mxu0 %v933
  %1329 = vmatprep.subr.bf16.mxu0 0
  %1330 = vmatpush1.bf16.msra.mxu0 %v934
  %1331 = vmatprep.subr.bf16.mxu0 0
  %1332 = vmatpush1.bf16.msra.mxu0 %v935
  %1333 = vmatprep.subr.bf16.mxu0 0
  %1334 = vmatpush1.bf16.msra.mxu0 0
  %1335 = vmatprep.subr.bf16.mxu0 0
  %1336 = vmatpush1.bf16.msra.mxu0 0
  %1337 = vmatprep.subr.bf16.mxu0 0
  %1338 = vmatpush1.bf16.msra.mxu0 0
  %1339 = vmatprep.subr.bf16.mxu0 0
  %1340 = vmatpush1.bf16.msra.mxu0 0
  %1341 = vmatprep.subr.bf16.mxu0 0
  %1342 = vmatpush1.bf16.msra.mxu0 0
  %1343 = vmatprep.subr.bf16.mxu0 0
  %1344 = vmatpush1.bf16.msra.mxu0 0
  %1345 = vmatprep.subr.bf16.mxu0 0
  %1346 = vmatpush1.bf16.msra.mxu0 0
  %1347 = vmatprep.subr.bf16.mxu0 0
  %1348 = vmatpush1.bf16.msra.mxu0 0
  %1349 = vmatprep.subr.bf16.mxu0 0
  %1350 = vmatpush1.bf16.msra.mxu0 0
  %1351 = vmatprep.subr.bf16.mxu0 0
  %1352 = vmatpush1.bf16.msra.mxu0 0
  %1353 = vmatprep.subr.bf16.mxu0 0
  %1354 = vmatpush1.bf16.msra.mxu0 0
  %1355 = vmatprep.subr.bf16.mxu0 0
  %1356 = vmatpush1.bf16.msra.mxu0 0
  %1357 = vmatprep.mubr.bf16.mxu0 0
  %1358 = vmatmul.mubr.bf16.gmra.mrb[0].mxu0 %v942
  %v1359 = vpop.f32.mrb[0].mxu0
  %v1360 = vadd.f32 0.0, %v1359
  %v1361 = vpop.f32.mrb[0].mxu0
  %v1362 = vpop.f32.mrb[0].mxu0
  %v1363 = vadd.f32 0.0, %v1362
  %v1364 = vpop.f32.mrb[0].mxu0
  %1365 = vmatprep.mubr.bf16.mxu0 0
  %1366 = vmatmul.mubr.bf16.gmra.mrb[0].mxu0 %v945
  %v1367 = vpop.f32.mrb[0].mxu0
  %v1368 = vadd.f32 0.0, %v1367
  %v1369 = vpop.f32.mrb[0].mxu0
  %v1370 = vpop.f32.mrb[0].mxu0
  %v1371 = vadd.f32 0.0, %v1370
  %v1372 = vpop.f32.mrb[0].mxu0
  %1373 = vmatprep.mubr.bf16.mxu0 0
  %1374 = vmatmul.mubr.bf16.gmra.mrb[0].mxu0 %v948
  %v1375 = vpop.f32.mrb[0].mxu0
  %v1376 = vadd.f32 0.0, %v1375
  %v1377 = vpop.f32.mrb[0].mxu0
  %v1378 = vpop.f32.mrb[0].mxu0
  %v1379 = vadd.f32 0.0, %v1378
  %v1380 = vpop.f32.mrb[0].mxu0
  %1381 = vmatprep.mubr.bf16.mxu0 0
  %1382 = vmatmul.mubr.bf16.gmra.mrb[0].mxu0 %v951
  %v1383 = vpop.f32.mrb[0].mxu0
  %v1384 = vadd.f32 0.0, %v1383
  %v1385 = vpop.f32.mrb[0].mxu0
  %v1386 = vpop.f32.mrb[0].mxu0
  %v1387 = vadd.f32 0.0, %v1386
  %v1388 = vpop.f32.mrb[0].mxu0
  %1389 = vmatprep.mubr.bf16.mxu0 0
  %1390 = vmatmul.mubr.bf16.gmra.mrb[0].mxu0 %v954
  %v1391 = vpop.f32.mrb[0].mxu0
  %v1392 = vadd.f32 0.0, %v1391
  %v1393 = vpop.f32.mrb[0].mxu0
  %v1394 = vpop.f32.mrb[0].mxu0
  %v1395 = vadd.f32 0.0, %v1394
  %v1396 = vpop.f32.mrb[0].mxu0
  %1397 = vmatprep.mubr.bf16.mxu0 0
  %1398 = vmatmul.mubr.bf16.gmra.mrb[0].mxu0 %v957
  %v1399 = vpop.f32.mrb[0].mxu0
  %v1400 = vadd.f32 0.0, %v1399
  %v1401 = vpop.f32.mrb[0].mxu0
  %v1402 = vpop.f32.mrb[0].mxu0
  %v1403 = vadd.f32 0.0, %v1402
  %v1404 = vpop.f32.mrb[0].mxu0
  %1405 = vmatprep.mubr.bf16.mxu0 0
  %1406 = vmatmul.mubr.bf16.gmra.mrb[0].mxu0 %v960
  %v1407 = vpop.f32.mrb[0].mxu0
  %v1408 = vadd.f32 0.0, %v1407
  %v1409 = vpop.f32.mrb[0].mxu0
  %v1410 = vpop.f32.mrb[0].mxu0
  %v1411 = vadd.f32 0.0, %v1410
  %v1412 = vpop.f32.mrb[0].mxu0
  %1413 = vmatprep.mubr.bf16.mxu0 0
  %1414 = vmatmul.mubr.bf16.gmra.mrb[0].mxu0 %v963
  %v1415 = vpop.f32.mrb[0].mxu0
  %v1416 = vadd.f32 0.0, %v1415
  %v1417 = vpop.f32.mrb[0].mxu0
  %v1418 = vpop.f32.mrb[0].mxu0
  %v1419 = vadd.f32 0.0, %v1418
  %v1420 = vpop.f32.mrb[0].mxu0
  %1421 = vmatprep.mubr.bf16.mxu0 0
  %1422 = vmatmul.mubr.bf16.gmra.mrb[0].mxu0 %v966
  %v1423 = vpop.f32.mrb[0].mxu0
  %v1424 = vadd.f32 0.0, %v1423
  %v1425 = vpop.f32.mrb[0].mxu0
  %v1426 = vpop.f32.mrb[0].mxu0
  %v1427 = vadd.f32 0.0, %v1426
  %v1428 = vpop.f32.mrb[0].mxu0
  %1429 = vmatprep.mubr.bf16.mxu0 0
  %1430 = vmatmul.mubr.bf16.gmra.mrb[0].mxu0 %v969
  %v1431 = vpop.f32.mrb[0].mxu0
  %v1432 = vadd.f32 0.0, %v1431
  %v1433 = vpop.f32.mrb[0].mxu0
  %v1434 = vpop.f32.mrb[0].mxu0
  %v1435 = vadd.f32 0.0, %v1434
  %v1436 = vpop.f32.mrb[0].mxu0
  %1437 = vmatprep.mubr.bf16.mxu0 0
  %1438 = vmatmul.mubr.bf16.gmra.mrb[0].mxu0 %v972
  %v1439 = vpop.f32.mrb[0].mxu0
  %v1440 = vadd.f32 0.0, %v1439
  %v1441 = vpop.f32.mrb[0].mxu0
  %v1442 = vpop.f32.mrb[0].mxu0
  %v1443 = vadd.f32 0.0, %v1442
  %v1444 = vpop.f32.mrb[0].mxu0
  %1445 = vmatprep.mubr.bf16.mxu0 0
  %1446 = vmatmul.mubr.bf16.gmra.mrb[0].mxu0 %v975
  %v1447 = vpop.f32.mrb[0].mxu0
  %v1448 = vadd.f32 0.0, %v1447
  %v1449 = vpop.f32.mrb[0].mxu0
  %v1450 = vpop.f32.mrb[0].mxu0
  %v1451 = vadd.f32 0.0, %v1450
  %v1452 = vpop.f32.mrb[0].mxu0
  %1453 = vmatprep.mubr.bf16.mxu0 0
  %1454 = vmatmul.mubr.bf16.gmra.mrb[0].mxu0 %v978
  %v1455 = vpop.f32.mrb[0].mxu0
  %v1456 = vadd.f32 0.0, %v1455
  %v1457 = vpop.f32.mrb[0].mxu0
  %v1458 = vpop.f32.mrb[0].mxu0
  %v1459 = vadd.f32 0.0, %v1458
  %v1460 = vpop.f32.mrb[0].mxu0
  %1461 = vmatprep.mubr.bf16.mxu0 0
  %1462 = vmatmul.mubr.bf16.gmra.mrb[0].mxu0 %v981
  %v1463 = vpop.f32.mrb[0].mxu0
  %v1464 = vadd.f32 0.0, %v1463
  %v1465 = vpop.f32.mrb[0].mxu0
  %v1466 = vpop.f32.mrb[0].mxu0
  %v1467 = vadd.f32 0.0, %v1466
  %v1468 = vpop.f32.mrb[0].mxu0
  %1469 = vmatprep.mubr.bf16.mxu0 0
  %1470 = vmatmul.mubr.bf16.gmra.mrb[0].mxu0 %v984
  %v1471 = vpop.f32.mrb[0].mxu0
  %v1472 = vadd.f32 0.0, %v1471
  %v1473 = vpop.f32.mrb[0].mxu0
  %v1474 = vpop.f32.mrb[0].mxu0
  %v1475 = vadd.f32 0.0, %v1474
  %v1476 = vpop.f32.mrb[0].mxu0
  %1477 = vmatprep.mubr.bf16.mxu0 0
  %1478 = vmatmul.mubr.bf16.gmra.mrb[0].mxu0 %v987
  %v1479 = vpop.f32.mrb[0].mxu0
  %v1480 = vadd.f32 0.0, %v1479
  %v1481 = vpop.f32.mrb[0].mxu0
  %v1482 = vpop.f32.mrb[0].mxu0
  %v1483 = vadd.f32 0.0, %v1482
  %v1484 = vpop.f32.mrb[0].mxu0
  %1485 = vmatprep.mubr.bf16.mxu0 0
  %1486 = vmatmul.mubr.bf16.gmra.mrb[0].mxu0 %v990
  %v1487 = vpop.f32.mrb[0].mxu0
  %v1488 = vadd.f32 0.0, %v1487
  %v1489 = vpop.f32.mrb[0].mxu0
  %v1490 = vpop.f32.mrb[0].mxu0
  %v1491 = vadd.f32 0.0, %v1490
  %v1492 = vpop.f32.mrb[0].mxu0
  %1493 = vmatprep.mubr.bf16.mxu0 0
  %1494 = vmatmul.mubr.bf16.gmra.mrb[0].mxu0 %v993
  %v1495 = vpop.f32.mrb[0].mxu0
  %v1496 = vadd.f32 0.0, %v1495
  %v1497 = vpop.f32.mrb[0].mxu0
  %v1498 = vpop.f32.mrb[0].mxu0
  %v1499 = vadd.f32 0.0, %v1498
  %v1500 = vpop.f32.mrb[0].mxu0
  %1501 = vmatprep.mubr.bf16.mxu0 0
  %1502 = vmatmul.mubr.bf16.gmra.mrb[0].mxu0 %v996
  %v1503 = vpop.f32.mrb[0].mxu0
  %v1504 = vadd.f32 0.0, %v1503
  %v1505 = vpop.f32.mrb[0].mxu0
  %v1506 = vpop.f32.mrb[0].mxu0
  %v1507 = vadd.f32 0.0, %v1506
  %v1508 = vpop.f32.mrb[0].mxu0
  %1509 = vmatprep.mubr.bf16.mxu0 0
  %1510 = vmatmul.mubr.bf16.gmra.mrb[0].mxu0 %v999
  %v1511 = vpop.f32.mrb[0].mxu0
  %v1512 = vadd.f32 0.0, %v1511
  %v1513 = vpop.f32.mrb[0].mxu0
  %v1514 = vpop.f32.mrb[0].mxu0
  %v1515 = vadd.f32 0.0, %v1514
  %v1516 = vpop.f32.mrb[0].mxu0
  %1517 = vmatprep.mubr.bf16.mxu0 0
  %1518 = vmatmul.mubr.bf16.gmra.mrb[0].mxu0 %v1002
  %v1519 = vpop.f32.mrb[0].mxu0
  %v1520 = vadd.f32 0.0, %v1519
  %v1521 = vpop.f32.mrb[0].mxu0
  %v1522 = vpop.f32.mrb[0].mxu0
  %v1523 = vadd.f32 0.0, %v1522
  %v1524 = vpop.f32.mrb[0].mxu0
  %1525 = vmatprep.mubr.bf16.mxu0 0
  %1526 = vmatmul.mubr.bf16.gmra.mrb[0].mxu0 %v1005
  %v1527 = vpop.f32.mrb[0].mxu0
  %v1528 = vadd.f32 0.0, %v1527
  %v1529 = vpop.f32.mrb[0].mxu0
  %v1530 = vpop.f32.mrb[0].mxu0
  %v1531 = vadd.f32 0.0, %v1530
  %v1532 = vpop.f32.mrb[0].mxu0
  %1533 = vmatprep.mubr.bf16.mxu0 0
  %1534 = vmatmul.mubr.bf16.gmra.mrb[0].mxu0 %v1008
  %v1535 = vpop.f32.mrb[0].mxu0
  %v1536 = vadd.f32 0.0, %v1535
  %v1537 = vpop.f32.mrb[0].mxu0
  %v1538 = vpop.f32.mrb[0].mxu0
  %v1539 = vadd.f32 0.0, %v1538
  %v1540 = vpop.f32.mrb[0].mxu0
  %1541 = vmatprep.mubr.bf16.mxu0 0
  %1542 = vmatmul.mubr.bf16.gmra.mrb[0].mxu0 %v1011
  %v1543 = vpop.f32.mrb[0].mxu0
  %v1544 = vadd.f32 0.0, %v1543
  %v1545 = vpop.f32.mrb[0].mxu0
  %v1546 = vpop.f32.mrb[0].mxu0
  %v1547 = vadd.f32 0.0, %v1546
  %v1548 = vpop.f32.mrb[0].mxu0
  %1549 = vmatprep.mubr.bf16.mxu0 0
  %1550 = vmatmul.mubr.bf16.gmra.mrb[0].mxu0 %v1014
  %v1551 = vpop.f32.mrb[0].mxu0
  %v1552 = vadd.f32 0.0, %v1551
  %v1553 = vpop.f32.mrb[0].mxu0
  %v1554 = vpop.f32.mrb[0].mxu0
  %v1555 = vadd.f32 0.0, %v1554
  %v1556 = vpop.f32.mrb[0].mxu0
  %1557 = vmatprep.mubr.bf16.mxu0 0
  %1558 = vmatmul.mubr.bf16.gmra.mrb[0].mxu0 %v1017
  %v1559 = vpop.f32.mrb[0].mxu0
  %v1560 = vadd.f32 0.0, %v1559
  %v1561 = vpop.f32.mrb[0].mxu0
  %v1562 = vpop.f32.mrb[0].mxu0
  %v1563 = vadd.f32 0.0, %v1562
  %v1564 = vpop.f32.mrb[0].mxu0
  %1565 = vmatprep.mubr.bf16.mxu0 0
  %1566 = vmatmul.mubr.bf16.gmra.mrb[0].mxu0 %v1020
  %v1567 = vpop.f32.mrb[0].mxu0
  %v1568 = vadd.f32 0.0, %v1567
  %v1569 = vpop.f32.mrb[0].mxu0
  %v1570 = vpop.f32.mrb[0].mxu0
  %v1571 = vadd.f32 0.0, %v1570
  %v1572 = vpop.f32.mrb[0].mxu0
  %1573 = vmatprep.mubr.bf16.mxu0 0
  %1574 = vmatmul.mubr.bf16.gmra.mrb[0].mxu0 %v1023
  %v1575 = vpop.f32.mrb[0].mxu0
  %v1576 = vadd.f32 0.0, %v1575
  %v1577 = vpop.f32.mrb[0].mxu0
  %v1578 = vpop.f32.mrb[0].mxu0
  %v1579 = vadd.f32 0.0, %v1578
  %v1580 = vpop.f32.mrb[0].mxu0
  %1581 = vmatprep.mubr.bf16.mxu0 0
  %1582 = vmatmul.mubr.bf16.gmra.mrb[0].mxu0 %v1026
  %v1583 = vpop.f32.mrb[0].mxu0
  %v1584 = vadd.f32 0.0, %v1583
  %v1585 = vpop.f32.mrb[0].mxu0
  %v1586 = vpop.f32.mrb[0].mxu0
  %v1587 = vadd.f32 0.0, %v1586
  %v1588 = vpop.f32.mrb[0].mxu0
  %1589 = vmatprep.mubr.bf16.mxu0 0
  %1590 = vmatmul.mubr.bf16.gmra.mrb[0].mxu0 %v1029
  %v1591 = vpop.f32.mrb[0].mxu0
  %v1592 = vadd.f32 0.0, %v1591
  %v1593 = vpop.f32.mrb[0].mxu0
  %v1594 = vpop.f32.mrb[0].mxu0
  %v1595 = vadd.f32 0.0, %v1594
  %v1596 = vpop.f32.mrb[0].mxu0
  %1597 = vmatprep.mubr.bf16.mxu0 0
  %1598 = vmatmul.mubr.bf16.gmra.mrb[0].mxu0 %v1032
  %v1599 = vpop.f32.mrb[0].mxu0
  %v1600 = vadd.f32 0.0, %v1599
  %v1601 = vpop.f32.mrb[0].mxu0
  %v1602 = vpop.f32.mrb[0].mxu0
  %v1603 = vadd.f32 0.0, %v1602
  %v1604 = vpop.f32.mrb[0].mxu0
  %1605 = vmatprep.mubr.bf16.mxu0 0
  %1606 = vmatmul.mubr.bf16.gmra.mrb[0].mxu0 %v1035
  %v1607 = vpop.f32.mrb[0].mxu0
  %v1608 = vadd.f32 0.0, %v1607
  %v1609 = vpop.f32.mrb[0].mxu0
  %v1610 = vpop.f32.mrb[0].mxu0
  %v1611 = vadd.f32 0.0, %v1610
  %v1612 = vpop.f32.mrb[0].mxu0
  %1613 = vmatprep.mubr.bf16.mxu0 0
  %1614 = vmatmul.mubr.bf16.gmra.mrb[0].mxu0 %v1038
  %v1615 = vpop.f32.mrb[0].mxu0
  %v1616 = vadd.f32 0.0, %v1615
  %v1617 = vpop.f32.mrb[0].mxu0
  %v1618 = vpop.f32.mrb[0].mxu0
  %v1619 = vadd.f32 0.0, %v1618
  %v1620 = vpop.f32.mrb[0].mxu0
  %1621 = vmatprep.mubr.bf16.mxu0 0
  %1622 = vmatmul.mubr.bf16.gmra.mrb[0].mxu0 %v1041
  %v1623 = vpop.f32.mrb[0].mxu0
  %v1624 = vadd.f32 0.0, %v1623
  %v1625 = vpop.f32.mrb[0].mxu0
  %v1626 = vpop.f32.mrb[0].mxu0
  %v1627 = vadd.f32 0.0, %v1626
  %v1628 = vpop.f32.mrb[0].mxu0
  %1629 = vmatprep.mubr.bf16.mxu0 0
  %1630 = vmatmul.mubr.bf16.gmra.mrb[0].mxu0 %v1044
  %v1631 = vpop.f32.mrb[0].mxu0
  %v1632 = vadd.f32 0.0, %v1631
  %v1633 = vpop.f32.mrb[0].mxu0
  %v1634 = vpop.f32.mrb[0].mxu0
  %v1635 = vadd.f32 0.0, %v1634
  %v1636 = vpop.f32.mrb[0].mxu0
  %1637 = vmatprep.mubr.bf16.mxu0 0
  %1638 = vmatmul.mubr.bf16.gmra.mrb[0].mxu0 %v1047
  %v1639 = vpop.f32.mrb[0].mxu0
  %v1640 = vadd.f32 0.0, %v1639
  %v1641 = vpop.f32.mrb[0].mxu0
  %v1642 = vpop.f32.mrb[0].mxu0
  %v1643 = vadd.f32 0.0, %v1642
  %v1644 = vpop.f32.mrb[0].mxu0
  %1645 = vmatprep.mubr.bf16.mxu0 0
  %1646 = vmatmul.mubr.bf16.gmra.mrb[0].mxu0 %v1050
  %v1647 = vpop.f32.mrb[0].mxu0
  %v1648 = vadd.f32 0.0, %v1647
  %v1649 = vpop.f32.mrb[0].mxu0
  %v1650 = vpop.f32.mrb[0].mxu0
  %v1651 = vadd.f32 0.0, %v1650
  %v1652 = vpop.f32.mrb[0].mxu0
  %1653 = vmatprep.mubr.bf16.mxu0 0
  %1654 = vmatmul.mubr.bf16.gmra.mrb[0].mxu0 %v1053
  %v1655 = vpop.f32.mrb[0].mxu0
  %v1656 = vadd.f32 0.0, %v1655
  %v1657 = vpop.f32.mrb[0].mxu0
  %v1658 = vpop.f32.mrb[0].mxu0
  %v1659 = vadd.f32 0.0, %v1658
  %v1660 = vpop.f32.mrb[0].mxu0
  %1661 = vmatprep.mubr.bf16.mxu0 0
  %1662 = vmatmul.mubr.bf16.gmra.mrb[0].mxu0 %v1056
  %v1663 = vpop.f32.mrb[0].mxu0
  %v1664 = vadd.f32 0.0, %v1663
  %v1665 = vpop.f32.mrb[0].mxu0
  %v1666 = vpop.f32.mrb[0].mxu0
  %v1667 = vadd.f32 0.0, %v1666
  %v1668 = vpop.f32.mrb[0].mxu0
  %1669 = vmatprep.mubr.bf16.mxu0 0
  %1670 = vmatmul.mubr.bf16.gmra.mrb[0].mxu0 %v1059
  %v1671 = vpop.f32.mrb[0].mxu0
  %v1672 = vadd.f32 0.0, %v1671
  %v1673 = vpop.f32.mrb[0].mxu0
  %v1674 = vpop.f32.mrb[0].mxu0
  %v1675 = vadd.f32 0.0, %v1674
  %v1676 = vpop.f32.mrb[0].mxu0
  %1677 = vmatprep.mubr.bf16.mxu0 0
  %1678 = vmatmul.mubr.bf16.gmra.mrb[0].mxu0 %v1062
  %v1679 = vpop.f32.mrb[0].mxu0
  %v1680 = vadd.f32 0.0, %v1679
  %v1681 = vpop.f32.mrb[0].mxu0
  %v1682 = vpop.f32.mrb[0].mxu0
  %v1683 = vadd.f32 0.0, %v1682
  %v1684 = vpop.f32.mrb[0].mxu0
  %1685 = vmatprep.mubr.bf16.mxu0 0
  %1686 = vmatmul.mubr.bf16.gmra.mrb[0].mxu0 %v1065
  %v1687 = vpop.f32.mrb[0].mxu0
  %v1688 = vadd.f32 0.0, %v1687
  %v1689 = vpop.f32.mrb[0].mxu0
  %v1690 = vpop.f32.mrb[0].mxu0
  %v1691 = vadd.f32 0.0, %v1690
  %v1692 = vpop.f32.mrb[0].mxu0
  %1693 = vmatprep.mubr.bf16.mxu0 0
  %1694 = vmatmul.mubr.bf16.gmra.mrb[0].mxu0 %v1068
  %v1695 = vpop.f32.mrb[0].mxu0
  %v1696 = vadd.f32 0.0, %v1695
  %v1697 = vpop.f32.mrb[0].mxu0
  %v1698 = vpop.f32.mrb[0].mxu0
  %v1699 = vadd.f32 0.0, %v1698
  %v1700 = vpop.f32.mrb[0].mxu0
  %1701 = vmatprep.mubr.bf16.mxu0 0
  %1702 = vmatmul.mubr.bf16.gmra.mrb[0].mxu0 %v1071
  %v1703 = vpop.f32.mrb[0].mxu0
  %v1704 = vadd.f32 0.0, %v1703
  %v1705 = vpop.f32.mrb[0].mxu0
  %v1706 = vpop.f32.mrb[0].mxu0
  %v1707 = vadd.f32 0.0, %v1706
  %v1708 = vpop.f32.mrb[0].mxu0
  %1709 = vmatprep.mubr.bf16.mxu0 0
  %1710 = vmatmul.mubr.bf16.gmra.mrb[0].mxu0 %v1074
  %v1711 = vpop.f32.mrb[0].mxu0
  %v1712 = vadd.f32 0.0, %v1711
  %v1713 = vpop.f32.mrb[0].mxu0
  %v1714 = vpop.f32.mrb[0].mxu0
  %v1715 = vadd.f32 0.0, %v1714
  %v1716 = vpop.f32.mrb[0].mxu0
  %1717 = vmatprep.mubr.bf16.mxu0 0
  %1718 = vmatmul.mubr.bf16.gmra.mrb[0].mxu0 %v1077
  %v1719 = vpop.f32.mrb[0].mxu0
  %v1720 = vadd.f32 0.0, %v1719
  %v1721 = vpop.f32.mrb[0].mxu0
  %v1722 = vpop.f32.mrb[0].mxu0
  %v1723 = vadd.f32 0.0, %v1722
  %v1724 = vpop.f32.mrb[0].mxu0
  %1725 = vmatprep.mubr.bf16.mxu0 0
  %1726 = vmatmul.mubr.bf16.gmra.mrb[0].mxu0 %v1080
  %v1727 = vpop.f32.mrb[0].mxu0
  %v1728 = vadd.f32 0.0, %v1727
  %v1729 = vpop.f32.mrb[0].mxu0
  %v1730 = vpop.f32.mrb[0].mxu0
  %v1731 = vadd.f32 0.0, %v1730
  %v1732 = vpop.f32.mrb[0].mxu0
  %1733 = vmatprep.mubr.bf16.mxu0 0
  %1734 = vmatmul.mubr.bf16.gmra.mrb[0].mxu0 %v1083
  %v1735 = vpop.f32.mrb[0].mxu0
  %v1736 = vadd.f32 0.0, %v1735
  %v1737 = vpop.f32.mrb[0].mxu0
  %v1738 = vpop.f32.mrb[0].mxu0
  %v1739 = vadd.f32 0.0, %v1738
  %v1740 = vpop.f32.mrb[0].mxu0
  %1741 = vmatprep.mubr.bf16.mxu0 0
  %1742 = vmatmul.mubr.bf16.gmra.mrb[0].mxu0 %v1086
  %v1743 = vpop.f32.mrb[0].mxu0
  %v1744 = vadd.f32 0.0, %v1743
  %v1745 = vpop.f32.mrb[0].mxu0
  %v1746 = vpop.f32.mrb[0].mxu0
  %v1747 = vadd.f32 0.0, %v1746
  %v1748 = vpop.f32.mrb[0].mxu0
  %1749 = vmatprep.mubr.bf16.mxu0 0
  %1750 = vmatmul.mubr.bf16.gmra.mrb[0].mxu0 %v1089
  %v1751 = vpop.f32.mrb[0].mxu0
  %v1752 = vadd.f32 0.0, %v1751
  %v1753 = vpop.f32.mrb[0].mxu0
  %v1754 = vpop.f32.mrb[0].mxu0
  %v1755 = vadd.f32 0.0, %v1754
  %v1756 = vpop.f32.mrb[0].mxu0
  %1757 = vmatprep.mubr.bf16.mxu0 0
  %1758 = vmatmul.mubr.bf16.gmra.mrb[0].mxu0 %v1092
  %v1759 = vpop.f32.mrb[0].mxu0
  %v1760 = vadd.f32 0.0, %v1759
  %v1761 = vpop.f32.mrb[0].mxu0
  %v1762 = vpop.f32.mrb[0].mxu0
  %v1763 = vadd.f32 0.0, %v1762
  %v1764 = vpop.f32.mrb[0].mxu0
  %1765 = vmatprep.mubr.bf16.mxu0 0
  %1766 = vmatmul.mubr.bf16.gmra.mrb[0].mxu0 %v1095
  %v1767 = vpop.f32.mrb[0].mxu0
  %v1768 = vadd.f32 0.0, %v1767
  %v1769 = vpop.f32.mrb[0].mxu0
  %v1770 = vpop.f32.mrb[0].mxu0
  %v1771 = vadd.f32 0.0, %v1770
  %v1772 = vpop.f32.mrb[0].mxu0
  %1773 = vmatprep.mubr.bf16.mxu0 0
  %1774 = vmatmul.mubr.bf16.gmra.mrb[0].mxu0 %v1098
  %v1775 = vpop.f32.mrb[0].mxu0
  %v1776 = vadd.f32 0.0, %v1775
  %v1777 = vpop.f32.mrb[0].mxu0
  %v1778 = vpop.f32.mrb[0].mxu0
  %v1779 = vadd.f32 0.0, %v1778
  %v1780 = vpop.f32.mrb[0].mxu0
  %1781 = vmatprep.mubr.bf16.mxu0 0
  %1782 = vmatmul.mubr.bf16.gmra.mrb[0].mxu0 %v1101
  %v1783 = vpop.f32.mrb[0].mxu0
  %v1784 = vadd.f32 0.0, %v1783
  %v1785 = vpop.f32.mrb[0].mxu0
  %v1786 = vpop.f32.mrb[0].mxu0
  %v1787 = vadd.f32 0.0, %v1786
  %v1788 = vpop.f32.mrb[0].mxu0
  %1789 = vmatprep.mubr.bf16.mxu0 0
  %1790 = vmatmul.mubr.bf16.gmra.mrb[0].mxu0 %v1104
  %v1791 = vpop.f32.mrb[0].mxu0
  %v1792 = vadd.f32 0.0, %v1791
  %v1793 = vpop.f32.mrb[0].mxu0
  %v1794 = vpop.f32.mrb[0].mxu0
  %v1795 = vadd.f32 0.0, %v1794
  %v1796 = vpop.f32.mrb[0].mxu0
  %1797 = vmatprep.mubr.bf16.mxu0 0
  %1798 = vmatmul.mubr.bf16.gmra.mrb[0].mxu0 %v1107
  %v1799 = vpop.f32.mrb[0].mxu0
  %v1800 = vadd.f32 0.0, %v1799
  %v1801 = vpop.f32.mrb[0].mxu0
  %v1802 = vpop.f32.mrb[0].mxu0
  %v1803 = vadd.f32 0.0, %v1802
  %v1804 = vpop.f32.mrb[0].mxu0
  %1805 = vmatprep.mubr.bf16.mxu0 0
  %1806 = vmatmul.mubr.bf16.gmra.mrb[0].mxu0 %v1110
  %v1807 = vpop.f32.mrb[0].mxu0
  %v1808 = vadd.f32 0.0, %v1807
  %v1809 = vpop.f32.mrb[0].mxu0
  %v1810 = vpop.f32.mrb[0].mxu0
  %v1811 = vadd.f32 0.0, %v1810
  %v1812 = vpop.f32.mrb[0].mxu0
  %1813 = vmatprep.mubr.bf16.mxu0 0
  %1814 = vmatmul.mubr.bf16.gmra.mrb[0].mxu0 %v1113
  %v1815 = vpop.f32.mrb[0].mxu0
  %v1816 = vadd.f32 0.0, %v1815
  %v1817 = vpop.f32.mrb[0].mxu0
  %v1818 = vpop.f32.mrb[0].mxu0
  %v1819 = vadd.f32 0.0, %v1818
  %v1820 = vpop.f32.mrb[0].mxu0
  %1821 = vmatprep.mubr.bf16.mxu0 0
  %1822 = vmatmul.mubr.bf16.gmra.mrb[0].mxu0 %v1116
  %v1823 = vpop.f32.mrb[0].mxu0
  %v1824 = vadd.f32 0.0, %v1823
  %v1825 = vpop.f32.mrb[0].mxu0
  %v1826 = vpop.f32.mrb[0].mxu0
  %v1827 = vadd.f32 0.0, %v1826
  %v1828 = vpop.f32.mrb[0].mxu0
  %1829 = vmatprep.mubr.bf16.mxu0 0
  %1830 = vmatmul.mubr.bf16.gmra.mrb[0].mxu0 %v1119
  %v1831 = vpop.f32.mrb[0].mxu0
  %v1832 = vadd.f32 0.0, %v1831
  %v1833 = vpop.f32.mrb[0].mxu0
  %v1834 = vpop.f32.mrb[0].mxu0
  %v1835 = vadd.f32 0.0, %v1834
  %v1836 = vpop.f32.mrb[0].mxu0
  %1837 = vmatprep.mubr.bf16.mxu0 0
  %1838 = vmatmul.mubr.bf16.gmra.mrb[0].mxu0 %v1122
  %v1839 = vpop.f32.mrb[0].mxu0
  %v1840 = vadd.f32 0.0, %v1839
  %v1841 = vpop.f32.mrb[0].mxu0
  %v1842 = vpop.f32.mrb[0].mxu0
  %v1843 = vadd.f32 0.0, %v1842
  %v1844 = vpop.f32.mrb[0].mxu0
  %1845 = vmatprep.mubr.bf16.mxu0 0
  %1846 = vmatmul.mubr.bf16.gmra.mrb[0].mxu0 %v1125
  %v1847 = vpop.f32.mrb[0].mxu0
  %v1848 = vadd.f32 0.0, %v1847
  %v1849 = vpop.f32.mrb[0].mxu0
  %v1850 = vpop.f32.mrb[0].mxu0
  %v1851 = vadd.f32 0.0, %v1850
  %v1852 = vpop.f32.mrb[0].mxu0
  %1853 = vmatprep.mubr.bf16.mxu0 0
  %1854 = vmatmul.mubr.bf16.gmra.mrb[0].mxu0 %v1128
  %v1855 = vpop.f32.mrb[0].mxu0
  %v1856 = vadd.f32 0.0, %v1855
  %v1857 = vpop.f32.mrb[0].mxu0
  %v1858 = vpop.f32.mrb[0].mxu0
  %v1859 = vadd.f32 0.0, %v1858
  %v1860 = vpop.f32.mrb[0].mxu0
  %1861 = vmatprep.mubr.bf16.mxu0 0
  %1862 = vmatmul.mubr.bf16.gmra.mrb[0].mxu0 %v1131
  %v1863 = vpop.f32.mrb[0].mxu0
  %v1864 = vadd.f32 0.0, %v1863
  %v1865 = vpop.f32.mrb[0].mxu0
  %v1866 = vpop.f32.mrb[0].mxu0
  %v1867 = vadd.f32 0.0, %v1866
  %v1868 = vpop.f32.mrb[0].mxu0
  %1869 = vmatprep.mubr.bf16.mxu0 0
  %1870 = vmatmul.mubr.bf16.gmra.mrb[0].mxu0 %v1134
  %v1871 = vpop.f32.mrb[0].mxu0
  %v1872 = vadd.f32 0.0, %v1871
  %v1873 = vpop.f32.mrb[0].mxu0
  %v1874 = vpop.f32.mrb[0].mxu0
  %v1875 = vadd.f32 0.0, %v1874
  %v1876 = vpop.f32.mrb[0].mxu0
  %1877 = vmatprep.mubr.bf16.mxu0 0
  %1878 = vmatmul.mubr.bf16.gmra.mrb[0].mxu0 %v1137
  %v1879 = vpop.f32.mrb[0].mxu0
  %v1880 = vadd.f32 0.0, %v1879
  %v1881 = vpop.f32.mrb[0].mxu0
  %v1882 = vpop.f32.mrb[0].mxu0
  %v1883 = vadd.f32 0.0, %v1882
  %v1884 = vpop.f32.mrb[0].mxu0
  %1885 = vmatprep.mubr.bf16.mxu0 0
  %1886 = vmatmul.mubr.bf16.gmra.mrb[0].mxu0 %v1140
  %v1887 = vpop.f32.mrb[0].mxu0
  %v1888 = vadd.f32 0.0, %v1887
  %v1889 = vpop.f32.mrb[0].mxu0
  %v1890 = vpop.f32.mrb[0].mxu0
  %v1891 = vadd.f32 0.0, %v1890
  %v1892 = vpop.f32.mrb[0].mxu0
  %1893 = vmatprep.mubr.bf16.mxu0 0
  %1894 = vmatmul.mubr.bf16.gmra.mrb[0].mxu0 %v1143
  %v1895 = vpop.f32.mrb[0].mxu0
  %v1896 = vadd.f32 0.0, %v1895
  %v1897 = vpop.f32.mrb[0].mxu0
  %v1898 = vpop.f32.mrb[0].mxu0
  %v1899 = vadd.f32 0.0, %v1898
  %v1900 = vpop.f32.mrb[0].mxu0
  %1901 = vmatprep.mubr.bf16.mxu0 0
  %1902 = vmatmul.mubr.bf16.gmra.mrb[0].mxu0 %v1146
  %v1903 = vpop.f32.mrb[0].mxu0
  %v1904 = vadd.f32 0.0, %v1903
  %v1905 = vpop.f32.mrb[0].mxu0
  %v1906 = vpop.f32.mrb[0].mxu0
  %v1907 = vadd.f32 0.0, %v1906
  %v1908 = vpop.f32.mrb[0].mxu0
  %1909 = vmatprep.mubr.bf16.mxu0 0
  %1910 = vmatmul.mubr.bf16.gmra.mrb[0].mxu0 %v1149
  %v1911 = vpop.f32.mrb[0].mxu0
  %v1912 = vadd.f32 0.0, %v1911
  %v1913 = vpop.f32.mrb[0].mxu0
  %v1914 = vpop.f32.mrb[0].mxu0
  %v1915 = vadd.f32 0.0, %v1914
  %v1916 = vpop.f32.mrb[0].mxu0
  %1917 = vmatprep.mubr.bf16.mxu0 0
  %1918 = vmatmul.mubr.bf16.gmra.mrb[0].mxu0 %v1152
  %v1919 = vpop.f32.mrb[0].mxu0
  %v1920 = vadd.f32 0.0, %v1919
  %v1921 = vpop.f32.mrb[0].mxu0
  %v1922 = vpop.f32.mrb[0].mxu0
  %v1923 = vadd.f32 0.0, %v1922
  %v1924 = vpop.f32.mrb[0].mxu0
  %1925 = vmatprep.mubr.bf16.mxu0 0
  %1926 = vmatmul.mubr.bf16.gmra.mrb[0].mxu0 %v1155
  %v1927 = vpop.f32.mrb[0].mxu0
  %v1928 = vadd.f32 0.0, %v1927
  %v1929 = vpop.f32.mrb[0].mxu0
  %v1930 = vpop.f32.mrb[0].mxu0
  %v1931 = vadd.f32 0.0, %v1930
  %v1932 = vpop.f32.mrb[0].mxu0
  %1933 = vmatprep.mubr.bf16.mxu0 0
  %1934 = vmatmul.mubr.bf16.gmra.mrb[0].mxu0 %v1158
  %v1935 = vpop.f32.mrb[0].mxu0
  %v1936 = vadd.f32 0.0, %v1935
  %v1937 = vpop.f32.mrb[0].mxu0
  %v1938 = vpop.f32.mrb[0].mxu0
  %v1939 = vadd.f32 0.0, %v1938
  %v1940 = vpop.f32.mrb[0].mxu0
  %1941 = vmatprep.mubr.bf16.mxu0 0
  %1942 = vmatmul.mubr.bf16.gmra.mrb[0].mxu0 %v1161
  %v1943 = vpop.f32.mrb[0].mxu0
  %v1944 = vadd.f32 0.0, %v1943
  %v1945 = vpop.f32.mrb[0].mxu0
  %v1946 = vpop.f32.mrb[0].mxu0
  %v1947 = vadd.f32 0.0, %v1946
  %v1948 = vpop.f32.mrb[0].mxu0
  %1949 = vmatprep.mubr.bf16.mxu0 0
  %1950 = vmatmul.mubr.bf16.gmra.mrb[0].mxu0 %v1164
  %v1951 = vpop.f32.mrb[0].mxu0
  %v1952 = vadd.f32 0.0, %v1951
  %v1953 = vpop.f32.mrb[0].mxu0
  %v1954 = vpop.f32.mrb[0].mxu0
  %v1955 = vadd.f32 0.0, %v1954
  %v1956 = vpop.f32.mrb[0].mxu0
  %1957 = vmatprep.mubr.bf16.mxu0 0
  %1958 = vmatmul.mubr.bf16.gmra.mrb[0].mxu0 %v1167
  %v1959 = vpop.f32.mrb[0].mxu0
  %v1960 = vadd.f32 0.0, %v1959
  %v1961 = vpop.f32.mrb[0].mxu0
  %v1962 = vpop.f32.mrb[0].mxu0
  %v1963 = vadd.f32 0.0, %v1962
  %v1964 = vpop.f32.mrb[0].mxu0
  %1965 = vmatprep.mubr.bf16.mxu0 0
  %1966 = vmatmul.mubr.bf16.gmra.mrb[0].mxu0 %v1170
  %v1967 = vpop.f32.mrb[0].mxu0
  %v1968 = vadd.f32 0.0, %v1967
  %v1969 = vpop.f32.mrb[0].mxu0
  %v1970 = vpop.f32.mrb[0].mxu0
  %v1971 = vadd.f32 0.0, %v1970
  %v1972 = vpop.f32.mrb[0].mxu0
  %1973 = vmatprep.mubr.bf16.mxu0 0
  %1974 = vmatmul.mubr.bf16.gmra.mrb[0].mxu0 %v1173
  %v1975 = vpop.f32.mrb[0].mxu0
  %v1976 = vadd.f32 0.0, %v1975
  %v1977 = vpop.f32.mrb[0].mxu0
  %v1978 = vpop.f32.mrb[0].mxu0
  %v1979 = vadd.f32 0.0, %v1978
  %v1980 = vpop.f32.mrb[0].mxu0
  %1981 = vmatprep.mubr.bf16.mxu0 0
  %1982 = vmatmul.mubr.bf16.gmra.mrb[0].mxu0 %v1176
  %v1983 = vpop.f32.mrb[0].mxu0
  %v1984 = vadd.f32 0.0, %v1983
  %v1985 = vpop.f32.mrb[0].mxu0
  %v1986 = vpop.f32.mrb[0].mxu0
  %v1987 = vadd.f32 0.0, %v1986
  %v1988 = vpop.f32.mrb[0].mxu0
  %1989 = vmatprep.mubr.bf16.mxu0 0
  %1990 = vmatmul.mubr.bf16.gmra.mrb[0].mxu0 %v1179
  %v1991 = vpop.f32.mrb[0].mxu0
  %v1992 = vadd.f32 0.0, %v1991
  %v1993 = vpop.f32.mrb[0].mxu0
  %v1994 = vpop.f32.mrb[0].mxu0
  %v1995 = vadd.f32 0.0, %v1994
  %v1996 = vpop.f32.mrb[0].mxu0
  %1997 = vmatprep.mubr.bf16.mxu0 0
  %1998 = vmatmul.mubr.bf16.gmra.mrb[0].mxu0 %v1182
  %v1999 = vpop.f32.mrb[0].mxu0
  %v2000 = vadd.f32 0.0, %v1999
  %v2001 = vpop.f32.mrb[0].mxu0
  %v2002 = vpop.f32.mrb[0].mxu0
  %v2003 = vadd.f32 0.0, %v2002
  %v2004 = vpop.f32.mrb[0].mxu0
  %2005 = vmatprep.mubr.bf16.mxu0 0
  %2006 = vmatmul.mubr.bf16.gmra.mrb[0].mxu0 %v1185
  %v2007 = vpop.f32.mrb[0].mxu0
  %v2008 = vadd.f32 0.0, %v2007
  %v2009 = vpop.f32.mrb[0].mxu0
  %v2010 = vpop.f32.mrb[0].mxu0
  %v2011 = vadd.f32 0.0, %v2010
  %v2012 = vpop.f32.mrb[0].mxu0
  %2013 = vmatprep.mubr.bf16.mxu0 0
  %2014 = vmatmul.mubr.bf16.gmra.mrb[0].mxu0 %v1188
  %v2015 = vpop.f32.mrb[0].mxu0
  %v2016 = vadd.f32 0.0, %v2015
  %v2017 = vpop.f32.mrb[0].mxu0
  %v2018 = vpop.f32.mrb[0].mxu0
  %v2019 = vadd.f32 0.0, %v2018
  %v2020 = vpop.f32.mrb[0].mxu0
  %2021 = vmatprep.mubr.bf16.mxu0 0
  %2022 = vmatmul.mubr.bf16.gmra.mrb[0].mxu0 %v1191
  %v2023 = vpop.f32.mrb[0].mxu0
  %v2024 = vadd.f32 0.0, %v2023
  %v2025 = vpop.f32.mrb[0].mxu0
  %v2026 = vpop.f32.mrb[0].mxu0
  %v2027 = vadd.f32 0.0, %v2026
  %v2028 = vpop.f32.mrb[0].mxu0
  %2029 = vmatprep.mubr.bf16.mxu0 0
  %2030 = vmatmul.mubr.bf16.gmra.mrb[0].mxu0 %v1194
  %v2031 = vpop.f32.mrb[0].mxu0
  %v2032 = vadd.f32 0.0, %v2031
  %v2033 = vpop.f32.mrb[0].mxu0
  %v2034 = vpop.f32.mrb[0].mxu0
  %v2035 = vadd.f32 0.0, %v2034
  %v2036 = vpop.f32.mrb[0].mxu0
  %2037 = vmatprep.mubr.bf16.mxu0 0
  %2038 = vmatmul.mubr.bf16.gmra.mrb[0].mxu0 %v1197
  %v2039 = vpop.f32.mrb[0].mxu0
  %v2040 = vadd.f32 0.0, %v2039
  %v2041 = vpop.f32.mrb[0].mxu0
  %v2042 = vpop.f32.mrb[0].mxu0
  %v2043 = vadd.f32 0.0, %v2042
  %v2044 = vpop.f32.mrb[0].mxu0
  %2045 = vmatprep.mubr.bf16.mxu0 0
  %2046 = vmatmul.mubr.bf16.gmra.mrb[0].mxu0 %v1200
  %v2047 = vpop.f32.mrb[0].mxu0
  %v2048 = vadd.f32 0.0, %v2047
  %v2049 = vpop.f32.mrb[0].mxu0
  %v2050 = vpop.f32.mrb[0].mxu0
  %v2051 = vadd.f32 0.0, %v2050
  %v2052 = vpop.f32.mrb[0].mxu0
  %2053 = vmatprep.mubr.bf16.mxu0 0
  %2054 = vmatmul.mubr.bf16.gmra.mrb[0].mxu0 %v1203
  %v2055 = vpop.f32.mrb[0].mxu0
  %v2056 = vadd.f32 0.0, %v2055
  %v2057 = vpop.f32.mrb[0].mxu0
  %v2058 = vpop.f32.mrb[0].mxu0
  %v2059 = vadd.f32 0.0, %v2058
  %v2060 = vpop.f32.mrb[0].mxu0
  %2061 = vmatprep.mubr.bf16.mxu0 0
  %2062 = vmatmul.mubr.bf16.gmra.mrb[0].mxu0 %v1206
  %v2063 = vpop.f32.mrb[0].mxu0
  %v2064 = vadd.f32 0.0, %v2063
  %v2065 = vpop.f32.mrb[0].mxu0
  %v2066 = vpop.f32.mrb[0].mxu0
  %v2067 = vadd.f32 0.0, %v2066
  %v2068 = vpop.f32.mrb[0].mxu0
  %2069 = vmatprep.mubr.bf16.mxu0 0
  %2070 = vmatmul.mubr.bf16.gmra.mrb[0].mxu0 %v1209
  %v2071 = vpop.f32.mrb[0].mxu0
  %v2072 = vadd.f32 0.0, %v2071
  %v2073 = vpop.f32.mrb[0].mxu0
  %v2074 = vpop.f32.mrb[0].mxu0
  %v2075 = vadd.f32 0.0, %v2074
  %v2076 = vpop.f32.mrb[0].mxu0
  %2077 = vmatprep.mubr.bf16.mxu0 0
  %2078 = vmatmul.mubr.bf16.gmra.mrb[0].mxu0 %v1212
  %v2079 = vpop.f32.mrb[0].mxu0
  %v2080 = vadd.f32 0.0, %v2079
  %v2081 = vpop.f32.mrb[0].mxu0
  %v2082 = vpop.f32.mrb[0].mxu0
  %v2083 = vadd.f32 0.0, %v2082
  %v2084 = vpop.f32.mrb[0].mxu0
  %2085 = vmatprep.mubr.bf16.mxu0 0
  %2086 = vmatmul.mubr.bf16.gmra.mrb[0].mxu0 %v1215
  %v2087 = vpop.f32.mrb[0].mxu0
  %v2088 = vadd.f32 0.0, %v2087
  %v2089 = vpop.f32.mrb[0].mxu0
  %v2090 = vpop.f32.mrb[0].mxu0
  %v2091 = vadd.f32 0.0, %v2090
  %v2092 = vpop.f32.mrb[0].mxu0
  %2093 = vmatprep.mubr.bf16.mxu0 0
  %2094 = vmatmul.mubr.bf16.gmra.mrb[0].mxu0 %v1218
  %v2095 = vpop.f32.mrb[0].mxu0
  %v2096 = vadd.f32 0.0, %v2095
  %v2097 = vpop.f32.mrb[0].mxu0
  %v2098 = vpop.f32.mrb[0].mxu0
  %v2099 = vadd.f32 0.0, %v2098
  %v2100 = vpop.f32.mrb[0].mxu0
  %2101 = vmatprep.mubr.bf16.mxu0 0
  %2102 = vmatmul.mubr.bf16.gmra.mrb[0].mxu0 %v1221
  %v2103 = vpop.f32.mrb[0].mxu0
  %v2104 = vadd.f32 0.0, %v2103
  %v2105 = vpop.f32.mrb[0].mxu0
  %v2106 = vpop.f32.mrb[0].mxu0
  %v2107 = vadd.f32 0.0, %v2106
  %v2108 = vpop.f32.mrb[0].mxu0
  %2109 = vmatprep.mubr.bf16.mxu0 0
  %2110 = vmatmul.mubr.bf16.gmra.mrb[0].mxu0 %v1224
  %v2111 = vpop.f32.mrb[0].mxu0
  %v2112 = vadd.f32 0.0, %v2111
  %v2113 = vpop.f32.mrb[0].mxu0
  %v2114 = vpop.f32.mrb[0].mxu0
  %v2115 = vadd.f32 0.0, %v2114
  %v2116 = vpop.f32.mrb[0].mxu0
  %2117 = vmatprep.mubr.bf16.mxu0 0
  %2118 = vmatmul.mubr.bf16.gmra.mrb[0].mxu0 %v1227
  %v2119 = vpop.f32.mrb[0].mxu0
  %v2120 = vadd.f32 0.0, %v2119
  %v2121 = vpop.f32.mrb[0].mxu0
  %v2122 = vpop.f32.mrb[0].mxu0
  %v2123 = vadd.f32 0.0, %v2122
  %v2124 = vpop.f32.mrb[0].mxu0
  %2125 = vmatprep.mubr.bf16.mxu0 0
  %2126 = vmatmul.mubr.bf16.gmra.mrb[0].mxu0 %v1230
  %v2127 = vpop.f32.mrb[0].mxu0
  %v2128 = vadd.f32 0.0, %v2127
  %v2129 = vpop.f32.mrb[0].mxu0
  %v2130 = vpop.f32.mrb[0].mxu0
  %v2131 = vadd.f32 0.0, %v2130
  %v2132 = vpop.f32.mrb[0].mxu0
  %2133 = vmatprep.mubr.bf16.mxu0 0
  %2134 = vmatmul.mubr.bf16.gmra.mrb[0].mxu0 %v1233
  %v2135 = vpop.f32.mrb[0].mxu0
  %v2136 = vadd.f32 0.0, %v2135
  %v2137 = vpop.f32.mrb[0].mxu0
  %v2138 = vpop.f32.mrb[0].mxu0
  %v2139 = vadd.f32 0.0, %v2138
  %v2140 = vpop.f32.mrb[0].mxu0
  %2141 = vmatprep.mubr.bf16.mxu0 0
  %2142 = vmatmul.mubr.bf16.gmra.mrb[0].mxu0 %v1236
  %v2143 = vpop.f32.mrb[0].mxu0
  %v2144 = vadd.f32 0.0, %v2143
  %v2145 = vpop.f32.mrb[0].mxu0
  %v2146 = vpop.f32.mrb[0].mxu0
  %v2147 = vadd.f32 0.0, %v2146
  %v2148 = vpop.f32.mrb[0].mxu0
  %2149 = vmatprep.mubr.bf16.mxu0 0
  %2150 = vmatmul.mubr.bf16.gmra.mrb[0].mxu0 %v1239
  %v2151 = vpop.f32.mrb[0].mxu0
  %v2152 = vadd.f32 0.0, %v2151
  %v2153 = vpop.f32.mrb[0].mxu0
  %v2154 = vpop.f32.mrb[0].mxu0
  %v2155 = vadd.f32 0.0, %v2154
  %v2156 = vpop.f32.mrb[0].mxu0
  %2157 = vmatprep.mubr.bf16.mxu0 0
  %2158 = vmatmul.mubr.bf16.gmra.mrb[0].mxu0 %v1242
  %v2159 = vpop.f32.mrb[0].mxu0
  %v2160 = vadd.f32 0.0, %v2159
  %v2161 = vpop.f32.mrb[0].mxu0
  %v2162 = vpop.f32.mrb[0].mxu0
  %v2163 = vadd.f32 0.0, %v2162
  %v2164 = vpop.f32.mrb[0].mxu0
  %2165 = vmatprep.mubr.bf16.mxu0 0
  %2166 = vmatmul.mubr.bf16.gmra.mrb[0].mxu0 %v1245
  %v2167 = vpop.f32.mrb[0].mxu0
  %v2168 = vadd.f32 0.0, %v2167
  %v2169 = vpop.f32.mrb[0].mxu0
  %v2170 = vpop.f32.mrb[0].mxu0
  %v2171 = vadd.f32 0.0, %v2170
  %v2172 = vpop.f32.mrb[0].mxu0
  %2173 = vmatprep.mubr.bf16.mxu0 0
  %2174 = vmatmul.mubr.bf16.gmra.mrb[0].mxu0 %v1248
  %v2175 = vpop.f32.mrb[0].mxu0
  %v2176 = vadd.f32 0.0, %v2175
  %v2177 = vpop.f32.mrb[0].mxu0
  %v2178 = vpop.f32.mrb[0].mxu0
  %v2179 = vadd.f32 0.0, %v2178
  %v2180 = vpop.f32.mrb[0].mxu0
  %2181 = vmatprep.mubr.bf16.mxu0 0
  %2182 = vmatmul.mubr.bf16.gmra.mrb[0].mxu0 %v1251
  %v2183 = vpop.f32.mrb[0].mxu0
  %v2184 = vadd.f32 0.0, %v2183
  %v2185 = vpop.f32.mrb[0].mxu0
  %v2186 = vpop.f32.mrb[0].mxu0
  %v2187 = vadd.f32 0.0, %v2186
  %v2188 = vpop.f32.mrb[0].mxu0
  %2189 = vmatprep.mubr.bf16.mxu0 0
  %2190 = vmatmul.mubr.bf16.gmra.mrb[0].mxu0 %v1254
  %v2191 = vpop.f32.mrb[0].mxu0
  %v2192 = vadd.f32 0.0, %v2191
  %v2193 = vpop.f32.mrb[0].mxu0
  %v2194 = vpop.f32.mrb[0].mxu0
  %v2195 = vadd.f32 0.0, %v2194
  %v2196 = vpop.f32.mrb[0].mxu0
  %2197 = vmatprep.mubr.bf16.mxu0 0
  %2198 = vmatmul.mubr.bf16.gmra.mrb[0].mxu0 %v1257
  %v2199 = vpop.f32.mrb[0].mxu0
  %v2200 = vadd.f32 0.0, %v2199
  %v2201 = vpop.f32.mrb[0].mxu0
  %v2202 = vpop.f32.mrb[0].mxu0
  %v2203 = vadd.f32 0.0, %v2202
  %v2204 = vpop.f32.mrb[0].mxu0
  %2205 = vmatprep.mubr.bf16.mxu0 0
  %2206 = vmatmul.mubr.bf16.gmra.mrb[0].mxu0 %v1260
  %v2207 = vpop.f32.mrb[0].mxu0
  %v2208 = vadd.f32 0.0, %v2207
  %v2209 = vpop.f32.mrb[0].mxu0
  %v2210 = vpop.f32.mrb[0].mxu0
  %v2211 = vadd.f32 0.0, %v2210
  %v2212 = vpop.f32.mrb[0].mxu0
  %2213 = vmatprep.mubr.bf16.mxu0 0
  %2214 = vmatmul.mubr.bf16.gmra.mrb[0].mxu0 %v1263
  %v2215 = vpop.f32.mrb[0].mxu0
  %v2216 = vadd.f32 0.0, %v2215
  %v2217 = vpop.f32.mrb[0].mxu0
  %v2218 = vpop.f32.mrb[0].mxu0
  %v2219 = vadd.f32 0.0, %v2218
  %v2220 = vpop.f32.mrb[0].mxu0
  %2221 = vmatprep.mubr.bf16.mxu0 0
  %2222 = vmatmul.mubr.bf16.gmra.mrb[0].mxu0 %v1266
  %v2223 = vpop.f32.mrb[0].mxu0
  %v2224 = vadd.f32 0.0, %v2223
  %v2225 = vpop.f32.mrb[0].mxu0
  %v2226 = vpop.f32.mrb[0].mxu0
  %v2227 = vadd.f32 0.0, %v2226
  %v2228 = vpop.f32.mrb[0].mxu0
  %2229 = vmatprep.mubr.bf16.mxu0 0
  %2230 = vmatmul.mubr.bf16.gmra.mrb[0].mxu0 %v1269
  %v2231 = vpop.f32.mrb[0].mxu0
  %v2232 = vadd.f32 0.0, %v2231
  %v2233 = vpop.f32.mrb[0].mxu0
  %v2234 = vpop.f32.mrb[0].mxu0
  %v2235 = vadd.f32 0.0, %v2234
  %v2236 = vpop.f32.mrb[0].mxu0
  %2237 = vmatprep.mubr.bf16.mxu0 0
  %2238 = vmatmul.mubr.bf16.gmra.mrb[0].mxu0 %v1272
  %v2239 = vpop.f32.mrb[0].mxu0
  %v2240 = vadd.f32 0.0, %v2239
  %v2241 = vpop.f32.mrb[0].mxu0
  %v2242 = vpop.f32.mrb[0].mxu0
  %v2243 = vadd.f32 0.0, %v2242
  %v2244 = vpop.f32.mrb[0].mxu0
  %2245 = vmatprep.mubr.bf16.mxu0 0
  %2246 = vmatmul.mubr.bf16.gmra.mrb[0].mxu0 %v1275
  %v2247 = vpop.f32.mrb[0].mxu0
  %v2248 = vadd.f32 0.0, %v2247
  %v2249 = vpop.f32.mrb[0].mxu0
  %v2250 = vpop.f32.mrb[0].mxu0
  %v2251 = vadd.f32 0.0, %v2250
  %v2252 = vpop.f32.mrb[0].mxu0
  %2253 = vmatprep.mubr.bf16.mxu0 0
  %2254 = vmatmul.mubr.bf16.gmra.mrb[0].mxu0 %v1278
  %v2255 = vpop.f32.mrb[0].mxu0
  %v2256 = vadd.f32 0.0, %v2255
  %v2257 = vpop.f32.mrb[0].mxu0
  %v2258 = vpop.f32.mrb[0].mxu0
  %v2259 = vadd.f32 0.0, %v2258
  %v2260 = vpop.f32.mrb[0].mxu0
  %2261 = vmatprep.mubr.bf16.mxu0 0
  %2262 = vmatmul.mubr.bf16.gmra.mrb[0].mxu0 %v1281
  %v2263 = vpop.f32.mrb[0].mxu0
  %v2264 = vadd.f32 0.0, %v2263
  %v2265 = vpop.f32.mrb[0].mxu0
  %v2266 = vpop.f32.mrb[0].mxu0
  %v2267 = vadd.f32 0.0, %v2266
  %v2268 = vpop.f32.mrb[0].mxu0
  %2269 = vmatprep.mubr.bf16.mxu0 0
  %2270 = vmatmul.mubr.bf16.gmra.mrb[0].mxu0 %v1284
  %v2271 = vpop.f32.mrb[0].mxu0
  %v2272 = vadd.f32 0.0, %v2271
  %v2273 = vpop.f32.mrb[0].mxu0
  %v2274 = vpop.f32.mrb[0].mxu0
  %v2275 = vadd.f32 0.0, %v2274
  %v2276 = vpop.f32.mrb[0].mxu0
  %2277 = vmatprep.mubr.bf16.mxu0 0
  %2278 = vmatmul.mubr.bf16.gmra.mrb[0].mxu0 %v1287
  %v2279 = vpop.f32.mrb[0].mxu0
  %v2280 = vadd.f32 0.0, %v2279
  %v2281 = vpop.f32.mrb[0].mxu0
  %v2282 = vpop.f32.mrb[0].mxu0
  %v2283 = vadd.f32 0.0, %v2282
  %v2284 = vpop.f32.mrb[0].mxu0
  %2285 = vmatprep.mubr.bf16.mxu0 0
  %2286 = vmatmul.mubr.bf16.gmra.mrb[0].mxu0 %v1290
  %v2287 = vpop.f32.mrb[0].mxu0
  %v2288 = vadd.f32 0.0, %v2287
  %v2289 = vpop.f32.mrb[0].mxu0
  %v2290 = vpop.f32.mrb[0].mxu0
  %v2291 = vadd.f32 0.0, %v2290
  %v2292 = vpop.f32.mrb[0].mxu0
  %2293 = vmatprep.mubr.bf16.mxu0 0
  %2294 = vmatmul.mubr.bf16.gmra.mrb[0].mxu0 %v1293
  %v2295 = vpop.f32.mrb[0].mxu0
  %v2296 = vadd.f32 0.0, %v2295
  %v2297 = vpop.f32.mrb[0].mxu0
  %v2298 = vpop.f32.mrb[0].mxu0
  %v2299 = vadd.f32 0.0, %v2298
  %v2300 = vpop.f32.mrb[0].mxu0
  %2301 = vmatprep.mubr.bf16.mxu0 0
  %2302 = vmatmul.mubr.bf16.gmra.mrb[0].mxu0 %v1296
  %v2303 = vpop.f32.mrb[0].mxu0
  %v2304 = vadd.f32 0.0, %v2303
  %v2305 = vpop.f32.mrb[0].mxu0
  %v2306 = vpop.f32.mrb[0].mxu0
  %v2307 = vadd.f32 0.0, %v2306
  %v2308 = vpop.f32.mrb[0].mxu0
  %2309 = vmatprep.mubr.bf16.mxu0 0
  %2310 = vmatmul.mubr.bf16.gmra.mrb[0].mxu0 %v1299
  %v2311 = vpop.f32.mrb[0].mxu0
  %v2312 = vadd.f32 0.0, %v2311
  %v2313 = vpop.f32.mrb[0].mxu0
  %v2314 = vpop.f32.mrb[0].mxu0
  %v2315 = vadd.f32 0.0, %v2314
  %v2316 = vpop.f32.mrb[0].mxu0
  %2317 = vmatprep.mubr.bf16.mxu0 0
  %2318 = vmatmul.mubr.bf16.gmra.mrb[0].mxu0 %v1302
  %v2319 = vpop.f32.mrb[0].mxu0
  %v2320 = vadd.f32 0.0, %v2319
  %v2321 = vpop.f32.mrb[0].mxu0
  %v2322 = vpop.f32.mrb[0].mxu0
  %v2323 = vadd.f32 0.0, %v2322
  %v2324 = vpop.f32.mrb[0].mxu0
  %2325 = vmatprep.mubr.bf16.mxu0 0
  %2326 = vmatmul.mubr.bf16.gmra.mrb[0].mxu0 %v1305
  %v2327 = vpop.f32.mrb[0].mxu0
  %v2328 = vadd.f32 0.0, %v2327
  %v2329 = vpop.f32.mrb[0].mxu0
  %v2330 = vpop.f32.mrb[0].mxu0
  %v2331 = vadd.f32 0.0, %v2330
  %v2332 = vpop.f32.mrb[0].mxu0
  %2333 = vmatprep.mubr.bf16.mxu0 0
  %2334 = vmatmul.mubr.bf16.gmra.mrb[0].mxu0 %v1308
  %v2335 = vpop.f32.mrb[0].mxu0
  %v2336 = vadd.f32 0.0, %v2335
  %v2337 = vpop.f32.mrb[0].mxu0
  %v2338 = vpop.f32.mrb[0].mxu0
  %v2339 = vadd.f32 0.0, %v2338
  %v2340 = vpop.f32.mrb[0].mxu0
  %2341 = vmatprep.mubr.bf16.mxu0 0
  %2342 = vmatmul.mubr.bf16.gmra.mrb[0].mxu0 %v1311
  %v2343 = vpop.f32.mrb[0].mxu0
  %v2344 = vadd.f32 0.0, %v2343
  %v2345 = vpop.f32.mrb[0].mxu0
  %v2346 = vpop.f32.mrb[0].mxu0
  %v2347 = vadd.f32 0.0, %v2346
  %v2348 = vpop.f32.mrb[0].mxu0
  %2349 = vmatprep.mubr.bf16.mxu0 0
  %2350 = vmatmul.mubr.bf16.gmra.mrb[0].mxu0 %v1314
  %v2351 = vpop.f32.mrb[0].mxu0
  %v2352 = vadd.f32 0.0, %v2351
  %v2353 = vpop.f32.mrb[0].mxu0
  %v2354 = vpop.f32.mrb[0].mxu0
  %v2355 = vadd.f32 0.0, %v2354
  %v2356 = vpop.f32.mrb[0].mxu0
  %2357 = vmatprep.mubr.bf16.mxu0 0
  %2358 = vmatmul.mubr.bf16.gmra.mrb[0].mxu0 %v1317
  %v2359 = vpop.f32.mrb[0].mxu0
  %v2360 = vadd.f32 0.0, %v2359
  %v2361 = vpop.f32.mrb[0].mxu0
  %v2362 = vpop.f32.mrb[0].mxu0
  %v2363 = vadd.f32 0.0, %v2362
  %v2364 = vpop.f32.mrb[0].mxu0
  %2365 = vmatprep.mubr.bf16.mxu0 0
  %2366 = vmatmul.mubr.bf16.gmra.mrb[0].mxu0 %v1320
  %v2367 = vpop.f32.mrb[0].mxu0
  %v2368 = vadd.f32 0.0, %v2367
  %v2369 = vpop.f32.mrb[0].mxu0
  %v2370 = vpop.f32.mrb[0].mxu0
  %v2371 = vadd.f32 0.0, %v2370
  %v2372 = vpop.f32.mrb[0].mxu0
  %2373 = vmatprep.mubr.bf16.mxu0 0
  %2374 = vmatmul.mubr.bf16.gmra.mrb[0].mxu0 %v1323
  %v2375 = vpop.f32.mrb[0].mxu0
  %v2376 = vadd.f32 0.0, %v2375
  %v2377 = vpop.f32.mrb[0].mxu0
  %v2378 = vpop.f32.mrb[0].mxu0
  %v2379 = vadd.f32 0.0, %v2378
  %v2380 = vpop.f32.mrb[0].mxu0
  %2381 = vdwg.mxu0
  %vm2382 = vcmp.gt.f32.partialorder %v1360, 0.0
  %vm2383 = vcmp.gt.f32.partialorder %v1363, 0.0
  %vm2384 = vcmp.gt.f32.partialorder %v1368, 0.0
  %vm2385 = vcmp.gt.f32.partialorder %v1371, 0.0
  %vm2386 = vcmp.gt.f32.partialorder %v1376, 0.0
  %vm2387 = vcmp.gt.f32.partialorder %v1379, 0.0
  %vm2388 = vcmp.gt.f32.partialorder %v1384, 0.0
  %vm2389 = vcmp.gt.f32.partialorder %v1387, 0.0
  %vm2390 = vcmp.gt.f32.partialorder %v1392, 0.0
  %vm2391 = vcmp.gt.f32.partialorder %v1395, 0.0
  %vm2392 = vcmp.gt.f32.partialorder %v1400, 0.0
  %vm2393 = vcmp.gt.f32.partialorder %v1403, 0.0
  %vm2394 = vcmp.gt.f32.partialorder %v1408, 0.0
  %vm2395 = vcmp.gt.f32.partialorder %v1411, 0.0
  %vm2396 = vcmp.gt.f32.partialorder %v1416, 0.0
  %vm2397 = vcmp.gt.f32.partialorder %v1419, 0.0
  %vm2398 = vcmp.gt.f32.partialorder %v1424, 0.0
  %vm2399 = vcmp.gt.f32.partialorder %v1427, 0.0
  %vm2400 = vcmp.gt.f32.partialorder %v1432, 0.0
  %vm2401 = vcmp.gt.f32.partialorder %v1435, 0.0
  %vm2402 = vcmp.gt.f32.partialorder %v1440, 0.0
  %vm2403 = vcmp.gt.f32.partialorder %v1443, 0.0
  %vm2404 = vcmp.gt.f32.partialorder %v1448, 0.0
  %vm2405 = vcmp.gt.f32.partialorder %v1451, 0.0
  %vm2406 = vcmp.gt.f32.partialorder %v1456, 0.0
  %vm2407 = vcmp.gt.f32.partialorder %v1459, 0.0
  %vm2408 = vcmp.gt.f32.partialorder %v1464, 0.0
  %vm2409 = vcmp.gt.f32.partialorder %v1467, 0.0
  %vm2410 = vcmp.gt.f32.partialorder %v1472, 0.0
  %vm2411 = vcmp.gt.f32.partialorder %v1475, 0.0
  %vm2412 = vcmp.gt.f32.partialorder %v1480, 0.0
  %vm2413 = vcmp.gt.f32.partialorder %v1483, 0.0
  %vm2414 = vcmp.gt.f32.partialorder %v1488, 0.0
  %vm2415 = vcmp.gt.f32.partialorder %v1491, 0.0
  %vm2416 = vcmp.gt.f32.partialorder %v1496, 0.0
  %vm2417 = vcmp.gt.f32.partialorder %v1499, 0.0
  %vm2418 = vcmp.gt.f32.partialorder %v1504, 0.0
  %vm2419 = vcmp.gt.f32.partialorder %v1507, 0.0
  %vm2420 = vcmp.gt.f32.partialorder %v1512, 0.0
  %vm2421 = vcmp.gt.f32.partialorder %v1515, 0.0
  %vm2422 = vcmp.gt.f32.partialorder %v1520, 0.0
  %vm2423 = vcmp.gt.f32.partialorder %v1523, 0.0
  %vm2424 = vcmp.gt.f32.partialorder %v1528, 0.0
  %vm2425 = vcmp.gt.f32.partialorder %v1531, 0.0
  %vm2426 = vcmp.gt.f32.partialorder %v1536, 0.0
  %vm2427 = vcmp.gt.f32.partialorder %v1539, 0.0
  %vm2428 = vcmp.gt.f32.partialorder %v1544, 0.0
  %vm2429 = vcmp.gt.f32.partialorder %v1547, 0.0
  %vm2430 = vcmp.gt.f32.partialorder %v1552, 0.0
  %vm2431 = vcmp.gt.f32.partialorder %v1555, 0.0
  %vm2432 = vcmp.gt.f32.partialorder %v1560, 0.0
  %vm2433 = vcmp.gt.f32.partialorder %v1563, 0.0
  %vm2434 = vcmp.gt.f32.partialorder %v1568, 0.0
  %vm2435 = vcmp.gt.f32.partialorder %v1571, 0.0
  %vm2436 = vcmp.gt.f32.partialorder %v1576, 0.0
  %vm2437 = vcmp.gt.f32.partialorder %v1579, 0.0
  %vm2438 = vcmp.gt.f32.partialorder %v1584, 0.0
  %vm2439 = vcmp.gt.f32.partialorder %v1587, 0.0
  %vm2440 = vcmp.gt.f32.partialorder %v1592, 0.0
  %vm2441 = vcmp.gt.f32.partialorder %v1595, 0.0
  %vm2442 = vcmp.gt.f32.partialorder %v1600, 0.0
  %vm2443 = vcmp.gt.f32.partialorder %v1603, 0.0
  %vm2444 = vcmp.gt.f32.partialorder %v1608, 0.0
  %vm2445 = vcmp.gt.f32.partialorder %v1611, 0.0
  %vm2446 = vcmp.gt.f32.partialorder %v1616, 0.0
  %vm2447 = vcmp.gt.f32.partialorder %v1619, 0.0
  %vm2448 = vcmp.gt.f32.partialorder %v1624, 0.0
  %vm2449 = vcmp.gt.f32.partialorder %v1627, 0.0
  %vm2450 = vcmp.gt.f32.partialorder %v1632, 0.0
  %vm2451 = vcmp.gt.f32.partialorder %v1635, 0.0
  %vm2452 = vcmp.gt.f32.partialorder %v1640, 0.0
  %vm2453 = vcmp.gt.f32.partialorder %v1643, 0.0
  %vm2454 = vcmp.gt.f32.partialorder %v1648, 0.0
  %vm2455 = vcmp.gt.f32.partialorder %v1651, 0.0
  %vm2456 = vcmp.gt.f32.partialorder %v1656, 0.0
  %vm2457 = vcmp.gt.f32.partialorder %v1659, 0.0
  %vm2458 = vcmp.gt.f32.partialorder %v1664, 0.0
  %vm2459 = vcmp.gt.f32.partialorder %v1667, 0.0
  %vm2460 = vcmp.gt.f32.partialorder %v1672, 0.0
  %vm2461 = vcmp.gt.f32.partialorder %v1675, 0.0
  %vm2462 = vcmp.gt.f32.partialorder %v1680, 0.0
  %vm2463 = vcmp.gt.f32.partialorder %v1683, 0.0
  %vm2464 = vcmp.gt.f32.partialorder %v1688, 0.0
  %vm2465 = vcmp.gt.f32.partialorder %v1691, 0.0
  %vm2466 = vcmp.gt.f32.partialorder %v1696, 0.0
  %vm2467 = vcmp.gt.f32.partialorder %v1699, 0.0
  %vm2468 = vcmp.gt.f32.partialorder %v1704, 0.0
  %vm2469 = vcmp.gt.f32.partialorder %v1707, 0.0
  %vm2470 = vcmp.gt.f32.partialorder %v1712, 0.0
  %vm2471 = vcmp.gt.f32.partialorder %v1715, 0.0
  %vm2472 = vcmp.gt.f32.partialorder %v1720, 0.0
  %vm2473 = vcmp.gt.f32.partialorder %v1723, 0.0
  %vm2474 = vcmp.gt.f32.partialorder %v1728, 0.0
  %vm2475 = vcmp.gt.f32.partialorder %v1731, 0.0
  %vm2476 = vcmp.gt.f32.partialorder %v1736, 0.0
  %vm2477 = vcmp.gt.f32.partialorder %v1739, 0.0
  %vm2478 = vcmp.gt.f32.partialorder %v1744, 0.0
  %vm2479 = vcmp.gt.f32.partialorder %v1747, 0.0
  %vm2480 = vcmp.gt.f32.partialorder %v1752, 0.0
  %vm2481 = vcmp.gt.f32.partialorder %v1755, 0.0
  %vm2482 = vcmp.gt.f32.partialorder %v1760, 0.0
  %vm2483 = vcmp.gt.f32.partialorder %v1763, 0.0
  %vm2484 = vcmp.gt.f32.partialorder %v1768, 0.0
  %vm2485 = vcmp.gt.f32.partialorder %v1771, 0.0
  %vm2486 = vcmp.gt.f32.partialorder %v1776, 0.0
  %vm2487 = vcmp.gt.f32.partialorder %v1779, 0.0
  %vm2488 = vcmp.gt.f32.partialorder %v1784, 0.0
  %vm2489 = vcmp.gt.f32.partialorder %v1787, 0.0
  %vm2490 = vcmp.gt.f32.partialorder %v1792, 0.0
  %vm2491 = vcmp.gt.f32.partialorder %v1795, 0.0
  %vm2492 = vcmp.gt.f32.partialorder %v1800, 0.0
  %vm2493 = vcmp.gt.f32.partialorder %v1803, 0.0
  %vm2494 = vcmp.gt.f32.partialorder %v1808, 0.0
  %vm2495 = vcmp.gt.f32.partialorder %v1811, 0.0
  %vm2496 = vcmp.gt.f32.partialorder %v1816, 0.0
  %vm2497 = vcmp.gt.f32.partialorder %v1819, 0.0
  %vm2498 = vcmp.gt.f32.partialorder %v1824, 0.0
  %vm2499 = vcmp.gt.f32.partialorder %v1827, 0.0
  %vm2500 = vcmp.gt.f32.partialorder %v1832, 0.0
  %vm2501 = vcmp.gt.f32.partialorder %v1835, 0.0
  %vm2502 = vcmp.gt.f32.partialorder %v1840, 0.0
  %vm2503 = vcmp.gt.f32.partialorder %v1843, 0.0
  %vm2504 = vcmp.gt.f32.partialorder %v1848, 0.0
  %vm2505 = vcmp.gt.f32.partialorder %v1851, 0.0
  %vm2506 = vcmp.gt.f32.partialorder %v1856, 0.0
  %vm2507 = vcmp.gt.f32.partialorder %v1859, 0.0
  %vm2508 = vcmp.gt.f32.partialorder %v1864, 0.0
  %vm2509 = vcmp.gt.f32.partialorder %v1867, 0.0
  %vm2510 = vcmp.gt.f32.partialorder %v1872, 0.0
  %vm2511 = vcmp.gt.f32.partialorder %v1875, 0.0
  %vm2512 = vcmp.gt.f32.partialorder %v1880, 0.0
  %vm2513 = vcmp.gt.f32.partialorder %v1883, 0.0
  %vm2514 = vcmp.gt.f32.partialorder %v1888, 0.0
  %vm2515 = vcmp.gt.f32.partialorder %v1891, 0.0
  %vm2516 = vcmp.gt.f32.partialorder %v1896, 0.0
  %vm2517 = vcmp.gt.f32.partialorder %v1899, 0.0
  %vm2518 = vcmp.gt.f32.partialorder %v1904, 0.0
  %vm2519 = vcmp.gt.f32.partialorder %v1907, 0.0
  %vm2520 = vcmp.gt.f32.partialorder %v1912, 0.0
  %vm2521 = vcmp.gt.f32.partialorder %v1915, 0.0
  %vm2522 = vcmp.gt.f32.partialorder %v1920, 0.0
  %vm2523 = vcmp.gt.f32.partialorder %v1923, 0.0
  %vm2524 = vcmp.gt.f32.partialorder %v1928, 0.0
  %vm2525 = vcmp.gt.f32.partialorder %v1931, 0.0
  %vm2526 = vcmp.gt.f32.partialorder %v1936, 0.0
  %vm2527 = vcmp.gt.f32.partialorder %v1939, 0.0
  %vm2528 = vcmp.gt.f32.partialorder %v1944, 0.0
  %vm2529 = vcmp.gt.f32.partialorder %v1947, 0.0
  %vm2530 = vcmp.gt.f32.partialorder %v1952, 0.0
  %vm2531 = vcmp.gt.f32.partialorder %v1955, 0.0
  %vm2532 = vcmp.gt.f32.partialorder %v1960, 0.0
  %vm2533 = vcmp.gt.f32.partialorder %v1963, 0.0
  %vm2534 = vcmp.gt.f32.partialorder %v1968, 0.0
  %vm2535 = vcmp.gt.f32.partialorder %v1971, 0.0
  %vm2536 = vcmp.gt.f32.partialorder %v1976, 0.0
  %vm2537 = vcmp.gt.f32.partialorder %v1979, 0.0
  %vm2538 = vcmp.gt.f32.partialorder %v1984, 0.0
  %vm2539 = vcmp.gt.f32.partialorder %v1987, 0.0
  %vm2540 = vcmp.gt.f32.partialorder %v1992, 0.0
  %vm2541 = vcmp.gt.f32.partialorder %v1995, 0.0
  %vm2542 = vcmp.gt.f32.partialorder %v2000, 0.0
  %vm2543 = vcmp.gt.f32.partialorder %v2003, 0.0
  %vm2544 = vcmp.gt.f32.partialorder %v2008, 0.0
  %vm2545 = vcmp.gt.f32.partialorder %v2011, 0.0
  %vm2546 = vcmp.gt.f32.partialorder %v2016, 0.0
  %vm2547 = vcmp.gt.f32.partialorder %v2019, 0.0
  %vm2548 = vcmp.gt.f32.partialorder %v2024, 0.0
  %vm2549 = vcmp.gt.f32.partialorder %v2027, 0.0
  %vm2550 = vcmp.gt.f32.partialorder %v2032, 0.0
  %vm2551 = vcmp.gt.f32.partialorder %v2035, 0.0
  %vm2552 = vcmp.gt.f32.partialorder %v2040, 0.0
  %vm2553 = vcmp.gt.f32.partialorder %v2043, 0.0
  %vm2554 = vcmp.gt.f32.partialorder %v2048, 0.0
  %vm2555 = vcmp.gt.f32.partialorder %v2051, 0.0
  %vm2556 = vcmp.gt.f32.partialorder %v2056, 0.0
  %vm2557 = vcmp.gt.f32.partialorder %v2059, 0.0
  %vm2558 = vcmp.gt.f32.partialorder %v2064, 0.0
  %vm2559 = vcmp.gt.f32.partialorder %v2067, 0.0
  %vm2560 = vcmp.gt.f32.partialorder %v2072, 0.0
  %vm2561 = vcmp.gt.f32.partialorder %v2075, 0.0
  %vm2562 = vcmp.gt.f32.partialorder %v2080, 0.0
  %vm2563 = vcmp.gt.f32.partialorder %v2083, 0.0
  %vm2564 = vcmp.gt.f32.partialorder %v2088, 0.0
  %vm2565 = vcmp.gt.f32.partialorder %v2091, 0.0
  %vm2566 = vcmp.gt.f32.partialorder %v2096, 0.0
  %vm2567 = vcmp.gt.f32.partialorder %v2099, 0.0
  %vm2568 = vcmp.gt.f32.partialorder %v2104, 0.0
  %vm2569 = vcmp.gt.f32.partialorder %v2107, 0.0
  %vm2570 = vcmp.gt.f32.partialorder %v2112, 0.0
  %vm2571 = vcmp.gt.f32.partialorder %v2115, 0.0
  %vm2572 = vcmp.gt.f32.partialorder %v2120, 0.0
  %vm2573 = vcmp.gt.f32.partialorder %v2123, 0.0
  %vm2574 = vcmp.gt.f32.partialorder %v2128, 0.0
  %vm2575 = vcmp.gt.f32.partialorder %v2131, 0.0
  %vm2576 = vcmp.gt.f32.partialorder %v2136, 0.0
  %vm2577 = vcmp.gt.f32.partialorder %v2139, 0.0
  %vm2578 = vcmp.gt.f32.partialorder %v2144, 0.0
  %vm2579 = vcmp.gt.f32.partialorder %v2147, 0.0
  %vm2580 = vcmp.gt.f32.partialorder %v2152, 0.0
  %vm2581 = vcmp.gt.f32.partialorder %v2155, 0.0
  %vm2582 = vcmp.gt.f32.partialorder %v2160, 0.0
  %vm2583 = vcmp.gt.f32.partialorder %v2163, 0.0
  %vm2584 = vcmp.gt.f32.partialorder %v2168, 0.0
  %vm2585 = vcmp.gt.f32.partialorder %v2171, 0.0
  %vm2586 = vcmp.gt.f32.partialorder %v2176, 0.0
  %vm2587 = vcmp.gt.f32.partialorder %v2179, 0.0
  %vm2588 = vcmp.gt.f32.partialorder %v2184, 0.0
  %vm2589 = vcmp.gt.f32.partialorder %v2187, 0.0
  %vm2590 = vcmp.gt.f32.partialorder %v2192, 0.0
  %vm2591 = vcmp.gt.f32.partialorder %v2195, 0.0
  %vm2592 = vcmp.gt.f32.partialorder %v2200, 0.0
  %vm2593 = vcmp.gt.f32.partialorder %v2203, 0.0
  %vm2594 = vcmp.gt.f32.partialorder %v2208, 0.0
  %vm2595 = vcmp.gt.f32.partialorder %v2211, 0.0
  %vm2596 = vcmp.gt.f32.partialorder %v2216, 0.0
  %vm2597 = vcmp.gt.f32.partialorder %v2219, 0.0
  %vm2598 = vcmp.gt.f32.partialorder %v2224, 0.0
  %vm2599 = vcmp.gt.f32.partialorder %v2227, 0.0
  %vm2600 = vcmp.gt.f32.partialorder %v2232, 0.0
  %vm2601 = vcmp.gt.f32.partialorder %v2235, 0.0
  %vm2602 = vcmp.gt.f32.partialorder %v2240, 0.0
  %vm2603 = vcmp.gt.f32.partialorder %v2243, 0.0
  %vm2604 = vcmp.gt.f32.partialorder %v2248, 0.0
  %vm2605 = vcmp.gt.f32.partialorder %v2251, 0.0
  %vm2606 = vcmp.gt.f32.partialorder %v2256, 0.0
  %vm2607 = vcmp.gt.f32.partialorder %v2259, 0.0
  %vm2608 = vcmp.gt.f32.partialorder %v2264, 0.0
  %vm2609 = vcmp.gt.f32.partialorder %v2267, 0.0
  %vm2610 = vcmp.gt.f32.partialorder %v2272, 0.0
  %vm2611 = vcmp.gt.f32.partialorder %v2275, 0.0
  %vm2612 = vcmp.gt.f32.partialorder %v2280, 0.0
  %vm2613 = vcmp.gt.f32.partialorder %v2283, 0.0
  %vm2614 = vcmp.gt.f32.partialorder %v2288, 0.0
  %vm2615 = vcmp.gt.f32.partialorder %v2291, 0.0
  %vm2616 = vcmp.gt.f32.partialorder %v2296, 0.0
  %vm2617 = vcmp.gt.f32.partialorder %v2299, 0.0
  %vm2618 = vcmp.gt.f32.partialorder %v2304, 0.0
  %vm2619 = vcmp.gt.f32.partialorder %v2307, 0.0
  %vm2620 = vcmp.gt.f32.partialorder %v2312, 0.0
  %vm2621 = vcmp.gt.f32.partialorder %v2315, 0.0
  %vm2622 = vcmp.gt.f32.partialorder %v2320, 0.0
  %vm2623 = vcmp.gt.f32.partialorder %v2323, 0.0
  %vm2624 = vcmp.gt.f32.partialorder %v2328, 0.0
  %vm2625 = vcmp.gt.f32.partialorder %v2331, 0.0
  %vm2626 = vcmp.gt.f32.partialorder %v2336, 0.0
  %vm2627 = vcmp.gt.f32.partialorder %v2339, 0.0
  %vm2628 = vcmp.gt.f32.partialorder %v2344, 0.0
  %vm2629 = vcmp.gt.f32.partialorder %v2347, 0.0
  %vm2630 = vcmp.gt.f32.partialorder %v2352, 0.0
  %vm2631 = vcmp.gt.f32.partialorder %v2355, 0.0
  %vm2632 = vcmp.gt.f32.partialorder %v2360, 0.0
  %vm2633 = vcmp.gt.f32.partialorder %v2363, 0.0
  %vm2634 = vcmp.gt.f32.partialorder %v2368, 0.0
  %vm2635 = vcmp.gt.f32.partialorder %v2371, 0.0
  %vm2636 = vcmp.gt.f32.partialorder %v2376, 0.0
  %vm2637 = vcmp.gt.f32.partialorder %v2379, 0.0
  %v2638 = vmul.f32 %v1360, 0.2
  %v2639 = vmul.f32 %v1363, 0.2
  %v2640 = vmul.f32 %v1368, 0.2
  %v2641 = vmul.f32 %v1371, 0.2
  %v2642 = vmul.f32 %v1376, 0.2
  %v2643 = vmul.f32 %v1379, 0.2
  %v2644 = vmul.f32 %v1384, 0.2
  %v2645 = vmul.f32 %v1387, 0.2
  %v2646 = vmul.f32 %v1392, 0.2
  %v2647 = vmul.f32 %v1395, 0.2
  %v2648 = vmul.f32 %v1400, 0.2
  %v2649 = vmul.f32 %v1403, 0.2
  %v2650 = vmul.f32 %v1408, 0.2
  %v2651 = vmul.f32 %v1411, 0.2
  %v2652 = vmul.f32 %v1416, 0.2
  %v2653 = vmul.f32 %v1419, 0.2
  %v2654 = vmul.f32 %v1424, 0.2
  %v2655 = vmul.f32 %v1427, 0.2
  %v2656 = vmul.f32 %v1432, 0.2
  %v2657 = vmul.f32 %v1435, 0.2
  %v2658 = vmul.f32 %v1440, 0.2
  %v2659 = vmul.f32 %v1443, 0.2
  %v2660 = vmul.f32 %v1448, 0.2
  %v2661 = vmul.f32 %v1451, 0.2
  %v2662 = vmul.f32 %v1456, 0.2
  %v2663 = vmul.f32 %v1459, 0.2
  %v2664 = vmul.f32 %v1464, 0.2
  %v2665 = vmul.f32 %v1467, 0.2
  %v2666 = vmul.f32 %v1472, 0.2
  %v2667 = vmul.f32 %v1475, 0.2
  %v2668 = vmul.f32 %v1480, 0.2
  %v2669 = vmul.f32 %v1483, 0.2
  %v2670 = vmul.f32 %v1488, 0.2
  %v2671 = vmul.f32 %v1491, 0.2
  %v2672 = vmul.f32 %v1496, 0.2
  %v2673 = vmul.f32 %v1499, 0.2
  %v2674 = vmul.f32 %v1504, 0.2
  %v2675 = vmul.f32 %v1507, 0.2
  %v2676 = vmul.f32 %v1512, 0.2
  %v2677 = vmul.f32 %v1515, 0.2
  %v2678 = vmul.f32 %v1520, 0.2
  %v2679 = vmul.f32 %v1523, 0.2
  %v2680 = vmul.f32 %v1528, 0.2
  %v2681 = vmul.f32 %v1531, 0.2
  %v2682 = vmul.f32 %v1536, 0.2
  %v2683 = vmul.f32 %v1539, 0.2
  %v2684 = vmul.f32 %v1544, 0.2
  %v2685 = vmul.f32 %v1547, 0.2
  %v2686 = vmul.f32 %v1552, 0.2
  %v2687 = vmul.f32 %v1555, 0.2
  %v2688 = vmul.f32 %v1560, 0.2
  %v2689 = vmul.f32 %v1563, 0.2
  %v2690 = vmul.f32 %v1568, 0.2
  %v2691 = vmul.f32 %v1571, 0.2
  %v2692 = vmul.f32 %v1576, 0.2
  %v2693 = vmul.f32 %v1579, 0.2
  %v2694 = vmul.f32 %v1584, 0.2
  %v2695 = vmul.f32 %v1587, 0.2
  %v2696 = vmul.f32 %v1592, 0.2
  %v2697 = vmul.f32 %v1595, 0.2
  %v2698 = vmul.f32 %v1600, 0.2
  %v2699 = vmul.f32 %v1603, 0.2
  %v2700 = vmul.f32 %v1608, 0.2
  %v2701 = vmul.f32 %v1611, 0.2
  %v2702 = vmul.f32 %v1616, 0.2
  %v2703 = vmul.f32 %v1619, 0.2
  %v2704 = vmul.f32 %v1624, 0.2
  %v2705 = vmul.f32 %v1627, 0.2
  %v2706 = vmul.f32 %v1632, 0.2
  %v2707 = vmul.f32 %v1635, 0.2
  %v2708 = vmul.f32 %v1640, 0.2
  %v2709 = vmul.f32 %v1643, 0.2
  %v2710 = vmul.f32 %v1648, 0.2
  %v2711 = vmul.f32 %v1651, 0.2
  %v2712 = vmul.f32 %v1656, 0.2
  %v2713 = vmul.f32 %v1659, 0.2
  %v2714 = vmul.f32 %v1664, 0.2
  %v2715 = vmul.f32 %v1667, 0.2
  %v2716 = vmul.f32 %v1672, 0.2
  %v2717 = vmul.f32 %v1675, 0.2
  %v2718 = vmul.f32 %v1680, 0.2
  %v2719 = vmul.f32 %v1683, 0.2
  %v2720 = vmul.f32 %v1688, 0.2
  %v2721 = vmul.f32 %v1691, 0.2
  %v2722 = vmul.f32 %v1696, 0.2
  %v2723 = vmul.f32 %v1699, 0.2
  %v2724 = vmul.f32 %v1704, 0.2
  %v2725 = vmul.f32 %v1707, 0.2
  %v2726 = vmul.f32 %v1712, 0.2
  %v2727 = vmul.f32 %v1715, 0.2
  %v2728 = vmul.f32 %v1720, 0.2
  %v2729 = vmul.f32 %v1723, 0.2
  %v2730 = vmul.f32 %v1728, 0.2
  %v2731 = vmul.f32 %v1731, 0.2
  %v2732 = vmul.f32 %v1736, 0.2
  %v2733 = vmul.f32 %v1739, 0.2
  %v2734 = vmul.f32 %v1744, 0.2
  %v2735 = vmul.f32 %v1747, 0.2
  %v2736 = vmul.f32 %v1752, 0.2
  %v2737 = vmul.f32 %v1755, 0.2
  %v2738 = vmul.f32 %v1760, 0.2
  %v2739 = vmul.f32 %v1763, 0.2
  %v2740 = vmul.f32 %v1768, 0.2
  %v2741 = vmul.f32 %v1771, 0.2
  %v2742 = vmul.f32 %v1776, 0.2
  %v2743 = vmul.f32 %v1779, 0.2
  %v2744 = vmul.f32 %v1784, 0.2
  %v2745 = vmul.f32 %v1787, 0.2
  %v2746 = vmul.f32 %v1792, 0.2
  %v2747 = vmul.f32 %v1795, 0.2
  %v2748 = vmul.f32 %v1800, 0.2
  %v2749 = vmul.f32 %v1803, 0.2
  %v2750 = vmul.f32 %v1808, 0.2
  %v2751 = vmul.f32 %v1811, 0.2
  %v2752 = vmul.f32 %v1816, 0.2
  %v2753 = vmul.f32 %v1819, 0.2
  %v2754 = vmul.f32 %v1824, 0.2
  %v2755 = vmul.f32 %v1827, 0.2
  %v2756 = vmul.f32 %v1832, 0.2
  %v2757 = vmul.f32 %v1835, 0.2
  %v2758 = vmul.f32 %v1840, 0.2
  %v2759 = vmul.f32 %v1843, 0.2
  %v2760 = vmul.f32 %v1848, 0.2
  %v2761 = vmul.f32 %v1851, 0.2
  %v2762 = vmul.f32 %v1856, 0.2
  %v2763 = vmul.f32 %v1859, 0.2
  %v2764 = vmul.f32 %v1864, 0.2
  %v2765 = vmul.f32 %v1867, 0.2
  %v2766 = vmul.f32 %v1872, 0.2
  %v2767 = vmul.f32 %v1875, 0.2
  %v2768 = vmul.f32 %v1880, 0.2
  %v2769 = vmul.f32 %v1883, 0.2
  %v2770 = vmul.f32 %v1888, 0.2
  %v2771 = vmul.f32 %v1891, 0.2
  %v2772 = vmul.f32 %v1896, 0.2
  %v2773 = vmul.f32 %v1899, 0.2
  %v2774 = vmul.f32 %v1904, 0.2
  %v2775 = vmul.f32 %v1907, 0.2
  %v2776 = vmul.f32 %v1912, 0.2
  %v2777 = vmul.f32 %v1915, 0.2
  %v2778 = vmul.f32 %v1920, 0.2
  %v2779 = vmul.f32 %v1923, 0.2
  %v2780 = vmul.f32 %v1928, 0.2
  %v2781 = vmul.f32 %v1931, 0.2
  %v2782 = vmul.f32 %v1936, 0.2
  %v2783 = vmul.f32 %v1939, 0.2
  %v2784 = vmul.f32 %v1944, 0.2
  %v2785 = vmul.f32 %v1947, 0.2
  %v2786 = vmul.f32 %v1952, 0.2
  %v2787 = vmul.f32 %v1955, 0.2
  %v2788 = vmul.f32 %v1960, 0.2
  %v2789 = vmul.f32 %v1963, 0.2
  %v2790 = vmul.f32 %v1968, 0.2
  %v2791 = vmul.f32 %v1971, 0.2
  %v2792 = vmul.f32 %v1976, 0.2
  %v2793 = vmul.f32 %v1979, 0.2
  %v2794 = vmul.f32 %v1984, 0.2
  %v2795 = vmul.f32 %v1987, 0.2
  %v2796 = vmul.f32 %v1992, 0.2
  %v2797 = vmul.f32 %v1995, 0.2
  %v2798 = vmul.f32 %v2000, 0.2
  %v2799 = vmul.f32 %v2003, 0.2
  %v2800 = vmul.f32 %v2008, 0.2
  %v2801 = vmul.f32 %v2011, 0.2
  %v2802 = vmul.f32 %v2016, 0.2
  %v2803 = vmul.f32 %v2019, 0.2
  %v2804 = vmul.f32 %v2024, 0.2
  %v2805 = vmul.f32 %v2027, 0.2
  %v2806 = vmul.f32 %v2032, 0.2
  %v2807 = vmul.f32 %v2035, 0.2
  %v2808 = vmul.f32 %v2040, 0.2
  %v2809 = vmul.f32 %v2043, 0.2
  %v2810 = vmul.f32 %v2048, 0.2
  %v2811 = vmul.f32 %v2051, 0.2
  %v2812 = vmul.f32 %v2056, 0.2
  %v2813 = vmul.f32 %v2059, 0.2
  %v2814 = vmul.f32 %v2064, 0.2
  %v2815 = vmul.f32 %v2067, 0.2
  %v2816 = vmul.f32 %v2072, 0.2
  %v2817 = vmul.f32 %v2075, 0.2
  %v2818 = vmul.f32 %v2080, 0.2
  %v2819 = vmul.f32 %v2083, 0.2
  %v2820 = vmul.f32 %v2088, 0.2
  %v2821 = vmul.f32 %v2091, 0.2
  %v2822 = vmul.f32 %v2096, 0.2
  %v2823 = vmul.f32 %v2099, 0.2
  %v2824 = vmul.f32 %v2104, 0.2
  %v2825 = vmul.f32 %v2107, 0.2
  %v2826 = vmul.f32 %v2112, 0.2
  %v2827 = vmul.f32 %v2115, 0.2
  %v2828 = vmul.f32 %v2120, 0.2
  %v2829 = vmul.f32 %v2123, 0.2
  %v2830 = vmul.f32 %v2128, 0.2
  %v2831 = vmul.f32 %v2131, 0.2
  %v2832 = vmul.f32 %v2136, 0.2
  %v2833 = vmul.f32 %v2139, 0.2
  %v2834 = vmul.f32 %v2144, 0.2
  %v2835 = vmul.f32 %v2147, 0.2
  %v2836 = vmul.f32 %v2152, 0.2
  %v2837 = vmul.f32 %v2155, 0.2
  %v2838 = vmul.f32 %v2160, 0.2
  %v2839 = vmul.f32 %v2163, 0.2
  %v2840 = vmul.f32 %v2168, 0.2
  %v2841 = vmul.f32 %v2171, 0.2
  %v2842 = vmul.f32 %v2176, 0.2
  %v2843 = vmul.f32 %v2179, 0.2
  %v2844 = vmul.f32 %v2184, 0.2
  %v2845 = vmul.f32 %v2187, 0.2
  %v2846 = vmul.f32 %v2192, 0.2
  %v2847 = vmul.f32 %v2195, 0.2
  %v2848 = vmul.f32 %v2200, 0.2
  %v2849 = vmul.f32 %v2203, 0.2
  %v2850 = vmul.f32 %v2208, 0.2
  %v2851 = vmul.f32 %v2211, 0.2
  %v2852 = vmul.f32 %v2216, 0.2
  %v2853 = vmul.f32 %v2219, 0.2
  %v2854 = vmul.f32 %v2224, 0.2
  %v2855 = vmul.f32 %v2227, 0.2
  %v2856 = vmul.f32 %v2232, 0.2
  %v2857 = vmul.f32 %v2235, 0.2
  %v2858 = vmul.f32 %v2240, 0.2
  %v2859 = vmul.f32 %v2243, 0.2
  %v2860 = vmul.f32 %v2248, 0.2
  %v2861 = vmul.f32 %v2251, 0.2
  %v2862 = vmul.f32 %v2256, 0.2
  %v2863 = vmul.f32 %v2259, 0.2
  %v2864 = vmul.f32 %v2264, 0.2
  %v2865 = vmul.f32 %v2267, 0.2
  %v2866 = vmul.f32 %v2272, 0.2
  %v2867 = vmul.f32 %v2275, 0.2
  %v2868 = vmul.f32 %v2280, 0.2
  %v2869 = vmul.f32 %v2283, 0.2
  %v2870 = vmul.f32 %v2288, 0.2
  %v2871 = vmul.f32 %v2291, 0.2
  %v2872 = vmul.f32 %v2296, 0.2
  %v2873 = vmul.f32 %v2299, 0.2
  %v2874 = vmul.f32 %v2304, 0.2
  %v2875 = vmul.f32 %v2307, 0.2
  %v2876 = vmul.f32 %v2312, 0.2
  %v2877 = vmul.f32 %v2315, 0.2
  %v2878 = vmul.f32 %v2320, 0.2
  %v2879 = vmul.f32 %v2323, 0.2
  %v2880 = vmul.f32 %v2328, 0.2
  %v2881 = vmul.f32 %v2331, 0.2
  %v2882 = vmul.f32 %v2336, 0.2
  %v2883 = vmul.f32 %v2339, 0.2
  %v2884 = vmul.f32 %v2344, 0.2
  %v2885 = vmul.f32 %v2347, 0.2
  %v2886 = vmul.f32 %v2352, 0.2
  %v2887 = vmul.f32 %v2355, 0.2
  %v2888 = vmul.f32 %v2360, 0.2
  %v2889 = vmul.f32 %v2363, 0.2
  %v2890 = vmul.f32 %v2368, 0.2
  %v2891 = vmul.f32 %v2371, 0.2
  %v2892 = vmul.f32 %v2376, 0.2
  %v2893 = vmul.f32 %v2379, 0.2
  %v2894 = vsel %vm2382, %v1360, %v2638
  %v2895 = vsel %vm2383, %v1363, %v2639
  %v2896 = vsel %vm2384, %v1368, %v2640
  %v2897 = vsel %vm2385, %v1371, %v2641
  %v2898 = vsel %vm2386, %v1376, %v2642
  %v2899 = vsel %vm2387, %v1379, %v2643
  %v2900 = vsel %vm2388, %v1384, %v2644
  %v2901 = vsel %vm2389, %v1387, %v2645
  %v2902 = vsel %vm2390, %v1392, %v2646
  %v2903 = vsel %vm2391, %v1395, %v2647
  %v2904 = vsel %vm2392, %v1400, %v2648
  %v2905 = vsel %vm2393, %v1403, %v2649
  %v2906 = vsel %vm2394, %v1408, %v2650
  %v2907 = vsel %vm2395, %v1411, %v2651
  %v2908 = vsel %vm2396, %v1416, %v2652
  %v2909 = vsel %vm2397, %v1419, %v2653
  %v2910 = vsel %vm2398, %v1424, %v2654
  %v2911 = vsel %vm2399, %v1427, %v2655
  %v2912 = vsel %vm2400, %v1432, %v2656
  %v2913 = vsel %vm2401, %v1435, %v2657
  %v2914 = vsel %vm2402, %v1440, %v2658
  %v2915 = vsel %vm2403, %v1443, %v2659
  %v2916 = vsel %vm2404, %v1448, %v2660
  %v2917 = vsel %vm2405, %v1451, %v2661
  %v2918 = vsel %vm2406, %v1456, %v2662
  %v2919 = vsel %vm2407, %v1459, %v2663
  %v2920 = vsel %vm2408, %v1464, %v2664
  %v2921 = vsel %vm2409, %v1467, %v2665
  %v2922 = vsel %vm2410, %v1472, %v2666
  %v2923 = vsel %vm2411, %v1475, %v2667
  %v2924 = vsel %vm2412, %v1480, %v2668
  %v2925 = vsel %vm2413, %v1483, %v2669
  %v2926 = vsel %vm2414, %v1488, %v2670
  %v2927 = vsel %vm2415, %v1491, %v2671
  %v2928 = vsel %vm2416, %v1496, %v2672
  %v2929 = vsel %vm2417, %v1499, %v2673
  %v2930 = vsel %vm2418, %v1504, %v2674
  %v2931 = vsel %vm2419, %v1507, %v2675
  %v2932 = vsel %vm2420, %v1512, %v2676
  %v2933 = vsel %vm2421, %v1515, %v2677
  %v2934 = vsel %vm2422, %v1520, %v2678
  %v2935 = vsel %vm2423, %v1523, %v2679
  %v2936 = vsel %vm2424, %v1528, %v2680
  %v2937 = vsel %vm2425, %v1531, %v2681
  %v2938 = vsel %vm2426, %v1536, %v2682
  %v2939 = vsel %vm2427, %v1539, %v2683
  %v2940 = vsel %vm2428, %v1544, %v2684
  %v2941 = vsel %vm2429, %v1547, %v2685
  %v2942 = vsel %vm2430, %v1552, %v2686
  %v2943 = vsel %vm2431, %v1555, %v2687
  %v2944 = vsel %vm2432, %v1560, %v2688
  %v2945 = vsel %vm2433, %v1563, %v2689
  %v2946 = vsel %vm2434, %v1568, %v2690
  %v2947 = vsel %vm2435, %v1571, %v2691
  %v2948 = vsel %vm2436, %v1576, %v2692
  %v2949 = vsel %vm2437, %v1579, %v2693
  %v2950 = vsel %vm2438, %v1584, %v2694
  %v2951 = vsel %vm2439, %v1587, %v2695
  %v2952 = vsel %vm2440, %v1592, %v2696
  %v2953 = vsel %vm2441, %v1595, %v2697
  %v2954 = vsel %vm2442, %v1600, %v2698
  %v2955 = vsel %vm2443, %v1603, %v2699
  %v2956 = vsel %vm2444, %v1608, %v2700
  %v2957 = vsel %vm2445, %v1611, %v2701
  %v2958 = vsel %vm2446, %v1616, %v2702
  %v2959 = vsel %vm2447, %v1619, %v2703
  %v2960 = vsel %vm2448, %v1624, %v2704
  %v2961 = vsel %vm2449, %v1627, %v2705
  %v2962 = vsel %vm2450, %v1632, %v2706
  %v2963 = vsel %vm2451, %v1635, %v2707
  %v2964 = vsel %vm2452, %v1640, %v2708
  %v2965 = vsel %vm2453, %v1643, %v2709
  %v2966 = vsel %vm2454, %v1648, %v2710
  %v2967 = vsel %vm2455, %v1651, %v2711
  %v2968 = vsel %vm2456, %v1656, %v2712
  %v2969 = vsel %vm2457, %v1659, %v2713
  %v2970 = vsel %vm2458, %v1664, %v2714
  %v2971 = vsel %vm2459, %v1667, %v2715
  %v2972 = vsel %vm2460, %v1672, %v2716
  %v2973 = vsel %vm2461, %v1675, %v2717
  %v2974 = vsel %vm2462, %v1680, %v2718
  %v2975 = vsel %vm2463, %v1683, %v2719
  %v2976 = vsel %vm2464, %v1688, %v2720
  %v2977 = vsel %vm2465, %v1691, %v2721
  %v2978 = vsel %vm2466, %v1696, %v2722
  %v2979 = vsel %vm2467, %v1699, %v2723
  %v2980 = vsel %vm2468, %v1704, %v2724
  %v2981 = vsel %vm2469, %v1707, %v2725
  %v2982 = vsel %vm2470, %v1712, %v2726
  %v2983 = vsel %vm2471, %v1715, %v2727
  %v2984 = vsel %vm2472, %v1720, %v2728
  %v2985 = vsel %vm2473, %v1723, %v2729
  %v2986 = vsel %vm2474, %v1728, %v2730
  %v2987 = vsel %vm2475, %v1731, %v2731
  %v2988 = vsel %vm2476, %v1736, %v2732
  %v2989 = vsel %vm2477, %v1739, %v2733
  %v2990 = vsel %vm2478, %v1744, %v2734
  %v2991 = vsel %vm2479, %v1747, %v2735
  %v2992 = vsel %vm2480, %v1752, %v2736
  %v2993 = vsel %vm2481, %v1755, %v2737
  %v2994 = vsel %vm2482, %v1760, %v2738
  %v2995 = vsel %vm2483, %v1763, %v2739
  %v2996 = vsel %vm2484, %v1768, %v2740
  %v2997 = vsel %vm2485, %v1771, %v2741
  %v2998 = vsel %vm2486, %v1776, %v2742
  %v2999 = vsel %vm2487, %v1779, %v2743
  %v3000 = vsel %vm2488, %v1784, %v2744
  %v3001 = vsel %vm2489, %v1787, %v2745
  %v3002 = vsel %vm2490, %v1792, %v2746
  %v3003 = vsel %vm2491, %v1795, %v2747
  %v3004 = vsel %vm2492, %v1800, %v2748
  %v3005 = vsel %vm2493, %v1803, %v2749
  %v3006 = vsel %vm2494, %v1808, %v2750
  %v3007 = vsel %vm2495, %v1811, %v2751
  %v3008 = vsel %vm2496, %v1816, %v2752
  %v3009 = vsel %vm2497, %v1819, %v2753
  %v3010 = vsel %vm2498, %v1824, %v2754
  %v3011 = vsel %vm2499, %v1827, %v2755
  %v3012 = vsel %vm2500, %v1832, %v2756
  %v3013 = vsel %vm2501, %v1835, %v2757
  %v3014 = vsel %vm2502, %v1840, %v2758
  %v3015 = vsel %vm2503, %v1843, %v2759
  %v3016 = vsel %vm2504, %v1848, %v2760
  %v3017 = vsel %vm2505, %v1851, %v2761
  %v3018 = vsel %vm2506, %v1856, %v2762
  %v3019 = vsel %vm2507, %v1859, %v2763
  %v3020 = vsel %vm2508, %v1864, %v2764
  %v3021 = vsel %vm2509, %v1867, %v2765
  %v3022 = vsel %vm2510, %v1872, %v2766
  %v3023 = vsel %vm2511, %v1875, %v2767
  %v3024 = vsel %vm2512, %v1880, %v2768
  %v3025 = vsel %vm2513, %v1883, %v2769
  %v3026 = vsel %vm2514, %v1888, %v2770
  %v3027 = vsel %vm2515, %v1891, %v2771
  %v3028 = vsel %vm2516, %v1896, %v2772
  %v3029 = vsel %vm2517, %v1899, %v2773
  %v3030 = vsel %vm2518, %v1904, %v2774
  %v3031 = vsel %vm2519, %v1907, %v2775
  %v3032 = vsel %vm2520, %v1912, %v2776
  %v3033 = vsel %vm2521, %v1915, %v2777
  %v3034 = vsel %vm2522, %v1920, %v2778
  %v3035 = vsel %vm2523, %v1923, %v2779
  %v3036 = vsel %vm2524, %v1928, %v2780
  %v3037 = vsel %vm2525, %v1931, %v2781
  %v3038 = vsel %vm2526, %v1936, %v2782
  %v3039 = vsel %vm2527, %v1939, %v2783
  %v3040 = vsel %vm2528, %v1944, %v2784
  %v3041 = vsel %vm2529, %v1947, %v2785
  %v3042 = vsel %vm2530, %v1952, %v2786
  %v3043 = vsel %vm2531, %v1955, %v2787
  %v3044 = vsel %vm2532, %v1960, %v2788
  %v3045 = vsel %vm2533, %v1963, %v2789
  %v3046 = vsel %vm2534, %v1968, %v2790
  %v3047 = vsel %vm2535, %v1971, %v2791
  %v3048 = vsel %vm2536, %v1976, %v2792
  %v3049 = vsel %vm2537, %v1979, %v2793
  %v3050 = vsel %vm2538, %v1984, %v2794
  %v3051 = vsel %vm2539, %v1987, %v2795
  %v3052 = vsel %vm2540, %v1992, %v2796
  %v3053 = vsel %vm2541, %v1995, %v2797
  %v3054 = vsel %vm2542, %v2000, %v2798
  %v3055 = vsel %vm2543, %v2003, %v2799
  %v3056 = vsel %vm2544, %v2008, %v2800
  %v3057 = vsel %vm2545, %v2011, %v2801
  %v3058 = vsel %vm2546, %v2016, %v2802
  %v3059 = vsel %vm2547, %v2019, %v2803
  %v3060 = vsel %vm2548, %v2024, %v2804
  %v3061 = vsel %vm2549, %v2027, %v2805
  %v3062 = vsel %vm2550, %v2032, %v2806
  %v3063 = vsel %vm2551, %v2035, %v2807
  %v3064 = vsel %vm2552, %v2040, %v2808
  %v3065 = vsel %vm2553, %v2043, %v2809
  %v3066 = vsel %vm2554, %v2048, %v2810
  %v3067 = vsel %vm2555, %v2051, %v2811
  %v3068 = vsel %vm2556, %v2056, %v2812
  %v3069 = vsel %vm2557, %v2059, %v2813
  %v3070 = vsel %vm2558, %v2064, %v2814
  %v3071 = vsel %vm2559, %v2067, %v2815
  %v3072 = vsel %vm2560, %v2072, %v2816
  %v3073 = vsel %vm2561, %v2075, %v2817
  %v3074 = vsel %vm2562, %v2080, %v2818
  %v3075 = vsel %vm2563, %v2083, %v2819
  %v3076 = vsel %vm2564, %v2088, %v2820
  %v3077 = vsel %vm2565, %v2091, %v2821
  %v3078 = vsel %vm2566, %v2096, %v2822
  %v3079 = vsel %vm2567, %v2099, %v2823
  %v3080 = vsel %vm2568, %v2104, %v2824
  %v3081 = vsel %vm2569, %v2107, %v2825
  %v3082 = vsel %vm2570, %v2112, %v2826
  %v3083 = vsel %vm2571, %v2115, %v2827
  %v3084 = vsel %vm2572, %v2120, %v2828
  %v3085 = vsel %vm2573, %v2123, %v2829
  %v3086 = vsel %vm2574, %v2128, %v2830
  %v3087 = vsel %vm2575, %v2131, %v2831
  %v3088 = vsel %vm2576, %v2136, %v2832
  %v3089 = vsel %vm2577, %v2139, %v2833
  %v3090 = vsel %vm2578, %v2144, %v2834
  %v3091 = vsel %vm2579, %v2147, %v2835
  %v3092 = vsel %vm2580, %v2152, %v2836
  %v3093 = vsel %vm2581, %v2155, %v2837
  %v3094 = vsel %vm2582, %v2160, %v2838
  %v3095 = vsel %vm2583, %v2163, %v2839
  %v3096 = vsel %vm2584, %v2168, %v2840
  %v3097 = vsel %vm2585, %v2171, %v2841
  %v3098 = vsel %vm2586, %v2176, %v2842
  %v3099 = vsel %vm2587, %v2179, %v2843
  %v3100 = vsel %vm2588, %v2184, %v2844
  %v3101 = vsel %vm2589, %v2187, %v2845
  %v3102 = vsel %vm2590, %v2192, %v2846
  %v3103 = vsel %vm2591, %v2195, %v2847
  %v3104 = vsel %vm2592, %v2200, %v2848
  %v3105 = vsel %vm2593, %v2203, %v2849
  %v3106 = vsel %vm2594, %v2208, %v2850
  %v3107 = vsel %vm2595, %v2211, %v2851
  %v3108 = vsel %vm2596, %v2216, %v2852
  %v3109 = vsel %vm2597, %v2219, %v2853
  %v3110 = vsel %vm2598, %v2224, %v2854
  %v3111 = vsel %vm2599, %v2227, %v2855
  %v3112 = vsel %vm2600, %v2232, %v2856
  %v3113 = vsel %vm2601, %v2235, %v2857
  %v3114 = vsel %vm2602, %v2240, %v2858
  %v3115 = vsel %vm2603, %v2243, %v2859
  %v3116 = vsel %vm2604, %v2248, %v2860
  %v3117 = vsel %vm2605, %v2251, %v2861
  %v3118 = vsel %vm2606, %v2256, %v2862
  %v3119 = vsel %vm2607, %v2259, %v2863
  %v3120 = vsel %vm2608, %v2264, %v2864
  %v3121 = vsel %vm2609, %v2267, %v2865
  %v3122 = vsel %vm2610, %v2272, %v2866
  %v3123 = vsel %vm2611, %v2275, %v2867
  %v3124 = vsel %vm2612, %v2280, %v2868
  %v3125 = vsel %vm2613, %v2283, %v2869
  %v3126 = vsel %vm2614, %v2288, %v2870
  %v3127 = vsel %vm2615, %v2291, %v2871
  %v3128 = vsel %vm2616, %v2296, %v2872
  %v3129 = vsel %vm2617, %v2299, %v2873
  %v3130 = vsel %vm2618, %v2304, %v2874
  %v3131 = vsel %vm2619, %v2307, %v2875
  %v3132 = vsel %vm2620, %v2312, %v2876
  %v3133 = vsel %vm2621, %v2315, %v2877
  %v3134 = vsel %vm2622, %v2320, %v2878
  %v3135 = vsel %vm2623, %v2323, %v2879
  %v3136 = vsel %vm2624, %v2328, %v2880
  %v3137 = vsel %vm2625, %v2331, %v2881
  %v3138 = vsel %vm2626, %v2336, %v2882
  %v3139 = vsel %vm2627, %v2339, %v2883
  %v3140 = vsel %vm2628, %v2344, %v2884
  %v3141 = vsel %vm2629, %v2347, %v2885
  %v3142 = vsel %vm2630, %v2352, %v2886
  %v3143 = vsel %vm2631, %v2355, %v2887
  %v3144 = vsel %vm2632, %v2360, %v2888
  %v3145 = vsel %vm2633, %v2363, %v2889
  %v3146 = vsel %vm2634, %v2368, %v2890
  %v3147 = vsel %vm2635, %v2371, %v2891
  %v3148 = vsel %vm2636, %v2376, %v2892
  %v3149 = vsel %vm2637, %v2379, %v2893
  %v3150 = vpack.c.bf16 %v2895, %v2894
  %v3151 = vpack.c.bf16 %v2897, %v2896
  %v3152 = vpack.c.bf16 %v2899, %v2898
  %v3153 = vpack.c.bf16 %v2901, %v2900
  %v3154 = vpack.c.bf16 %v2903, %v2902
  %v3155 = vpack.c.bf16 %v2905, %v2904
  %v3156 = vpack.c.bf16 %v2907, %v2906
  %v3157 = vpack.c.bf16 %v2909, %v2908
  %v3158 = vpack.c.bf16 %v2911, %v2910
  %v3159 = vpack.c.bf16 %v2913, %v2912
  %v3160 = vpack.c.bf16 %v2915, %v2914
  %v3161 = vpack.c.bf16 %v2917, %v2916
  %v3162 = vpack.c.bf16 %v2919, %v2918
  %v3163 = vpack.c.bf16 %v2921, %v2920
  %v3164 = vpack.c.bf16 %v2923, %v2922
  %v3165 = vpack.c.bf16 %v2925, %v2924
  %v3166 = vpack.c.bf16 %v2927, %v2926
  %v3167 = vpack.c.bf16 %v2929, %v2928
  %v3168 = vpack.c.bf16 %v2931, %v2930
  %v3169 = vpack.c.bf16 %v2933, %v2932
  %v3170 = vpack.c.bf16 %v2935, %v2934
  %v3171 = vpack.c.bf16 %v2937, %v2936
  %v3172 = vpack.c.bf16 %v2939, %v2938
  %v3173 = vpack.c.bf16 %v2941, %v2940
  %v3174 = vpack.c.bf16 %v2943, %v2942
  %v3175 = vpack.c.bf16 %v2945, %v2944
  %v3176 = vpack.c.bf16 %v2947, %v2946
  %v3177 = vpack.c.bf16 %v2949, %v2948
  %v3178 = vpack.c.bf16 %v2951, %v2950
  %v3179 = vpack.c.bf16 %v2953, %v2952
  %v3180 = vpack.c.bf16 %v2955, %v2954
  %v3181 = vpack.c.bf16 %v2957, %v2956
  %v3182 = vpack.c.bf16 %v2959, %v2958
  %v3183 = vpack.c.bf16 %v2961, %v2960
  %v3184 = vpack.c.bf16 %v2963, %v2962
  %v3185 = vpack.c.bf16 %v2965, %v2964
  %v3186 = vpack.c.bf16 %v2967, %v2966
  %v3187 = vpack.c.bf16 %v2969, %v2968
  %v3188 = vpack.c.bf16 %v2971, %v2970
  %v3189 = vpack.c.bf16 %v2973, %v2972
  %v3190 = vpack.c.bf16 %v2975, %v2974
  %v3191 = vpack.c.bf16 %v2977, %v2976
  %v3192 = vpack.c.bf16 %v2979, %v2978
  %v3193 = vpack.c.bf16 %v2981, %v2980
  %v3194 = vpack.c.bf16 %v2983, %v2982
  %v3195 = vpack.c.bf16 %v2985, %v2984
  %v3196 = vpack.c.bf16 %v2987, %v2986
  %v3197 = vpack.c.bf16 %v2989, %v2988
  %v3198 = vpack.c.bf16 %v2991, %v2990
  %v3199 = vpack.c.bf16 %v2993, %v2992
  %v3200 = vpack.c.bf16 %v2995, %v2994
  %v3201 = vpack.c.bf16 %v2997, %v2996
  %v3202 = vpack.c.bf16 %v2999, %v2998
  %v3203 = vpack.c.bf16 %v3001, %v3000
  %v3204 = vpack.c.bf16 %v3003, %v3002
  %v3205 = vpack.c.bf16 %v3005, %v3004
  %v3206 = vpack.c.bf16 %v3007, %v3006
  %v3207 = vpack.c.bf16 %v3009, %v3008
  %v3208 = vpack.c.bf16 %v3011, %v3010
  %v3209 = vpack.c.bf16 %v3013, %v3012
  %v3210 = vpack.c.bf16 %v3015, %v3014
  %v3211 = vpack.c.bf16 %v3017, %v3016
  %v3212 = vpack.c.bf16 %v3019, %v3018
  %v3213 = vpack.c.bf16 %v3021, %v3020
  %v3214 = vpack.c.bf16 %v3023, %v3022
  %v3215 = vpack.c.bf16 %v3025, %v3024
  %v3216 = vpack.c.bf16 %v3027, %v3026
  %v3217 = vpack.c.bf16 %v3029, %v3028
  %v3218 = vpack.c.bf16 %v3031, %v3030
  %v3219 = vpack.c.bf16 %v3033, %v3032
  %v3220 = vpack.c.bf16 %v3035, %v3034
  %v3221 = vpack.c.bf16 %v3037, %v3036
  %v3222 = vpack.c.bf16 %v3039, %v3038
  %v3223 = vpack.c.bf16 %v3041, %v3040
  %v3224 = vpack.c.bf16 %v3043, %v3042
  %v3225 = vpack.c.bf16 %v3045, %v3044
  %v3226 = vpack.c.bf16 %v3047, %v3046
  %v3227 = vpack.c.bf16 %v3049, %v3048
  %v3228 = vpack.c.bf16 %v3051, %v3050
  %v3229 = vpack.c.bf16 %v3053, %v3052
  %v3230 = vpack.c.bf16 %v3055, %v3054
  %v3231 = vpack.c.bf16 %v3057, %v3056
  %v3232 = vpack.c.bf16 %v3059, %v3058
  %v3233 = vpack.c.bf16 %v3061, %v3060
  %v3234 = vpack.c.bf16 %v3063, %v3062
  %v3235 = vpack.c.bf16 %v3065, %v3064
  %v3236 = vpack.c.bf16 %v3067, %v3066
  %v3237 = vpack.c.bf16 %v3069, %v3068
  %v3238 = vpack.c.bf16 %v3071, %v3070
  %v3239 = vpack.c.bf16 %v3073, %v3072
  %v3240 = vpack.c.bf16 %v3075, %v3074
  %v3241 = vpack.c.bf16 %v3077, %v3076
  %v3242 = vpack.c.bf16 %v3079, %v3078
  %v3243 = vpack.c.bf16 %v3081, %v3080
  %v3244 = vpack.c.bf16 %v3083, %v3082
  %v3245 = vpack.c.bf16 %v3085, %v3084
  %v3246 = vpack.c.bf16 %v3087, %v3086
  %v3247 = vpack.c.bf16 %v3089, %v3088
  %v3248 = vpack.c.bf16 %v3091, %v3090
  %v3249 = vpack.c.bf16 %v3093, %v3092
  %v3250 = vpack.c.bf16 %v3095, %v3094
  %v3251 = vpack.c.bf16 %v3097, %v3096
  %v3252 = vpack.c.bf16 %v3099, %v3098
  %v3253 = vpack.c.bf16 %v3101, %v3100
  %v3254 = vpack.c.bf16 %v3103, %v3102
  %v3255 = vpack.c.bf16 %v3105, %v3104
  %v3256 = vpack.c.bf16 %v3107, %v3106
  %v3257 = vpack.c.bf16 %v3109, %v3108
  %v3258 = vpack.c.bf16 %v3111, %v3110
  %v3259 = vpack.c.bf16 %v3113, %v3112
  %v3260 = vpack.c.bf16 %v3115, %v3114
  %v3261 = vpack.c.bf16 %v3117, %v3116
  %v3262 = vpack.c.bf16 %v3119, %v3118
  %v3263 = vpack.c.bf16 %v3121, %v3120
  %v3264 = vpack.c.bf16 %v3123, %v3122
  %v3265 = vpack.c.bf16 %v3125, %v3124
  %v3266 = vpack.c.bf16 %v3127, %v3126
  %v3267 = vpack.c.bf16 %v3129, %v3128
  %v3268 = vpack.c.bf16 %v3131, %v3130
  %v3269 = vpack.c.bf16 %v3133, %v3132
  %v3270 = vpack.c.bf16 %v3135, %v3134
  %v3271 = vpack.c.bf16 %v3137, %v3136
  %v3272 = vpack.c.bf16 %v3139, %v3138
  %v3273 = vpack.c.bf16 %v3141, %v3140
  %v3274 = vpack.c.bf16 %v3143, %v3142
  %v3275 = vpack.c.bf16 %v3145, %v3144
  %v3276 = vpack.c.bf16 %v3147, %v3146
  %v3277 = vpack.c.bf16 %v3149, %v3148
  %v3406 = vunpack.c.l.b16 %v3150
  %v3407 = vunpack.c.h.b16 %v3150
  %v3408 = vunpack.c.l.b16 %v3151
  %v3409 = vunpack.c.h.b16 %v3151
  %v3410 = vunpack.c.l.b16 %v3152
  %v3411 = vunpack.c.h.b16 %v3152
  %v3412 = vunpack.c.l.b16 %v3153
  %v3413 = vunpack.c.h.b16 %v3153
  %v3414 = vunpack.c.l.b16 %v3154
  %v3415 = vunpack.c.h.b16 %v3154
  %v3416 = vunpack.c.l.b16 %v3155
  %v3417 = vunpack.c.h.b16 %v3155
  %v3418 = vunpack.c.l.b16 %v3156
  %v3419 = vunpack.c.h.b16 %v3156
  %v3420 = vunpack.c.l.b16 %v3157
  %v3421 = vunpack.c.h.b16 %v3157
  %v3422 = vunpack.c.l.b16 %v3158
  %v3423 = vunpack.c.h.b16 %v3158
  %v3424 = vunpack.c.l.b16 %v3159
  %v3425 = vunpack.c.h.b16 %v3159
  %v3426 = vunpack.c.l.b16 %v3160
  %v3427 = vunpack.c.h.b16 %v3160
  %v3428 = vunpack.c.l.b16 %v3161
  %v3429 = vunpack.c.h.b16 %v3161
  %v3430 = vunpack.c.l.b16 %v3162
  %v3431 = vunpack.c.h.b16 %v3162
  %v3432 = vunpack.c.l.b16 %v3163
  %v3433 = vunpack.c.h.b16 %v3163
  %v3434 = vunpack.c.l.b16 %v3164
  %v3435 = vunpack.c.h.b16 %v3164
  %v3436 = vunpack.c.l.b16 %v3165
  %v3437 = vunpack.c.h.b16 %v3165
  %v3438 = vunpack.c.l.b16 %v3166
  %v3439 = vunpack.c.h.b16 %v3166
  %v3440 = vunpack.c.l.b16 %v3167
  %v3441 = vunpack.c.h.b16 %v3167
  %v3442 = vunpack.c.l.b16 %v3168
  %v3443 = vunpack.c.h.b16 %v3168
  %v3444 = vunpack.c.l.b16 %v3169
  %v3445 = vunpack.c.h.b16 %v3169
  %v3446 = vunpack.c.l.b16 %v3170
  %v3447 = vunpack.c.h.b16 %v3170
  %v3448 = vunpack.c.l.b16 %v3171
  %v3449 = vunpack.c.h.b16 %v3171
  %v3450 = vunpack.c.l.b16 %v3172
  %v3451 = vunpack.c.h.b16 %v3172
  %v3452 = vunpack.c.l.b16 %v3173
  %v3453 = vunpack.c.h.b16 %v3173
  %v3454 = vunpack.c.l.b16 %v3174
  %v3455 = vunpack.c.h.b16 %v3174
  %v3456 = vunpack.c.l.b16 %v3175
  %v3457 = vunpack.c.h.b16 %v3175
  %v3458 = vunpack.c.l.b16 %v3176
  %v3459 = vunpack.c.h.b16 %v3176
  %v3460 = vunpack.c.l.b16 %v3177
  %v3461 = vunpack.c.h.b16 %v3177
  %v3462 = vunpack.c.l.b16 %v3178
  %v3463 = vunpack.c.h.b16 %v3178
  %v3464 = vunpack.c.l.b16 %v3179
  %v3465 = vunpack.c.h.b16 %v3179
  %v3466 = vunpack.c.l.b16 %v3180
  %v3467 = vunpack.c.h.b16 %v3180
  %v3468 = vunpack.c.l.b16 %v3181
  %v3469 = vunpack.c.h.b16 %v3181
  %v3470 = vunpack.c.l.b16 %v3182
  %v3471 = vunpack.c.h.b16 %v3182
  %v3472 = vunpack.c.l.b16 %v3183
  %v3473 = vunpack.c.h.b16 %v3183
  %v3474 = vunpack.c.l.b16 %v3184
  %v3475 = vunpack.c.h.b16 %v3184
  %v3476 = vunpack.c.l.b16 %v3185
  %v3477 = vunpack.c.h.b16 %v3185
  %v3478 = vunpack.c.l.b16 %v3186
  %v3479 = vunpack.c.h.b16 %v3186
  %v3480 = vunpack.c.l.b16 %v3187
  %v3481 = vunpack.c.h.b16 %v3187
  %v3482 = vunpack.c.l.b16 %v3188
  %v3483 = vunpack.c.h.b16 %v3188
  %v3484 = vunpack.c.l.b16 %v3189
  %v3485 = vunpack.c.h.b16 %v3189
  %v3486 = vunpack.c.l.b16 %v3190
  %v3487 = vunpack.c.h.b16 %v3190
  %v3488 = vunpack.c.l.b16 %v3191
  %v3489 = vunpack.c.h.b16 %v3191
  %v3490 = vunpack.c.l.b16 %v3192
  %v3491 = vunpack.c.h.b16 %v3192
  %v3492 = vunpack.c.l.b16 %v3193
  %v3493 = vunpack.c.h.b16 %v3193
  %v3494 = vunpack.c.l.b16 %v3194
  %v3495 = vunpack.c.h.b16 %v3194
  %v3496 = vunpack.c.l.b16 %v3195
  %v3497 = vunpack.c.h.b16 %v3195
  %v3498 = vunpack.c.l.b16 %v3196
  %v3499 = vunpack.c.h.b16 %v3196
  %v3500 = vunpack.c.l.b16 %v3197
  %v3501 = vunpack.c.h.b16 %v3197
  %v3502 = vunpack.c.l.b16 %v3198
  %v3503 = vunpack.c.h.b16 %v3198
  %v3504 = vunpack.c.l.b16 %v3199
  %v3505 = vunpack.c.h.b16 %v3199
  %v3506 = vunpack.c.l.b16 %v3200
  %v3507 = vunpack.c.h.b16 %v3200
  %v3508 = vunpack.c.l.b16 %v3201
  %v3509 = vunpack.c.h.b16 %v3201
  %v3510 = vunpack.c.l.b16 %v3202
  %v3511 = vunpack.c.h.b16 %v3202
  %v3512 = vunpack.c.l.b16 %v3203
  %v3513 = vunpack.c.h.b16 %v3203
  %v3514 = vunpack.c.l.b16 %v3204
  %v3515 = vunpack.c.h.b16 %v3204
  %v3516 = vunpack.c.l.b16 %v3205
  %v3517 = vunpack.c.h.b16 %v3205
  %v3518 = vunpack.c.l.b16 %v3206
  %v3519 = vunpack.c.h.b16 %v3206
  %v3520 = vunpack.c.l.b16 %v3207
  %v3521 = vunpack.c.h.b16 %v3207
  %v3522 = vunpack.c.l.b16 %v3208
  %v3523 = vunpack.c.h.b16 %v3208
  %v3524 = vunpack.c.l.b16 %v3209
  %v3525 = vunpack.c.h.b16 %v3209
  %v3526 = vunpack.c.l.b16 %v3210
  %v3527 = vunpack.c.h.b16 %v3210
  %v3528 = vunpack.c.l.b16 %v3211
  %v3529 = vunpack.c.h.b16 %v3211
  %v3530 = vunpack.c.l.b16 %v3212
  %v3531 = vunpack.c.h.b16 %v3212
  %v3532 = vunpack.c.l.b16 %v3213
  %v3533 = vunpack.c.h.b16 %v3213
  %v3534 = vunpack.c.l.b16 %v3214
  %v3535 = vunpack.c.h.b16 %v3214
  %v3536 = vunpack.c.l.b16 %v3215
  %v3537 = vunpack.c.h.b16 %v3215
  %v3538 = vunpack.c.l.b16 %v3216
  %v3539 = vunpack.c.h.b16 %v3216
  %v3540 = vunpack.c.l.b16 %v3217
  %v3541 = vunpack.c.h.b16 %v3217
  %v3542 = vunpack.c.l.b16 %v3218
  %v3543 = vunpack.c.h.b16 %v3218
  %v3544 = vunpack.c.l.b16 %v3219
  %v3545 = vunpack.c.h.b16 %v3219
  %v3546 = vunpack.c.l.b16 %v3220
  %v3547 = vunpack.c.h.b16 %v3220
  %v3548 = vunpack.c.l.b16 %v3221
  %v3549 = vunpack.c.h.b16 %v3221
  %v3550 = vunpack.c.l.b16 %v3222
  %v3551 = vunpack.c.h.b16 %v3222
  %v3552 = vunpack.c.l.b16 %v3223
  %v3553 = vunpack.c.h.b16 %v3223
  %v3554 = vunpack.c.l.b16 %v3224
  %v3555 = vunpack.c.h.b16 %v3224
  %v3556 = vunpack.c.l.b16 %v3225
  %v3557 = vunpack.c.h.b16 %v3225
  %v3558 = vunpack.c.l.b16 %v3226
  %v3559 = vunpack.c.h.b16 %v3226
  %v3560 = vunpack.c.l.b16 %v3227
  %v3561 = vunpack.c.h.b16 %v3227
  %v3562 = vunpack.c.l.b16 %v3228
  %v3563 = vunpack.c.h.b16 %v3228
  %v3564 = vunpack.c.l.b16 %v3229
  %v3565 = vunpack.c.h.b16 %v3229
  %v3566 = vunpack.c.l.b16 %v3230
  %v3567 = vunpack.c.h.b16 %v3230
  %v3568 = vunpack.c.l.b16 %v3231
  %v3569 = vunpack.c.h.b16 %v3231
  %v3570 = vunpack.c.l.b16 %v3232
  %v3571 = vunpack.c.h.b16 %v3232
  %v3572 = vunpack.c.l.b16 %v3233
  %v3573 = vunpack.c.h.b16 %v3233
  %v3574 = vunpack.c.l.b16 %v3234
  %v3575 = vunpack.c.h.b16 %v3234
  %v3576 = vunpack.c.l.b16 %v3235
  %v3577 = vunpack.c.h.b16 %v3235
  %v3578 = vunpack.c.l.b16 %v3236
  %v3579 = vunpack.c.h.b16 %v3236
  %v3580 = vunpack.c.l.b16 %v3237
  %v3581 = vunpack.c.h.b16 %v3237
  %v3582 = vunpack.c.l.b16 %v3238
  %v3583 = vunpack.c.h.b16 %v3238
  %v3584 = vunpack.c.l.b16 %v3239
  %v3585 = vunpack.c.h.b16 %v3239
  %v3586 = vunpack.c.l.b16 %v3240
  %v3587 = vunpack.c.h.b16 %v3240
  %v3588 = vunpack.c.l.b16 %v3241
  %v3589 = vunpack.c.h.b16 %v3241
  %v3590 = vunpack.c.l.b16 %v3242
  %v3591 = vunpack.c.h.b16 %v3242
  %v3592 = vunpack.c.l.b16 %v3243
  %v3593 = vunpack.c.h.b16 %v3243
  %v3594 = vunpack.c.l.b16 %v3244
  %v3595 = vunpack.c.h.b16 %v3244
  %v3596 = vunpack.c.l.b16 %v3245
  %v3597 = vunpack.c.h.b16 %v3245
  %v3598 = vunpack.c.l.b16 %v3246
  %v3599 = vunpack.c.h.b16 %v3246
  %v3600 = vunpack.c.l.b16 %v3247
  %v3601 = vunpack.c.h.b16 %v3247
  %v3602 = vunpack.c.l.b16 %v3248
  %v3603 = vunpack.c.h.b16 %v3248
  %v3604 = vunpack.c.l.b16 %v3249
  %v3605 = vunpack.c.h.b16 %v3249
  %v3606 = vunpack.c.l.b16 %v3250
  %v3607 = vunpack.c.h.b16 %v3250
  %v3608 = vunpack.c.l.b16 %v3251
  %v3609 = vunpack.c.h.b16 %v3251
  %v3610 = vunpack.c.l.b16 %v3252
  %v3611 = vunpack.c.h.b16 %v3252
  %v3612 = vunpack.c.l.b16 %v3253
  %v3613 = vunpack.c.h.b16 %v3253
  %v3614 = vunpack.c.l.b16 %v3254
  %v3615 = vunpack.c.h.b16 %v3254
  %v3616 = vunpack.c.l.b16 %v3255
  %v3617 = vunpack.c.h.b16 %v3255
  %v3618 = vunpack.c.l.b16 %v3256
  %v3619 = vunpack.c.h.b16 %v3256
  %v3620 = vunpack.c.l.b16 %v3257
  %v3621 = vunpack.c.h.b16 %v3257
  %v3622 = vunpack.c.l.b16 %v3258
  %v3623 = vunpack.c.h.b16 %v3258
  %v3624 = vunpack.c.l.b16 %v3259
  %v3625 = vunpack.c.h.b16 %v3259
  %v3626 = vunpack.c.l.b16 %v3260
  %v3627 = vunpack.c.h.b16 %v3260
  %v3628 = vunpack.c.l.b16 %v3261
  %v3629 = vunpack.c.h.b16 %v3261
  %v3630 = vunpack.c.l.b16 %v3262
  %v3631 = vunpack.c.h.b16 %v3262
  %v3632 = vunpack.c.l.b16 %v3263
  %v3633 = vunpack.c.h.b16 %v3263
  %v3634 = vunpack.c.l.b16 %v3264
  %v3635 = vunpack.c.h.b16 %v3264
  %v3636 = vunpack.c.l.b16 %v3265
  %v3637 = vunpack.c.h.b16 %v3265
  %v3638 = vunpack.c.l.b16 %v3266
  %v3639 = vunpack.c.h.b16 %v3266
  %v3640 = vunpack.c.l.b16 %v3267
  %v3641 = vunpack.c.h.b16 %v3267
  %v3642 = vunpack.c.l.b16 %v3268
  %v3643 = vunpack.c.h.b16 %v3268
  %v3644 = vunpack.c.l.b16 %v3269
  %v3645 = vunpack.c.h.b16 %v3269
  %v3646 = vunpack.c.l.b16 %v3270
  %v3647 = vunpack.c.h.b16 %v3270
  %v3648 = vunpack.c.l.b16 %v3271
  %v3649 = vunpack.c.h.b16 %v3271
  %v3650 = vunpack.c.l.b16 %v3272
  %v3651 = vunpack.c.h.b16 %v3272
  %v3652 = vunpack.c.l.b16 %v3273
  %v3653 = vunpack.c.h.b16 %v3273
  %v3654 = vunpack.c.l.b16 %v3274
  %v3655 = vunpack.c.h.b16 %v3274
  %v3656 = vunpack.c.l.b16 %v3275
  %v3657 = vunpack.c.h.b16 %v3275
  %v3658 = vunpack.c.l.b16 %v3276
  %v3659 = vunpack.c.h.b16 %v3276
  %v3660 = vunpack.c.l.b16 %v3277
  %v3661 = vunpack.c.h.b16 %v3277
  %v3662 = vpack.c.b16 %v3406, %v3406
  %v3663 = vpack.c.b16 %v3407, %v3407
  %v3664 = vpack.c.b16 %v3408, %v3408
  %v3665 = vpack.c.b16 %v3409, %v3409
  %v3666 = vpack.c.b16 %v3410, %v3410
  %v3667 = vpack.c.b16 %v3411, %v3411
  %v3668 = vpack.c.b16 %v3412, %v3412
  %v3669 = vpack.c.b16 %v3413, %v3413
  %v3670 = vpack.c.b16 %v3414, %v3414
  %v3671 = vpack.c.b16 %v3415, %v3415
  %v3672 = vpack.c.b16 %v3416, %v3416
  %v3673 = vpack.c.b16 %v3417, %v3417
  %v3674 = vpack.c.b16 %v3418, %v3418
  %v3675 = vpack.c.b16 %v3419, %v3419
  %v3676 = vpack.c.b16 %v3420, %v3420
  %v3677 = vpack.c.b16 %v3421, %v3421
  %v3678 = vpack.c.b16 %v3422, %v3422
  %v3679 = vpack.c.b16 %v3423, %v3423
  %v3680 = vpack.c.b16 %v3424, %v3424
  %v3681 = vpack.c.b16 %v3425, %v3425
  %v3682 = vpack.c.b16 %v3426, %v3426
  %v3683 = vpack.c.b16 %v3427, %v3427
  %v3684 = vpack.c.b16 %v3428, %v3428
  %v3685 = vpack.c.b16 %v3429, %v3429
  %v3686 = vpack.c.b16 %v3430, %v3430
  %v3687 = vpack.c.b16 %v3431, %v3431
  %v3688 = vpack.c.b16 %v3432, %v3432
  %v3689 = vpack.c.b16 %v3433, %v3433
  %v3690 = vpack.c.b16 %v3434, %v3434
  %v3691 = vpack.c.b16 %v3435, %v3435
  %v3692 = vpack.c.b16 %v3436, %v3436
  %v3693 = vpack.c.b16 %v3437, %v3437
  %v3694 = vpack.c.b16 %v3438, %v3438
  %v3695 = vpack.c.b16 %v3439, %v3439
  %v3696 = vpack.c.b16 %v3440, %v3440
  %v3697 = vpack.c.b16 %v3441, %v3441
  %v3698 = vpack.c.b16 %v3442, %v3442
  %v3699 = vpack.c.b16 %v3443, %v3443
  %v3700 = vpack.c.b16 %v3444, %v3444
  %v3701 = vpack.c.b16 %v3445, %v3445
  %v3702 = vpack.c.b16 %v3446, %v3446
  %v3703 = vpack.c.b16 %v3447, %v3447
  %v3704 = vpack.c.b16 %v3448, %v3448
  %v3705 = vpack.c.b16 %v3449, %v3449
  %v3706 = vpack.c.b16 %v3450, %v3450
  %v3707 = vpack.c.b16 %v3451, %v3451
  %v3708 = vpack.c.b16 %v3452, %v3452
  %v3709 = vpack.c.b16 %v3453, %v3453
  %v3710 = vpack.c.b16 %v3454, %v3454
  %v3711 = vpack.c.b16 %v3455, %v3455
  %v3712 = vpack.c.b16 %v3456, %v3456
  %v3713 = vpack.c.b16 %v3457, %v3457
  %v3714 = vpack.c.b16 %v3458, %v3458
  %v3715 = vpack.c.b16 %v3459, %v3459
  %v3716 = vpack.c.b16 %v3460, %v3460
  %v3717 = vpack.c.b16 %v3461, %v3461
  %v3718 = vpack.c.b16 %v3462, %v3462
  %v3719 = vpack.c.b16 %v3463, %v3463
  %v3720 = vpack.c.b16 %v3464, %v3464
  %v3721 = vpack.c.b16 %v3465, %v3465
  %v3722 = vpack.c.b16 %v3466, %v3466
  %v3723 = vpack.c.b16 %v3467, %v3467
  %v3724 = vpack.c.b16 %v3468, %v3468
  %v3725 = vpack.c.b16 %v3469, %v3469
  %v3726 = vpack.c.b16 %v3470, %v3470
  %v3727 = vpack.c.b16 %v3471, %v3471
  %v3728 = vpack.c.b16 %v3472, %v3472
  %v3729 = vpack.c.b16 %v3473, %v3473
  %v3730 = vpack.c.b16 %v3474, %v3474
  %v3731 = vpack.c.b16 %v3475, %v3475
  %v3732 = vpack.c.b16 %v3476, %v3476
  %v3733 = vpack.c.b16 %v3477, %v3477
  %v3734 = vpack.c.b16 %v3478, %v3478
  %v3735 = vpack.c.b16 %v3479, %v3479
  %v3736 = vpack.c.b16 %v3480, %v3480
  %v3737 = vpack.c.b16 %v3481, %v3481
  %v3738 = vpack.c.b16 %v3482, %v3482
  %v3739 = vpack.c.b16 %v3483, %v3483
  %v3740 = vpack.c.b16 %v3484, %v3484
  %v3741 = vpack.c.b16 %v3485, %v3485
  %v3742 = vpack.c.b16 %v3486, %v3486
  %v3743 = vpack.c.b16 %v3487, %v3487
  %v3744 = vpack.c.b16 %v3488, %v3488
  %v3745 = vpack.c.b16 %v3489, %v3489
  %v3746 = vpack.c.b16 %v3490, %v3490
  %v3747 = vpack.c.b16 %v3491, %v3491
  %v3748 = vpack.c.b16 %v3492, %v3492
  %v3749 = vpack.c.b16 %v3493, %v3493
  %v3750 = vpack.c.b16 %v3494, %v3494
  %v3751 = vpack.c.b16 %v3495, %v3495
  %v3752 = vpack.c.b16 %v3496, %v3496
  %v3753 = vpack.c.b16 %v3497, %v3497
  %v3754 = vpack.c.b16 %v3498, %v3498
  %v3755 = vpack.c.b16 %v3499, %v3499
  %v3756 = vpack.c.b16 %v3500, %v3500
  %v3757 = vpack.c.b16 %v3501, %v3501
  %v3758 = vpack.c.b16 %v3502, %v3502
  %v3759 = vpack.c.b16 %v3503, %v3503
  %v3760 = vpack.c.b16 %v3504, %v3504
  %v3761 = vpack.c.b16 %v3505, %v3505
  %v3762 = vpack.c.b16 %v3506, %v3506
  %v3763 = vpack.c.b16 %v3507, %v3507
  %v3764 = vpack.c.b16 %v3508, %v3508
  %v3765 = vpack.c.b16 %v3509, %v3509
  %v3766 = vpack.c.b16 %v3510, %v3510
  %v3767 = vpack.c.b16 %v3511, %v3511
  %v3768 = vpack.c.b16 %v3512, %v3512
  %v3769 = vpack.c.b16 %v3513, %v3513
  %v3770 = vpack.c.b16 %v3514, %v3514
  %v3771 = vpack.c.b16 %v3515, %v3515
  %v3772 = vpack.c.b16 %v3516, %v3516
  %v3773 = vpack.c.b16 %v3517, %v3517
  %v3774 = vpack.c.b16 %v3518, %v3518
  %v3775 = vpack.c.b16 %v3519, %v3519
  %v3776 = vpack.c.b16 %v3520, %v3520
  %v3777 = vpack.c.b16 %v3521, %v3521
  %v3778 = vpack.c.b16 %v3522, %v3522
  %v3779 = vpack.c.b16 %v3523, %v3523
  %v3780 = vpack.c.b16 %v3524, %v3524
  %v3781 = vpack.c.b16 %v3525, %v3525
  %v3782 = vpack.c.b16 %v3526, %v3526
  %v3783 = vpack.c.b16 %v3527, %v3527
  %v3784 = vpack.c.b16 %v3528, %v3528
  %v3785 = vpack.c.b16 %v3529, %v3529
  %v3786 = vpack.c.b16 %v3530, %v3530
  %v3787 = vpack.c.b16 %v3531, %v3531
  %v3788 = vpack.c.b16 %v3532, %v3532
  %v3789 = vpack.c.b16 %v3533, %v3533
  %v3790 = vpack.c.b16 %v3534, %v3534
  %v3791 = vpack.c.b16 %v3535, %v3535
  %v3792 = vpack.c.b16 %v3536, %v3536
  %v3793 = vpack.c.b16 %v3537, %v3537
  %v3794 = vpack.c.b16 %v3538, %v3538
  %v3795 = vpack.c.b16 %v3539, %v3539
  %v3796 = vpack.c.b16 %v3540, %v3540
  %v3797 = vpack.c.b16 %v3541, %v3541
  %v3798 = vpack.c.b16 %v3542, %v3542
  %v3799 = vpack.c.b16 %v3543, %v3543
  %v3800 = vpack.c.b16 %v3544, %v3544
  %v3801 = vpack.c.b16 %v3545, %v3545
  %v3802 = vpack.c.b16 %v3546, %v3546
  %v3803 = vpack.c.b16 %v3547, %v3547
  %v3804 = vpack.c.b16 %v3548, %v3548
  %v3805 = vpack.c.b16 %v3549, %v3549
  %v3806 = vpack.c.b16 %v3550, %v3550
  %v3807 = vpack.c.b16 %v3551, %v3551
  %v3808 = vpack.c.b16 %v3552, %v3552
  %v3809 = vpack.c.b16 %v3553, %v3553
  %v3810 = vpack.c.b16 %v3554, %v3554
  %v3811 = vpack.c.b16 %v3555, %v3555
  %v3812 = vpack.c.b16 %v3556, %v3556
  %v3813 = vpack.c.b16 %v3557, %v3557
  %v3814 = vpack.c.b16 %v3558, %v3558
  %v3815 = vpack.c.b16 %v3559, %v3559
  %v3816 = vpack.c.b16 %v3560, %v3560
  %v3817 = vpack.c.b16 %v3561, %v3561
  %v3818 = vpack.c.b16 %v3562, %v3562
  %v3819 = vpack.c.b16 %v3563, %v3563
  %v3820 = vpack.c.b16 %v3564, %v3564
  %v3821 = vpack.c.b16 %v3565, %v3565
  %v3822 = vpack.c.b16 %v3566, %v3566
  %v3823 = vpack.c.b16 %v3567, %v3567
  %v3824 = vpack.c.b16 %v3568, %v3568
  %v3825 = vpack.c.b16 %v3569, %v3569
  %v3826 = vpack.c.b16 %v3570, %v3570
  %v3827 = vpack.c.b16 %v3571, %v3571
  %v3828 = vpack.c.b16 %v3572, %v3572
  %v3829 = vpack.c.b16 %v3573, %v3573
  %v3830 = vpack.c.b16 %v3574, %v3574
  %v3831 = vpack.c.b16 %v3575, %v3575
  %v3832 = vpack.c.b16 %v3576, %v3576
  %v3833 = vpack.c.b16 %v3577, %v3577
  %v3834 = vpack.c.b16 %v3578, %v3578
  %v3835 = vpack.c.b16 %v3579, %v3579
  %v3836 = vpack.c.b16 %v3580, %v3580
  %v3837 = vpack.c.b16 %v3581, %v3581
  %v3838 = vpack.c.b16 %v3582, %v3582
  %v3839 = vpack.c.b16 %v3583, %v3583
  %v3840 = vpack.c.b16 %v3584, %v3584
  %v3841 = vpack.c.b16 %v3585, %v3585
  %v3842 = vpack.c.b16 %v3586, %v3586
  %v3843 = vpack.c.b16 %v3587, %v3587
  %v3844 = vpack.c.b16 %v3588, %v3588
  %v3845 = vpack.c.b16 %v3589, %v3589
  %v3846 = vpack.c.b16 %v3590, %v3590
  %v3847 = vpack.c.b16 %v3591, %v3591
  %v3848 = vpack.c.b16 %v3592, %v3592
  %v3849 = vpack.c.b16 %v3593, %v3593
  %v3850 = vpack.c.b16 %v3594, %v3594
  %v3851 = vpack.c.b16 %v3595, %v3595
  %v3852 = vpack.c.b16 %v3596, %v3596
  %v3853 = vpack.c.b16 %v3597, %v3597
  %v3854 = vpack.c.b16 %v3598, %v3598
  %v3855 = vpack.c.b16 %v3599, %v3599
  %v3856 = vpack.c.b16 %v3600, %v3600
  %v3857 = vpack.c.b16 %v3601, %v3601
  %v3858 = vpack.c.b16 %v3602, %v3602
  %v3859 = vpack.c.b16 %v3603, %v3603
  %v3860 = vpack.c.b16 %v3604, %v3604
  %v3861 = vpack.c.b16 %v3605, %v3605
  %v3862 = vpack.c.b16 %v3606, %v3606
  %v3863 = vpack.c.b16 %v3607, %v3607
  %v3864 = vpack.c.b16 %v3608, %v3608
  %v3865 = vpack.c.b16 %v3609, %v3609
  %v3866 = vpack.c.b16 %v3610, %v3610
  %v3867 = vpack.c.b16 %v3611, %v3611
  %v3868 = vpack.c.b16 %v3612, %v3612
  %v3869 = vpack.c.b16 %v3613, %v3613
  %v3870 = vpack.c.b16 %v3614, %v3614
  %v3871 = vpack.c.b16 %v3615, %v3615
  %v3872 = vpack.c.b16 %v3616, %v3616
  %v3873 = vpack.c.b16 %v3617, %v3617
  %v3874 = vpack.c.b16 %v3618, %v3618
  %v3875 = vpack.c.b16 %v3619, %v3619
  %v3876 = vpack.c.b16 %v3620, %v3620
  %v3877 = vpack.c.b16 %v3621, %v3621
  %v3878 = vpack.c.b16 %v3622, %v3622
  %v3879 = vpack.c.b16 %v3623, %v3623
  %v3880 = vpack.c.b16 %v3624, %v3624
  %v3881 = vpack.c.b16 %v3625, %v3625
  %v3882 = vpack.c.b16 %v3626, %v3626
  %v3883 = vpack.c.b16 %v3627, %v3627
  %v3884 = vpack.c.b16 %v3628, %v3628
  %v3885 = vpack.c.b16 %v3629, %v3629
  %v3886 = vpack.c.b16 %v3630, %v3630
  %v3887 = vpack.c.b16 %v3631, %v3631
  %v3888 = vpack.c.b16 %v3632, %v3632
  %v3889 = vpack.c.b16 %v3633, %v3633
  %v3890 = vpack.c.b16 %v3634, %v3634
  %v3891 = vpack.c.b16 %v3635, %v3635
  %v3892 = vpack.c.b16 %v3636, %v3636
  %v3893 = vpack.c.b16 %v3637, %v3637
  %v3894 = vpack.c.b16 %v3638, %v3638
  %v3895 = vpack.c.b16 %v3639, %v3639
  %v3896 = vpack.c.b16 %v3640, %v3640
  %v3897 = vpack.c.b16 %v3641, %v3641
  %v3898 = vpack.c.b16 %v3642, %v3642
  %v3899 = vpack.c.b16 %v3643, %v3643
  %v3900 = vpack.c.b16 %v3644, %v3644
  %v3901 = vpack.c.b16 %v3645, %v3645
  %v3902 = vpack.c.b16 %v3646, %v3646
  %v3903 = vpack.c.b16 %v3647, %v3647
  %v3904 = vpack.c.b16 %v3648, %v3648
  %v3905 = vpack.c.b16 %v3649, %v3649
  %v3906 = vpack.c.b16 %v3650, %v3650
  %v3907 = vpack.c.b16 %v3651, %v3651
  %v3908 = vpack.c.b16 %v3652, %v3652
  %v3909 = vpack.c.b16 %v3653, %v3653
  %v3910 = vpack.c.b16 %v3654, %v3654
  %v3911 = vpack.c.b16 %v3655, %v3655
  %v3912 = vpack.c.b16 %v3656, %v3656
  %v3913 = vpack.c.b16 %v3657, %v3657
  %v3914 = vpack.c.b16 %v3658, %v3658
  %v3915 = vpack.c.b16 %v3659, %v3659
  %v3916 = vpack.c.b16 %v3660, %v3660
  %v3917 = vpack.c.b16 %v3661, %v3661
  %4174 = vst [vmem:[%s2] sm:$0xf] %v3662
  %4175 = vst [vmem:[%s2 + $0x4] sm:$0xf] %v3663
  %4176 = vst [vmem:[%s2 + $0x8] sm:$0xf] %v3664
  %4177 = vst [vmem:[%s2 + $0xc] sm:$0xf] %v3665
  %4178 = vst [vmem:[%s2 + $0x10] sm:$0xf] %v3666
  %4179 = vst [vmem:[%s2 + $0x14] sm:$0xf] %v3667
  %4180 = vst [vmem:[%s2 + $0x18] sm:$0xf] %v3668
  %4181 = vst [vmem:[%s2 + $0x1c] sm:$0xf] %v3669
  %4182 = vst [vmem:[%s2 + $0x20] sm:$0xf] %v3670
  %4183 = vst [vmem:[%s2 + $0x24] sm:$0xf] %v3671
  %4184 = vst [vmem:[%s2 + $0x28] sm:$0xf] %v3672
  %4185 = vst [vmem:[%s2 + $0x2c] sm:$0xf] %v3673
  %4186 = vst [vmem:[%s2 + $0x30] sm:$0xf] %v3674
  %4187 = vst [vmem:[%s2 + $0x34] sm:$0xf] %v3675
  %4188 = vst [vmem:[%s2 + $0x38] sm:$0xf] %v3676
  %4189 = vst [vmem:[%s2 + $0x3c] sm:$0xf] %v3677
  %4190 = vst [vmem:[%s2 + $0x40] sm:$0xf] %v3678
  %4191 = vst [vmem:[%s2 + $0x44] sm:$0xf] %v3679
  %4192 = vst [vmem:[%s2 + $0x48] sm:$0xf] %v3680
  %4193 = vst [vmem:[%s2 + $0x4c] sm:$0xf] %v3681
  %4194 = vst [vmem:[%s2 + $0x50] sm:$0xf] %v3682
  %4195 = vst [vmem:[%s2 + $0x54] sm:$0xf] %v3683
  %4196 = vst [vmem:[%s2 + $0x58] sm:$0xf] %v3684
  %4197 = vst [vmem:[%s2 + $0x5c] sm:$0xf] %v3685
  %4198 = vst [vmem:[%s2 + $0x60] sm:$0xf] %v3686
  %4199 = vst [vmem:[%s2 + $0x64] sm:$0xf] %v3687
  %4200 = vst [vmem:[%s2 + $0x68] sm:$0xf] %v3688
  %4201 = vst [vmem:[%s2 + $0x6c] sm:$0xf] %v3689
  %4202 = vst [vmem:[%s2 + $0x70] sm:$0xf] %v3690
  %4203 = vst [vmem:[%s2 + $0x74] sm:$0xf] %v3691
  %4204 = vst [vmem:[%s2 + $0x78] sm:$0xf] %v3692
  %4205 = vst [vmem:[%s2 + $0x7c] sm:$0xf] %v3693
  %4206 = vst [vmem:[%s2 + $0x80] sm:$0xf] %v3694
  %4207 = vst [vmem:[%s2 + $0x84] sm:$0xf] %v3695
  %4208 = vst [vmem:[%s2 + $0x88] sm:$0xf] %v3696
  %4209 = vst [vmem:[%s2 + $0x8c] sm:$0xf] %v3697
  %4210 = vst [vmem:[%s2 + $0x90] sm:$0xf] %v3698
  %4211 = vst [vmem:[%s2 + $0x94] sm:$0xf] %v3699
  %4212 = vst [vmem:[%s2 + $0x98] sm:$0xf] %v3700
  %4213 = vst [vmem:[%s2 + $0x9c] sm:$0xf] %v3701
  %4214 = vst [vmem:[%s2 + $0xa0] sm:$0xf] %v3702
  %4215 = vst [vmem:[%s2 + $0xa4] sm:$0xf] %v3703
  %4216 = vst [vmem:[%s2 + $0xa8] sm:$0xf] %v3704
  %4217 = vst [vmem:[%s2 + $0xac] sm:$0xf] %v3705
  %4218 = vst [vmem:[%s2 + $0xb0] sm:$0xf] %v3706
  %4219 = vst [vmem:[%s2 + $0xb4] sm:$0xf] %v3707
  %4220 = vst [vmem:[%s2 + $0xb8] sm:$0xf] %v3708
  %4221 = vst [vmem:[%s2 + $0xbc] sm:$0xf] %v3709
  %4222 = vst [vmem:[%s2 + $0xc0] sm:$0xf] %v3710
  %4223 = vst [vmem:[%s2 + $0xc4] sm:$0xf] %v3711
  %4224 = vst [vmem:[%s2 + $0xc8] sm:$0xf] %v3712
  %4225 = vst [vmem:[%s2 + $0xcc] sm:$0xf] %v3713
  %4226 = vst [vmem:[%s2 + $0xd0] sm:$0xf] %v3714
  %4227 = vst [vmem:[%s2 + $0xd4] sm:$0xf] %v3715
  %4228 = vst [vmem:[%s2 + $0xd8] sm:$0xf] %v3716
  %4229 = vst [vmem:[%s2 + $0xdc] sm:$0xf] %v3717
  %4230 = vst [vmem:[%s2 + $0xe0] sm:$0xf] %v3718
  %4231 = vst [vmem:[%s2 + $0xe4] sm:$0xf] %v3719
  %4232 = vst [vmem:[%s2 + $0xe8] sm:$0xf] %v3720
  %4233 = vst [vmem:[%s2 + $0xec] sm:$0xf] %v3721
  %4234 = vst [vmem:[%s2 + $0xf0] sm:$0xf] %v3722
  %4235 = vst [vmem:[%s2 + $0xf4] sm:$0xf] %v3723
  %4236 = vst [vmem:[%s2 + $0xf8] sm:$0xf] %v3724
  %4237 = vst [vmem:[%s2 + $0xfc] sm:$0xf] %v3725
  %4238 = vst [vmem:[%s2 + $0x100] sm:$0xf] %v3726
  %4239 = vst [vmem:[%s2 + $0x104] sm:$0xf] %v3727
  %4240 = vst [vmem:[%s2 + $0x108] sm:$0xf] %v3728
  %4241 = vst [vmem:[%s2 + $0x10c] sm:$0xf] %v3729
  %4242 = vst [vmem:[%s2 + $0x110] sm:$0xf] %v3730
  %4243 = vst [vmem:[%s2 + $0x114] sm:$0xf] %v3731
  %4244 = vst [vmem:[%s2 + $0x118] sm:$0xf] %v3732
  %4245 = vst [vmem:[%s2 + $0x11c] sm:$0xf] %v3733
  %4246 = vst [vmem:[%s2 + $0x120] sm:$0xf] %v3734
  %4247 = vst [vmem:[%s2 + $0x124] sm:$0xf] %v3735
  %4248 = vst [vmem:[%s2 + $0x128] sm:$0xf] %v3736
  %4249 = vst [vmem:[%s2 + $0x12c] sm:$0xf] %v3737
  %4250 = vst [vmem:[%s2 + $0x130] sm:$0xf] %v3738
  %4251 = vst [vmem:[%s2 + $0x134] sm:$0xf] %v3739
  %4252 = vst [vmem:[%s2 + $0x138] sm:$0xf] %v3740
  %4253 = vst [vmem:[%s2 + $0x13c] sm:$0xf] %v3741
  %4254 = vst [vmem:[%s2 + $0x140] sm:$0xf] %v3742
  %4255 = vst [vmem:[%s2 + $0x144] sm:$0xf] %v3743
  %4256 = vst [vmem:[%s2 + $0x148] sm:$0xf] %v3744
  %4257 = vst [vmem:[%s2 + $0x14c] sm:$0xf] %v3745
  %4258 = vst [vmem:[%s2 + $0x150] sm:$0xf] %v3746
  %4259 = vst [vmem:[%s2 + $0x154] sm:$0xf] %v3747
  %4260 = vst [vmem:[%s2 + $0x158] sm:$0xf] %v3748
  %4261 = vst [vmem:[%s2 + $0x15c] sm:$0xf] %v3749
  %4262 = vst [vmem:[%s2 + $0x160] sm:$0xf] %v3750
  %4263 = vst [vmem:[%s2 + $0x164] sm:$0xf] %v3751
  %4264 = vst [vmem:[%s2 + $0x168] sm:$0xf] %v3752
  %4265 = vst [vmem:[%s2 + $0x16c] sm:$0xf] %v3753
  %4266 = vst [vmem:[%s2 + $0x170] sm:$0xf] %v3754
  %4267 = vst [vmem:[%s2 + $0x174] sm:$0xf] %v3755
  %4268 = vst [vmem:[%s2 + $0x178] sm:$0xf] %v3756
  %4269 = vst [vmem:[%s2 + $0x17c] sm:$0xf] %v3757
  %4270 = vst [vmem:[%s2 + $0x180] sm:$0xf] %v3758
  %4271 = vst [vmem:[%s2 + $0x184] sm:$0xf] %v3759
  %4272 = vst [vmem:[%s2 + $0x188] sm:$0xf] %v3760
  %4273 = vst [vmem:[%s2 + $0x18c] sm:$0xf] %v3761
  %4274 = vst [vmem:[%s2 + $0x190] sm:$0xf] %v3762
  %4275 = vst [vmem:[%s2 + $0x194] sm:$0xf] %v3763
  %4276 = vst [vmem:[%s2 + $0x198] sm:$0xf] %v3764
  %4277 = vst [vmem:[%s2 + $0x19c] sm:$0xf] %v3765
  %4278 = vst [vmem:[%s2 + $0x1a0] sm:$0xf] %v3766
  %4279 = vst [vmem:[%s2 + $0x1a4] sm:$0xf] %v3767
  %4280 = vst [vmem:[%s2 + $0x1a8] sm:$0xf] %v3768
  %4281 = vst [vmem:[%s2 + $0x1ac] sm:$0xf] %v3769
  %4282 = vst [vmem:[%s2 + $0x1b0] sm:$0xf] %v3770
  %4283 = vst [vmem:[%s2 + $0x1b4] sm:$0xf] %v3771
  %4284 = vst [vmem:[%s2 + $0x1b8] sm:$0xf] %v3772
  %4285 = vst [vmem:[%s2 + $0x1bc] sm:$0xf] %v3773
  %4286 = vst [vmem:[%s2 + $0x1c0] sm:$0xf] %v3774
  %4287 = vst [vmem:[%s2 + $0x1c4] sm:$0xf] %v3775
  %4288 = vst [vmem:[%s2 + $0x1c8] sm:$0xf] %v3776
  %4289 = vst [vmem:[%s2 + $0x1cc] sm:$0xf] %v3777
  %4290 = vst [vmem:[%s2 + $0x1d0] sm:$0xf] %v3778
  %4291 = vst [vmem:[%s2 + $0x1d4] sm:$0xf] %v3779
  %4292 = vst [vmem:[%s2 + $0x1d8] sm:$0xf] %v3780
  %4293 = vst [vmem:[%s2 + $0x1dc] sm:$0xf] %v3781
  %4294 = vst [vmem:[%s2 + $0x1e0] sm:$0xf] %v3782
  %4295 = vst [vmem:[%s2 + $0x1e4] sm:$0xf] %v3783
  %4296 = vst [vmem:[%s2 + $0x1e8] sm:$0xf] %v3784
  %4297 = vst [vmem:[%s2 + $0x1ec] sm:$0xf] %v3785
  %4298 = vst [vmem:[%s2 + $0x1f0] sm:$0xf] %v3786
  %4299 = vst [vmem:[%s2 + $0x1f4] sm:$0xf] %v3787
  %4300 = vst [vmem:[%s2 + $0x1f8] sm:$0xf] %v3788
  %4301 = vst [vmem:[%s2 + $0x1fc] sm:$0xf] %v3789
  %4302 = vst [vmem:[%s2 + $0x200] sm:$0xf] %v3790
  %4303 = vst [vmem:[%s2 + $0x204] sm:$0xf] %v3791
  %4304 = vst [vmem:[%s2 + $0x208] sm:$0xf] %v3792
  %4305 = vst [vmem:[%s2 + $0x20c] sm:$0xf] %v3793
  %4306 = vst [vmem:[%s2 + $0x210] sm:$0xf] %v3794
  %4307 = vst [vmem:[%s2 + $0x214] sm:$0xf] %v3795
  %4308 = vst [vmem:[%s2 + $0x218] sm:$0xf] %v3796
  %4309 = vst [vmem:[%s2 + $0x21c] sm:$0xf] %v3797
  %4310 = vst [vmem:[%s2 + $0x220] sm:$0xf] %v3798
  %4311 = vst [vmem:[%s2 + $0x224] sm:$0xf] %v3799
  %4312 = vst [vmem:[%s2 + $0x228] sm:$0xf] %v3800
  %4313 = vst [vmem:[%s2 + $0x22c] sm:$0xf] %v3801
  %4314 = vst [vmem:[%s2 + $0x230] sm:$0xf] %v3802
  %4315 = vst [vmem:[%s2 + $0x234] sm:$0xf] %v3803
  %4316 = vst [vmem:[%s2 + $0x238] sm:$0xf] %v3804
  %4317 = vst [vmem:[%s2 + $0x23c] sm:$0xf] %v3805
  %4318 = vst [vmem:[%s2 + $0x240] sm:$0xf] %v3806
  %4319 = vst [vmem:[%s2 + $0x244] sm:$0xf] %v3807
  %4320 = vst [vmem:[%s2 + $0x248] sm:$0xf] %v3808
  %4321 = vst [vmem:[%s2 + $0x24c] sm:$0xf] %v3809
  %4322 = vst [vmem:[%s2 + $0x250] sm:$0xf] %v3810
  %4323 = vst [vmem:[%s2 + $0x254] sm:$0xf] %v3811
  %4324 = vst [vmem:[%s2 + $0x258] sm:$0xf] %v3812
  %4325 = vst [vmem:[%s2 + $0x25c] sm:$0xf] %v3813
  %4326 = vst [vmem:[%s2 + $0x260] sm:$0xf] %v3814
  %4327 = vst [vmem:[%s2 + $0x264] sm:$0xf] %v3815
  %4328 = vst [vmem:[%s2 + $0x268] sm:$0xf] %v3816
  %4329 = vst [vmem:[%s2 + $0x26c] sm:$0xf] %v3817
  %4330 = vst [vmem:[%s2 + $0x270] sm:$0xf] %v3818
  %4331 = vst [vmem:[%s2 + $0x274] sm:$0xf] %v3819
  %4332 = vst [vmem:[%s2 + $0x278] sm:$0xf] %v3820
  %4333 = vst [vmem:[%s2 + $0x27c] sm:$0xf] %v3821
  %4334 = vst [vmem:[%s2 + $0x280] sm:$0xf] %v3822
  %4335 = vst [vmem:[%s2 + $0x284] sm:$0xf] %v3823
  %4336 = vst [vmem:[%s2 + $0x288] sm:$0xf] %v3824
  %4337 = vst [vmem:[%s2 + $0x28c] sm:$0xf] %v3825
  %4338 = vst [vmem:[%s2 + $0x290] sm:$0xf] %v3826
  %4339 = vst [vmem:[%s2 + $0x294] sm:$0xf] %v3827
  %4340 = vst [vmem:[%s2 + $0x298] sm:$0xf] %v3828
  %4341 = vst [vmem:[%s2 + $0x29c] sm:$0xf] %v3829
  %4342 = vst [vmem:[%s2 + $0x2a0] sm:$0xf] %v3830
  %4343 = vst [vmem:[%s2 + $0x2a4] sm:$0xf] %v3831
  %4344 = vst [vmem:[%s2 + $0x2a8] sm:$0xf] %v3832
  %4345 = vst [vmem:[%s2 + $0x2ac] sm:$0xf] %v3833
  %4346 = vst [vmem:[%s2 + $0x2b0] sm:$0xf] %v3834
  %4347 = vst [vmem:[%s2 + $0x2b4] sm:$0xf] %v3835
  %4348 = vst [vmem:[%s2 + $0x2b8] sm:$0xf] %v3836
  %4349 = vst [vmem:[%s2 + $0x2bc] sm:$0xf] %v3837
  %4350 = vst [vmem:[%s2 + $0x2c0] sm:$0xf] %v3838
  %4351 = vst [vmem:[%s2 + $0x2c4] sm:$0xf] %v3839
  %4352 = vst [vmem:[%s2 + $0x2c8] sm:$0xf] %v3840
  %4353 = vst [vmem:[%s2 + $0x2cc] sm:$0xf] %v3841
  %4354 = vst [vmem:[%s2 + $0x2d0] sm:$0xf] %v3842
  %4355 = vst [vmem:[%s2 + $0x2d4] sm:$0xf] %v3843
  %4356 = vst [vmem:[%s2 + $0x2d8] sm:$0xf] %v3844
  %4357 = vst [vmem:[%s2 + $0x2dc] sm:$0xf] %v3845
  %4358 = vst [vmem:[%s2 + $0x2e0] sm:$0xf] %v3846
  %4359 = vst [vmem:[%s2 + $0x2e4] sm:$0xf] %v3847
  %4360 = vst [vmem:[%s2 + $0x2e8] sm:$0xf] %v3848
  %4361 = vst [vmem:[%s2 + $0x2ec] sm:$0xf] %v3849
  %4362 = vst [vmem:[%s2 + $0x2f0] sm:$0xf] %v3850
  %4363 = vst [vmem:[%s2 + $0x2f4] sm:$0xf] %v3851
  %4364 = vst [vmem:[%s2 + $0x2f8] sm:$0xf] %v3852
  %4365 = vst [vmem:[%s2 + $0x2fc] sm:$0xf] %v3853
  %4366 = vst [vmem:[%s2 + $0x300] sm:$0xf] %v3854
  %4367 = vst [vmem:[%s2 + $0x304] sm:$0xf] %v3855
  %4368 = vst [vmem:[%s2 + $0x308] sm:$0xf] %v3856
  %4369 = vst [vmem:[%s2 + $0x30c] sm:$0xf] %v3857
  %4370 = vst [vmem:[%s2 + $0x310] sm:$0xf] %v3858
  %4371 = vst [vmem:[%s2 + $0x314] sm:$0xf] %v3859
  %4372 = vst [vmem:[%s2 + $0x318] sm:$0xf] %v3860
  %4373 = vst [vmem:[%s2 + $0x31c] sm:$0xf] %v3861
  %4374 = vst [vmem:[%s2 + $0x320] sm:$0xf] %v3862
  %4375 = vst [vmem:[%s2 + $0x324] sm:$0xf] %v3863
  %4376 = vst [vmem:[%s2 + $0x328] sm:$0xf] %v3864
  %4377 = vst [vmem:[%s2 + $0x32c] sm:$0xf] %v3865
  %4378 = vst [vmem:[%s2 + $0x330] sm:$0xf] %v3866
  %4379 = vst [vmem:[%s2 + $0x334] sm:$0xf] %v3867
  %4380 = vst [vmem:[%s2 + $0x338] sm:$0xf] %v3868
  %4381 = vst [vmem:[%s2 + $0x33c] sm:$0xf] %v3869
  %4382 = vst [vmem:[%s2 + $0x340] sm:$0xf] %v3870
  %4383 = vst [vmem:[%s2 + $0x344] sm:$0xf] %v3871
  %4384 = vst [vmem:[%s2 + $0x348] sm:$0xf] %v3872
  %4385 = vst [vmem:[%s2 + $0x34c] sm:$0xf] %v3873
  %4386 = vst [vmem:[%s2 + $0x350] sm:$0xf] %v3874
  %4387 = vst [vmem:[%s2 + $0x354] sm:$0xf] %v3875
  %4388 = vst [vmem:[%s2 + $0x358] sm:$0xf] %v3876
  %4389 = vst [vmem:[%s2 + $0x35c] sm:$0xf] %v3877
  %4390 = vst [vmem:[%s2 + $0x360] sm:$0xf] %v3878
  %4391 = vst [vmem:[%s2 + $0x364] sm:$0xf] %v3879
  %4392 = vst [vmem:[%s2 + $0x368] sm:$0xf] %v3880
  %4393 = vst [vmem:[%s2 + $0x36c] sm:$0xf] %v3881
  %4394 = vst [vmem:[%s2 + $0x370] sm:$0xf] %v3882
  %4395 = vst [vmem:[%s2 + $0x374] sm:$0xf] %v3883
  %4396 = vst [vmem:[%s2 + $0x378] sm:$0xf] %v3884
  %4397 = vst [vmem:[%s2 + $0x37c] sm:$0xf] %v3885
  %4398 = vst [vmem:[%s2 + $0x380] sm:$0xf] %v3886
  %4399 = vst [vmem:[%s2 + $0x384] sm:$0xf] %v3887
  %4400 = vst [vmem:[%s2 + $0x388] sm:$0xf] %v3888
  %4401 = vst [vmem:[%s2 + $0x38c] sm:$0xf] %v3889
  %4402 = vst [vmem:[%s2 + $0x390] sm:$0xf] %v3890
  %4403 = vst [vmem:[%s2 + $0x394] sm:$0xf] %v3891
  %4404 = vst [vmem:[%s2 + $0x398] sm:$0xf] %v3892
  %4405 = vst [vmem:[%s2 + $0x39c] sm:$0xf] %v3893
  %4406 = vst [vmem:[%s2 + $0x3a0] sm:$0xf] %v3894
  %4407 = vst [vmem:[%s2 + $0x3a4] sm:$0xf] %v3895
  %4408 = vst [vmem:[%s2 + $0x3a8] sm:$0xf] %v3896
  %4409 = vst [vmem:[%s2 + $0x3ac] sm:$0xf] %v3897
  %4410 = vst [vmem:[%s2 + $0x3b0] sm:$0xf] %v3898
  %4411 = vst [vmem:[%s2 + $0x3b4] sm:$0xf] %v3899
  %4412 = vst [vmem:[%s2 + $0x3b8] sm:$0xf] %v3900
  %4413 = vst [vmem:[%s2 + $0x3bc] sm:$0xf] %v3901
  %4414 = vst [vmem:[%s2 + $0x3c0] sm:$0xf] %v3902
  %4415 = vst [vmem:[%s2 + $0x3c4] sm:$0xf] %v3903
  %4416 = vst [vmem:[%s2 + $0x3c8] sm:$0xf] %v3904
  %4417 = vst [vmem:[%s2 + $0x3cc] sm:$0xf] %v3905
  %4418 = vst [vmem:[%s2 + $0x3d0] sm:$0xf] %v3906
  %4419 = vst [vmem:[%s2 + $0x3d4] sm:$0xf] %v3907
  %4420 = vst [vmem:[%s2 + $0x3d8] sm:$0xf] %v3908
  %4421 = vst [vmem:[%s2 + $0x3dc] sm:$0xf] %v3909
  %4422 = vst [vmem:[%s2 + $0x3e0] sm:$0xf] %v3910
  %4423 = vst [vmem:[%s2 + $0x3e4] sm:$0xf] %v3911
  %4424 = vst [vmem:[%s2 + $0x3e8] sm:$0xf] %v3912
  %4425 = vst [vmem:[%s2 + $0x3ec] sm:$0xf] %v3913
  %4426 = vst [vmem:[%s2 + $0x3f0] sm:$0xf] %v3914
  %4427 = vst [vmem:[%s2 + $0x3f4] sm:$0xf] %v3915
  %4428 = vst [vmem:[%s2 + $0x3f8] sm:$0xf] %v3916
  %4429 = vst [vmem:[%s2 + $0x3fc] sm:$0xf] %v3917
  // Predicated region
  $region10: #{critic_forward.4} parent=0 // pred_check
    _
  $region11: #{critic_forward.4} parent=0 // pred_check_branch
    %4431 = sbr.rel (0) target = $region13
  $region12: #{critic_forward.4} parent=0 // pred_region
    _
  $region13: #{critic_forward.4} parent=0 // pred_fallthru
    _
  // Predicated region
  $region14: #{critic_forward.4} parent=0 // pred_check
    _
  $region15: #{critic_forward.4} parent=0 // pred_check_branch
    %4433 = sbr.rel (0) target = $region17
  $region16: #{critic_forward.4} parent=0 // pred_region
    _
  $region17: #{critic_forward.4} parent=0 // pred_fallthru
    _

// kernel: critic_forward.5
$region0: #{critic_forward.5}
  #allocation0 [shape = 'u32[]', space=smem, size = 0x4, offset = 0x4, fixed_abs, tag = 'smem constant byte address 0x4 - core index']
  #allocation1 [shape = 'u32[144,128]{1,0:T(1,128)}', space=vmem, size = 0x12000, scoped, tag = 'internal scratch']
  #allocation2 [shape = 'f32[1,128]{1,0:T(1,128)}', space=vmem, size = 0x200, scoped, tag = 'scratch operand']
  #allocation3 [shape = 'f32[1,128]{1,0:T(1,128)}', space=vmem, size = 0x200, scoped, tag = 'scratch operand']
  %s0 = inlined_call_operand.vmem [shape: bf16[512,128], index: 0, kind: input, shape index: {}]
  %s1 = inlined_call_operand.vmem [shape: bf16[128,128], index: 1, kind: input, shape index: {}]
  %s2 = inlined_call_operand.vmem [shape: f32[1,128], index: 2, kind: input, shape index: {}]
  %s3 = inlined_call_operand.vmem [shape: f32[1,128], index: 3, kind: input, shape index: {}]
  %s4 = inlined_call_operand.vmem [shape: bf16[1,512,128], index: 4, kind: output, shape index: {}]
  %s5 = sld [smem:[#allocation0]]
  $region34: #{critic_forward.5} parent=0
    _
  %s7 = ssub.s32 1, %s5
  %s8 = scalar_select 0, %s7, %s5
  // Predicated region
  $region2: #{critic_forward.5} parent=0 // pred_check
    _
  $region3: #{critic_forward.5} parent=0 // pred_check_branch
    %10 = sbr.rel (0) target = $region5
  $region4: #{critic_forward.5} parent=0 // pred_region
    _
  $region5: #{critic_forward.5} parent=0 // pred_fallthru
    _
  // Predicated region
  $region6: #{critic_forward.5} parent=0 // pred_check
    _
  $region7: #{critic_forward.5} parent=0 // pred_check_branch
    %12 = sbr.rel (0) target = $region9
  $region8: #{critic_forward.5} parent=0 // pred_region
    _
  $region9: #{critic_forward.5} parent=0 // pred_fallthru
    _
  // Predicated region
  $region10: #{critic_forward.5} parent=0 // pred_check
    _
  $region11: #{critic_forward.5} parent=0 // pred_check_branch
    %14 = sbr.rel (0) target = $region13
  $region12: #{critic_forward.5} parent=0 // pred_region
    _
  $region13: #{critic_forward.5} parent=0 // pred_fallthru
    _
  // Predicated region
  $region14: #{critic_forward.5} parent=0 // pred_check
    _
  $region15: #{critic_forward.5} parent=0 // pred_check_branch
    %16 = sbr.rel (0) target = $region17
  $region16: #{critic_forward.5} parent=0 // pred_region
    _
  $region17: #{critic_forward.5} parent=0 // pred_fallthru
    _
  %v18 = vld [vmem:[%s0] sm:$0xf]
  %v19 = vld [vmem:[%s0 + $0x4] sm:$0xf]
  %v20 = vld [vmem:[%s0 + $0x8] sm:$0xf]
  %v21 = vld [vmem:[%s0 + $0xc] sm:$0xf]
  %v22 = vld [vmem:[%s0 + $0x10] sm:$0xf]
  %v23 = vld [vmem:[%s0 + $0x14] sm:$0xf]
  %v24 = vld [vmem:[%s0 + $0x18] sm:$0xf]
  %v25 = vld [vmem:[%s0 + $0x1c] sm:$0xf]
  %v26 = vld [vmem:[%s0 + $0x20] sm:$0xf]
  %v27 = vld [vmem:[%s0 + $0x24] sm:$0xf]
  %v28 = vld [vmem:[%s0 + $0x28] sm:$0xf]
  %v29 = vld [vmem:[%s0 + $0x2c] sm:$0xf]
  %v30 = vld [vmem:[%s0 + $0x30] sm:$0xf]
  %v31 = vld [vmem:[%s0 + $0x34] sm:$0xf]
  %v32 = vld [vmem:[%s0 + $0x38] sm:$0xf]
  %v33 = vld [vmem:[%s0 + $0x3c] sm:$0xf]
  %v34 = vld [vmem:[%s0 + $0x40] sm:$0xf]
  %v35 = vld [vmem:[%s0 + $0x44] sm:$0xf]
  %v36 = vld [vmem:[%s0 + $0x48] sm:$0xf]
  %v37 = vld [vmem:[%s0 + $0x4c] sm:$0xf]
  %v38 = vld [vmem:[%s0 + $0x50] sm:$0xf]
  %v39 = vld [vmem:[%s0 + $0x54] sm:$0xf]
  %v40 = vld [vmem:[%s0 + $0x58] sm:$0xf]
  %v41 = vld [vmem:[%s0 + $0x5c] sm:$0xf]
  %v42 = vld [vmem:[%s0 + $0x60] sm:$0xf]
  %v43 = vld [vmem:[%s0 + $0x64] sm:$0xf]
  %v44 = vld [vmem:[%s0 + $0x68] sm:$0xf]
  %v45 = vld [vmem:[%s0 + $0x6c] sm:$0xf]
  %v46 = vld [vmem:[%s0 + $0x70] sm:$0xf]
  %v47 = vld [vmem:[%s0 + $0x74] sm:$0xf]
  %v48 = vld [vmem:[%s0 + $0x78] sm:$0xf]
  %v49 = vld [vmem:[%s0 + $0x7c] sm:$0xf]
  %v50 = vld [vmem:[%s0 + $0x80] sm:$0xf]
  %v51 = vld [vmem:[%s0 + $0x84] sm:$0xf]
  %v52 = vld [vmem:[%s0 + $0x88] sm:$0xf]
  %v53 = vld [vmem:[%s0 + $0x8c] sm:$0xf]
  %v54 = vld [vmem:[%s0 + $0x90] sm:$0xf]
  %v55 = vld [vmem:[%s0 + $0x94] sm:$0xf]
  %v56 = vld [vmem:[%s0 + $0x98] sm:$0xf]
  %v57 = vld [vmem:[%s0 + $0x9c] sm:$0xf]
  %v58 = vld [vmem:[%s0 + $0xa0] sm:$0xf]
  %v59 = vld [vmem:[%s0 + $0xa4] sm:$0xf]
  %v60 = vld [vmem:[%s0 + $0xa8] sm:$0xf]
  %v61 = vld [vmem:[%s0 + $0xac] sm:$0xf]
  %v62 = vld [vmem:[%s0 + $0xb0] sm:$0xf]
  %v63 = vld [vmem:[%s0 + $0xb4] sm:$0xf]
  %v64 = vld [vmem:[%s0 + $0xb8] sm:$0xf]
  %v65 = vld [vmem:[%s0 + $0xbc] sm:$0xf]
  %v66 = vld [vmem:[%s0 + $0xc0] sm:$0xf]
  %v67 = vld [vmem:[%s0 + $0xc4] sm:$0xf]
  %v68 = vld [vmem:[%s0 + $0xc8] sm:$0xf]
  %v69 = vld [vmem:[%s0 + $0xcc] sm:$0xf]
  %v70 = vld [vmem:[%s0 + $0xd0] sm:$0xf]
  %v71 = vld [vmem:[%s0 + $0xd4] sm:$0xf]
  %v72 = vld [vmem:[%s0 + $0xd8] sm:$0xf]
  %v73 = vld [vmem:[%s0 + $0xdc] sm:$0xf]
  %v74 = vld [vmem:[%s0 + $0xe0] sm:$0xf]
  %v75 = vld [vmem:[%s0 + $0xe4] sm:$0xf]
  %v76 = vld [vmem:[%s0 + $0xe8] sm:$0xf]
  %v77 = vld [vmem:[%s0 + $0xec] sm:$0xf]
  %v78 = vld [vmem:[%s0 + $0xf0] sm:$0xf]
  %v79 = vld [vmem:[%s0 + $0xf4] sm:$0xf]
  %v80 = vld [vmem:[%s0 + $0xf8] sm:$0xf]
  %v81 = vld [vmem:[%s0 + $0xfc] sm:$0xf]
  %v82 = vld [vmem:[%s1] sm:$0xf]
  %v83 = vld [vmem:[%s1 + $0x4] sm:$0xf]
  %v84 = vld [vmem:[%s1 + $0x8] sm:$0xf]
  %v85 = vld [vmem:[%s1 + $0xc] sm:$0xf]
  %v86 = vld [vmem:[%s1 + $0x10] sm:$0xf]
  %v87 = vld [vmem:[%s1 + $0x14] sm:$0xf]
  %v88 = vld [vmem:[%s1 + $0x18] sm:$0xf]
  %v89 = vld [vmem:[%s1 + $0x1c] sm:$0xf]
  %v90 = vld [vmem:[%s1 + $0x20] sm:$0xf]
  %v91 = vld [vmem:[%s1 + $0x24] sm:$0xf]
  %v92 = vld [vmem:[%s1 + $0x28] sm:$0xf]
  %v93 = vld [vmem:[%s1 + $0x2c] sm:$0xf]
  %v94 = vld [vmem:[%s1 + $0x30] sm:$0xf]
  %v95 = vld [vmem:[%s1 + $0x34] sm:$0xf]
  %v96 = vld [vmem:[%s1 + $0x38] sm:$0xf]
  %v97 = vld [vmem:[%s1 + $0x3c] sm:$0xf]
  %v162 = vunpack.c.l.b16 %v18
  %v163 = vunpack.c.l.b16 %v19
  %v164 = vunpack.c.l.b16 %v20
  %v165 = vunpack.c.l.b16 %v21
  %v166 = vunpack.c.l.b16 %v22
  %v167 = vunpack.c.l.b16 %v23
  %v168 = vunpack.c.l.b16 %v24
  %v169 = vunpack.c.l.b16 %v25
  %v170 = vunpack.c.l.b16 %v26
  %v171 = vunpack.c.l.b16 %v27
  %v172 = vunpack.c.l.b16 %v28
  %v173 = vunpack.c.l.b16 %v29
  %v174 = vunpack.c.l.b16 %v30
  %v175 = vunpack.c.l.b16 %v31
  %v176 = vunpack.c.l.b16 %v32
  %v177 = vunpack.c.l.b16 %v33
  %v178 = vunpack.c.l.b16 %v34
  %v179 = vunpack.c.l.b16 %v35
  %v180 = vunpack.c.l.b16 %v36
  %v181 = vunpack.c.l.b16 %v37
  %v182 = vunpack.c.l.b16 %v38
  %v183 = vunpack.c.l.b16 %v39
  %v184 = vunpack.c.l.b16 %v40
  %v185 = vunpack.c.l.b16 %v41
  %v186 = vunpack.c.l.b16 %v42
  %v187 = vunpack.c.l.b16 %v43
  %v188 = vunpack.c.l.b16 %v44
  %v189 = vunpack.c.l.b16 %v45
  %v190 = vunpack.c.l.b16 %v46
  %v191 = vunpack.c.l.b16 %v47
  %v192 = vunpack.c.l.b16 %v48
  %v193 = vunpack.c.l.b16 %v49
  %v194 = vunpack.c.l.b16 %v50
  %v195 = vunpack.c.l.b16 %v51
  %v196 = vunpack.c.l.b16 %v52
  %v197 = vunpack.c.l.b16 %v53
  %v198 = vunpack.c.l.b16 %v54
  %v199 = vunpack.c.l.b16 %v55
  %v200 = vunpack.c.l.b16 %v56
  %v201 = vunpack.c.l.b16 %v57
  %v202 = vunpack.c.l.b16 %v58
  %v203 = vunpack.c.l.b16 %v59
  %v204 = vunpack.c.l.b16 %v60
  %v205 = vunpack.c.l.b16 %v61
  %v206 = vunpack.c.l.b16 %v62
  %v207 = vunpack.c.l.b16 %v63
  %v208 = vunpack.c.l.b16 %v64
  %v209 = vunpack.c.l.b16 %v65
  %v210 = vunpack.c.l.b16 %v66
  %v211 = vunpack.c.l.b16 %v67
  %v212 = vunpack.c.l.b16 %v68
  %v213 = vunpack.c.l.b16 %v69
  %v214 = vunpack.c.l.b16 %v70
  %v215 = vunpack.c.l.b16 %v71
  %v216 = vunpack.c.l.b16 %v72
  %v217 = vunpack.c.l.b16 %v73
  %v218 = vunpack.c.l.b16 %v74
  %v219 = vunpack.c.l.b16 %v75
  %v220 = vunpack.c.l.b16 %v76
  %v221 = vunpack.c.l.b16 %v77
  %v222 = vunpack.c.l.b16 %v78
  %v223 = vunpack.c.l.b16 %v79
  %v224 = vunpack.c.l.b16 %v80
  %v225 = vunpack.c.l.b16 %v81
  %v226 = vpack.c.b16 %v163, %v162
  %v227 = vpack.c.b16 %v165, %v164
  %v228 = vpack.c.b16 %v167, %v166
  %v229 = vpack.c.b16 %v169, %v168
  %v230 = vpack.c.b16 %v171, %v170
  %v231 = vpack.c.b16 %v173, %v172
  %v232 = vpack.c.b16 %v175, %v174
  %v233 = vpack.c.b16 %v177, %v176
  %v234 = vpack.c.b16 %v179, %v178
  %v235 = vpack.c.b16 %v181, %v180
  %v236 = vpack.c.b16 %v183, %v182
  %v237 = vpack.c.b16 %v185, %v184
  %v238 = vpack.c.b16 %v187, %v186
  %v239 = vpack.c.b16 %v189, %v188
  %v240 = vpack.c.b16 %v191, %v190
  %v241 = vpack.c.b16 %v193, %v192
  %v242 = vpack.c.b16 %v195, %v194
  %v243 = vpack.c.b16 %v197, %v196
  %v244 = vpack.c.b16 %v199, %v198
  %v245 = vpack.c.b16 %v201, %v200
  %v246 = vpack.c.b16 %v203, %v202
  %v247 = vpack.c.b16 %v205, %v204
  %v248 = vpack.c.b16 %v207, %v206
  %v249 = vpack.c.b16 %v209, %v208
  %v250 = vpack.c.b16 %v211, %v210
  %v251 = vpack.c.b16 %v213, %v212
  %v252 = vpack.c.b16 %v215, %v214
  %v253 = vpack.c.b16 %v217, %v216
  %v254 = vpack.c.b16 %v219, %v218
  %v255 = vpack.c.b16 %v221, %v220
  %v256 = vpack.c.b16 %v223, %v222
  %v257 = vpack.c.b16 %v225, %v224
  %v306 = vunpack.c.l.b16 %v82
  %v307 = vunpack.c.l.b16 %v83
  %v308 = vunpack.c.l.b16 %v84
  %v309 = vunpack.c.l.b16 %v85
  %v310 = vunpack.c.l.b16 %v86
  %v311 = vunpack.c.l.b16 %v87
  %v312 = vunpack.c.l.b16 %v88
  %v313 = vunpack.c.l.b16 %v89
  %v314 = vunpack.c.l.b16 %v90
  %v315 = vunpack.c.l.b16 %v91
  %v316 = vunpack.c.l.b16 %v92
  %v317 = vunpack.c.l.b16 %v93
  %v318 = vunpack.c.l.b16 %v94
  %v319 = vunpack.c.l.b16 %v95
  %v320 = vunpack.c.l.b16 %v96
  %v321 = vunpack.c.l.b16 %v97
  %v322 = vpack.c.b16 %v307, %v306
  %v323 = vpack.c.b16 %v309, %v308
  %v324 = vpack.c.b16 %v311, %v310
  %v325 = vpack.c.b16 %v313, %v312
  %v326 = vpack.c.b16 %v315, %v314
  %v327 = vpack.c.b16 %v317, %v316
  %v328 = vpack.c.b16 %v319, %v318
  %v329 = vpack.c.b16 %v321, %v320
  %338 = vmatprep.subr.bf16.mxu0 0
  %339 = vmatpush1.bf16.msra.mxu0 %v322
  %340 = vmatprep.subr.bf16.mxu0 0
  %341 = vmatpush1.bf16.msra.mxu0 %v323
  %342 = vmatprep.subr.bf16.mxu0 0
  %343 = vmatpush1.bf16.msra.mxu0 %v324
  %344 = vmatprep.subr.bf16.mxu0 0
  %345 = vmatpush1.bf16.msra.mxu0 %v325
  %346 = vmatprep.subr.bf16.mxu0 0
  %347 = vmatpush1.bf16.msra.mxu0 %v326
  %348 = vmatprep.subr.bf16.mxu0 0
  %349 = vmatpush1.bf16.msra.mxu0 %v327
  %350 = vmatprep.subr.bf16.mxu0 0
  %351 = vmatpush1.bf16.msra.mxu0 %v328
  %352 = vmatprep.subr.bf16.mxu0 0
  %353 = vmatpush1.bf16.msra.mxu0 %v329
  %354 = vmatprep.subr.bf16.mxu0 0
  %355 = vmatpush1.bf16.msra.mxu0 0
  %356 = vmatprep.subr.bf16.mxu0 0
  %357 = vmatpush1.bf16.msra.mxu0 0
  %358 = vmatprep.subr.bf16.mxu0 0
  %359 = vmatpush1.bf16.msra.mxu0 0
  %360 = vmatprep.subr.bf16.mxu0 0
  %361 = vmatpush1.bf16.msra.mxu0 0
  %362 = vmatprep.subr.bf16.mxu0 0
  %363 = vmatpush1.bf16.msra.mxu0 0
  %364 = vmatprep.subr.bf16.mxu0 0
  %365 = vmatpush1.bf16.msra.mxu0 0
  %366 = vmatprep.subr.bf16.mxu0 0
  %367 = vmatpush1.bf16.msra.mxu0 0
  %368 = vmatprep.subr.bf16.mxu0 0
  %369 = vmatpush1.bf16.msra.mxu0 0
  %370 = vmatprep.mubr.bf16.mxu0 0
  %371 = vmatmul.mubr.bf16.gmra.mrb[0].mxu0 %v226
  %v372 = vpop.f32.mrb[0].mxu0
  %v373 = vadd.f32 0.0, %v372
  %v374 = vpop.f32.mrb[0].mxu0
  %v375 = vpop.f32.mrb[0].mxu0
  %v376 = vadd.f32 0.0, %v375
  %v377 = vpop.f32.mrb[0].mxu0
  %378 = vmatprep.mubr.bf16.mxu0 0
  %379 = vmatmul.mubr.bf16.gmra.mrb[0].mxu0 %v227
  %v380 = vpop.f32.mrb[0].mxu0
  %v381 = vadd.f32 0.0, %v380
  %v382 = vpop.f32.mrb[0].mxu0
  %v383 = vpop.f32.mrb[0].mxu0
  %v384 = vadd.f32 0.0, %v383
  %v385 = vpop.f32.mrb[0].mxu0
  %386 = vmatprep.mubr.bf16.mxu0 0
  %387 = vmatmul.mubr.bf16.gmra.mrb[0].mxu0 %v228
  %v388 = vpop.f32.mrb[0].mxu0
  %v389 = vadd.f32 0.0, %v388
  %v390 = vpop.f32.mrb[0].mxu0
  %v391 = vpop.f32.mrb[0].mxu0
  %v392 = vadd.f32 0.0, %v391
  %v393 = vpop.f32.mrb[0].mxu0
  %394 = vmatprep.mubr.bf16.mxu0 0
  %395 = vmatmul.mubr.bf16.gmra.mrb[0].mxu0 %v229
  %v396 = vpop.f32.mrb[0].mxu0
  %v397 = vadd.f32 0.0, %v396
  %v398 = vpop.f32.mrb[0].mxu0
  %v399 = vpop.f32.mrb[0].mxu0
  %v400 = vadd.f32 0.0, %v399
  %v401 = vpop.f32.mrb[0].mxu0
  %402 = vmatprep.mubr.bf16.mxu0 0
  %403 = vmatmul.mubr.bf16.gmra.mrb[0].mxu0 %v230
  %v404 = vpop.f32.mrb[0].mxu0
  %v405 = vadd.f32 0.0, %v404
  %v406 = vpop.f32.mrb[0].mxu0
  %v407 = vpop.f32.mrb[0].mxu0
  %v408 = vadd.f32 0.0, %v407
  %v409 = vpop.f32.mrb[0].mxu0
  %410 = vmatprep.mubr.bf16.mxu0 0
  %411 = vmatmul.mubr.bf16.gmra.mrb[0].mxu0 %v231
  %v412 = vpop.f32.mrb[0].mxu0
  %v413 = vadd.f32 0.0, %v412
  %v414 = vpop.f32.mrb[0].mxu0
  %v415 = vpop.f32.mrb[0].mxu0
  %v416 = vadd.f32 0.0, %v415
  %v417 = vpop.f32.mrb[0].mxu0
  %418 = vmatprep.mubr.bf16.mxu0 0
  %419 = vmatmul.mubr.bf16.gmra.mrb[0].mxu0 %v232
  %v420 = vpop.f32.mrb[0].mxu0
  %v421 = vadd.f32 0.0, %v420
  %v422 = vpop.f32.mrb[0].mxu0
  %v423 = vpop.f32.mrb[0].mxu0
  %v424 = vadd.f32 0.0, %v423
  %v425 = vpop.f32.mrb[0].mxu0
  %426 = vmatprep.mubr.bf16.mxu0 0
  %427 = vmatmul.mubr.bf16.gmra.mrb[0].mxu0 %v233
  %v428 = vpop.f32.mrb[0].mxu0
  %v429 = vadd.f32 0.0, %v428
  %v430 = vpop.f32.mrb[0].mxu0
  %v431 = vpop.f32.mrb[0].mxu0
  %v432 = vadd.f32 0.0, %v431
  %v433 = vpop.f32.mrb[0].mxu0
  %434 = vmatprep.mubr.bf16.mxu0 0
  %435 = vmatmul.mubr.bf16.gmra.mrb[0].mxu0 %v234
  %v436 = vpop.f32.mrb[0].mxu0
  %v437 = vadd.f32 0.0, %v436
  %v438 = vpop.f32.mrb[0].mxu0
  %v439 = vpop.f32.mrb[0].mxu0
  %v440 = vadd.f32 0.0, %v439
  %v441 = vpop.f32.mrb[0].mxu0
  %442 = vmatprep.mubr.bf16.mxu0 0
  %443 = vmatmul.mubr.bf16.gmra.mrb[0].mxu0 %v235
  %v444 = vpop.f32.mrb[0].mxu0
  %v445 = vadd.f32 0.0, %v444
  %v446 = vpop.f32.mrb[0].mxu0
  %v447 = vpop.f32.mrb[0].mxu0
  %v448 = vadd.f32 0.0, %v447
  %v449 = vpop.f32.mrb[0].mxu0
  %450 = vmatprep.mubr.bf16.mxu0 0
  %451 = vmatmul.mubr.bf16.gmra.mrb[0].mxu0 %v236
  %v452 = vpop.f32.mrb[0].mxu0
  %v453 = vadd.f32 0.0, %v452
  %v454 = vpop.f32.mrb[0].mxu0
  %v455 = vpop.f32.mrb[0].mxu0
  %v456 = vadd.f32 0.0, %v455
  %v457 = vpop.f32.mrb[0].mxu0
  %458 = vmatprep.mubr.bf16.mxu0 0
  %459 = vmatmul.mubr.bf16.gmra.mrb[0].mxu0 %v237
  %v460 = vpop.f32.mrb[0].mxu0
  %v461 = vadd.f32 0.0, %v460
  %v462 = vpop.f32.mrb[0].mxu0
  %v463 = vpop.f32.mrb[0].mxu0
  %v464 = vadd.f32 0.0, %v463
  %v465 = vpop.f32.mrb[0].mxu0
  %466 = vmatprep.mubr.bf16.mxu0 0
  %467 = vmatmul.mubr.bf16.gmra.mrb[0].mxu0 %v238
  %v468 = vpop.f32.mrb[0].mxu0
  %v469 = vadd.f32 0.0, %v468
  %v470 = vpop.f32.mrb[0].mxu0
  %v471 = vpop.f32.mrb[0].mxu0
  %v472 = vadd.f32 0.0, %v471
  %v473 = vpop.f32.mrb[0].mxu0
  %474 = vmatprep.mubr.bf16.mxu0 0
  %475 = vmatmul.mubr.bf16.gmra.mrb[0].mxu0 %v239
  %v476 = vpop.f32.mrb[0].mxu0
  %v477 = vadd.f32 0.0, %v476
  %v478 = vpop.f32.mrb[0].mxu0
  %v479 = vpop.f32.mrb[0].mxu0
  %v480 = vadd.f32 0.0, %v479
  %v481 = vpop.f32.mrb[0].mxu0
  %482 = vmatprep.mubr.bf16.mxu0 0
  %483 = vmatmul.mubr.bf16.gmra.mrb[0].mxu0 %v240
  %v484 = vpop.f32.mrb[0].mxu0
  %v485 = vadd.f32 0.0, %v484
  %v486 = vpop.f32.mrb[0].mxu0
  %v487 = vpop.f32.mrb[0].mxu0
  %v488 = vadd.f32 0.0, %v487
  %v489 = vpop.f32.mrb[0].mxu0
  %490 = vmatprep.mubr.bf16.mxu0 0
  %491 = vmatmul.mubr.bf16.gmra.mrb[0].mxu0 %v241
  %v492 = vpop.f32.mrb[0].mxu0
  %v493 = vadd.f32 0.0, %v492
  %v494 = vpop.f32.mrb[0].mxu0
  %v495 = vpop.f32.mrb[0].mxu0
  %v496 = vadd.f32 0.0, %v495
  %v497 = vpop.f32.mrb[0].mxu0
  %498 = vmatprep.mubr.bf16.mxu0 0
  %499 = vmatmul.mubr.bf16.gmra.mrb[0].mxu0 %v242
  %v500 = vpop.f32.mrb[0].mxu0
  %v501 = vadd.f32 0.0, %v500
  %v502 = vpop.f32.mrb[0].mxu0
  %v503 = vpop.f32.mrb[0].mxu0
  %v504 = vadd.f32 0.0, %v503
  %v505 = vpop.f32.mrb[0].mxu0
  %506 = vmatprep.mubr.bf16.mxu0 0
  %507 = vmatmul.mubr.bf16.gmra.mrb[0].mxu0 %v243
  %v508 = vpop.f32.mrb[0].mxu0
  %v509 = vadd.f32 0.0, %v508
  %v510 = vpop.f32.mrb[0].mxu0
  %v511 = vpop.f32.mrb[0].mxu0
  %v512 = vadd.f32 0.0, %v511
  %v513 = vpop.f32.mrb[0].mxu0
  %514 = vmatprep.mubr.bf16.mxu0 0
  %515 = vmatmul.mubr.bf16.gmra.mrb[0].mxu0 %v244
  %v516 = vpop.f32.mrb[0].mxu0
  %v517 = vadd.f32 0.0, %v516
  %v518 = vpop.f32.mrb[0].mxu0
  %v519 = vpop.f32.mrb[0].mxu0
  %v520 = vadd.f32 0.0, %v519
  %v521 = vpop.f32.mrb[0].mxu0
  %522 = vmatprep.mubr.bf16.mxu0 0
  %523 = vmatmul.mubr.bf16.gmra.mrb[0].mxu0 %v245
  %v524 = vpop.f32.mrb[0].mxu0
  %v525 = vadd.f32 0.0, %v524
  %v526 = vpop.f32.mrb[0].mxu0
  %v527 = vpop.f32.mrb[0].mxu0
  %v528 = vadd.f32 0.0, %v527
  %v529 = vpop.f32.mrb[0].mxu0
  %530 = vmatprep.mubr.bf16.mxu0 0
  %531 = vmatmul.mubr.bf16.gmra.mrb[0].mxu0 %v246
  %v532 = vpop.f32.mrb[0].mxu0
  %v533 = vadd.f32 0.0, %v532
  %v534 = vpop.f32.mrb[0].mxu0
  %v535 = vpop.f32.mrb[0].mxu0
  %v536 = vadd.f32 0.0, %v535
  %v537 = vpop.f32.mrb[0].mxu0
  %538 = vmatprep.mubr.bf16.mxu0 0
  %539 = vmatmul.mubr.bf16.gmra.mrb[0].mxu0 %v247
  %v540 = vpop.f32.mrb[0].mxu0
  %v541 = vadd.f32 0.0, %v540
  %v542 = vpop.f32.mrb[0].mxu0
  %v543 = vpop.f32.mrb[0].mxu0
  %v544 = vadd.f32 0.0, %v543
  %v545 = vpop.f32.mrb[0].mxu0
  %546 = vmatprep.mubr.bf16.mxu0 0
  %547 = vmatmul.mubr.bf16.gmra.mrb[0].mxu0 %v248
  %v548 = vpop.f32.mrb[0].mxu0
  %v549 = vadd.f32 0.0, %v548
  %v550 = vpop.f32.mrb[0].mxu0
  %v551 = vpop.f32.mrb[0].mxu0
  %v552 = vadd.f32 0.0, %v551
  %v553 = vpop.f32.mrb[0].mxu0
  %554 = vmatprep.mubr.bf16.mxu0 0
  %555 = vmatmul.mubr.bf16.gmra.mrb[0].mxu0 %v249
  %v556 = vpop.f32.mrb[0].mxu0
  %v557 = vadd.f32 0.0, %v556
  %v558 = vpop.f32.mrb[0].mxu0
  %v559 = vpop.f32.mrb[0].mxu0
  %v560 = vadd.f32 0.0, %v559
  %v561 = vpop.f32.mrb[0].mxu0
  %562 = vmatprep.mubr.bf16.mxu0 0
  %563 = vmatmul.mubr.bf16.gmra.mrb[0].mxu0 %v250
  %v564 = vpop.f32.mrb[0].mxu0
  %v565 = vadd.f32 0.0, %v564
  %v566 = vpop.f32.mrb[0].mxu0
  %v567 = vpop.f32.mrb[0].mxu0
  %v568 = vadd.f32 0.0, %v567
  %v569 = vpop.f32.mrb[0].mxu0
  %570 = vmatprep.mubr.bf16.mxu0 0
  %571 = vmatmul.mubr.bf16.gmra.mrb[0].mxu0 %v251
  %v572 = vpop.f32.mrb[0].mxu0
  %v573 = vadd.f32 0.0, %v572
  %v574 = vpop.f32.mrb[0].mxu0
  %v575 = vpop.f32.mrb[0].mxu0
  %v576 = vadd.f32 0.0, %v575
  %v577 = vpop.f32.mrb[0].mxu0
  %578 = vmatprep.mubr.bf16.mxu0 0
  %579 = vmatmul.mubr.bf16.gmra.mrb[0].mxu0 %v252
  %v580 = vpop.f32.mrb[0].mxu0
  %v581 = vadd.f32 0.0, %v580
  %v582 = vpop.f32.mrb[0].mxu0
  %v583 = vpop.f32.mrb[0].mxu0
  %v584 = vadd.f32 0.0, %v583
  %v585 = vpop.f32.mrb[0].mxu0
  %586 = vmatprep.mubr.bf16.mxu0 0
  %587 = vmatmul.mubr.bf16.gmra.mrb[0].mxu0 %v253
  %v588 = vpop.f32.mrb[0].mxu0
  %v589 = vadd.f32 0.0, %v588
  %v590 = vpop.f32.mrb[0].mxu0
  %v591 = vpop.f32.mrb[0].mxu0
  %v592 = vadd.f32 0.0, %v591
  %v593 = vpop.f32.mrb[0].mxu0
  %594 = vmatprep.mubr.bf16.mxu0 0
  %595 = vmatmul.mubr.bf16.gmra.mrb[0].mxu0 %v254
  %v596 = vpop.f32.mrb[0].mxu0
  %v597 = vadd.f32 0.0, %v596
  %v598 = vpop.f32.mrb[0].mxu0
  %v599 = vpop.f32.mrb[0].mxu0
  %v600 = vadd.f32 0.0, %v599
  %v601 = vpop.f32.mrb[0].mxu0
  %602 = vmatprep.mubr.bf16.mxu0 0
  %603 = vmatmul.mubr.bf16.gmra.mrb[0].mxu0 %v255
  %v604 = vpop.f32.mrb[0].mxu0
  %v605 = vadd.f32 0.0, %v604
  %v606 = vpop.f32.mrb[0].mxu0
  %v607 = vpop.f32.mrb[0].mxu0
  %v608 = vadd.f32 0.0, %v607
  %v609 = vpop.f32.mrb[0].mxu0
  %610 = vmatprep.mubr.bf16.mxu0 0
  %611 = vmatmul.mubr.bf16.gmra.mrb[0].mxu0 %v256
  %v612 = vpop.f32.mrb[0].mxu0
  %v613 = vadd.f32 0.0, %v612
  %v614 = vpop.f32.mrb[0].mxu0
  %v615 = vpop.f32.mrb[0].mxu0
  %v616 = vadd.f32 0.0, %v615
  %v617 = vpop.f32.mrb[0].mxu0
  %618 = vmatprep.mubr.bf16.mxu0 0
  %619 = vmatmul.mubr.bf16.gmra.mrb[0].mxu0 %v257
  %v620 = vpop.f32.mrb[0].mxu0
  %v621 = vadd.f32 0.0, %v620
  %v622 = vpop.f32.mrb[0].mxu0
  %v623 = vpop.f32.mrb[0].mxu0
  %v624 = vadd.f32 0.0, %v623
  %v625 = vpop.f32.mrb[0].mxu0
  %626 = vdwg.mxu0
  %p627 = scmp.eq.s32.totalorder 0, 0
  // Predicated region
  $region18: #{critic_forward.5} parent=0 // pred_check
    %p628 = pneg %p627
  $region19: #{critic_forward.5} parent=0 // pred_check_branch
    %630 = sbr.rel (%p628) target = $region21
  $region20: #{critic_forward.5} parent=0 // pred_region
    %631 = vst [vmem:[#allocation2] sm:$0x1] 0.0
    %632 = vst [vmem:[#allocation3] sm:$0x1] 0.0
  $region21: #{critic_forward.5} parent=0 // pred_fallthru
    _
  %v633 = vld [vmem:[#allocation2] sm:$0x1]
  %v634 = vadd.f32 %v373, %v376
  %v635 = vadd.f32 %v634, %v381
  %v636 = vadd.f32 %v635, %v384
  %v637 = vadd.f32 %v636, %v389
  %v638 = vadd.f32 %v637, %v392
  %v639 = vadd.f32 %v638, %v397
  %v640 = vadd.f32 %v639, %v400
  %v641 = vadd.f32 %v640, %v405
  %v642 = vadd.f32 %v641, %v408
  %v643 = vadd.f32 %v642, %v413
  %v644 = vadd.f32 %v643, %v416
  %v645 = vadd.f32 %v644, %v421
  %v646 = vadd.f32 %v645, %v424
  %v647 = vadd.f32 %v646, %v429
  %v648 = vadd.f32 %v647, %v432
  %v649 = vadd.f32 %v648, %v437
  %v650 = vadd.f32 %v649, %v440
  %v651 = vadd.f32 %v650, %v445
  %v652 = vadd.f32 %v651, %v448
  %v653 = vadd.f32 %v652, %v453
  %v654 = vadd.f32 %v653, %v456
  %v655 = vadd.f32 %v654, %v461
  %v656 = vadd.f32 %v655, %v464
  %v657 = vadd.f32 %v656, %v469
  %v658 = vadd.f32 %v657, %v472
  %v659 = vadd.f32 %v658, %v477
  %v660 = vadd.f32 %v659, %v480
  %v661 = vadd.f32 %v660, %v485
  %v662 = vadd.f32 %v661, %v488
  %v663 = vadd.f32 %v662, %v493
  %v664 = vadd.f32 %v663, %v496
  %v665 = vadd.f32 %v664, %v501
  %v666 = vadd.f32 %v665, %v504
  %v667 = vadd.f32 %v666, %v509
  %v668 = vadd.f32 %v667, %v512
  %v669 = vadd.f32 %v668, %v517
  %v670 = vadd.f32 %v669, %v520
  %v671 = vadd.f32 %v670, %v525
  %v672 = vadd.f32 %v671, %v528
  %v673 = vadd.f32 %v672, %v533
  %v674 = vadd.f32 %v673, %v536
  %v675 = vadd.f32 %v674, %v541
  %v676 = vadd.f32 %v675, %v544
  %v677 = vadd.f32 %v676, %v549
  %v678 = vadd.f32 %v677, %v552
  %v679 = vadd.f32 %v678, %v557
  %v680 = vadd.f32 %v679, %v560
  %v681 = vadd.f32 %v680, %v565
  %v682 = vadd.f32 %v681, %v568
  %v683 = vadd.f32 %v682, %v573
  %v684 = vadd.f32 %v683, %v576
  %v685 = vadd.f32 %v684, %v581
  %v686 = vadd.f32 %v685, %v584
  %v687 = vadd.f32 %v686, %v589
  %v688 = vadd.f32 %v687, %v592
  %v689 = vadd.f32 %v688, %v597
  %v690 = vadd.f32 %v689, %v600
  %v691 = vadd.f32 %v690, %v605
  %v692 = vadd.f32 %v691, %v608
  %v693 = vadd.f32 %v692, %v613
  %v694 = vadd.f32 %v693, %v616
  %v695 = vadd.f32 %v694, %v621
  %v696 = vadd.f32 %v695, %v624
  %v697 = vrot.slane %v696, 4
  %v698 = vadd.f32 %v696, %v697
  %v699 = vrot.slane %v698, 2
  %v700 = vadd.f32 %v698, %v699
  %v701 = vrot.slane %v700, 1
  %v702 = vadd.f32 %v700, %v701
  %v703 = vadd.f32 %v633, %v702
  %704 = vst [vmem:[#allocation2] sm:$0x1] %v703
  %v705 = vld [vmem:[#allocation3] sm:$0x1]
  %v706 = vmul.f32 %v373, %v373
  %v707 = vmul.f32 %v376, %v376
  %v708 = vmul.f32 %v381, %v381
  %v709 = vmul.f32 %v384, %v384
  %v710 = vmul.f32 %v389, %v389
  %v711 = vmul.f32 %v392, %v392
  %v712 = vmul.f32 %v397, %v397
  %v713 = vmul.f32 %v400, %v400
  %v714 = vmul.f32 %v405, %v405
  %v715 = vmul.f32 %v408, %v408
  %v716 = vmul.f32 %v413, %v413
  %v717 = vmul.f32 %v416, %v416
  %v718 = vmul.f32 %v421, %v421
  %v719 = vmul.f32 %v424, %v424
  %v720 = vmul.f32 %v429, %v429
  %v721 = vmul.f32 %v432, %v432
  %v722 = vmul.f32 %v437, %v437
  %v723 = vmul.f32 %v440, %v440
  %v724 = vmul.f32 %v445, %v445
  %v725 = vmul.f32 %v448, %v448
  %v726 = vmul.f32 %v453, %v453
  %v727 = vmul.f32 %v456, %v456
  %v728 = vmul.f32 %v461, %v461
  %v729 = vmul.f32 %v464, %v464
  %v730 = vmul.f32 %v469, %v469
  %v731 = vmul.f32 %v472, %v472
  %v732 = vmul.f32 %v477, %v477
  %v733 = vmul.f32 %v480, %v480
  %v734 = vmul.f32 %v485, %v485
  %v735 = vmul.f32 %v488, %v488
  %v736 = vmul.f32 %v493, %v493
  %v737 = vmul.f32 %v496, %v496
  %v738 = vmul.f32 %v501, %v501
  %v739 = vmul.f32 %v504, %v504
  %v740 = vmul.f32 %v509, %v509
  %v741 = vmul.f32 %v512, %v512
  %v742 = vmul.f32 %v517, %v517
  %v743 = vmul.f32 %v520, %v520
  %v744 = vmul.f32 %v525, %v525
  %v745 = vmul.f32 %v528, %v528
  %v746 = vmul.f32 %v533, %v533
  %v747 = vmul.f32 %v536, %v536
  %v748 = vmul.f32 %v541, %v541
  %v749 = vmul.f32 %v544, %v544
  %v750 = vmul.f32 %v549, %v549
  %v751 = vmul.f32 %v552, %v552
  %v752 = vmul.f32 %v557, %v557
  %v753 = vmul.f32 %v560, %v560
  %v754 = vmul.f32 %v565, %v565
  %v755 = vmul.f32 %v568, %v568
  %v756 = vmul.f32 %v573, %v573
  %v757 = vmul.f32 %v576, %v576
  %v758 = vmul.f32 %v581, %v581
  %v759 = vmul.f32 %v584, %v584
  %v760 = vmul.f32 %v589, %v589
  %v761 = vmul.f32 %v592, %v592
  %v762 = vmul.f32 %v597, %v597
  %v763 = vmul.f32 %v600, %v600
  %v764 = vmul.f32 %v605, %v605
  %v765 = vmul.f32 %v608, %v608
  %v766 = vmul.f32 %v613, %v613
  %v767 = vmul.f32 %v616, %v616
  %v768 = vmul.f32 %v621, %v621
  %v769 = vmul.f32 %v624, %v624
  %v770 = vadd.f32 %v706, %v707
  %v771 = vadd.f32 %v770, %v708
  %v772 = vadd.f32 %v771, %v709
  %v773 = vadd.f32 %v772, %v710
  %v774 = vadd.f32 %v773, %v711
  %v775 = vadd.f32 %v774, %v712
  %v776 = vadd.f32 %v775, %v713
  %v777 = vadd.f32 %v776, %v714
  %v778 = vadd.f32 %v777, %v715
  %v779 = vadd.f32 %v778, %v716
  %v780 = vadd.f32 %v779, %v717
  %v781 = vadd.f32 %v780, %v718
  %v782 = vadd.f32 %v781, %v719
  %v783 = vadd.f32 %v782, %v720
  %v784 = vadd.f32 %v783, %v721
  %v785 = vadd.f32 %v784, %v722
  %v786 = vadd.f32 %v785, %v723
  %v787 = vadd.f32 %v786, %v724
  %v788 = vadd.f32 %v787, %v725
  %v789 = vadd.f32 %v788, %v726
  %v790 = vadd.f32 %v789, %v727
  %v791 = vadd.f32 %v790, %v728
  %v792 = vadd.f32 %v791, %v729
  %v793 = vadd.f32 %v792, %v730
  %v794 = vadd.f32 %v793, %v731
  %v795 = vadd.f32 %v794, %v732
  %v796 = vadd.f32 %v795, %v733
  %v797 = vadd.f32 %v796, %v734
  %v798 = vadd.f32 %v797, %v735
  %v799 = vadd.f32 %v798, %v736
  %v800 = vadd.f32 %v799, %v737
  %v801 = vadd.f32 %v800, %v738
  %v802 = vadd.f32 %v801, %v739
  %v803 = vadd.f32 %v802, %v740
  %v804 = vadd.f32 %v803, %v741
  %v805 = vadd.f32 %v804, %v742
  %v806 = vadd.f32 %v805, %v743
  %v807 = vadd.f32 %v806, %v744
  %v808 = vadd.f32 %v807, %v745
  %v809 = vadd.f32 %v808, %v746
  %v810 = vadd.f32 %v809, %v747
  %v811 = vadd.f32 %v810, %v748
  %v812 = vadd.f32 %v811, %v749
  %v813 = vadd.f32 %v812, %v750
  %v814 = vadd.f32 %v813, %v751
  %v815 = vadd.f32 %v814, %v752
  %v816 = vadd.f32 %v815, %v753
  %v817 = vadd.f32 %v816, %v754
  %v818 = vadd.f32 %v817, %v755
  %v819 = vadd.f32 %v818, %v756
  %v820 = vadd.f32 %v819, %v757
  %v821 = vadd.f32 %v820, %v758
  %v822 = vadd.f32 %v821, %v759
  %v823 = vadd.f32 %v822, %v760
  %v824 = vadd.f32 %v823, %v761
  %v825 = vadd.f32 %v824, %v762
  %v826 = vadd.f32 %v825, %v763
  %v827 = vadd.f32 %v826, %v764
  %v828 = vadd.f32 %v827, %v765
  %v829 = vadd.f32 %v828, %v766
  %v830 = vadd.f32 %v829, %v767
  %v831 = vadd.f32 %v830, %v768
  %v832 = vadd.f32 %v831, %v769
  %v833 = vrot.slane %v832, 4
  %v834 = vadd.f32 %v832, %v833
  %v835 = vrot.slane %v834, 2
  %v836 = vadd.f32 %v834, %v835
  %v837 = vrot.slane %v836, 1
  %v838 = vadd.f32 %v836, %v837
  %v839 = vadd.f32 %v705, %v838
  %840 = vst [vmem:[#allocation3] sm:$0x1] %v839
  %v841 = vpack.c.bf16 %v376, %v373
  %v842 = vpack.c.bf16 %v384, %v381
  %v843 = vpack.c.bf16 %v392, %v389
  %v844 = vpack.c.bf16 %v400, %v397
  %v845 = vpack.c.bf16 %v408, %v405
  %v846 = vpack.c.bf16 %v416, %v413
  %v847 = vpack.c.bf16 %v424, %v421
  %v848 = vpack.c.bf16 %v432, %v429
  %v849 = vpack.c.bf16 %v440, %v437
  %v850 = vpack.c.bf16 %v448, %v445
  %v851 = vpack.c.bf16 %v456, %v453
  %v852 = vpack.c.bf16 %v464, %v461
  %v853 = vpack.c.bf16 %v472, %v469
  %v854 = vpack.c.bf16 %v480, %v477
  %v855 = vpack.c.bf16 %v488, %v485
  %v856 = vpack.c.bf16 %v496, %v493
  %v857 = vpack.c.bf16 %v504, %v501
  %v858 = vpack.c.bf16 %v512, %v509
  %v859 = vpack.c.bf16 %v520, %v517
  %v860 = vpack.c.bf16 %v528, %v525
  %v861 = vpack.c.bf16 %v536, %v533
  %v862 = vpack.c.bf16 %v544, %v541
  %v863 = vpack.c.bf16 %v552, %v549
  %v864 = vpack.c.bf16 %v560, %v557
  %v865 = vpack.c.bf16 %v568, %v565
  %v866 = vpack.c.bf16 %v576, %v573
  %v867 = vpack.c.bf16 %v584, %v581
  %v868 = vpack.c.bf16 %v592, %v589
  %v869 = vpack.c.bf16 %v600, %v597
  %v870 = vpack.c.bf16 %v608, %v605
  %v871 = vpack.c.bf16 %v616, %v613
  %v872 = vpack.c.bf16 %v624, %v621
  %v905 = vunpack.c.l.b16 %v841
  %v906 = vunpack.c.h.b16 %v841
  %v907 = vunpack.c.l.b16 %v842
  %v908 = vunpack.c.h.b16 %v842
  %v909 = vunpack.c.l.b16 %v843
  %v910 = vunpack.c.h.b16 %v843
  %v911 = vunpack.c.l.b16 %v844
  %v912 = vunpack.c.h.b16 %v844
  %v913 = vunpack.c.l.b16 %v845
  %v914 = vunpack.c.h.b16 %v845
  %v915 = vunpack.c.l.b16 %v846
  %v916 = vunpack.c.h.b16 %v846
  %v917 = vunpack.c.l.b16 %v847
  %v918 = vunpack.c.h.b16 %v847
  %v919 = vunpack.c.l.b16 %v848
  %v920 = vunpack.c.h.b16 %v848
  %v921 = vunpack.c.l.b16 %v849
  %v922 = vunpack.c.h.b16 %v849
  %v923 = vunpack.c.l.b16 %v850
  %v924 = vunpack.c.h.b16 %v850
  %v925 = vunpack.c.l.b16 %v851
  %v926 = vunpack.c.h.b16 %v851
  %v927 = vunpack.c.l.b16 %v852
  %v928 = vunpack.c.h.b16 %v852
  %v929 = vunpack.c.l.b16 %v853
  %v930 = vunpack.c.h.b16 %v853
  %v931 = vunpack.c.l.b16 %v854
  %v932 = vunpack.c.h.b16 %v854
  %v933 = vunpack.c.l.b16 %v855
  %v934 = vunpack.c.h.b16 %v855
  %v935 = vunpack.c.l.b16 %v856
  %v936 = vunpack.c.h.b16 %v856
  %v937 = vunpack.c.l.b16 %v857
  %v938 = vunpack.c.h.b16 %v857
  %v939 = vunpack.c.l.b16 %v858
  %v940 = vunpack.c.h.b16 %v858
  %v941 = vunpack.c.l.b16 %v859
  %v942 = vunpack.c.h.b16 %v859
  %v943 = vunpack.c.l.b16 %v860
  %v944 = vunpack.c.h.b16 %v860
  %v945 = vunpack.c.l.b16 %v861
  %v946 = vunpack.c.h.b16 %v861
  %v947 = vunpack.c.l.b16 %v862
  %v948 = vunpack.c.h.b16 %v862
  %v949 = vunpack.c.l.b16 %v863
  %v950 = vunpack.c.h.b16 %v863
  %v951 = vunpack.c.l.b16 %v864
  %v952 = vunpack.c.h.b16 %v864
  %v953 = vunpack.c.l.b16 %v865
  %v954 = vunpack.c.h.b16 %v865
  %v955 = vunpack.c.l.b16 %v866
  %v956 = vunpack.c.h.b16 %v866
  %v957 = vunpack.c.l.b16 %v867
  %v958 = vunpack.c.h.b16 %v867
  %v959 = vunpack.c.l.b16 %v868
  %v960 = vunpack.c.h.b16 %v868
  %v961 = vunpack.c.l.b16 %v869
  %v962 = vunpack.c.h.b16 %v869
  %v963 = vunpack.c.l.b16 %v870
  %v964 = vunpack.c.h.b16 %v870
  %v965 = vunpack.c.l.b16 %v871
  %v966 = vunpack.c.h.b16 %v871
  %v967 = vunpack.c.l.b16 %v872
  %v968 = vunpack.c.h.b16 %v872
  %v969 = vpack.c.b16 %v905, %v905
  %v970 = vpack.c.b16 %v906, %v906
  %v971 = vpack.c.b16 %v907, %v907
  %v972 = vpack.c.b16 %v908, %v908
  %v973 = vpack.c.b16 %v909, %v909
  %v974 = vpack.c.b16 %v910, %v910
  %v975 = vpack.c.b16 %v911, %v911
  %v976 = vpack.c.b16 %v912, %v912
  %v977 = vpack.c.b16 %v913, %v913
  %v978 = vpack.c.b16 %v914, %v914
  %v979 = vpack.c.b16 %v915, %v915
  %v980 = vpack.c.b16 %v916, %v916
  %v981 = vpack.c.b16 %v917, %v917
  %v982 = vpack.c.b16 %v918, %v918
  %v983 = vpack.c.b16 %v919, %v919
  %v984 = vpack.c.b16 %v920, %v920
  %v985 = vpack.c.b16 %v921, %v921
  %v986 = vpack.c.b16 %v922, %v922
  %v987 = vpack.c.b16 %v923, %v923
  %v988 = vpack.c.b16 %v924, %v924
  %v989 = vpack.c.b16 %v925, %v925
  %v990 = vpack.c.b16 %v926, %v926
  %v991 = vpack.c.b16 %v927, %v927
  %v992 = vpack.c.b16 %v928, %v928
  %v993 = vpack.c.b16 %v929, %v929
  %v994 = vpack.c.b16 %v930, %v930
  %v995 = vpack.c.b16 %v931, %v931
  %v996 = vpack.c.b16 %v932, %v932
  %v997 = vpack.c.b16 %v933, %v933
  %v998 = vpack.c.b16 %v934, %v934
  %v999 = vpack.c.b16 %v935, %v935
  %v1000 = vpack.c.b16 %v936, %v936
  %v1001 = vpack.c.b16 %v937, %v937
  %v1002 = vpack.c.b16 %v938, %v938
  %v1003 = vpack.c.b16 %v939, %v939
  %v1004 = vpack.c.b16 %v940, %v940
  %v1005 = vpack.c.b16 %v941, %v941
  %v1006 = vpack.c.b16 %v942, %v942
  %v1007 = vpack.c.b16 %v943, %v943
  %v1008 = vpack.c.b16 %v944, %v944
  %v1009 = vpack.c.b16 %v945, %v945
  %v1010 = vpack.c.b16 %v946, %v946
  %v1011 = vpack.c.b16 %v947, %v947
  %v1012 = vpack.c.b16 %v948, %v948
  %v1013 = vpack.c.b16 %v949, %v949
  %v1014 = vpack.c.b16 %v950, %v950
  %v1015 = vpack.c.b16 %v951, %v951
  %v1016 = vpack.c.b16 %v952, %v952
  %v1017 = vpack.c.b16 %v953, %v953
  %v1018 = vpack.c.b16 %v954, %v954
  %v1019 = vpack.c.b16 %v955, %v955
  %v1020 = vpack.c.b16 %v956, %v956
  %v1021 = vpack.c.b16 %v957, %v957
  %v1022 = vpack.c.b16 %v958, %v958
  %v1023 = vpack.c.b16 %v959, %v959
  %v1024 = vpack.c.b16 %v960, %v960
  %v1025 = vpack.c.b16 %v961, %v961
  %v1026 = vpack.c.b16 %v962, %v962
  %v1027 = vpack.c.b16 %v963, %v963
  %v1028 = vpack.c.b16 %v964, %v964
  %v1029 = vpack.c.b16 %v965, %v965
  %v1030 = vpack.c.b16 %v966, %v966
  %v1031 = vpack.c.b16 %v967, %v967
  %v1032 = vpack.c.b16 %v968, %v968
  %s1097 = smul.u32 0, 64
  %s1098 = smul.addr %s1097, 4
  %s1099 = scalar_lea.vmem %s4, %s1098
  %1100 = vst [vmem:[%s1099] sm:$0xf] %v969
  %1101 = vst [vmem:[%s1099 + $0x4] sm:$0xf] %v970
  %1102 = vst [vmem:[%s1099 + $0x8] sm:$0xf] %v971
  %1103 = vst [vmem:[%s1099 + $0xc] sm:$0xf] %v972
  %1104 = vst [vmem:[%s1099 + $0x10] sm:$0xf] %v973
  %1105 = vst [vmem:[%s1099 + $0x14] sm:$0xf] %v974
  %1106 = vst [vmem:[%s1099 + $0x18] sm:$0xf] %v975
  %1107 = vst [vmem:[%s1099 + $0x1c] sm:$0xf] %v976
  %1108 = vst [vmem:[%s1099 + $0x20] sm:$0xf] %v977
  %1109 = vst [vmem:[%s1099 + $0x24] sm:$0xf] %v978
  %1110 = vst [vmem:[%s1099 + $0x28] sm:$0xf] %v979
  %1111 = vst [vmem:[%s1099 + $0x2c] sm:$0xf] %v980
  %1112 = vst [vmem:[%s1099 + $0x30] sm:$0xf] %v981
  %1113 = vst [vmem:[%s1099 + $0x34] sm:$0xf] %v982
  %1114 = vst [vmem:[%s1099 + $0x38] sm:$0xf] %v983
  %1115 = vst [vmem:[%s1099 + $0x3c] sm:$0xf] %v984
  %1116 = vst [vmem:[%s1099 + $0x40] sm:$0xf] %v985
  %1117 = vst [vmem:[%s1099 + $0x44] sm:$0xf] %v986
  %1118 = vst [vmem:[%s1099 + $0x48] sm:$0xf] %v987
  %1119 = vst [vmem:[%s1099 + $0x4c] sm:$0xf] %v988
  %1120 = vst [vmem:[%s1099 + $0x50] sm:$0xf] %v989
  %1121 = vst [vmem:[%s1099 + $0x54] sm:$0xf] %v990
  %1122 = vst [vmem:[%s1099 + $0x58] sm:$0xf] %v991
  %1123 = vst [vmem:[%s1099 + $0x5c] sm:$0xf] %v992
  %1124 = vst [vmem:[%s1099 + $0x60] sm:$0xf] %v993
  %1125 = vst [vmem:[%s1099 + $0x64] sm:$0xf] %v994
  %1126 = vst [vmem:[%s1099 + $0x68] sm:$0xf] %v995
  %1127 = vst [vmem:[%s1099 + $0x6c] sm:$0xf] %v996
  %1128 = vst [vmem:[%s1099 + $0x70] sm:$0xf] %v997
  %1129 = vst [vmem:[%s1099 + $0x74] sm:$0xf] %v998
  %1130 = vst [vmem:[%s1099 + $0x78] sm:$0xf] %v999
  %1131 = vst [vmem:[%s1099 + $0x7c] sm:$0xf] %v1000
  %1132 = vst [vmem:[%s1099 + $0x80] sm:$0xf] %v1001
  %1133 = vst [vmem:[%s1099 + $0x84] sm:$0xf] %v1002
  %1134 = vst [vmem:[%s1099 + $0x88] sm:$0xf] %v1003
  %1135 = vst [vmem:[%s1099 + $0x8c] sm:$0xf] %v1004
  %1136 = vst [vmem:[%s1099 + $0x90] sm:$0xf] %v1005
  %1137 = vst [vmem:[%s1099 + $0x94] sm:$0xf] %v1006
  %1138 = vst [vmem:[%s1099 + $0x98] sm:$0xf] %v1007
  %1139 = vst [vmem:[%s1099 + $0x9c] sm:$0xf] %v1008
  %1140 = vst [vmem:[%s1099 + $0xa0] sm:$0xf] %v1009
  %1141 = vst [vmem:[%s1099 + $0xa4] sm:$0xf] %v1010
  %1142 = vst [vmem:[%s1099 + $0xa8] sm:$0xf] %v1011
  %1143 = vst [vmem:[%s1099 + $0xac] sm:$0xf] %v1012
  %1144 = vst [vmem:[%s1099 + $0xb0] sm:$0xf] %v1013
  %1145 = vst [vmem:[%s1099 + $0xb4] sm:$0xf] %v1014
  %1146 = vst [vmem:[%s1099 + $0xb8] sm:$0xf] %v1015
  %1147 = vst [vmem:[%s1099 + $0xbc] sm:$0xf] %v1016
  %1148 = vst [vmem:[%s1099 + $0xc0] sm:$0xf] %v1017
  %1149 = vst [vmem:[%s1099 + $0xc4] sm:$0xf] %v1018
  %1150 = vst [vmem:[%s1099 + $0xc8] sm:$0xf] %v1019
  %1151 = vst [vmem:[%s1099 + $0xcc] sm:$0xf] %v1020
  %1152 = vst [vmem:[%s1099 + $0xd0] sm:$0xf] %v1021
  %1153 = vst [vmem:[%s1099 + $0xd4] sm:$0xf] %v1022
  %1154 = vst [vmem:[%s1099 + $0xd8] sm:$0xf] %v1023
  %1155 = vst [vmem:[%s1099 + $0xdc] sm:$0xf] %v1024
  %1156 = vst [vmem:[%s1099 + $0xe0] sm:$0xf] %v1025
  %1157 = vst [vmem:[%s1099 + $0xe4] sm:$0xf] %v1026
  %1158 = vst [vmem:[%s1099 + $0xe8] sm:$0xf] %v1027
  %1159 = vst [vmem:[%s1099 + $0xec] sm:$0xf] %v1028
  %1160 = vst [vmem:[%s1099 + $0xf0] sm:$0xf] %v1029
  %1161 = vst [vmem:[%s1099 + $0xf4] sm:$0xf] %v1030
  %1162 = vst [vmem:[%s1099 + $0xf8] sm:$0xf] %v1031
  %1163 = vst [vmem:[%s1099 + $0xfc] sm:$0xf] %v1032
  // Predicated region
  $region22: #{critic_forward.5} parent=0 // pred_check
    %p1164 = pneg %p627
  $region23: #{critic_forward.5} parent=0 // pred_check_branch
    %1166 = sbr.rel (%p1164) target = $region25
  $region24: #{critic_forward.5} parent=0 // pred_region
    %v1167 = vld [vmem:[#allocation2] sm:$0x1]
    %v1168 = vmul.f32 %v1167, 0.001953125
    %v1169 = vld [vmem:[#allocation3] sm:$0x1]
    %v1170 = vmul.f32 %v1169, 0.001953125
    %v1171 = vmul.f32 %v1168, %v1168
    %v1172 = vsub.f32 %v1170, %v1171
    %v1173 = vadd.f32 %v1172, 1e-05
    %v1174 = vrsqrt.pop %v1173
    %v1175 = vld [vmem:[%s2] sm:$0x1]
    %v1176 = vmul.f32 %v1174, %v1175
    %v1177 = vld [vmem:[%s3] sm:$0x1]
    %v1178 = vmul.f32 %v1168, %v1176
    %v1179 = vsub.f32 %v1177, %v1178
    %v1180 = vld [vmem:[%s4] sm:$0xf]
    %v1181 = vld [vmem:[%s4 + $0x4] sm:$0xf]
    %v1182 = vld [vmem:[%s4 + $0x8] sm:$0xf]
    %v1183 = vld [vmem:[%s4 + $0xc] sm:$0xf]
    %v1184 = vld [vmem:[%s4 + $0x10] sm:$0xf]
    %v1185 = vld [vmem:[%s4 + $0x14] sm:$0xf]
    %v1186 = vld [vmem:[%s4 + $0x18] sm:$0xf]
    %v1187 = vld [vmem:[%s4 + $0x1c] sm:$0xf]
    %v1188 = vld [vmem:[%s4 + $0x20] sm:$0xf]
    %v1189 = vld [vmem:[%s4 + $0x24] sm:$0xf]
    %v1190 = vld [vmem:[%s4 + $0x28] sm:$0xf]
    %v1191 = vld [vmem:[%s4 + $0x2c] sm:$0xf]
    %v1192 = vld [vmem:[%s4 + $0x30] sm:$0xf]
    %v1193 = vld [vmem:[%s4 + $0x34] sm:$0xf]
    %v1194 = vld [vmem:[%s4 + $0x38] sm:$0xf]
    %v1195 = vld [vmem:[%s4 + $0x3c] sm:$0xf]
    %v1196 = vld [vmem:[%s4 + $0x40] sm:$0xf]
    %v1197 = vld [vmem:[%s4 + $0x44] sm:$0xf]
    %v1198 = vld [vmem:[%s4 + $0x48] sm:$0xf]
    %v1199 = vld [vmem:[%s4 + $0x4c] sm:$0xf]
    %v1200 = vld [vmem:[%s4 + $0x50] sm:$0xf]
    %v1201 = vld [vmem:[%s4 + $0x54] sm:$0xf]
    %v1202 = vld [vmem:[%s4 + $0x58] sm:$0xf]
    %v1203 = vld [vmem:[%s4 + $0x5c] sm:$0xf]
    %v1204 = vld [vmem:[%s4 + $0x60] sm:$0xf]
    %v1205 = vld [vmem:[%s4 + $0x64] sm:$0xf]
    %v1206 = vld [vmem:[%s4 + $0x68] sm:$0xf]
    %v1207 = vld [vmem:[%s4 + $0x6c] sm:$0xf]
    %v1208 = vld [vmem:[%s4 + $0x70] sm:$0xf]
    %v1209 = vld [vmem:[%s4 + $0x74] sm:$0xf]
    %v1210 = vld [vmem:[%s4 + $0x78] sm:$0xf]
    %v1211 = vld [vmem:[%s4 + $0x7c] sm:$0xf]
    %v1212 = vld [vmem:[%s4 + $0x80] sm:$0xf]
    %v1213 = vld [vmem:[%s4 + $0x84] sm:$0xf]
    %v1214 = vld [vmem:[%s4 + $0x88] sm:$0xf]
    %v1215 = vld [vmem:[%s4 + $0x8c] sm:$0xf]
    %v1216 = vld [vmem:[%s4 + $0x90] sm:$0xf]
    %v1217 = vld [vmem:[%s4 + $0x94] sm:$0xf]
    %v1218 = vld [vmem:[%s4 + $0x98] sm:$0xf]
    %v1219 = vld [vmem:[%s4 + $0x9c] sm:$0xf]
    %v1220 = vld [vmem:[%s4 + $0xa0] sm:$0xf]
    %v1221 = vld [vmem:[%s4 + $0xa4] sm:$0xf]
    %v1222 = vld [vmem:[%s4 + $0xa8] sm:$0xf]
    %v1223 = vld [vmem:[%s4 + $0xac] sm:$0xf]
    %v1224 = vld [vmem:[%s4 + $0xb0] sm:$0xf]
    %v1225 = vld [vmem:[%s4 + $0xb4] sm:$0xf]
    %v1226 = vld [vmem:[%s4 + $0xb8] sm:$0xf]
    %v1227 = vld [vmem:[%s4 + $0xbc] sm:$0xf]
    %v1228 = vld [vmem:[%s4 + $0xc0] sm:$0xf]
    %v1229 = vld [vmem:[%s4 + $0xc4] sm:$0xf]
    %v1230 = vld [vmem:[%s4 + $0xc8] sm:$0xf]
    %v1231 = vld [vmem:[%s4 + $0xcc] sm:$0xf]
    %v1232 = vld [vmem:[%s4 + $0xd0] sm:$0xf]
    %v1233 = vld [vmem:[%s4 + $0xd4] sm:$0xf]
    %v1234 = vld [vmem:[%s4 + $0xd8] sm:$0xf]
    %v1235 = vld [vmem:[%s4 + $0xdc] sm:$0xf]
    %v1236 = vld [vmem:[%s4 + $0xe0] sm:$0xf]
    %v1237 = vld [vmem:[%s4 + $0xe4] sm:$0xf]
    %v1238 = vld [vmem:[%s4 + $0xe8] sm:$0xf]
    %v1239 = vld [vmem:[%s4 + $0xec] sm:$0xf]
    %v1240 = vld [vmem:[%s4 + $0xf0] sm:$0xf]
    %v1241 = vld [vmem:[%s4 + $0xf4] sm:$0xf]
    %v1242 = vld [vmem:[%s4 + $0xf8] sm:$0xf]
    %v1243 = vld [vmem:[%s4 + $0xfc] sm:$0xf]
    %v1244 = vunpack.c.l.bf16 %v1180
    %v1245 = vunpack.c.l.bf16 %v1181
    %v1246 = vunpack.c.l.bf16 %v1182
    %v1247 = vunpack.c.l.bf16 %v1183
    %v1248 = vunpack.c.l.bf16 %v1184
    %v1249 = vunpack.c.l.bf16 %v1185
    %v1250 = vunpack.c.l.bf16 %v1186
    %v1251 = vunpack.c.l.bf16 %v1187
    %v1252 = vunpack.c.l.bf16 %v1188
    %v1253 = vunpack.c.l.bf16 %v1189
    %v1254 = vunpack.c.l.bf16 %v1190
    %v1255 = vunpack.c.l.bf16 %v1191
    %v1256 = vunpack.c.l.bf16 %v1192
    %v1257 = vunpack.c.l.bf16 %v1193
    %v1258 = vunpack.c.l.bf16 %v1194
    %v1259 = vunpack.c.l.bf16 %v1195
    %v1260 = vunpack.c.l.bf16 %v1196
    %v1261 = vunpack.c.l.bf16 %v1197
    %v1262 = vunpack.c.l.bf16 %v1198
    %v1263 = vunpack.c.l.bf16 %v1199
    %v1264 = vunpack.c.l.bf16 %v1200
    %v1265 = vunpack.c.l.bf16 %v1201
    %v1266 = vunpack.c.l.bf16 %v1202
    %v1267 = vunpack.c.l.bf16 %v1203
    %v1268 = vunpack.c.l.bf16 %v1204
    %v1269 = vunpack.c.l.bf16 %v1205
    %v1270 = vunpack.c.l.bf16 %v1206
    %v1271 = vunpack.c.l.bf16 %v1207
    %v1272 = vunpack.c.l.bf16 %v1208
    %v1273 = vunpack.c.l.bf16 %v1209
    %v1274 = vunpack.c.l.bf16 %v1210
    %v1275 = vunpack.c.l.bf16 %v1211
    %v1276 = vunpack.c.l.bf16 %v1212
    %v1277 = vunpack.c.l.bf16 %v1213
    %v1278 = vunpack.c.l.bf16 %v1214
    %v1279 = vunpack.c.l.bf16 %v1215
    %v1280 = vunpack.c.l.bf16 %v1216
    %v1281 = vunpack.c.l.bf16 %v1217
    %v1282 = vunpack.c.l.bf16 %v1218
    %v1283 = vunpack.c.l.bf16 %v1219
    %v1284 = vunpack.c.l.bf16 %v1220
    %v1285 = vunpack.c.l.bf16 %v1221
    %v1286 = vunpack.c.l.bf16 %v1222
    %v1287 = vunpack.c.l.bf16 %v1223
    %v1288 = vunpack.c.l.bf16 %v1224
    %v1289 = vunpack.c.l.bf16 %v1225
    %v1290 = vunpack.c.l.bf16 %v1226
    %v1291 = vunpack.c.l.bf16 %v1227
    %v1292 = vunpack.c.l.bf16 %v1228
    %v1293 = vunpack.c.l.bf16 %v1229
    %v1294 = vunpack.c.l.bf16 %v1230
    %v1295 = vunpack.c.l.bf16 %v1231
    %v1296 = vunpack.c.l.bf16 %v1232
    %v1297 = vunpack.c.l.bf16 %v1233
    %v1298 = vunpack.c.l.bf16 %v1234
    %v1299 = vunpack.c.l.bf16 %v1235
    %v1300 = vunpack.c.l.bf16 %v1236
    %v1301 = vunpack.c.l.bf16 %v1237
    %v1302 = vunpack.c.l.bf16 %v1238
    %v1303 = vunpack.c.l.bf16 %v1239
    %v1304 = vunpack.c.l.bf16 %v1240
    %v1305 = vunpack.c.l.bf16 %v1241
    %v1306 = vunpack.c.l.bf16 %v1242
    %v1307 = vunpack.c.l.bf16 %v1243
    %v1309 = vlaneseq
    %v1310 = vshrl.u32 %v1309, 7
    %v1311 = vsub.s32 0, %v1310
    %v1312 = vrot.slane %v1176, %v1311
    %v1314 = vmul.f32 %v1244, %v1312
    %v1315 = vmul.f32 %v1245, %v1312
    %v1316 = vmul.f32 %v1246, %v1312
    %v1317 = vmul.f32 %v1247, %v1312
    %v1318 = vmul.f32 %v1248, %v1312
    %v1319 = vmul.f32 %v1249, %v1312
    %v1320 = vmul.f32 %v1250, %v1312
    %v1321 = vmul.f32 %v1251, %v1312
    %v1322 = vmul.f32 %v1252, %v1312
    %v1323 = vmul.f32 %v1253, %v1312
    %v1324 = vmul.f32 %v1254, %v1312
    %v1325 = vmul.f32 %v1255, %v1312
    %v1326 = vmul.f32 %v1256, %v1312
    %v1327 = vmul.f32 %v1257, %v1312
    %v1328 = vmul.f32 %v1258, %v1312
    %v1329 = vmul.f32 %v1259, %v1312
    %v1330 = vmul.f32 %v1260, %v1312
    %v1331 = vmul.f32 %v1261, %v1312
    %v1332 = vmul.f32 %v1262, %v1312
    %v1333 = vmul.f32 %v1263, %v1312
    %v1334 = vmul.f32 %v1264, %v1312
    %v1335 = vmul.f32 %v1265, %v1312
    %v1336 = vmul.f32 %v1266, %v1312
    %v1337 = vmul.f32 %v1267, %v1312
    %v1338 = vmul.f32 %v1268, %v1312
    %v1339 = vmul.f32 %v1269, %v1312
    %v1340 = vmul.f32 %v1270, %v1312
    %v1341 = vmul.f32 %v1271, %v1312
    %v1342 = vmul.f32 %v1272, %v1312
    %v1343 = vmul.f32 %v1273, %v1312
    %v1344 = vmul.f32 %v1274, %v1312
    %v1345 = vmul.f32 %v1275, %v1312
    %v1346 = vmul.f32 %v1276, %v1312
    %v1347 = vmul.f32 %v1277, %v1312
    %v1348 = vmul.f32 %v1278, %v1312
    %v1349 = vmul.f32 %v1279, %v1312
    %v1350 = vmul.f32 %v1280, %v1312
    %v1351 = vmul.f32 %v1281, %v1312
    %v1352 = vmul.f32 %v1282, %v1312
    %v1353 = vmul.f32 %v1283, %v1312
    %v1354 = vmul.f32 %v1284, %v1312
    %v1355 = vmul.f32 %v1285, %v1312
    %v1356 = vmul.f32 %v1286, %v1312
    %v1357 = vmul.f32 %v1287, %v1312
    %v1358 = vmul.f32 %v1288, %v1312
    %v1359 = vmul.f32 %v1289, %v1312
    %v1360 = vmul.f32 %v1290, %v1312
    %v1361 = vmul.f32 %v1291, %v1312
    %v1362 = vmul.f32 %v1292, %v1312
    %v1363 = vmul.f32 %v1293, %v1312
    %v1364 = vmul.f32 %v1294, %v1312
    %v1365 = vmul.f32 %v1295, %v1312
    %v1366 = vmul.f32 %v1296, %v1312
    %v1367 = vmul.f32 %v1297, %v1312
    %v1368 = vmul.f32 %v1298, %v1312
    %v1369 = vmul.f32 %v1299, %v1312
    %v1370 = vmul.f32 %v1300, %v1312
    %v1371 = vmul.f32 %v1301, %v1312
    %v1372 = vmul.f32 %v1302, %v1312
    %v1373 = vmul.f32 %v1303, %v1312
    %v1374 = vmul.f32 %v1304, %v1312
    %v1375 = vmul.f32 %v1305, %v1312
    %v1376 = vmul.f32 %v1306, %v1312
    %v1377 = vmul.f32 %v1307, %v1312
    %v1379 = vlaneseq
    %v1380 = vshrl.u32 %v1379, 7
    %v1381 = vsub.s32 0, %v1380
    %v1382 = vrot.slane %v1179, %v1381
    %v1384 = vadd.f32 %v1314, %v1382
    %v1385 = vadd.f32 %v1315, %v1382
    %v1386 = vadd.f32 %v1316, %v1382
    %v1387 = vadd.f32 %v1317, %v1382
    %v1388 = vadd.f32 %v1318, %v1382
    %v1389 = vadd.f32 %v1319, %v1382
    %v1390 = vadd.f32 %v1320, %v1382
    %v1391 = vadd.f32 %v1321, %v1382
    %v1392 = vadd.f32 %v1322, %v1382
    %v1393 = vadd.f32 %v1323, %v1382
    %v1394 = vadd.f32 %v1324, %v1382
    %v1395 = vadd.f32 %v1325, %v1382
    %v1396 = vadd.f32 %v1326, %v1382
    %v1397 = vadd.f32 %v1327, %v1382
    %v1398 = vadd.f32 %v1328, %v1382
    %v1399 = vadd.f32 %v1329, %v1382
    %v1400 = vadd.f32 %v1330, %v1382
    %v1401 = vadd.f32 %v1331, %v1382
    %v1402 = vadd.f32 %v1332, %v1382
    %v1403 = vadd.f32 %v1333, %v1382
    %v1404 = vadd.f32 %v1334, %v1382
    %v1405 = vadd.f32 %v1335, %v1382
    %v1406 = vadd.f32 %v1336, %v1382
    %v1407 = vadd.f32 %v1337, %v1382
    %v1408 = vadd.f32 %v1338, %v1382
    %v1409 = vadd.f32 %v1339, %v1382
    %v1410 = vadd.f32 %v1340, %v1382
    %v1411 = vadd.f32 %v1341, %v1382
    %v1412 = vadd.f32 %v1342, %v1382
    %v1413 = vadd.f32 %v1343, %v1382
    %v1414 = vadd.f32 %v1344, %v1382
    %v1415 = vadd.f32 %v1345, %v1382
    %v1416 = vadd.f32 %v1346, %v1382
    %v1417 = vadd.f32 %v1347, %v1382
    %v1418 = vadd.f32 %v1348, %v1382
    %v1419 = vadd.f32 %v1349, %v1382
    %v1420 = vadd.f32 %v1350, %v1382
    %v1421 = vadd.f32 %v1351, %v1382
    %v1422 = vadd.f32 %v1352, %v1382
    %v1423 = vadd.f32 %v1353, %v1382
    %v1424 = vadd.f32 %v1354, %v1382
    %v1425 = vadd.f32 %v1355, %v1382
    %v1426 = vadd.f32 %v1356, %v1382
    %v1427 = vadd.f32 %v1357, %v1382
    %v1428 = vadd.f32 %v1358, %v1382
    %v1429 = vadd.f32 %v1359, %v1382
    %v1430 = vadd.f32 %v1360, %v1382
    %v1431 = vadd.f32 %v1361, %v1382
    %v1432 = vadd.f32 %v1362, %v1382
    %v1433 = vadd.f32 %v1363, %v1382
    %v1434 = vadd.f32 %v1364, %v1382
    %v1435 = vadd.f32 %v1365, %v1382
    %v1436 = vadd.f32 %v1366, %v1382
    %v1437 = vadd.f32 %v1367, %v1382
    %v1438 = vadd.f32 %v1368, %v1382
    %v1439 = vadd.f32 %v1369, %v1382
    %v1440 = vadd.f32 %v1370, %v1382
    %v1441 = vadd.f32 %v1371, %v1382
    %v1442 = vadd.f32 %v1372, %v1382
    %v1443 = vadd.f32 %v1373, %v1382
    %v1444 = vadd.f32 %v1374, %v1382
    %v1445 = vadd.f32 %v1375, %v1382
    %v1446 = vadd.f32 %v1376, %v1382
    %v1447 = vadd.f32 %v1377, %v1382
    %vm1448 = vcmp.gt.f32.partialorder %v1384, 0.0
    %vm1449 = vcmp.gt.f32.partialorder %v1385, 0.0
    %vm1450 = vcmp.gt.f32.partialorder %v1386, 0.0
    %vm1451 = vcmp.gt.f32.partialorder %v1387, 0.0
    %vm1452 = vcmp.gt.f32.partialorder %v1388, 0.0
    %vm1453 = vcmp.gt.f32.partialorder %v1389, 0.0
    %vm1454 = vcmp.gt.f32.partialorder %v1390, 0.0
    %vm1455 = vcmp.gt.f32.partialorder %v1391, 0.0
    %vm1456 = vcmp.gt.f32.partialorder %v1392, 0.0
    %vm1457 = vcmp.gt.f32.partialorder %v1393, 0.0
    %vm1458 = vcmp.gt.f32.partialorder %v1394, 0.0
    %vm1459 = vcmp.gt.f32.partialorder %v1395, 0.0
    %vm1460 = vcmp.gt.f32.partialorder %v1396, 0.0
    %vm1461 = vcmp.gt.f32.partialorder %v1397, 0.0
    %vm1462 = vcmp.gt.f32.partialorder %v1398, 0.0
    %vm1463 = vcmp.gt.f32.partialorder %v1399, 0.0
    %vm1464 = vcmp.gt.f32.partialorder %v1400, 0.0
    %vm1465 = vcmp.gt.f32.partialorder %v1401, 0.0
    %vm1466 = vcmp.gt.f32.partialorder %v1402, 0.0
    %vm1467 = vcmp.gt.f32.partialorder %v1403, 0.0
    %vm1468 = vcmp.gt.f32.partialorder %v1404, 0.0
    %vm1469 = vcmp.gt.f32.partialorder %v1405, 0.0
    %vm1470 = vcmp.gt.f32.partialorder %v1406, 0.0
    %vm1471 = vcmp.gt.f32.partialorder %v1407, 0.0
    %vm1472 = vcmp.gt.f32.partialorder %v1408, 0.0
    %vm1473 = vcmp.gt.f32.partialorder %v1409, 0.0
    %vm1474 = vcmp.gt.f32.partialorder %v1410, 0.0
    %vm1475 = vcmp.gt.f32.partialorder %v1411, 0.0
    %vm1476 = vcmp.gt.f32.partialorder %v1412, 0.0
    %vm1477 = vcmp.gt.f32.partialorder %v1413, 0.0
    %vm1478 = vcmp.gt.f32.partialorder %v1414, 0.0
    %vm1479 = vcmp.gt.f32.partialorder %v1415, 0.0
    %vm1480 = vcmp.gt.f32.partialorder %v1416, 0.0
    %vm1481 = vcmp.gt.f32.partialorder %v1417, 0.0
    %vm1482 = vcmp.gt.f32.partialorder %v1418, 0.0
    %vm1483 = vcmp.gt.f32.partialorder %v1419, 0.0
    %vm1484 = vcmp.gt.f32.partialorder %v1420, 0.0
    %vm1485 = vcmp.gt.f32.partialorder %v1421, 0.0
    %vm1486 = vcmp.gt.f32.partialorder %v1422, 0.0
    %vm1487 = vcmp.gt.f32.partialorder %v1423, 0.0
    %vm1488 = vcmp.gt.f32.partialorder %v1424, 0.0
    %vm1489 = vcmp.gt.f32.partialorder %v1425, 0.0
    %vm1490 = vcmp.gt.f32.partialorder %v1426, 0.0
    %vm1491 = vcmp.gt.f32.partialorder %v1427, 0.0
    %vm1492 = vcmp.gt.f32.partialorder %v1428, 0.0
    %vm1493 = vcmp.gt.f32.partialorder %v1429, 0.0
    %vm1494 = vcmp.gt.f32.partialorder %v1430, 0.0
    %vm1495 = vcmp.gt.f32.partialorder %v1431, 0.0
    %vm1496 = vcmp.gt.f32.partialorder %v1432, 0.0
    %vm1497 = vcmp.gt.f32.partialorder %v1433, 0.0
    %vm1498 = vcmp.gt.f32.partialorder %v1434, 0.0
    %vm1499 = vcmp.gt.f32.partialorder %v1435, 0.0
    %vm1500 = vcmp.gt.f32.partialorder %v1436, 0.0
    %vm1501 = vcmp.gt.f32.partialorder %v1437, 0.0
    %vm1502 = vcmp.gt.f32.partialorder %v1438, 0.0
    %vm1503 = vcmp.gt.f32.partialorder %v1439, 0.0
    %vm1504 = vcmp.gt.f32.partialorder %v1440, 0.0
    %vm1505 = vcmp.gt.f32.partialorder %v1441, 0.0
    %vm1506 = vcmp.gt.f32.partialorder %v1442, 0.0
    %vm1507 = vcmp.gt.f32.partialorder %v1443, 0.0
    %vm1508 = vcmp.gt.f32.partialorder %v1444, 0.0
    %vm1509 = vcmp.gt.f32.partialorder %v1445, 0.0
    %vm1510 = vcmp.gt.f32.partialorder %v1446, 0.0
    %vm1511 = vcmp.gt.f32.partialorder %v1447, 0.0
    %v1512 = vmul.f32 %v1384, 0.2
    %v1513 = vmul.f32 %v1385, 0.2
    %v1514 = vmul.f32 %v1386, 0.2
    %v1515 = vmul.f32 %v1387, 0.2
    %v1516 = vmul.f32 %v1388, 0.2
    %v1517 = vmul.f32 %v1389, 0.2
    %v1518 = vmul.f32 %v1390, 0.2
    %v1519 = vmul.f32 %v1391, 0.2
    %v1520 = vmul.f32 %v1392, 0.2
    %v1521 = vmul.f32 %v1393, 0.2
    %v1522 = vmul.f32 %v1394, 0.2
    %v1523 = vmul.f32 %v1395, 0.2
    %v1524 = vmul.f32 %v1396, 0.2
    %v1525 = vmul.f32 %v1397, 0.2
    %v1526 = vmul.f32 %v1398, 0.2
    %v1527 = vmul.f32 %v1399, 0.2
    %v1528 = vmul.f32 %v1400, 0.2
    %v1529 = vmul.f32 %v1401, 0.2
    %v1530 = vmul.f32 %v1402, 0.2
    %v1531 = vmul.f32 %v1403, 0.2
    %v1532 = vmul.f32 %v1404, 0.2
    %v1533 = vmul.f32 %v1405, 0.2
    %v1534 = vmul.f32 %v1406, 0.2
    %v1535 = vmul.f32 %v1407, 0.2
    %v1536 = vmul.f32 %v1408, 0.2
    %v1537 = vmul.f32 %v1409, 0.2
    %v1538 = vmul.f32 %v1410, 0.2
    %v1539 = vmul.f32 %v1411, 0.2
    %v1540 = vmul.f32 %v1412, 0.2
    %v1541 = vmul.f32 %v1413, 0.2
    %v1542 = vmul.f32 %v1414, 0.2
    %v1543 = vmul.f32 %v1415, 0.2
    %v1544 = vmul.f32 %v1416, 0.2
    %v1545 = vmul.f32 %v1417, 0.2
    %v1546 = vmul.f32 %v1418, 0.2
    %v1547 = vmul.f32 %v1419, 0.2
    %v1548 = vmul.f32 %v1420, 0.2
    %v1549 = vmul.f32 %v1421, 0.2
    %v1550 = vmul.f32 %v1422, 0.2
    %v1551 = vmul.f32 %v1423, 0.2
    %v1552 = vmul.f32 %v1424, 0.2
    %v1553 = vmul.f32 %v1425, 0.2
    %v1554 = vmul.f32 %v1426, 0.2
    %v1555 = vmul.f32 %v1427, 0.2
    %v1556 = vmul.f32 %v1428, 0.2
    %v1557 = vmul.f32 %v1429, 0.2
    %v1558 = vmul.f32 %v1430, 0.2
    %v1559 = vmul.f32 %v1431, 0.2
    %v1560 = vmul.f32 %v1432, 0.2
    %v1561 = vmul.f32 %v1433, 0.2
    %v1562 = vmul.f32 %v1434, 0.2
    %v1563 = vmul.f32 %v1435, 0.2
    %v1564 = vmul.f32 %v1436, 0.2
    %v1565 = vmul.f32 %v1437, 0.2
    %v1566 = vmul.f32 %v1438, 0.2
    %v1567 = vmul.f32 %v1439, 0.2
    %v1568 = vmul.f32 %v1440, 0.2
    %v1569 = vmul.f32 %v1441, 0.2
    %v1570 = vmul.f32 %v1442, 0.2
    %v1571 = vmul.f32 %v1443, 0.2
    %v1572 = vmul.f32 %v1444, 0.2
    %v1573 = vmul.f32 %v1445, 0.2
    %v1574 = vmul.f32 %v1446, 0.2
    %v1575 = vmul.f32 %v1447, 0.2
    %v1576 = vsel %vm1448, %v1384, %v1512
    %v1577 = vsel %vm1449, %v1385, %v1513
    %v1578 = vsel %vm1450, %v1386, %v1514
    %v1579 = vsel %vm1451, %v1387, %v1515
    %v1580 = vsel %vm1452, %v1388, %v1516
    %v1581 = vsel %vm1453, %v1389, %v1517
    %v1582 = vsel %vm1454, %v1390, %v1518
    %v1583 = vsel %vm1455, %v1391, %v1519
    %v1584 = vsel %vm1456, %v1392, %v1520
    %v1585 = vsel %vm1457, %v1393, %v1521
    %v1586 = vsel %vm1458, %v1394, %v1522
    %v1587 = vsel %vm1459, %v1395, %v1523
    %v1588 = vsel %vm1460, %v1396, %v1524
    %v1589 = vsel %vm1461, %v1397, %v1525
    %v1590 = vsel %vm1462, %v1398, %v1526
    %v1591 = vsel %vm1463, %v1399, %v1527
    %v1592 = vsel %vm1464, %v1400, %v1528
    %v1593 = vsel %vm1465, %v1401, %v1529
    %v1594 = vsel %vm1466, %v1402, %v1530
    %v1595 = vsel %vm1467, %v1403, %v1531
    %v1596 = vsel %vm1468, %v1404, %v1532
    %v1597 = vsel %vm1469, %v1405, %v1533
    %v1598 = vsel %vm1470, %v1406, %v1534
    %v1599 = vsel %vm1471, %v1407, %v1535
    %v1600 = vsel %vm1472, %v1408, %v1536
    %v1601 = vsel %vm1473, %v1409, %v1537
    %v1602 = vsel %vm1474, %v1410, %v1538
    %v1603 = vsel %vm1475, %v1411, %v1539
    %v1604 = vsel %vm1476, %v1412, %v1540
    %v1605 = vsel %vm1477, %v1413, %v1541
    %v1606 = vsel %vm1478, %v1414, %v1542
    %v1607 = vsel %vm1479, %v1415, %v1543
    %v1608 = vsel %vm1480, %v1416, %v1544
    %v1609 = vsel %vm1481, %v1417, %v1545
    %v1610 = vsel %vm1482, %v1418, %v1546
    %v1611 = vsel %vm1483, %v1419, %v1547
    %v1612 = vsel %vm1484, %v1420, %v1548
    %v1613 = vsel %vm1485, %v1421, %v1549
    %v1614 = vsel %vm1486, %v1422, %v1550
    %v1615 = vsel %vm1487, %v1423, %v1551
    %v1616 = vsel %vm1488, %v1424, %v1552
    %v1617 = vsel %vm1489, %v1425, %v1553
    %v1618 = vsel %vm1490, %v1426, %v1554
    %v1619 = vsel %vm1491, %v1427, %v1555
    %v1620 = vsel %vm1492, %v1428, %v1556
    %v1621 = vsel %vm1493, %v1429, %v1557
    %v1622 = vsel %vm1494, %v1430, %v1558
    %v1623 = vsel %vm1495, %v1431, %v1559
    %v1624 = vsel %vm1496, %v1432, %v1560
    %v1625 = vsel %vm1497, %v1433, %v1561
    %v1626 = vsel %vm1498, %v1434, %v1562
    %v1627 = vsel %vm1499, %v1435, %v1563
    %v1628 = vsel %vm1500, %v1436, %v1564
    %v1629 = vsel %vm1501, %v1437, %v1565
    %v1630 = vsel %vm1502, %v1438, %v1566
    %v1631 = vsel %vm1503, %v1439, %v1567
    %v1632 = vsel %vm1504, %v1440, %v1568
    %v1633 = vsel %vm1505, %v1441, %v1569
    %v1634 = vsel %vm1506, %v1442, %v1570
    %v1635 = vsel %vm1507, %v1443, %v1571
    %v1636 = vsel %vm1508, %v1444, %v1572
    %v1637 = vsel %vm1509, %v1445, %v1573
    %v1638 = vsel %vm1510, %v1446, %v1574
    %v1639 = vsel %vm1511, %v1447, %v1575
    %v1640 = vpack.c.bf16 %v1577, %v1576
    %v1641 = vpack.c.bf16 %v1579, %v1578
    %v1642 = vpack.c.bf16 %v1581, %v1580
    %v1643 = vpack.c.bf16 %v1583, %v1582
    %v1644 = vpack.c.bf16 %v1585, %v1584
    %v1645 = vpack.c.bf16 %v1587, %v1586
    %v1646 = vpack.c.bf16 %v1589, %v1588
    %v1647 = vpack.c.bf16 %v1591, %v1590
    %v1648 = vpack.c.bf16 %v1593, %v1592
    %v1649 = vpack.c.bf16 %v1595, %v1594
    %v1650 = vpack.c.bf16 %v1597, %v1596
    %v1651 = vpack.c.bf16 %v1599, %v1598
    %v1652 = vpack.c.bf16 %v1601, %v1600
    %v1653 = vpack.c.bf16 %v1603, %v1602
    %v1654 = vpack.c.bf16 %v1605, %v1604
    %v1655 = vpack.c.bf16 %v1607, %v1606
    %v1656 = vpack.c.bf16 %v1609, %v1608
    %v1657 = vpack.c.bf16 %v1611, %v1610
    %v1658 = vpack.c.bf16 %v1613, %v1612
    %v1659 = vpack.c.bf16 %v1615, %v1614
    %v1660 = vpack.c.bf16 %v1617, %v1616
    %v1661 = vpack.c.bf16 %v1619, %v1618
    %v1662 = vpack.c.bf16 %v1621, %v1620
    %v1663 = vpack.c.bf16 %v1623, %v1622
    %v1664 = vpack.c.bf16 %v1625, %v1624
    %v1665 = vpack.c.bf16 %v1627, %v1626
    %v1666 = vpack.c.bf16 %v1629, %v1628
    %v1667 = vpack.c.bf16 %v1631, %v1630
    %v1668 = vpack.c.bf16 %v1633, %v1632
    %v1669 = vpack.c.bf16 %v1635, %v1634
    %v1670 = vpack.c.bf16 %v1637, %v1636
    %v1671 = vpack.c.bf16 %v1639, %v1638
    %v1704 = vunpack.c.l.b16 %v1640
    %v1705 = vunpack.c.h.b16 %v1640
    %v1706 = vunpack.c.l.b16 %v1641
    %v1707 = vunpack.c.h.b16 %v1641
    %v1708 = vunpack.c.l.b16 %v1642
    %v1709 = vunpack.c.h.b16 %v1642
    %v1710 = vunpack.c.l.b16 %v1643
    %v1711 = vunpack.c.h.b16 %v1643
    %v1712 = vunpack.c.l.b16 %v1644
    %v1713 = vunpack.c.h.b16 %v1644
    %v1714 = vunpack.c.l.b16 %v1645
    %v1715 = vunpack.c.h.b16 %v1645
    %v1716 = vunpack.c.l.b16 %v1646
    %v1717 = vunpack.c.h.b16 %v1646
    %v1718 = vunpack.c.l.b16 %v1647
    %v1719 = vunpack.c.h.b16 %v1647
    %v1720 = vunpack.c.l.b16 %v1648
    %v1721 = vunpack.c.h.b16 %v1648
    %v1722 = vunpack.c.l.b16 %v1649
    %v1723 = vunpack.c.h.b16 %v1649
    %v1724 = vunpack.c.l.b16 %v1650
    %v1725 = vunpack.c.h.b16 %v1650
    %v1726 = vunpack.c.l.b16 %v1651
    %v1727 = vunpack.c.h.b16 %v1651
    %v1728 = vunpack.c.l.b16 %v1652
    %v1729 = vunpack.c.h.b16 %v1652
    %v1730 = vunpack.c.l.b16 %v1653
    %v1731 = vunpack.c.h.b16 %v1653
    %v1732 = vunpack.c.l.b16 %v1654
    %v1733 = vunpack.c.h.b16 %v1654
    %v1734 = vunpack.c.l.b16 %v1655
    %v1735 = vunpack.c.h.b16 %v1655
    %v1736 = vunpack.c.l.b16 %v1656
    %v1737 = vunpack.c.h.b16 %v1656
    %v1738 = vunpack.c.l.b16 %v1657
    %v1739 = vunpack.c.h.b16 %v1657
    %v1740 = vunpack.c.l.b16 %v1658
    %v1741 = vunpack.c.h.b16 %v1658
    %v1742 = vunpack.c.l.b16 %v1659
    %v1743 = vunpack.c.h.b16 %v1659
    %v1744 = vunpack.c.l.b16 %v1660
    %v1745 = vunpack.c.h.b16 %v1660
    %v1746 = vunpack.c.l.b16 %v1661
    %v1747 = vunpack.c.h.b16 %v1661
    %v1748 = vunpack.c.l.b16 %v1662
    %v1749 = vunpack.c.h.b16 %v1662
    %v1750 = vunpack.c.l.b16 %v1663
    %v1751 = vunpack.c.h.b16 %v1663
    %v1752 = vunpack.c.l.b16 %v1664
    %v1753 = vunpack.c.h.b16 %v1664
    %v1754 = vunpack.c.l.b16 %v1665
    %v1755 = vunpack.c.h.b16 %v1665
    %v1756 = vunpack.c.l.b16 %v1666
    %v1757 = vunpack.c.h.b16 %v1666
    %v1758 = vunpack.c.l.b16 %v1667
    %v1759 = vunpack.c.h.b16 %v1667
    %v1760 = vunpack.c.l.b16 %v1668
    %v1761 = vunpack.c.h.b16 %v1668
    %v1762 = vunpack.c.l.b16 %v1669
    %v1763 = vunpack.c.h.b16 %v1669
    %v1764 = vunpack.c.l.b16 %v1670
    %v1765 = vunpack.c.h.b16 %v1670
    %v1766 = vunpack.c.l.b16 %v1671
    %v1767 = vunpack.c.h.b16 %v1671
    %v1768 = vpack.c.b16 %v1704, %v1704
    %v1769 = vpack.c.b16 %v1705, %v1705
    %v1770 = vpack.c.b16 %v1706, %v1706
    %v1771 = vpack.c.b16 %v1707, %v1707
    %v1772 = vpack.c.b16 %v1708, %v1708
    %v1773 = vpack.c.b16 %v1709, %v1709
    %v1774 = vpack.c.b16 %v1710, %v1710
    %v1775 = vpack.c.b16 %v1711, %v1711
    %v1776 = vpack.c.b16 %v1712, %v1712
    %v1777 = vpack.c.b16 %v1713, %v1713
    %v1778 = vpack.c.b16 %v1714, %v1714
    %v1779 = vpack.c.b16 %v1715, %v1715
    %v1780 = vpack.c.b16 %v1716, %v1716
    %v1781 = vpack.c.b16 %v1717, %v1717
    %v1782 = vpack.c.b16 %v1718, %v1718
    %v1783 = vpack.c.b16 %v1719, %v1719
    %v1784 = vpack.c.b16 %v1720, %v1720
    %v1785 = vpack.c.b16 %v1721, %v1721
    %v1786 = vpack.c.b16 %v1722, %v1722
    %v1787 = vpack.c.b16 %v1723, %v1723
    %v1788 = vpack.c.b16 %v1724, %v1724
    %v1789 = vpack.c.b16 %v1725, %v1725
    %v1790 = vpack.c.b16 %v1726, %v1726
    %v1791 = vpack.c.b16 %v1727, %v1727
    %v1792 = vpack.c.b16 %v1728, %v1728
    %v1793 = vpack.c.b16 %v1729, %v1729
    %v1794 = vpack.c.b16 %v1730, %v1730
    %v1795 = vpack.c.b16 %v1731, %v1731
    %v1796 = vpack.c.b16 %v1732, %v1732
    %v1797 = vpack.c.b16 %v1733, %v1733
    %v1798 = vpack.c.b16 %v1734, %v1734
    %v1799 = vpack.c.b16 %v1735, %v1735
    %v1800 = vpack.c.b16 %v1736, %v1736
    %v1801 = vpack.c.b16 %v1737, %v1737
    %v1802 = vpack.c.b16 %v1738, %v1738
    %v1803 = vpack.c.b16 %v1739, %v1739
    %v1804 = vpack.c.b16 %v1740, %v1740
    %v1805 = vpack.c.b16 %v1741, %v1741
    %v1806 = vpack.c.b16 %v1742, %v1742
    %v1807 = vpack.c.b16 %v1743, %v1743
    %v1808 = vpack.c.b16 %v1744, %v1744
    %v1809 = vpack.c.b16 %v1745, %v1745
    %v1810 = vpack.c.b16 %v1746, %v1746
    %v1811 = vpack.c.b16 %v1747, %v1747
    %v1812 = vpack.c.b16 %v1748, %v1748
    %v1813 = vpack.c.b16 %v1749, %v1749
    %v1814 = vpack.c.b16 %v1750, %v1750
    %v1815 = vpack.c.b16 %v1751, %v1751
    %v1816 = vpack.c.b16 %v1752, %v1752
    %v1817 = vpack.c.b16 %v1753, %v1753
    %v1818 = vpack.c.b16 %v1754, %v1754
    %v1819 = vpack.c.b16 %v1755, %v1755
    %v1820 = vpack.c.b16 %v1756, %v1756
    %v1821 = vpack.c.b16 %v1757, %v1757
    %v1822 = vpack.c.b16 %v1758, %v1758
    %v1823 = vpack.c.b16 %v1759, %v1759
    %v1824 = vpack.c.b16 %v1760, %v1760
    %v1825 = vpack.c.b16 %v1761, %v1761
    %v1826 = vpack.c.b16 %v1762, %v1762
    %v1827 = vpack.c.b16 %v1763, %v1763
    %v1828 = vpack.c.b16 %v1764, %v1764
    %v1829 = vpack.c.b16 %v1765, %v1765
    %v1830 = vpack.c.b16 %v1766, %v1766
    %v1831 = vpack.c.b16 %v1767, %v1767
    %1896 = vst [vmem:[%s4] sm:$0xf] %v1768
    %1897 = vst [vmem:[%s4 + $0x4] sm:$0xf] %v1769
    %1898 = vst [vmem:[%s4 + $0x8] sm:$0xf] %v1770
    %1899 = vst [vmem:[%s4 + $0xc] sm:$0xf] %v1771
    %1900 = vst [vmem:[%s4 + $0x10] sm:$0xf] %v1772
    %1901 = vst [vmem:[%s4 + $0x14] sm:$0xf] %v1773
    %1902 = vst [vmem:[%s4 + $0x18] sm:$0xf] %v1774
    %1903 = vst [vmem:[%s4 + $0x1c] sm:$0xf] %v1775
    %1904 = vst [vmem:[%s4 + $0x20] sm:$0xf] %v1776
    %1905 = vst [vmem:[%s4 + $0x24] sm:$0xf] %v1777
    %1906 = vst [vmem:[%s4 + $0x28] sm:$0xf] %v1778
    %1907 = vst [vmem:[%s4 + $0x2c] sm:$0xf] %v1779
    %1908 = vst [vmem:[%s4 + $0x30] sm:$0xf] %v1780
    %1909 = vst [vmem:[%s4 + $0x34] sm:$0xf] %v1781
    %1910 = vst [vmem:[%s4 + $0x38] sm:$0xf] %v1782
    %1911 = vst [vmem:[%s4 + $0x3c] sm:$0xf] %v1783
    %1912 = vst [vmem:[%s4 + $0x40] sm:$0xf] %v1784
    %1913 = vst [vmem:[%s4 + $0x44] sm:$0xf] %v1785
    %1914 = vst [vmem:[%s4 + $0x48] sm:$0xf] %v1786
    %1915 = vst [vmem:[%s4 + $0x4c] sm:$0xf] %v1787
    %1916 = vst [vmem:[%s4 + $0x50] sm:$0xf] %v1788
    %1917 = vst [vmem:[%s4 + $0x54] sm:$0xf] %v1789
    %1918 = vst [vmem:[%s4 + $0x58] sm:$0xf] %v1790
    %1919 = vst [vmem:[%s4 + $0x5c] sm:$0xf] %v1791
    %1920 = vst [vmem:[%s4 + $0x60] sm:$0xf] %v1792
    %1921 = vst [vmem:[%s4 + $0x64] sm:$0xf] %v1793
    %1922 = vst [vmem:[%s4 + $0x68] sm:$0xf] %v1794
    %1923 = vst [vmem:[%s4 + $0x6c] sm:$0xf] %v1795
    %1924 = vst [vmem:[%s4 + $0x70] sm:$0xf] %v1796
    %1925 = vst [vmem:[%s4 + $0x74] sm:$0xf] %v1797
    %1926 = vst [vmem:[%s4 + $0x78] sm:$0xf] %v1798
    %1927 = vst [vmem:[%s4 + $0x7c] sm:$0xf] %v1799
    %1928 = vst [vmem:[%s4 + $0x80] sm:$0xf] %v1800
    %1929 = vst [vmem:[%s4 + $0x84] sm:$0xf] %v1801
    %1930 = vst [vmem:[%s4 + $0x88] sm:$0xf] %v1802
    %1931 = vst [vmem:[%s4 + $0x8c] sm:$0xf] %v1803
    %1932 = vst [vmem:[%s4 + $0x90] sm:$0xf] %v1804
    %1933 = vst [vmem:[%s4 + $0x94] sm:$0xf] %v1805
    %1934 = vst [vmem:[%s4 + $0x98] sm:$0xf] %v1806
    %1935 = vst [vmem:[%s4 + $0x9c] sm:$0xf] %v1807
    %1936 = vst [vmem:[%s4 + $0xa0] sm:$0xf] %v1808
    %1937 = vst [vmem:[%s4 + $0xa4] sm:$0xf] %v1809
    %1938 = vst [vmem:[%s4 + $0xa8] sm:$0xf] %v1810
    %1939 = vst [vmem:[%s4 + $0xac] sm:$0xf] %v1811
    %1940 = vst [vmem:[%s4 + $0xb0] sm:$0xf] %v1812
    %1941 = vst [vmem:[%s4 + $0xb4] sm:$0xf] %v1813
    %1942 = vst [vmem:[%s4 + $0xb8] sm:$0xf] %v1814
    %1943 = vst [vmem:[%s4 + $0xbc] sm:$0xf] %v1815
    %1944 = vst [vmem:[%s4 + $0xc0] sm:$0xf] %v1816
    %1945 = vst [vmem:[%s4 + $0xc4] sm:$0xf] %v1817
    %1946 = vst [vmem:[%s4 + $0xc8] sm:$0xf] %v1818
    %1947 = vst [vmem:[%s4 + $0xcc] sm:$0xf] %v1819
    %1948 = vst [vmem:[%s4 + $0xd0] sm:$0xf] %v1820
    %1949 = vst [vmem:[%s4 + $0xd4] sm:$0xf] %v1821
    %1950 = vst [vmem:[%s4 + $0xd8] sm:$0xf] %v1822
    %1951 = vst [vmem:[%s4 + $0xdc] sm:$0xf] %v1823
    %1952 = vst [vmem:[%s4 + $0xe0] sm:$0xf] %v1824
    %1953 = vst [vmem:[%s4 + $0xe4] sm:$0xf] %v1825
    %1954 = vst [vmem:[%s4 + $0xe8] sm:$0xf] %v1826
    %1955 = vst [vmem:[%s4 + $0xec] sm:$0xf] %v1827
    %1956 = vst [vmem:[%s4 + $0xf0] sm:$0xf] %v1828
    %1957 = vst [vmem:[%s4 + $0xf4] sm:$0xf] %v1829
    %1958 = vst [vmem:[%s4 + $0xf8] sm:$0xf] %v1830
    %1959 = vst [vmem:[%s4 + $0xfc] sm:$0xf] %v1831
  $region25: #{critic_forward.5} parent=0 // pred_fallthru
    _
  // Predicated region
  $region26: #{critic_forward.5} parent=0 // pred_check
    _
  $region27: #{critic_forward.5} parent=0 // pred_check_branch
    %1961 = sbr.rel (0) target = $region29
  $region28: #{critic_forward.5} parent=0 // pred_region
    _
  $region29: #{critic_forward.5} parent=0 // pred_fallthru
    _
  // Predicated region
  $region30: #{critic_forward.5} parent=0 // pred_check
    _
  $region31: #{critic_forward.5} parent=0 // pred_check_branch
    %1963 = sbr.rel (0) target = $region33
  $region32: #{critic_forward.5} parent=0 // pred_region
    _
  $region33: #{critic_forward.5} parent=0 // pred_fallthru
    _

// kernel: critic_forward.6
$region0: #{critic_forward.6}
  #allocation0 [shape = 'u32[]', space=smem, size = 0x4, offset = 0x4, fixed_abs, tag = 'smem constant byte address 0x4 - core index']
  #allocation1 [shape = 'u32[144,128]{1,0:T(1,128)}', space=vmem, size = 0x12000, scoped, tag = 'internal scratch']
  #allocation2 [shape = 'f32[1,128]{1,0:T(1,128)}', space=vmem, size = 0x200, scoped, tag = 'scratch operand']
  #allocation3 [shape = 'f32[1,128]{1,0:T(1,128)}', space=vmem, size = 0x200, scoped, tag = 'scratch operand']
  %s0 = inlined_call_operand.vmem [shape: bf16[128,256], index: 0, kind: input, shape index: {}]
  %s1 = inlined_call_operand.vmem [shape: bf16[256,128], index: 1, kind: input, shape index: {}]
  %s2 = inlined_call_operand.vmem [shape: f32[1,128], index: 2, kind: input, shape index: {}]
  %s3 = inlined_call_operand.vmem [shape: f32[1,128], index: 3, kind: input, shape index: {}]
  %s4 = inlined_call_operand.vmem [shape: bf16[1,128,128], index: 4, kind: output, shape index: {}]
  %s5 = sld [smem:[#allocation0]]
  $region34: #{critic_forward.6} parent=0
    _
  %s7 = ssub.s32 1, %s5
  %s8 = scalar_select 0, %s7, %s5
  // Predicated region
  $region2: #{critic_forward.6} parent=0 // pred_check
    _
  $region3: #{critic_forward.6} parent=0 // pred_check_branch
    %10 = sbr.rel (0) target = $region5
  $region4: #{critic_forward.6} parent=0 // pred_region
    _
  $region5: #{critic_forward.6} parent=0 // pred_fallthru
    _
  // Predicated region
  $region6: #{critic_forward.6} parent=0 // pred_check
    _
  $region7: #{critic_forward.6} parent=0 // pred_check_branch
    %12 = sbr.rel (0) target = $region9
  $region8: #{critic_forward.6} parent=0 // pred_region
    _
  $region9: #{critic_forward.6} parent=0 // pred_fallthru
    _
  // Predicated region
  $region10: #{critic_forward.6} parent=0 // pred_check
    _
  $region11: #{critic_forward.6} parent=0 // pred_check_branch
    %14 = sbr.rel (0) target = $region13
  $region12: #{critic_forward.6} parent=0 // pred_region
    _
  $region13: #{critic_forward.6} parent=0 // pred_fallthru
    _
  // Predicated region
  $region14: #{critic_forward.6} parent=0 // pred_check
    _
  $region15: #{critic_forward.6} parent=0 // pred_check_branch
    %16 = sbr.rel (0) target = $region17
  $region16: #{critic_forward.6} parent=0 // pred_region
    _
  $region17: #{critic_forward.6} parent=0 // pred_fallthru
    _
  %v18 = vld [vmem:[%s0] sm:$0xff]
  %v19 = vld [vmem:[%s0 + $0x8] sm:$0xff]
  %v20 = vld [vmem:[%s0 + $0x10] sm:$0xff]
  %v21 = vld [vmem:[%s0 + $0x18] sm:$0xff]
  %v22 = vld [vmem:[%s0 + $0x20] sm:$0xff]
  %v23 = vld [vmem:[%s0 + $0x28] sm:$0xff]
  %v24 = vld [vmem:[%s0 + $0x30] sm:$0xff]
  %v25 = vld [vmem:[%s0 + $0x38] sm:$0xff]
  %v26 = vld [vmem:[%s0 + $0x40] sm:$0xff]
  %v27 = vld [vmem:[%s0 + $0x48] sm:$0xff]
  %v28 = vld [vmem:[%s0 + $0x50] sm:$0xff]
  %v29 = vld [vmem:[%s0 + $0x58] sm:$0xff]
  %v30 = vld [vmem:[%s0 + $0x60] sm:$0xff]
  %v31 = vld [vmem:[%s0 + $0x68] sm:$0xff]
  %v32 = vld [vmem:[%s0 + $0x70] sm:$0xff]
  %v33 = vld [vmem:[%s0 + $0x78] sm:$0xff]
  %v34 = vld [vmem:[%s1] sm:$0xf]
  %v35 = vld [vmem:[%s1 + $0x4] sm:$0xf]
  %v36 = vld [vmem:[%s1 + $0x8] sm:$0xf]
  %v37 = vld [vmem:[%s1 + $0xc] sm:$0xf]
  %v38 = vld [vmem:[%s1 + $0x10] sm:$0xf]
  %v39 = vld [vmem:[%s1 + $0x14] sm:$0xf]
  %v40 = vld [vmem:[%s1 + $0x18] sm:$0xf]
  %v41 = vld [vmem:[%s1 + $0x1c] sm:$0xf]
  %v42 = vld [vmem:[%s1 + $0x20] sm:$0xf]
  %v43 = vld [vmem:[%s1 + $0x24] sm:$0xf]
  %v44 = vld [vmem:[%s1 + $0x28] sm:$0xf]
  %v45 = vld [vmem:[%s1 + $0x2c] sm:$0xf]
  %v46 = vld [vmem:[%s1 + $0x30] sm:$0xf]
  %v47 = vld [vmem:[%s1 + $0x34] sm:$0xf]
  %v48 = vld [vmem:[%s1 + $0x38] sm:$0xf]
  %v49 = vld [vmem:[%s1 + $0x3c] sm:$0xf]
  %v50 = vld [vmem:[%s1 + $0x40] sm:$0xf]
  %v51 = vld [vmem:[%s1 + $0x44] sm:$0xf]
  %v52 = vld [vmem:[%s1 + $0x48] sm:$0xf]
  %v53 = vld [vmem:[%s1 + $0x4c] sm:$0xf]
  %v54 = vld [vmem:[%s1 + $0x50] sm:$0xf]
  %v55 = vld [vmem:[%s1 + $0x54] sm:$0xf]
  %v56 = vld [vmem:[%s1 + $0x58] sm:$0xf]
  %v57 = vld [vmem:[%s1 + $0x5c] sm:$0xf]
  %v58 = vld [vmem:[%s1 + $0x60] sm:$0xf]
  %v59 = vld [vmem:[%s1 + $0x64] sm:$0xf]
  %v60 = vld [vmem:[%s1 + $0x68] sm:$0xf]
  %v61 = vld [vmem:[%s1 + $0x6c] sm:$0xf]
  %v62 = vld [vmem:[%s1 + $0x70] sm:$0xf]
  %v63 = vld [vmem:[%s1 + $0x74] sm:$0xf]
  %v64 = vld [vmem:[%s1 + $0x78] sm:$0xf]
  %v65 = vld [vmem:[%s1 + $0x7c] sm:$0xf]
  %v82 = vunpack.c.l.b16 %v18
  %v83 = vunpack.c.h.b16 %v18
  %v84 = vunpack.c.l.b16 %v19
  %v85 = vunpack.c.h.b16 %v19
  %v86 = vunpack.c.l.b16 %v20
  %v87 = vunpack.c.h.b16 %v20
  %v88 = vunpack.c.l.b16 %v21
  %v89 = vunpack.c.h.b16 %v21
  %v90 = vunpack.c.l.b16 %v22
  %v91 = vunpack.c.h.b16 %v22
  %v92 = vunpack.c.l.b16 %v23
  %v93 = vunpack.c.h.b16 %v23
  %v94 = vunpack.c.l.b16 %v24
  %v95 = vunpack.c.h.b16 %v24
  %v96 = vunpack.c.l.b16 %v25
  %v97 = vunpack.c.h.b16 %v25
  %v98 = vunpack.c.l.b16 %v26
  %v99 = vunpack.c.h.b16 %v26
  %v100 = vunpack.c.l.b16 %v27
  %v101 = vunpack.c.h.b16 %v27
  %v102 = vunpack.c.l.b16 %v28
  %v103 = vunpack.c.h.b16 %v28
  %v104 = vunpack.c.l.b16 %v29
  %v105 = vunpack.c.h.b16 %v29
  %v106 = vunpack.c.l.b16 %v30
  %v107 = vunpack.c.h.b16 %v30
  %v108 = vunpack.c.l.b16 %v31
  %v109 = vunpack.c.h.b16 %v31
  %v110 = vunpack.c.l.b16 %v32
  %v111 = vunpack.c.h.b16 %v32
  %v112 = vunpack.c.l.b16 %v33
  %v113 = vunpack.c.h.b16 %v33
  %v114 = vpack.c.b16 %v84, %v82
  %v115 = vpack.c.b16 %v85, %v83
  %v116 = vpack.c.b16 %v88, %v86
  %v117 = vpack.c.b16 %v89, %v87
  %v118 = vpack.c.b16 %v92, %v90
  %v119 = vpack.c.b16 %v93, %v91
  %v120 = vpack.c.b16 %v96, %v94
  %v121 = vpack.c.b16 %v97, %v95
  %v122 = vpack.c.b16 %v100, %v98
  %v123 = vpack.c.b16 %v101, %v99
  %v124 = vpack.c.b16 %v104, %v102
  %v125 = vpack.c.b16 %v105, %v103
  %v126 = vpack.c.b16 %v108, %v106
  %v127 = vpack.c.b16 %v109, %v107
  %v128 = vpack.c.b16 %v112, %v110
  %v129 = vpack.c.b16 %v113, %v111
  %v178 = vunpack.c.l.b16 %v34
  %v179 = vunpack.c.l.b16 %v35
  %v180 = vunpack.c.l.b16 %v36
  %v181 = vunpack.c.l.b16 %v37
  %v182 = vunpack.c.l.b16 %v38
  %v183 = vunpack.c.l.b16 %v39
  %v184 = vunpack.c.l.b16 %v40
  %v185 = vunpack.c.l.b16 %v41
  %v186 = vunpack.c.l.b16 %v42
  %v187 = vunpack.c.l.b16 %v43
  %v188 = vunpack.c.l.b16 %v44
  %v189 = vunpack.c.l.b16 %v45
  %v190 = vunpack.c.l.b16 %v46
  %v191 = vunpack.c.l.b16 %v47
  %v192 = vunpack.c.l.b16 %v48
  %v193 = vunpack.c.l.b16 %v49
  %v194 = vunpack.c.l.b16 %v50
  %v195 = vunpack.c.l.b16 %v51
  %v196 = vunpack.c.l.b16 %v52
  %v197 = vunpack.c.l.b16 %v53
  %v198 = vunpack.c.l.b16 %v54
  %v199 = vunpack.c.l.b16 %v55
  %v200 = vunpack.c.l.b16 %v56
  %v201 = vunpack.c.l.b16 %v57
  %v202 = vunpack.c.l.b16 %v58
  %v203 = vunpack.c.l.b16 %v59
  %v204 = vunpack.c.l.b16 %v60
  %v205 = vunpack.c.l.b16 %v61
  %v206 = vunpack.c.l.b16 %v62
  %v207 = vunpack.c.l.b16 %v63
  %v208 = vunpack.c.l.b16 %v64
  %v209 = vunpack.c.l.b16 %v65
  %v210 = vpack.c.b16 %v179, %v178
  %v211 = vpack.c.b16 %v181, %v180
  %v212 = vpack.c.b16 %v183, %v182
  %v213 = vpack.c.b16 %v185, %v184
  %v214 = vpack.c.b16 %v187, %v186
  %v215 = vpack.c.b16 %v189, %v188
  %v216 = vpack.c.b16 %v191, %v190
  %v217 = vpack.c.b16 %v193, %v192
  %v218 = vpack.c.b16 %v195, %v194
  %v219 = vpack.c.b16 %v197, %v196
  %v220 = vpack.c.b16 %v199, %v198
  %v221 = vpack.c.b16 %v201, %v200
  %v222 = vpack.c.b16 %v203, %v202
  %v223 = vpack.c.b16 %v205, %v204
  %v224 = vpack.c.b16 %v207, %v206
  %v225 = vpack.c.b16 %v209, %v208
  %242 = vmatprep.subr.bf16.mxu0 0
  %243 = vmatpush1.bf16.msra.mxu0 %v210
  %244 = vmatprep.subr.bf16.mxu0 0
  %245 = vmatpush1.bf16.msra.mxu0 %v211
  %246 = vmatprep.subr.bf16.mxu0 0
  %247 = vmatpush1.bf16.msra.mxu0 %v212
  %248 = vmatprep.subr.bf16.mxu0 0
  %249 = vmatpush1.bf16.msra.mxu0 %v213
  %250 = vmatprep.subr.bf16.mxu0 0
  %251 = vmatpush1.bf16.msra.mxu0 %v214
  %252 = vmatprep.subr.bf16.mxu0 0
  %253 = vmatpush1.bf16.msra.mxu0 %v215
  %254 = vmatprep.subr.bf16.mxu0 0
  %255 = vmatpush1.bf16.msra.mxu0 %v216
  %256 = vmatprep.subr.bf16.mxu0 0
  %257 = vmatpush1.bf16.msra.mxu0 %v217
  %258 = vmatprep.subr.bf16.mxu0 0
  %259 = vmatpush1.bf16.msra.mxu0 %v218
  %260 = vmatprep.subr.bf16.mxu0 0
  %261 = vmatpush1.bf16.msra.mxu0 %v219
  %262 = vmatprep.subr.bf16.mxu0 0
  %263 = vmatpush1.bf16.msra.mxu0 %v220
  %264 = vmatprep.subr.bf16.mxu0 0
  %265 = vmatpush1.bf16.msra.mxu0 %v221
  %266 = vmatprep.subr.bf16.mxu0 0
  %267 = vmatpush1.bf16.msra.mxu0 %v222
  %268 = vmatprep.subr.bf16.mxu0 0
  %269 = vmatpush1.bf16.msra.mxu0 %v223
  %270 = vmatprep.subr.bf16.mxu0 0
  %271 = vmatpush1.bf16.msra.mxu0 %v224
  %272 = vmatprep.subr.bf16.mxu0 0
  %273 = vmatpush1.bf16.msra.mxu0 %v225
  %274 = vmatprep.mubr.bf16.mxu0 %v115
  %275 = vmatmul.mubr.bf16.gmra.mrb[0].mxu0 %v114
  %v276 = vpop.f32.mrb[0].mxu0
  %v277 = vadd.f32 0.0, %v276
  %v278 = vpop.f32.mrb[0].mxu0
  %v279 = vpop.f32.mrb[0].mxu0
  %v280 = vadd.f32 0.0, %v279
  %v281 = vpop.f32.mrb[0].mxu0
  %282 = vmatprep.mubr.bf16.mxu0 %v117
  %283 = vmatmul.mubr.bf16.gmra.mrb[0].mxu0 %v116
  %v284 = vpop.f32.mrb[0].mxu0
  %v285 = vadd.f32 0.0, %v284
  %v286 = vpop.f32.mrb[0].mxu0
  %v287 = vpop.f32.mrb[0].mxu0
  %v288 = vadd.f32 0.0, %v287
  %v289 = vpop.f32.mrb[0].mxu0
  %290 = vmatprep.mubr.bf16.mxu0 %v119
  %291 = vmatmul.mubr.bf16.gmra.mrb[0].mxu0 %v118
  %v292 = vpop.f32.mrb[0].mxu0
  %v293 = vadd.f32 0.0, %v292
  %v294 = vpop.f32.mrb[0].mxu0
  %v295 = vpop.f32.mrb[0].mxu0
  %v296 = vadd.f32 0.0, %v295
  %v297 = vpop.f32.mrb[0].mxu0
  %298 = vmatprep.mubr.bf16.mxu0 %v121
  %299 = vmatmul.mubr.bf16.gmra.mrb[0].mxu0 %v120
  %v300 = vpop.f32.mrb[0].mxu0
  %v301 = vadd.f32 0.0, %v300
  %v302 = vpop.f32.mrb[0].mxu0
  %v303 = vpop.f32.mrb[0].mxu0
  %v304 = vadd.f32 0.0, %v303
  %v305 = vpop.f32.mrb[0].mxu0
  %306 = vmatprep.mubr.bf16.mxu0 %v123
  %307 = vmatmul.mubr.bf16.gmra.mrb[0].mxu0 %v122
  %v308 = vpop.f32.mrb[0].mxu0
  %v309 = vadd.f32 0.0, %v308
  %v310 = vpop.f32.mrb[0].mxu0
  %v311 = vpop.f32.mrb[0].mxu0
  %v312 = vadd.f32 0.0, %v311
  %v313 = vpop.f32.mrb[0].mxu0
  %314 = vmatprep.mubr.bf16.mxu0 %v125
  %315 = vmatmul.mubr.bf16.gmra.mrb[0].mxu0 %v124
  %v316 = vpop.f32.mrb[0].mxu0
  %v317 = vadd.f32 0.0, %v316
  %v318 = vpop.f32.mrb[0].mxu0
  %v319 = vpop.f32.mrb[0].mxu0
  %v320 = vadd.f32 0.0, %v319
  %v321 = vpop.f32.mrb[0].mxu0
  %322 = vmatprep.mubr.bf16.mxu0 %v127
  %323 = vmatmul.mubr.bf16.gmra.mrb[0].mxu0 %v126
  %v324 = vpop.f32.mrb[0].mxu0
  %v325 = vadd.f32 0.0, %v324
  %v326 = vpop.f32.mrb[0].mxu0
  %v327 = vpop.f32.mrb[0].mxu0
  %v328 = vadd.f32 0.0, %v327
  %v329 = vpop.f32.mrb[0].mxu0
  %330 = vmatprep.mubr.bf16.mxu0 %v129
  %331 = vmatmul.mubr.bf16.gmra.mrb[0].mxu0 %v128
  %v332 = vpop.f32.mrb[0].mxu0
  %v333 = vadd.f32 0.0, %v332
  %v334 = vpop.f32.mrb[0].mxu0
  %v335 = vpop.f32.mrb[0].mxu0
  %v336 = vadd.f32 0.0, %v335
  %v337 = vpop.f32.mrb[0].mxu0
  %338 = vdwg.mxu0
  %p339 = scmp.eq.s32.totalorder 0, 0
  // Predicated region
  $region18: #{critic_forward.6} parent=0 // pred_check
    %p340 = pneg %p339
  $region19: #{critic_forward.6} parent=0 // pred_check_branch
    %342 = sbr.rel (%p340) target = $region21
  $region20: #{critic_forward.6} parent=0 // pred_region
    %343 = vst [vmem:[#allocation2] sm:$0x1] 0.0
    %344 = vst [vmem:[#allocation3] sm:$0x1] 0.0
  $region21: #{critic_forward.6} parent=0 // pred_fallthru
    _
  %v345 = vld [vmem:[#allocation2] sm:$0x1]
  %v346 = vadd.f32 %v277, %v280
  %v347 = vadd.f32 %v346, %v285
  %v348 = vadd.f32 %v347, %v288
  %v349 = vadd.f32 %v348, %v293
  %v350 = vadd.f32 %v349, %v296
  %v351 = vadd.f32 %v350, %v301
  %v352 = vadd.f32 %v351, %v304
  %v353 = vadd.f32 %v352, %v309
  %v354 = vadd.f32 %v353, %v312
  %v355 = vadd.f32 %v354, %v317
  %v356 = vadd.f32 %v355, %v320
  %v357 = vadd.f32 %v356, %v325
  %v358 = vadd.f32 %v357, %v328
  %v359 = vadd.f32 %v358, %v333
  %v360 = vadd.f32 %v359, %v336
  %v361 = vrot.slane %v360, 4
  %v362 = vadd.f32 %v360, %v361
  %v363 = vrot.slane %v362, 2
  %v364 = vadd.f32 %v362, %v363
  %v365 = vrot.slane %v364, 1
  %v366 = vadd.f32 %v364, %v365
  %v367 = vadd.f32 %v345, %v366
  %368 = vst [vmem:[#allocation2] sm:$0x1] %v367
  %v369 = vld [vmem:[#allocation3] sm:$0x1]
  %v370 = vmul.f32 %v277, %v277
  %v371 = vmul.f32 %v280, %v280
  %v372 = vmul.f32 %v285, %v285
  %v373 = vmul.f32 %v288, %v288
  %v374 = vmul.f32 %v293, %v293
  %v375 = vmul.f32 %v296, %v296
  %v376 = vmul.f32 %v301, %v301
  %v377 = vmul.f32 %v304, %v304
  %v378 = vmul.f32 %v309, %v309
  %v379 = vmul.f32 %v312, %v312
  %v380 = vmul.f32 %v317, %v317
  %v381 = vmul.f32 %v320, %v320
  %v382 = vmul.f32 %v325, %v325
  %v383 = vmul.f32 %v328, %v328
  %v384 = vmul.f32 %v333, %v333
  %v385 = vmul.f32 %v336, %v336
  %v386 = vadd.f32 %v370, %v371
  %v387 = vadd.f32 %v386, %v372
  %v388 = vadd.f32 %v387, %v373
  %v389 = vadd.f32 %v388, %v374
  %v390 = vadd.f32 %v389, %v375
  %v391 = vadd.f32 %v390, %v376
  %v392 = vadd.f32 %v391, %v377
  %v393 = vadd.f32 %v392, %v378
  %v394 = vadd.f32 %v393, %v379
  %v395 = vadd.f32 %v394, %v380
  %v396 = vadd.f32 %v395, %v381
  %v397 = vadd.f32 %v396, %v382
  %v398 = vadd.f32 %v397, %v383
  %v399 = vadd.f32 %v398, %v384
  %v400 = vadd.f32 %v399, %v385
  %v401 = vrot.slane %v400, 4
  %v402 = vadd.f32 %v400, %v401
  %v403 = vrot.slane %v402, 2
  %v404 = vadd.f32 %v402, %v403
  %v405 = vrot.slane %v404, 1
  %v406 = vadd.f32 %v404, %v405
  %v407 = vadd.f32 %v369, %v406
  %408 = vst [vmem:[#allocation3] sm:$0x1] %v407
  %v409 = vpack.c.bf16 %v280, %v277
  %v410 = vpack.c.bf16 %v288, %v285
  %v411 = vpack.c.bf16 %v296, %v293
  %v412 = vpack.c.bf16 %v304, %v301
  %v413 = vpack.c.bf16 %v312, %v309
  %v414 = vpack.c.bf16 %v320, %v317
  %v415 = vpack.c.bf16 %v328, %v325
  %v416 = vpack.c.bf16 %v336, %v333
  %v425 = vunpack.c.l.b16 %v409
  %v426 = vunpack.c.h.b16 %v409
  %v427 = vunpack.c.l.b16 %v410
  %v428 = vunpack.c.h.b16 %v410
  %v429 = vunpack.c.l.b16 %v411
  %v430 = vunpack.c.h.b16 %v411
  %v431 = vunpack.c.l.b16 %v412
  %v432 = vunpack.c.h.b16 %v412
  %v433 = vunpack.c.l.b16 %v413
  %v434 = vunpack.c.h.b16 %v413
  %v435 = vunpack.c.l.b16 %v414
  %v436 = vunpack.c.h.b16 %v414
  %v437 = vunpack.c.l.b16 %v415
  %v438 = vunpack.c.h.b16 %v415
  %v439 = vunpack.c.l.b16 %v416
  %v440 = vunpack.c.h.b16 %v416
  %v441 = vpack.c.b16 %v425, %v425
  %v442 = vpack.c.b16 %v426, %v426
  %v443 = vpack.c.b16 %v427, %v427
  %v444 = vpack.c.b16 %v428, %v428
  %v445 = vpack.c.b16 %v429, %v429
  %v446 = vpack.c.b16 %v430, %v430
  %v447 = vpack.c.b16 %v431, %v431
  %v448 = vpack.c.b16 %v432, %v432
  %v449 = vpack.c.b16 %v433, %v433
  %v450 = vpack.c.b16 %v434, %v434
  %v451 = vpack.c.b16 %v435, %v435
  %v452 = vpack.c.b16 %v436, %v436
  %v453 = vpack.c.b16 %v437, %v437
  %v454 = vpack.c.b16 %v438, %v438
  %v455 = vpack.c.b16 %v439, %v439
  %v456 = vpack.c.b16 %v440, %v440
  %s473 = smul.u32 0, 16
  %s474 = smul.addr %s473, 4
  %s475 = scalar_lea.vmem %s4, %s474
  %476 = vst [vmem:[%s475] sm:$0xf] %v441
  %477 = vst [vmem:[%s475 + $0x4] sm:$0xf] %v442
  %478 = vst [vmem:[%s475 + $0x8] sm:$0xf] %v443
  %479 = vst [vmem:[%s475 + $0xc] sm:$0xf] %v444
  %480 = vst [vmem:[%s475 + $0x10] sm:$0xf] %v445
  %481 = vst [vmem:[%s475 + $0x14] sm:$0xf] %v446
  %482 = vst [vmem:[%s475 + $0x18] sm:$0xf] %v447
  %483 = vst [vmem:[%s475 + $0x1c] sm:$0xf] %v448
  %484 = vst [vmem:[%s475 + $0x20] sm:$0xf] %v449
  %485 = vst [vmem:[%s475 + $0x24] sm:$0xf] %v450
  %486 = vst [vmem:[%s475 + $0x28] sm:$0xf] %v451
  %487 = vst [vmem:[%s475 + $0x2c] sm:$0xf] %v452
  %488 = vst [vmem:[%s475 + $0x30] sm:$0xf] %v453
  %489 = vst [vmem:[%s475 + $0x34] sm:$0xf] %v454
  %490 = vst [vmem:[%s475 + $0x38] sm:$0xf] %v455
  %491 = vst [vmem:[%s475 + $0x3c] sm:$0xf] %v456
  // Predicated region
  $region22: #{critic_forward.6} parent=0 // pred_check
    %p492 = pneg %p339
  $region23: #{critic_forward.6} parent=0 // pred_check_branch
    %494 = sbr.rel (%p492) target = $region25
  $region24: #{critic_forward.6} parent=0 // pred_region
    %v495 = vld [vmem:[#allocation2] sm:$0x1]
    %v496 = vmul.f32 %v495, 0.0078125
    %v497 = vld [vmem:[#allocation3] sm:$0x1]
    %v498 = vmul.f32 %v497, 0.0078125
    %v499 = vmul.f32 %v496, %v496
    %v500 = vsub.f32 %v498, %v499
    %v501 = vadd.f32 %v500, 1e-05
    %v502 = vrsqrt.pop %v501
    %v503 = vld [vmem:[%s2] sm:$0x1]
    %v504 = vmul.f32 %v502, %v503
    %v505 = vld [vmem:[%s3] sm:$0x1]
    %v506 = vmul.f32 %v496, %v504
    %v507 = vsub.f32 %v505, %v506
    %v508 = vld [vmem:[%s4] sm:$0xf]
    %v509 = vld [vmem:[%s4 + $0x4] sm:$0xf]
    %v510 = vld [vmem:[%s4 + $0x8] sm:$0xf]
    %v511 = vld [vmem:[%s4 + $0xc] sm:$0xf]
    %v512 = vld [vmem:[%s4 + $0x10] sm:$0xf]
    %v513 = vld [vmem:[%s4 + $0x14] sm:$0xf]
    %v514 = vld [vmem:[%s4 + $0x18] sm:$0xf]
    %v515 = vld [vmem:[%s4 + $0x1c] sm:$0xf]
    %v516 = vld [vmem:[%s4 + $0x20] sm:$0xf]
    %v517 = vld [vmem:[%s4 + $0x24] sm:$0xf]
    %v518 = vld [vmem:[%s4 + $0x28] sm:$0xf]
    %v519 = vld [vmem:[%s4 + $0x2c] sm:$0xf]
    %v520 = vld [vmem:[%s4 + $0x30] sm:$0xf]
    %v521 = vld [vmem:[%s4 + $0x34] sm:$0xf]
    %v522 = vld [vmem:[%s4 + $0x38] sm:$0xf]
    %v523 = vld [vmem:[%s4 + $0x3c] sm:$0xf]
    %v524 = vunpack.c.l.bf16 %v508
    %v525 = vunpack.c.l.bf16 %v509
    %v526 = vunpack.c.l.bf16 %v510
    %v527 = vunpack.c.l.bf16 %v511
    %v528 = vunpack.c.l.bf16 %v512
    %v529 = vunpack.c.l.bf16 %v513
    %v530 = vunpack.c.l.bf16 %v514
    %v531 = vunpack.c.l.bf16 %v515
    %v532 = vunpack.c.l.bf16 %v516
    %v533 = vunpack.c.l.bf16 %v517
    %v534 = vunpack.c.l.bf16 %v518
    %v535 = vunpack.c.l.bf16 %v519
    %v536 = vunpack.c.l.bf16 %v520
    %v537 = vunpack.c.l.bf16 %v521
    %v538 = vunpack.c.l.bf16 %v522
    %v539 = vunpack.c.l.bf16 %v523
    %v541 = vlaneseq
    %v542 = vshrl.u32 %v541, 7
    %v543 = vsub.s32 0, %v542
    %v544 = vrot.slane %v504, %v543
    %v546 = vmul.f32 %v524, %v544
    %v547 = vmul.f32 %v525, %v544
    %v548 = vmul.f32 %v526, %v544
    %v549 = vmul.f32 %v527, %v544
    %v550 = vmul.f32 %v528, %v544
    %v551 = vmul.f32 %v529, %v544
    %v552 = vmul.f32 %v530, %v544
    %v553 = vmul.f32 %v531, %v544
    %v554 = vmul.f32 %v532, %v544
    %v555 = vmul.f32 %v533, %v544
    %v556 = vmul.f32 %v534, %v544
    %v557 = vmul.f32 %v535, %v544
    %v558 = vmul.f32 %v536, %v544
    %v559 = vmul.f32 %v537, %v544
    %v560 = vmul.f32 %v538, %v544
    %v561 = vmul.f32 %v539, %v544
    %v563 = vlaneseq
    %v564 = vshrl.u32 %v563, 7
    %v565 = vsub.s32 0, %v564
    %v566 = vrot.slane %v507, %v565
    %v568 = vadd.f32 %v546, %v566
    %v569 = vadd.f32 %v547, %v566
    %v570 = vadd.f32 %v548, %v566
    %v571 = vadd.f32 %v549, %v566
    %v572 = vadd.f32 %v550, %v566
    %v573 = vadd.f32 %v551, %v566
    %v574 = vadd.f32 %v552, %v566
    %v575 = vadd.f32 %v553, %v566
    %v576 = vadd.f32 %v554, %v566
    %v577 = vadd.f32 %v555, %v566
    %v578 = vadd.f32 %v556, %v566
    %v579 = vadd.f32 %v557, %v566
    %v580 = vadd.f32 %v558, %v566
    %v581 = vadd.f32 %v559, %v566
    %v582 = vadd.f32 %v560, %v566
    %v583 = vadd.f32 %v561, %v566
    %vm584 = vcmp.gt.f32.partialorder %v568, 0.0
    %vm585 = vcmp.gt.f32.partialorder %v569, 0.0
    %vm586 = vcmp.gt.f32.partialorder %v570, 0.0
    %vm587 = vcmp.gt.f32.partialorder %v571, 0.0
    %vm588 = vcmp.gt.f32.partialorder %v572, 0.0
    %vm589 = vcmp.gt.f32.partialorder %v573, 0.0
    %vm590 = vcmp.gt.f32.partialorder %v574, 0.0
    %vm591 = vcmp.gt.f32.partialorder %v575, 0.0
    %vm592 = vcmp.gt.f32.partialorder %v576, 0.0
    %vm593 = vcmp.gt.f32.partialorder %v577, 0.0
    %vm594 = vcmp.gt.f32.partialorder %v578, 0.0
    %vm595 = vcmp.gt.f32.partialorder %v579, 0.0
    %vm596 = vcmp.gt.f32.partialorder %v580, 0.0
    %vm597 = vcmp.gt.f32.partialorder %v581, 0.0
    %vm598 = vcmp.gt.f32.partialorder %v582, 0.0
    %vm599 = vcmp.gt.f32.partialorder %v583, 0.0
    %v600 = vmul.f32 %v568, 0.2
    %v601 = vmul.f32 %v569, 0.2
    %v602 = vmul.f32 %v570, 0.2
    %v603 = vmul.f32 %v571, 0.2
    %v604 = vmul.f32 %v572, 0.2
    %v605 = vmul.f32 %v573, 0.2
    %v606 = vmul.f32 %v574, 0.2
    %v607 = vmul.f32 %v575, 0.2
    %v608 = vmul.f32 %v576, 0.2
    %v609 = vmul.f32 %v577, 0.2
    %v610 = vmul.f32 %v578, 0.2
    %v611 = vmul.f32 %v579, 0.2
    %v612 = vmul.f32 %v580, 0.2
    %v613 = vmul.f32 %v581, 0.2
    %v614 = vmul.f32 %v582, 0.2
    %v615 = vmul.f32 %v583, 0.2
    %v616 = vsel %vm584, %v568, %v600
    %v617 = vsel %vm585, %v569, %v601
    %v618 = vsel %vm586, %v570, %v602
    %v619 = vsel %vm587, %v571, %v603
    %v620 = vsel %vm588, %v572, %v604
    %v621 = vsel %vm589, %v573, %v605
    %v622 = vsel %vm590, %v574, %v606
    %v623 = vsel %vm591, %v575, %v607
    %v624 = vsel %vm592, %v576, %v608
    %v625 = vsel %vm593, %v577, %v609
    %v626 = vsel %vm594, %v578, %v610
    %v627 = vsel %vm595, %v579, %v611
    %v628 = vsel %vm596, %v580, %v612
    %v629 = vsel %vm597, %v581, %v613
    %v630 = vsel %vm598, %v582, %v614
    %v631 = vsel %vm599, %v583, %v615
    %v632 = vpack.c.bf16 %v617, %v616
    %v633 = vpack.c.bf16 %v619, %v618
    %v634 = vpack.c.bf16 %v621, %v620
    %v635 = vpack.c.bf16 %v623, %v622
    %v636 = vpack.c.bf16 %v625, %v624
    %v637 = vpack.c.bf16 %v627, %v626
    %v638 = vpack.c.bf16 %v629, %v628
    %v639 = vpack.c.bf16 %v631, %v630
    %v648 = vunpack.c.l.b16 %v632
    %v649 = vunpack.c.h.b16 %v632
    %v650 = vunpack.c.l.b16 %v633
    %v651 = vunpack.c.h.b16 %v633
    %v652 = vunpack.c.l.b16 %v634
    %v653 = vunpack.c.h.b16 %v634
    %v654 = vunpack.c.l.b16 %v635
    %v655 = vunpack.c.h.b16 %v635
    %v656 = vunpack.c.l.b16 %v636
    %v657 = vunpack.c.h.b16 %v636
    %v658 = vunpack.c.l.b16 %v637
    %v659 = vunpack.c.h.b16 %v637
    %v660 = vunpack.c.l.b16 %v638
    %v661 = vunpack.c.h.b16 %v638
    %v662 = vunpack.c.l.b16 %v639
    %v663 = vunpack.c.h.b16 %v639
    %v664 = vpack.c.b16 %v648, %v648
    %v665 = vpack.c.b16 %v649, %v649
    %v666 = vpack.c.b16 %v650, %v650
    %v667 = vpack.c.b16 %v651, %v651
    %v668 = vpack.c.b16 %v652, %v652
    %v669 = vpack.c.b16 %v653, %v653
    %v670 = vpack.c.b16 %v654, %v654
    %v671 = vpack.c.b16 %v655, %v655
    %v672 = vpack.c.b16 %v656, %v656
    %v673 = vpack.c.b16 %v657, %v657
    %v674 = vpack.c.b16 %v658, %v658
    %v675 = vpack.c.b16 %v659, %v659
    %v676 = vpack.c.b16 %v660, %v660
    %v677 = vpack.c.b16 %v661, %v661
    %v678 = vpack.c.b16 %v662, %v662
    %v679 = vpack.c.b16 %v663, %v663
    %696 = vst [vmem:[%s4] sm:$0xf] %v664
    %697 = vst [vmem:[%s4 + $0x4] sm:$0xf] %v665
    %698 = vst [vmem:[%s4 + $0x8] sm:$0xf] %v666
    %699 = vst [vmem:[%s4 + $0xc] sm:$0xf] %v667
    %700 = vst [vmem:[%s4 + $0x10] sm:$0xf] %v668
    %701 = vst [vmem:[%s4 + $0x14] sm:$0xf] %v669
    %702 = vst [vmem:[%s4 + $0x18] sm:$0xf] %v670
    %703 = vst [vmem:[%s4 + $0x1c] sm:$0xf] %v671
    %704 = vst [vmem:[%s4 + $0x20] sm:$0xf] %v672
    %705 = vst [vmem:[%s4 + $0x24] sm:$0xf] %v673
    %706 = vst [vmem:[%s4 + $0x28] sm:$0xf] %v674
    %707 = vst [vmem:[%s4 + $0x2c] sm:$0xf] %v675
    %708 = vst [vmem:[%s4 + $0x30] sm:$0xf] %v676
    %709 = vst [vmem:[%s4 + $0x34] sm:$0xf] %v677
    %710 = vst [vmem:[%s4 + $0x38] sm:$0xf] %v678
    %711 = vst [vmem:[%s4 + $0x3c] sm:$0xf] %v679
  $region25: #{critic_forward.6} parent=0 // pred_fallthru
    _
  // Predicated region
  $region26: #{critic_forward.6} parent=0 // pred_check
    _
  $region27: #{critic_forward.6} parent=0 // pred_check_branch
    %713 = sbr.rel (0) target = $region29
  $region28: #{critic_forward.6} parent=0 // pred_region
    _
  $region29: #{critic_forward.6} parent=0 // pred_fallthru
    _
  // Predicated region
  $region30: #{critic_forward.6} parent=0 // pred_check
    _
  $region31: #{critic_forward.6} parent=0 // pred_check_branch
    %715 = sbr.rel (0) target = $region33
  $region32: #{critic_forward.6} parent=0 // pred_region
    _
  $region33: #{critic_forward.6} parent=0 // pred_fallthru
    _

// kernel: critic_forward.7
$region0: #{critic_forward.7}
  #allocation0 [shape = 'u32[]', space=smem, size = 0x4, offset = 0x4, fixed_abs, tag = 'smem constant byte address 0x4 - core index']
  #allocation1 [shape = 'u32[144,128]{1,0:T(1,128)}', space=vmem, size = 0x12000, scoped, tag = 'internal scratch']
  %s0 = inlined_call_operand.vmem [shape: bf16[32,512], index: 0, kind: input, shape index: {}]
  %s1 = inlined_call_operand.vmem [shape: bf16[512,128], index: 1, kind: input, shape index: {}]
  %s2 = inlined_call_operand.vmem [shape: f32[1,128], index: 2, kind: input, shape index: {}]
  %s3 = inlined_call_operand.vmem [shape: f32[1,128], index: 3, kind: input, shape index: {}]
  %s4 = inlined_call_operand.vmem [shape: f32[32,128], index: 4, kind: input, shape index: {}]
  %s5 = inlined_call_operand.vmem [shape: f32[8,32], index: 5, kind: input, shape index: {}]
  %s6 = inlined_call_operand.vmem [shape: f32[8,1], index: 6, kind: output, shape index: {}]
  %s7 = sld [smem:[#allocation0]]
  $region34: #{critic_forward.7} parent=0
    _
  %s9 = ssub.s32 1, %s7
  %s10 = scalar_select 0, %s9, %s7
  // Predicated region
  $region2: #{critic_forward.7} parent=0 // pred_check
    _
  $region3: #{critic_forward.7} parent=0 // pred_check_branch
    %12 = sbr.rel (0) target = $region5
  $region4: #{critic_forward.7} parent=0 // pred_region
    _
  $region5: #{critic_forward.7} parent=0 // pred_fallthru
    _
  // Predicated region
  $region6: #{critic_forward.7} parent=0 // pred_check
    _
  $region7: #{critic_forward.7} parent=0 // pred_check_branch
    %14 = sbr.rel (0) target = $region9
  $region8: #{critic_forward.7} parent=0 // pred_region
    _
  $region9: #{critic_forward.7} parent=0 // pred_fallthru
    _
  // Predicated region
  $region10: #{critic_forward.7} parent=0 // pred_check
    _
  $region11: #{critic_forward.7} parent=0 // pred_check_branch
    %16 = sbr.rel (0) target = $region13
  $region12: #{critic_forward.7} parent=0 // pred_region
    _
  $region13: #{critic_forward.7} parent=0 // pred_fallthru
    _
  // Predicated region
  $region14: #{critic_forward.7} parent=0 // pred_check
    _
  $region15: #{critic_forward.7} parent=0 // pred_check_branch
    %18 = sbr.rel (0) target = $region17
  $region16: #{critic_forward.7} parent=0 // pred_region
    _
  $region17: #{critic_forward.7} parent=0 // pred_fallthru
    _
  // Predicated region
  $region18: #{critic_forward.7} parent=0 // pred_check
    _
  $region19: #{critic_forward.7} parent=0 // pred_check_branch
    %20 = sbr.rel (0) target = $region21
  $region20: #{critic_forward.7} parent=0 // pred_region
    _
  $region21: #{critic_forward.7} parent=0 // pred_fallthru
    _
  // Predicated region
  $region22: #{critic_forward.7} parent=0 // pred_check
    _
  $region23: #{critic_forward.7} parent=0 // pred_check_branch
    %22 = sbr.rel (0) target = $region25
  $region24: #{critic_forward.7} parent=0 // pred_region
    _
  $region25: #{critic_forward.7} parent=0 // pred_fallthru
    _
  %v24 = vld [vmem:[%s0] sm:$0xff]
  %v25 = vld [vmem:[%s0 + $0x8] sm:$0xff]
  %v26 = vld [vmem:[%s0 + $0x10] sm:$0xff]
  %v27 = vld [vmem:[%s0 + $0x18] sm:$0xff]
  %v28 = vld [vmem:[%s0 + $0x20] sm:$0xff]
  %v29 = vld [vmem:[%s0 + $0x28] sm:$0xff]
  %v30 = vld [vmem:[%s0 + $0x30] sm:$0xff]
  %v31 = vld [vmem:[%s0 + $0x38] sm:$0xff]
  %v32 = vld [vmem:[%s1] sm:$0xf]
  %v33 = vld [vmem:[%s1 + $0x4] sm:$0xf]
  %v34 = vld [vmem:[%s1 + $0x8] sm:$0xf]
  %v35 = vld [vmem:[%s1 + $0xc] sm:$0xf]
  %v36 = vld [vmem:[%s1 + $0x10] sm:$0xf]
  %v37 = vld [vmem:[%s1 + $0x14] sm:$0xf]
  %v38 = vld [vmem:[%s1 + $0x18] sm:$0xf]
  %v39 = vld [vmem:[%s1 + $0x1c] sm:$0xf]
  %v40 = vld [vmem:[%s1 + $0x20] sm:$0xf]
  %v41 = vld [vmem:[%s1 + $0x24] sm:$0xf]
  %v42 = vld [vmem:[%s1 + $0x28] sm:$0xf]
  %v43 = vld [vmem:[%s1 + $0x2c] sm:$0xf]
  %v44 = vld [vmem:[%s1 + $0x30] sm:$0xf]
  %v45 = vld [vmem:[%s1 + $0x34] sm:$0xf]
  %v46 = vld [vmem:[%s1 + $0x38] sm:$0xf]
  %v47 = vld [vmem:[%s1 + $0x3c] sm:$0xf]
  %v48 = vld [vmem:[%s1 + $0x40] sm:$0xf]
  %v49 = vld [vmem:[%s1 + $0x44] sm:$0xf]
  %v50 = vld [vmem:[%s1 + $0x48] sm:$0xf]
  %v51 = vld [vmem:[%s1 + $0x4c] sm:$0xf]
  %v52 = vld [vmem:[%s1 + $0x50] sm:$0xf]
  %v53 = vld [vmem:[%s1 + $0x54] sm:$0xf]
  %v54 = vld [vmem:[%s1 + $0x58] sm:$0xf]
  %v55 = vld [vmem:[%s1 + $0x5c] sm:$0xf]
  %v56 = vld [vmem:[%s1 + $0x60] sm:$0xf]
  %v57 = vld [vmem:[%s1 + $0x64] sm:$0xf]
  %v58 = vld [vmem:[%s1 + $0x68] sm:$0xf]
  %v59 = vld [vmem:[%s1 + $0x6c] sm:$0xf]
  %v60 = vld [vmem:[%s1 + $0x70] sm:$0xf]
  %v61 = vld [vmem:[%s1 + $0x74] sm:$0xf]
  %v62 = vld [vmem:[%s1 + $0x78] sm:$0xf]
  %v63 = vld [vmem:[%s1 + $0x7c] sm:$0xf]
  %v64 = vld [vmem:[%s1 + $0x80] sm:$0xf]
  %v65 = vld [vmem:[%s1 + $0x84] sm:$0xf]
  %v66 = vld [vmem:[%s1 + $0x88] sm:$0xf]
  %v67 = vld [vmem:[%s1 + $0x8c] sm:$0xf]
  %v68 = vld [vmem:[%s1 + $0x90] sm:$0xf]
  %v69 = vld [vmem:[%s1 + $0x94] sm:$0xf]
  %v70 = vld [vmem:[%s1 + $0x98] sm:$0xf]
  %v71 = vld [vmem:[%s1 + $0x9c] sm:$0xf]
  %v72 = vld [vmem:[%s1 + $0xa0] sm:$0xf]
  %v73 = vld [vmem:[%s1 + $0xa4] sm:$0xf]
  %v74 = vld [vmem:[%s1 + $0xa8] sm:$0xf]
  %v75 = vld [vmem:[%s1 + $0xac] sm:$0xf]
  %v76 = vld [vmem:[%s1 + $0xb0] sm:$0xf]
  %v77 = vld [vmem:[%s1 + $0xb4] sm:$0xf]
  %v78 = vld [vmem:[%s1 + $0xb8] sm:$0xf]
  %v79 = vld [vmem:[%s1 + $0xbc] sm:$0xf]
  %v80 = vld [vmem:[%s1 + $0xc0] sm:$0xf]
  %v81 = vld [vmem:[%s1 + $0xc4] sm:$0xf]
  %v82 = vld [vmem:[%s1 + $0xc8] sm:$0xf]
  %v83 = vld [vmem:[%s1 + $0xcc] sm:$0xf]
  %v84 = vld [vmem:[%s1 + $0xd0] sm:$0xf]
  %v85 = vld [vmem:[%s1 + $0xd4] sm:$0xf]
  %v86 = vld [vmem:[%s1 + $0xd8] sm:$0xf]
  %v87 = vld [vmem:[%s1 + $0xdc] sm:$0xf]
  %v88 = vld [vmem:[%s1 + $0xe0] sm:$0xf]
  %v89 = vld [vmem:[%s1 + $0xe4] sm:$0xf]
  %v90 = vld [vmem:[%s1 + $0xe8] sm:$0xf]
  %v91 = vld [vmem:[%s1 + $0xec] sm:$0xf]
  %v92 = vld [vmem:[%s1 + $0xf0] sm:$0xf]
  %v93 = vld [vmem:[%s1 + $0xf4] sm:$0xf]
  %v94 = vld [vmem:[%s1 + $0xf8] sm:$0xf]
  %v95 = vld [vmem:[%s1 + $0xfc] sm:$0xf]
  %v104 = vunpack.c.l.b16 %v24
  %v105 = vunpack.c.h.b16 %v24
  %v106 = vunpack.c.l.b16 %v25
  %v107 = vunpack.c.h.b16 %v25
  %v108 = vunpack.c.l.b16 %v26
  %v109 = vunpack.c.h.b16 %v26
  %v110 = vunpack.c.l.b16 %v27
  %v111 = vunpack.c.h.b16 %v27
  %v112 = vunpack.c.l.b16 %v28
  %v113 = vunpack.c.h.b16 %v28
  %v114 = vunpack.c.l.b16 %v29
  %v115 = vunpack.c.h.b16 %v29
  %v116 = vunpack.c.l.b16 %v30
  %v117 = vunpack.c.h.b16 %v30
  %v118 = vunpack.c.l.b16 %v31
  %v119 = vunpack.c.h.b16 %v31
  %v120 = vpack.c.b16 %v108, %v104
  %v121 = vpack.c.b16 %v109, %v105
  %v122 = vpack.c.b16 %v110, %v106
  %v123 = vpack.c.b16 %v111, %v107
  %v124 = vpack.c.b16 %v116, %v112
  %v125 = vpack.c.b16 %v117, %v113
  %v126 = vpack.c.b16 %v118, %v114
  %v127 = vpack.c.b16 %v119, %v115
  %v200 = vunpack.c.l.b16 %v32
  %v201 = vunpack.c.l.b16 %v33
  %v202 = vunpack.c.l.b16 %v34
  %v203 = vunpack.c.l.b16 %v35
  %v204 = vunpack.c.l.b16 %v36
  %v205 = vunpack.c.l.b16 %v37
  %v206 = vunpack.c.l.b16 %v38
  %v207 = vunpack.c.l.b16 %v39
  %v208 = vunpack.c.l.b16 %v40
  %v209 = vunpack.c.l.b16 %v41
  %v210 = vunpack.c.l.b16 %v42
  %v211 = vunpack.c.l.b16 %v43
  %v212 = vunpack.c.l.b16 %v44
  %v213 = vunpack.c.l.b16 %v45
  %v214 = vunpack.c.l.b16 %v46
  %v215 = vunpack.c.l.b16 %v47
  %v216 = vunpack.c.l.b16 %v48
  %v217 = vunpack.c.l.b16 %v49
  %v218 = vunpack.c.l.b16 %v50
  %v219 = vunpack.c.l.b16 %v51
  %v220 = vunpack.c.l.b16 %v52
  %v221 = vunpack.c.l.b16 %v53
  %v222 = vunpack.c.l.b16 %v54
  %v223 = vunpack.c.l.b16 %v55
  %v224 = vunpack.c.l.b16 %v56
  %v225 = vunpack.c.l.b16 %v57
  %v226 = vunpack.c.l.b16 %v58
  %v227 = vunpack.c.l.b16 %v59
  %v228 = vunpack.c.l.b16 %v60
  %v229 = vunpack.c.l.b16 %v61
  %v230 = vunpack.c.l.b16 %v62
  %v231 = vunpack.c.l.b16 %v63
  %v232 = vunpack.c.l.b16 %v64
  %v233 = vunpack.c.l.b16 %v65
  %v234 = vunpack.c.l.b16 %v66
  %v235 = vunpack.c.l.b16 %v67
  %v236 = vunpack.c.l.b16 %v68
  %v237 = vunpack.c.l.b16 %v69
  %v238 = vunpack.c.l.b16 %v70
  %v239 = vunpack.c.l.b16 %v71
  %v240 = vunpack.c.l.b16 %v72
  %v241 = vunpack.c.l.b16 %v73
  %v242 = vunpack.c.l.b16 %v74
  %v243 = vunpack.c.l.b16 %v75
  %v244 = vunpack.c.l.b16 %v76
  %v245 = vunpack.c.l.b16 %v77
  %v246 = vunpack.c.l.b16 %v78
  %v247 = vunpack.c.l.b16 %v79
  %v248 = vunpack.c.l.b16 %v80
  %v249 = vunpack.c.l.b16 %v81
  %v250 = vunpack.c.l.b16 %v82
  %v251 = vunpack.c.l.b16 %v83
  %v252 = vunpack.c.l.b16 %v84
  %v253 = vunpack.c.l.b16 %v85
  %v254 = vunpack.c.l.b16 %v86
  %v255 = vunpack.c.l.b16 %v87
  %v256 = vunpack.c.l.b16 %v88
  %v257 = vunpack.c.l.b16 %v89
  %v258 = vunpack.c.l.b16 %v90
  %v259 = vunpack.c.l.b16 %v91
  %v260 = vunpack.c.l.b16 %v92
  %v261 = vunpack.c.l.b16 %v93
  %v262 = vunpack.c.l.b16 %v94
  %v263 = vunpack.c.l.b16 %v95
  %v264 = vpack.c.b16 %v201, %v200
  %v265 = vpack.c.b16 %v203, %v202
  %v266 = vpack.c.b16 %v205, %v204
  %v267 = vpack.c.b16 %v207, %v206
  %v268 = vpack.c.b16 %v209, %v208
  %v269 = vpack.c.b16 %v211, %v210
  %v270 = vpack.c.b16 %v213, %v212
  %v271 = vpack.c.b16 %v215, %v214
  %v272 = vpack.c.b16 %v217, %v216
  %v273 = vpack.c.b16 %v219, %v218
  %v274 = vpack.c.b16 %v221, %v220
  %v275 = vpack.c.b16 %v223, %v222
  %v276 = vpack.c.b16 %v225, %v224
  %v277 = vpack.c.b16 %v227, %v226
  %v278 = vpack.c.b16 %v229, %v228
  %v279 = vpack.c.b16 %v231, %v230
  %v280 = vpack.c.b16 %v233, %v232
  %v281 = vpack.c.b16 %v235, %v234
  %v282 = vpack.c.b16 %v237, %v236
  %v283 = vpack.c.b16 %v239, %v238
  %v284 = vpack.c.b16 %v241, %v240
  %v285 = vpack.c.b16 %v243, %v242
  %v286 = vpack.c.b16 %v245, %v244
  %v287 = vpack.c.b16 %v247, %v246
  %v288 = vpack.c.b16 %v249, %v248
  %v289 = vpack.c.b16 %v251, %v250
  %v290 = vpack.c.b16 %v253, %v252
  %v291 = vpack.c.b16 %v255, %v254
  %v292 = vpack.c.b16 %v257, %v256
  %v293 = vpack.c.b16 %v259, %v258
  %v294 = vpack.c.b16 %v261, %v260
  %v295 = vpack.c.b16 %v263, %v262
  %328 = vmatprep.subr.bf16.mxu0 0
  %329 = vmatpush1.bf16.msra.mxu0 %v264
  %330 = vmatprep.subr.bf16.mxu0 0
  %331 = vmatpush1.bf16.msra.mxu0 %v265
  %332 = vmatprep.subr.bf16.mxu0 0
  %333 = vmatpush1.bf16.msra.mxu0 %v266
  %334 = vmatprep.subr.bf16.mxu0 0
  %335 = vmatpush1.bf16.msra.mxu0 %v267
  %336 = vmatprep.subr.bf16.mxu0 0
  %337 = vmatpush1.bf16.msra.mxu0 %v268
  %338 = vmatprep.subr.bf16.mxu0 0
  %339 = vmatpush1.bf16.msra.mxu0 %v269
  %340 = vmatprep.subr.bf16.mxu0 0
  %341 = vmatpush1.bf16.msra.mxu0 %v270
  %342 = vmatprep.subr.bf16.mxu0 0
  %343 = vmatpush1.bf16.msra.mxu0 %v271
  %344 = vmatprep.subr.bf16.mxu0 0
  %345 = vmatpush1.bf16.msra.mxu0 %v272
  %346 = vmatprep.subr.bf16.mxu0 0
  %347 = vmatpush1.bf16.msra.mxu0 %v273
  %348 = vmatprep.subr.bf16.mxu0 0
  %349 = vmatpush1.bf16.msra.mxu0 %v274
  %350 = vmatprep.subr.bf16.mxu0 0
  %351 = vmatpush1.bf16.msra.mxu0 %v275
  %352 = vmatprep.subr.bf16.mxu0 0
  %353 = vmatpush1.bf16.msra.mxu0 %v276
  %354 = vmatprep.subr.bf16.mxu0 0
  %355 = vmatpush1.bf16.msra.mxu0 %v277
  %356 = vmatprep.subr.bf16.mxu0 0
  %357 = vmatpush1.bf16.msra.mxu0 %v278
  %358 = vmatprep.subr.bf16.mxu0 0
  %359 = vmatpush1.bf16.msra.mxu0 %v279
  %360 = vmatprep.mubr.bf16.mxu0 %v121
  %361 = vmatmul.mubr.bf16.gmra.mrb[0].mxu0 %v120
  %v362 = vpop.f32.mrb[0].mxu0
  %v363 = vadd.f32 0.0, %v362
  %v364 = vpop.f32.mrb[0].mxu0
  %v365 = vpop.f32.mrb[0].mxu0
  %v366 = vadd.f32 0.0, %v365
  %v367 = vpop.f32.mrb[0].mxu0
  %368 = vmatprep.mubr.bf16.mxu0 %v125
  %369 = vmatmul.mubr.bf16.gmra.mrb[0].mxu0 %v124
  %v370 = vpop.f32.mrb[0].mxu0
  %v371 = vadd.f32 0.0, %v370
  %v372 = vpop.f32.mrb[0].mxu0
  %v373 = vpop.f32.mrb[0].mxu0
  %v374 = vadd.f32 0.0, %v373
  %v375 = vpop.f32.mrb[0].mxu0
  %376 = vdwg.mxu0
  %377 = vmatprep.subr.bf16.mxu0 0
  %378 = vmatpush1.bf16.msra.mxu0 %v280
  %379 = vmatprep.subr.bf16.mxu0 0
  %380 = vmatpush1.bf16.msra.mxu0 %v281
  %381 = vmatprep.subr.bf16.mxu0 0
  %382 = vmatpush1.bf16.msra.mxu0 %v282
  %383 = vmatprep.subr.bf16.mxu0 0
  %384 = vmatpush1.bf16.msra.mxu0 %v283
  %385 = vmatprep.subr.bf16.mxu0 0
  %386 = vmatpush1.bf16.msra.mxu0 %v284
  %387 = vmatprep.subr.bf16.mxu0 0
  %388 = vmatpush1.bf16.msra.mxu0 %v285
  %389 = vmatprep.subr.bf16.mxu0 0
  %390 = vmatpush1.bf16.msra.mxu0 %v286
  %391 = vmatprep.subr.bf16.mxu0 0
  %392 = vmatpush1.bf16.msra.mxu0 %v287
  %393 = vmatprep.subr.bf16.mxu0 0
  %394 = vmatpush1.bf16.msra.mxu0 %v288
  %395 = vmatprep.subr.bf16.mxu0 0
  %396 = vmatpush1.bf16.msra.mxu0 %v289
  %397 = vmatprep.subr.bf16.mxu0 0
  %398 = vmatpush1.bf16.msra.mxu0 %v290
  %399 = vmatprep.subr.bf16.mxu0 0
  %400 = vmatpush1.bf16.msra.mxu0 %v291
  %401 = vmatprep.subr.bf16.mxu0 0
  %402 = vmatpush1.bf16.msra.mxu0 %v292
  %403 = vmatprep.subr.bf16.mxu0 0
  %404 = vmatpush1.bf16.msra.mxu0 %v293
  %405 = vmatprep.subr.bf16.mxu0 0
  %406 = vmatpush1.bf16.msra.mxu0 %v294
  %407 = vmatprep.subr.bf16.mxu0 0
  %408 = vmatpush1.bf16.msra.mxu0 %v295
  %409 = vmatprep.mubr.bf16.mxu0 %v123
  %410 = vmatmul.mubr.bf16.gmra.mrb[0].mxu0 %v122
  %v411 = vpop.f32.mrb[0].mxu0
  %v412 = vadd.f32 %v363, %v411
  %v413 = vpop.f32.mrb[0].mxu0
  %v414 = vpop.f32.mrb[0].mxu0
  %v415 = vadd.f32 %v366, %v414
  %v416 = vpop.f32.mrb[0].mxu0
  %417 = vmatprep.mubr.bf16.mxu0 %v127
  %418 = vmatmul.mubr.bf16.gmra.mrb[0].mxu0 %v126
  %v419 = vpop.f32.mrb[0].mxu0
  %v420 = vadd.f32 %v371, %v419
  %v421 = vpop.f32.mrb[0].mxu0
  %v422 = vpop.f32.mrb[0].mxu0
  %v423 = vadd.f32 %v374, %v422
  %v424 = vpop.f32.mrb[0].mxu0
  %425 = vdwg.mxu0
  %v426 = vadd.f32 %v412, %v415
  %v427 = vadd.f32 %v426, %v420
  %v428 = vadd.f32 %v427, %v423
  %v429 = vrot.slane %v428, 4
  %v430 = vadd.f32 %v428, %v429
  %v431 = vrot.slane %v430, 2
  %v432 = vadd.f32 %v430, %v431
  %v433 = vrot.slane %v432, 1
  %v434 = vadd.f32 %v432, %v433
  %v435 = vmul.f32 %v434, 0.03125
  %v436 = vmul.f32 %v412, %v412
  %v437 = vmul.f32 %v415, %v415
  %v438 = vmul.f32 %v420, %v420
  %v439 = vmul.f32 %v423, %v423
  %v440 = vadd.f32 %v436, %v437
  %v441 = vadd.f32 %v440, %v438
  %v442 = vadd.f32 %v441, %v439
  %v443 = vrot.slane %v442, 4
  %v444 = vadd.f32 %v442, %v443
  %v445 = vrot.slane %v444, 2
  %v446 = vadd.f32 %v444, %v445
  %v447 = vrot.slane %v446, 1
  %v448 = vadd.f32 %v446, %v447
  %v449 = vmul.f32 %v448, 0.03125
  %v450 = vmul.f32 %v435, %v435
  %v451 = vsub.f32 %v449, %v450
  %v452 = vadd.f32 %v451, 1e-05
  %v453 = vrsqrt.pop %v452
  %v454 = vld [vmem:[%s2] sm:$0x1]
  %v455 = vmul.f32 %v453, %v454
  %v456 = vld [vmem:[%s3] sm:$0x1]
  %v457 = vmul.f32 %v435, %v455
  %v458 = vsub.f32 %v456, %v457
  %v459 = vlaneseq
  %v460 = vshrl.u32 %v459, 7
  %v461 = vsub.s32 0, %v460
  %v462 = vrot.slane %v455, %v461
  %v463 = vmul.f32 %v412, %v462
  %v464 = vmul.f32 %v415, %v462
  %v465 = vmul.f32 %v420, %v462
  %v466 = vmul.f32 %v423, %v462
  %v468 = vlaneseq
  %v469 = vshrl.u32 %v468, 7
  %v470 = vsub.s32 0, %v469
  %v471 = vrot.slane %v458, %v470
  %v473 = vadd.f32 %v463, %v471
  %v474 = vadd.f32 %v464, %v471
  %v475 = vadd.f32 %v465, %v471
  %v476 = vadd.f32 %v466, %v471
  %vm477 = vcmp.gt.f32.partialorder %v473, 0.0
  %vm478 = vcmp.gt.f32.partialorder %v474, 0.0
  %vm479 = vcmp.gt.f32.partialorder %v475, 0.0
  %vm480 = vcmp.gt.f32.partialorder %v476, 0.0
  %v481 = vmul.f32 %v473, 0.2
  %v482 = vmul.f32 %v474, 0.2
  %v483 = vmul.f32 %v475, 0.2
  %v484 = vmul.f32 %v476, 0.2
  %v485 = vsel %vm477, %v473, %v481
  %v486 = vsel %vm478, %v474, %v482
  %v487 = vsel %vm479, %v475, %v483
  %v488 = vsel %vm480, %v476, %v484
  %v489 = vld [vmem:[%s4] sm:$0xff]
  %v490 = vld [vmem:[%s4 + $0x8] sm:$0xff]
  %v491 = vld [vmem:[%s4 + $0x10] sm:$0xff]
  %v492 = vld [vmem:[%s4 + $0x18] sm:$0xff]
  %v493 = vmul.f32 %v485, %v489
  %v494 = vmul.f32 %v486, %v490
  %v495 = vmul.f32 %v487, %v491
  %v496 = vmul.f32 %v488, %v492
  %v497 = vld [vmem:[%s5] sm:$0xff]
  %vm498 = vcmask 261120
  %v500 = vsel %vm498, %v497, 0
  %502 = vmatprep.subr.mxu0 0.0
  %503 = vmatpush1.msra.mxu0 %v493
  %504 = vmatprep.subr.mxu0 0.0
  %505 = vmatpush1.msra.mxu0 %v494
  %506 = vmatprep.subr.mxu0 0.0
  %507 = vmatpush1.msra.mxu0 %v495
  %508 = vmatprep.subr.mxu0 0.0
  %509 = vmatpush1.msra.mxu0 %v496
  %510 = vmatprep.subr.mxu0 0.0
  %511 = vmatpush1.msra.mxu0 0.0
  %512 = vmatprep.subr.mxu0 0.0
  %513 = vmatpush1.msra.mxu0 0.0
  %514 = vmatprep.subr.mxu0 0.0
  %515 = vmatpush1.msra.mxu0 0.0
  %516 = vmatprep.subr.mxu0 0.0
  %517 = vmatpush1.msra.mxu0 0.0
  %518 = vmatprep.subr.mxu0 0.0
  %519 = vmatpush1.msra.mxu0 0.0
  %520 = vmatprep.subr.mxu0 0.0
  %521 = vmatpush1.msra.mxu0 0.0
  %522 = vmatprep.subr.mxu0 0.0
  %523 = vmatpush1.msra.mxu0 0.0
  %524 = vmatprep.subr.mxu0 0.0
  %525 = vmatpush1.msra.mxu0 0.0
  %526 = vmatprep.subr.mxu0 0.0
  %527 = vmatpush1.msra.mxu0 0.0
  %528 = vmatprep.subr.mxu0 0.0
  %529 = vmatpush1.msra.mxu0 0.0
  %530 = vmatprep.subr.mxu0 0.0
  %531 = vmatpush1.msra.mxu0 0.0
  %532 = vmatprep.subr.mxu0 0.0
  %533 = vmatpush1.msra.mxu0 0.0
  %534 = vmatprep.subr.mxu0 0.0
  %535 = vmatpush1.msra.mxu0 0.0
  %536 = vmatprep.subr.mxu0 0.0
  %537 = vmatpush1.msra.mxu0 0.0
  %538 = vmatprep.subr.mxu0 0.0
  %539 = vmatpush1.msra.mxu0 0.0
  %540 = vmatprep.subr.mxu0 0.0
  %541 = vmatpush1.msra.mxu0 0.0
  %542 = vmatprep.subr.mxu0 0.0
  %543 = vmatpush1.msra.mxu0 0.0
  %544 = vmatprep.subr.mxu0 0.0
  %545 = vmatpush1.msra.mxu0 0.0
  %546 = vmatprep.subr.mxu0 0.0
  %547 = vmatpush1.msra.mxu0 0.0
  %548 = vmatprep.subr.mxu0 0.0
  %549 = vmatpush1.msra.mxu0 0.0
  %550 = vmatprep.subr.mxu0 0.0
  %551 = vmatpush1.msra.mxu0 0.0
  %552 = vmatprep.subr.mxu0 0.0
  %553 = vmatpush1.msra.mxu0 0.0
  %554 = vmatprep.subr.mxu0 0.0
  %555 = vmatpush1.msra.mxu0 0.0
  %556 = vmatprep.subr.mxu0 0.0
  %557 = vmatpush1.msra.mxu0 0.0
  %558 = vmatprep.subr.mxu0 0.0
  %559 = vmatpush1.msra.mxu0 0.0
  %560 = vmatprep.subr.mxu0 0.0
  %561 = vmatpush1.msra.mxu0 0.0
  %562 = vmatprep.subr.mxu0 0.0
  %563 = vmatpush1.msra.mxu0 0.0
  %564 = vmatprep.subr.mxu0 0.0
  %565 = vmatpush1.msra.mxu0 0.0
  %566 = vmatprep.mubr.f32.mxu0 0.0
  %567 = vmatmul.mubr.f32.gmra.mrb[0].mxu0 %v500
  %v568 = vpop.f32.mrb[0].mxu0
  %v569 = vadd.f32 0.0, %v568
  %v570 = vpop.f32.mrb[0].mxu0
  %571 = vdwg.mxu0
  %572 = vadd.xlane.f32.xlu0 %v569
  %v573 = vpop.xlane.xlu0 %572
  %vm574 = vcmask 7168
  %575 = vst.msk [vmem:[%s6] sm:$0xff] %vm574, %v573
  // Predicated region
  $region26: #{critic_forward.7} parent=0 // pred_check
    _
  $region27: #{critic_forward.7} parent=0 // pred_check_branch
    %577 = sbr.rel (0) target = $region29
  $region28: #{critic_forward.7} parent=0 // pred_region
    _
  $region29: #{critic_forward.7} parent=0 // pred_fallthru
    _
  // Predicated region
  $region30: #{critic_forward.7} parent=0 // pred_check
    _
  $region31: #{critic_forward.7} parent=0 // pred_check_branch
    %579 = sbr.rel (0) target = $region33
  $region32: #{critic_forward.7} parent=0 // pred_region
    _
  $region33: #{critic_forward.7} parent=0 // pred_fallthru
    _

</llo_original>
